<compile_context>
chip_gen: v7x
topology: tpu7x:2x2x1
jax: 0.10.0
libtpu: 0.0.40
codegen_flags: <defaults>
</compile_context>

<pallas_src>
import functools

import numpy as np

import jax
import jax.numpy as jnp
from jax.experimental import pallas as pl
from jax.experimental.pallas import tpu as pltpu


# ---------------------------------------------------------------------------
# Pallas kernel: fused multi-layer (conv 4x4 / s2 / p1 + LeakyReLU) encoder
# ---------------------------------------------------------------------------
def _encoder_kernel(*refs, slope):
    """refs = (p0, w0, b0, [g, w, b] * (L-1), out).

    p0 : (R0, 16*Cin0)      bf16  im2col patches of layer 0
    w0 : (16*Cin0, C1)      bf16  layer-0 weight matrix, rows ordered (kh,kw,ci)
    b0 : (1, C1)            f32
    g  : (16, R_out, R_in)  bf16  0/1 tap-gather matrices (in-kernel im2col)
    w  : (16, Cin, Cout)    bf16  per-tap weight slices, tap index kh*4+kw
    b  : (1, Cout)          f32
    out: (B, inner_nc)      f32   final bottleneck (only HBM write)
    """
    o_ref = refs[-1]
    in_refs = refs[:-1]
    p0_ref, w0_ref, b0_ref = in_refs[0], in_refs[1], in_refs[2]
    rest = in_refs[3:]
    n_rest = len(rest) // 3

    def leaky(v):
        return jnp.where(v > 0, v, slope * v)

    # Layer 0: single im2col matmul (patches built by jit-fused XLA glue).
    a = jnp.dot(p0_ref[...], w0_ref[...], preferred_element_type=jnp.float32)
    a = leaky(a + b0_ref[...])

    # Layers 1..L-1: im2col done in-kernel as 16 tap-gather matmuls per layer.
    for l in range(n_rest):
        g_ref = rest[3 * l]
        w_ref = rest[3 * l + 1]
        b_ref = rest[3 * l + 2]
        r_out = g_ref.shape[1]
        c_out = w_ref.shape[2]
        a16 = a.astype(jnp.bfloat16)               # bf16 MXU inputs
        acc = jnp.zeros((r_out, c_out), jnp.float32)
        for kk in range(16):                       # unrolled 4x4 taps
            tap = jnp.dot(g_ref[kk], a16, preferred_element_type=jnp.float32)
            acc = acc + jnp.dot(tap.astype(jnp.bfloat16), w_ref[kk],
                                preferred_element_type=jnp.float32)
        acc = acc + b_ref[...]
        # LeakyReLU(0.2) between down-blocks; innermost conv output is raw.
        a = leaky(acc) if l < n_rest - 1 else acc

    o_ref[...] = a.astype(o_ref.dtype)


# ---------------------------------------------------------------------------
# Glue: layer-0 im2col (jit-fused XLA) + constant tap-gather matrices
# ---------------------------------------------------------------------------
def _im2col_s2_k4_p1(x_nhwc):
    """Host-side (jit-fused) im2col for a 4x4 / stride-2 / pad-1 conv."""
    x = jnp.pad(x_nhwc, ((0, 0), (1, 1), (1, 1), (0, 0)))
    B, Hp, Wp, C = x.shape
    Ho = (Hp - 4) // 2 + 1
    Wo = (Wp - 4) // 2 + 1
    cols = []
    for kh in range(4):
        for kw in range(4):
            cols.append(x[:, kh:kh + 2 * Ho:2, kw:kw + 2 * Wo:2, :])
    patches = jnp.stack(cols, axis=3)                 # (B, Ho, Wo, 16, C)
    return patches.reshape(B * Ho * Wo, 16 * C), (B, Ho, Wo)


def _tap_gather_matrices(B, H, W):
    """(16, B*Ho*Wo, B*H*W) 0/1 matrices: G[kh*4+kw] @ x_flat gathers the
    (kh, kw) tap of a 4x4 / stride-2 / pad-1 conv; padded taps -> zero rows."""
    Ho, Wo = H // 2, W // 2
    g = np.zeros((16, B * Ho * Wo, B * H * W), np.float32)
    for b in range(B):
        for ho in range(Ho):
            for wo in range(Wo):
                r = (b * Ho + ho) * Wo + wo
                for kh in range(4):
                    for kw in range(4):
                        ih = 2 * ho - 1 + kh
                        iw = 2 * wo - 1 + kw
                        if 0 <= ih < H and 0 <= iw < W:
                            g[kh * 4 + kw, r, (b * H + ih) * W + iw] = 1.0
    return g


# ---------------------------------------------------------------------------
# BottleneckFromNet
# ---------------------------------------------------------------------------
class BottleneckFromNetPallas:
    def __init__(self, output_num_channels=2, input_num_channels=3,
                 inner_nc=32, ngf=8, num_downs=4, key=None):
        del output_num_channels  # decoder output is never used by forward()
        if key is None:
            key = jax.random.PRNGKey(0)
        # channel progression: in -> ngf -> 2*ngf -> ... -> inner_nc
        chans = [input_num_channels]
        c = ngf
        for _ in range(num_downs - 1):
            chans.append(min(c, inner_nc))
            c *= 2
        chans.append(inner_nc)

        self.inner_nc = inner_nc
        self.num_downs = num_downs

        self.weights_hwio = []      # f32 (4,4,Cin,Cout), kept for reference
        self.biases = []            # f32 (1, Cout)
        for i in range(num_downs):
            key, k1 = jax.random.split(key)
            w = 0.02 * jax.random.normal(
                k1, (4, 4, chans[i], chans[i + 1]), jnp.float32)
            # TODO(synk): PyTorch Conv2d default-initializes bias uniformly;
            # zeros kept here (random-weight kernel benchmark, no checkpoint).
            b = jnp.zeros((1, chans[i + 1]), jnp.float32)
            self.weights_hwio.append(w)
            self.biases.append(b)

        # Hoisted constant reshapes (kernel-ready layouts), bf16 MXU operands.
        w0 = self.weights_hwio[0]
        self.w0_mat = w0.reshape(16 * chans[0], chans[1]).astype(jnp.bfloat16)
        self.wk_taps = [
            w.reshape(16, w.shape[2], w.shape[3]).astype(jnp.bfloat16)
            for w in self.weights_hwio[1:]
        ]

        # One jitted forward: all glue + the single fused pallas_call.
        self._forward = jax.jit(self._forward_impl)

    def _forward_impl(self, target_pose):
        x = jnp.transpose(target_pose, (0, 2, 3, 1)).astype(jnp.float32)  # NHWC
        B, H, W, _ = x.shape
        if H != W or H != (1 << self.num_downs):
            raise ValueError(
                f"spatial size must be {1 << self.num_downs}x"
                f"{1 << self.num_downs} for a 1x1 bottleneck, got {H}x{W}")

        # Layer-0 im2col: tiny, jit-fused XLA glue feeding the fused kernel.
        patches0, (_, Ho, _) = _im2col_s2_k4_p1(x)
        patches0 = patches0.astype(jnp.bfloat16)

        inputs = [patches0, self.w0_mat, self.biases[0]]
        flops = 2 * patches0.shape[0] * patches0.shape[1] * self.w0_mat.shape[1]
        h = Ho
        for wk, b in zip(self.wk_taps, self.biases[1:]):
            g = jnp.asarray(_tap_gather_matrices(B, h, h), jnp.bfloat16)
            inputs += [g, wk, b]
            _, r_out, r_in = g.shape
            _, cin, cout = wk.shape
            flops += 2 * 16 * (r_out * r_in * cin + r_out * cin * cout)
            h //= 2

        bytes_accessed = sum(int(a.size) * a.dtype.itemsize for a in inputs)
        bytes_accessed += int(B) * self.inner_nc * 4

        out2d = pl.pallas_call(
            functools.partial(_encoder_kernel, slope=0.2),
            out_shape=jax.ShapeDtypeStruct((B, self.inner_nc), jnp.float32),
            in_specs=[pl.BlockSpec(memory_space=pltpu.MemorySpace.VMEM)]
            * len(inputs),
            out_specs=pl.BlockSpec(memory_space=pltpu.MemorySpace.VMEM),
            cost_estimate=pl.CostEstimate(
                flops=flops, transcendentals=0,
                bytes_accessed=bytes_accessed),
        )(*inputs)

        bottleneck = jnp.squeeze(out2d)              # torch .squeeze()
        return jax.lax.stop_gradient(bottleneck)     # torch .detach()

    def __call__(self, target_pose, *input_img):
        # *input_img is ignored, exactly as in the reference forward().
        return self._forward(target_pose)


# ---------------------------------------------------------------------------
# Pure-JAX reference (for a loose numerical sanity check)
# ---------------------------------------------------------------------------
def _reference_bottleneck(x_nchw, weights_hwio, biases, slope=0.2):
    a = jnp.transpose(x_nchw, (0, 2, 3, 1)).astype(jnp.float32)
    n = len(weights_hwio)
    for i, (w, b) in enumerate(zip(weights_hwio, biases)):
        # use bf16-quantized weights so only activation rounding differs
        wq = w.astype(jnp.bfloat16).astype(jnp.float32)
        a = jax.lax.conv_general_dilated(
            a, wq, window_strides=(2, 2), padding=((1, 1), (1, 1)),
            dimension_numbers=("NHWC", "HWIO", "NHWC"),
            precision=jax.lax.Precision.HIGHEST)
        a = a + b.reshape(1, 1, 1, -1)
        if i < n - 1:
            a = jnp.where(a > 0, a, slope * a)
    return jnp.squeeze(a)


if __name__ == "__main__":
    key = jax.random.PRNGKey(0)
    k_params, k_pose = jax.random.split(key)

    batch, in_ch, spatial, inner_nc = 2, 3, 16, 32
    model = BottleneckFromNetPallas(
        output_num_channels=2, input_num_channels=in_ch,
        inner_nc=inner_nc, ngf=8, num_downs=4, key=k_params,
    )

    target_pose = jax.random.normal(
        k_pose, (batch, in_ch, spatial, spatial), jnp.float32
    )  # NCHW, as PyTorch would pass it

    out = model(target_pose)
    jax.block_until_ready(out)

    assert out.shape == (batch, inner_nc), out.shape
    assert out.dtype == jnp.float32

    # Loose check vs pure-JAX reference (kernel uses bf16 MXU inputs with f32
    # accumulation, so small relative differences are expected).
    ref = _reference_bottleneck(target_pose, model.weights_hwio, model.biases)
    err = float(jnp.max(jnp.abs(out - ref)))
    scale = float(jnp.max(jnp.abs(ref))) + 1e-6
    assert err <= 0.05 * scale + 1e-4, (err, scale)

    print("KERNEL_OK")
</pallas_src>

<mosaic_0001>
module attributes {stable_mosaic.version = 11 : i64} {
  func.func @_encoder_kernel(%arg0: memref<128x48xbf16, #tpu.memory_space<vmem>>, %arg1: memref<48x8xbf16, #tpu.memory_space<vmem>>, %arg2: memref<1x8xf32, #tpu.memory_space<vmem>>, %arg3: memref<16x32x128xbf16, #tpu.memory_space<vmem>>, %arg4: memref<16x8x16xbf16, #tpu.memory_space<vmem>>, %arg5: memref<1x16xf32, #tpu.memory_space<vmem>>, %arg6: memref<16x8x32xbf16, #tpu.memory_space<vmem>>, %arg7: memref<16x16x32xbf16, #tpu.memory_space<vmem>>, %arg8: memref<1x32xf32, #tpu.memory_space<vmem>>, %arg9: memref<16x2x8xbf16, #tpu.memory_space<vmem>>, %arg10: memref<16x32x32xbf16, #tpu.memory_space<vmem>>, %arg11: memref<1x32xf32, #tpu.memory_space<vmem>>, %arg12: memref<2x32xf32, #tpu.memory_space<vmem>>) attributes {dimension_semantics = [], scalar_prefetch = 0 : i64, scratch_operands = 0 : i64, tpu.core_type = #tpu.core_type<tc>} {
    %c0 = arith.constant 0 : index
    %c0_0 = arith.constant 0 : index
    %0 = vector.load %arg0[%c0, %c0_0] : memref<128x48xbf16, #tpu.memory_space<vmem>>, vector<128x48xbf16>
    %c0_1 = arith.constant 0 : index
    %c0_2 = arith.constant 0 : index
    %1 = vector.load %arg1[%c0_1, %c0_2] : memref<48x8xbf16, #tpu.memory_space<vmem>>, vector<48x8xbf16>
    %cst = arith.constant dense<0.000000e+00> : vector<128x8xf32>
    %2 = tpu.matmul %0, %1, %cst {dimension_numbers = #tpu.dot_dimension_numbers<[1], [0], [0], [1], [0, 0, 1, 1], [], []>} : vector<128x48xbf16>, vector<48x8xbf16>, vector<128x8xf32> -> vector<128x8xf32>
    %c0_3 = arith.constant 0 : index
    %c0_4 = arith.constant 0 : index
    %3 = vector.load %arg2[%c0_3, %c0_4] : memref<1x8xf32, #tpu.memory_space<vmem>>, vector<1x8xf32>
    %4 = vector.broadcast %3 : vector<1x8xf32> to vector<128x8xf32>
    %5 = arith.addf %2, %4 : vector<128x8xf32>
    %cst_5 = arith.constant 0.000000e+00 : f32
    %6 = vector.broadcast %cst_5 : f32 to vector<128x8xf32>
    %7 = arith.cmpf ogt, %5, %6 : vector<128x8xf32>
    %cst_6 = arith.constant 2.000000e-01 : f32
    %8 = vector.broadcast %cst_6 : f32 to vector<128x8xf32>
    %9 = arith.mulf %8, %5 : vector<128x8xf32>
    %10 = arith.select %7, %5, %9 : vector<128x8xi1>, vector<128x8xf32>
    %11 = arith.truncf %10 : vector<128x8xf32> to vector<128x8xbf16>
    %cst_7 = arith.constant 0.000000e+00 : f32
    %12 = vector.broadcast %cst_7 : f32 to vector<32x16xf32>
    %c0_8 = arith.constant 0 : index
    %c0_9 = arith.constant 0 : index
    %c0_10 = arith.constant 0 : index
    %13 = vector.load %arg3[%c0_8, %c0_9, %c0_10] : memref<16x32x128xbf16, #tpu.memory_space<vmem>>, vector<1x32x128xbf16>
    %14 = vector.shape_cast %13 : vector<1x32x128xbf16> to vector<32x128xbf16>
    %cst_11 = arith.constant dense<0.000000e+00> : vector<32x8xf32>
    %15 = tpu.matmul %14, %11, %cst_11 {dimension_numbers = #tpu.dot_dimension_numbers<[1], [0], [0], [1], [0, 0, 1, 1], [], []>} : vector<32x128xbf16>, vector<128x8xbf16>, vector<32x8xf32> -> vector<32x8xf32>
    %16 = arith.truncf %15 : vector<32x8xf32> to vector<32x8xbf16>
    %c0_12 = arith.constant 0 : index
    %c0_13 = arith.constant 0 : index
    %c0_14 = arith.constant 0 : index
    %17 = vector.load %arg4[%c0_12, %c0_13, %c0_14] : memref<16x8x16xbf16, #tpu.memory_space<vmem>>, vector<1x8x16xbf16>
    %18 = vector.shape_cast %17 : vector<1x8x16xbf16> to vector<8x16xbf16>
    %cst_15 = arith.constant dense<0.000000e+00> : vector<32x16xf32>
    %19 = tpu.matmul %16, %18, %cst_15 {dimension_numbers = #tpu.dot_dimension_numbers<[1], [0], [0], [1], [0, 0, 1, 1], [], []>} : vector<32x8xbf16>, vector<8x16xbf16>, vector<32x16xf32> -> vector<32x16xf32>
    %20 = arith.addf %12, %19 : vector<32x16xf32>
    %c1 = arith.constant 1 : index
    %c0_16 = arith.constant 0 : index
    %c0_17 = arith.constant 0 : index
    %21 = vector.load %arg3[%c1, %c0_16, %c0_17] : memref<16x32x128xbf16, #tpu.memory_space<vmem>>, vector<1x32x128xbf16>
    %22 = vector.shape_cast %21 : vector<1x32x128xbf16> to vector<32x128xbf16>
    %cst_18 = arith.constant dense<0.000000e+00> : vector<32x8xf32>
    %23 = tpu.matmul %22, %11, %cst_18 {dimension_numbers = #tpu.dot_dimension_numbers<[1], [0], [0], [1], [0, 0, 1, 1], [], []>} : vector<32x128xbf16>, vector<128x8xbf16>, vector<32x8xf32> -> vector<32x8xf32>
    %24 = arith.truncf %23 : vector<32x8xf32> to vector<32x8xbf16>
    %c1_19 = arith.constant 1 : index
    %c0_20 = arith.constant 0 : index
    %c0_21 = arith.constant 0 : index
    %25 = vector.load %arg4[%c1_19, %c0_20, %c0_21] : memref<16x8x16xbf16, #tpu.memory_space<vmem>>, vector<1x8x16xbf16>
    %26 = vector.shape_cast %25 : vector<1x8x16xbf16> to vector<8x16xbf16>
    %cst_22 = arith.constant dense<0.000000e+00> : vector<32x16xf32>
    %27 = tpu.matmul %24, %26, %cst_22 {dimension_numbers = #tpu.dot_dimension_numbers<[1], [0], [0], [1], [0, 0, 1, 1], [], []>} : vector<32x8xbf16>, vector<8x16xbf16>, vector<32x16xf32> -> vector<32x16xf32>
    %28 = arith.addf %20, %27 : vector<32x16xf32>
    %c2 = arith.constant 2 : index
    %c0_23 = arith.constant 0 : index
    %c0_24 = arith.constant 0 : index
    %29 = vector.load %arg3[%c2, %c0_23, %c0_24] : memref<16x32x128xbf16, #tpu.memory_space<vmem>>, vector<1x32x128xbf16>
    %30 = vector.shape_cast %29 : vector<1x32x128xbf16> to vector<32x128xbf16>
    %cst_25 = arith.constant dense<0.000000e+00> : vector<32x8xf32>
    %31 = tpu.matmul %30, %11, %cst_25 {dimension_numbers = #tpu.dot_dimension_numbers<[1], [0], [0], [1], [0, 0, 1, 1], [], []>} : vector<32x128xbf16>, vector<128x8xbf16>, vector<32x8xf32> -> vector<32x8xf32>
    %32 = arith.truncf %31 : vector<32x8xf32> to vector<32x8xbf16>
    %c2_26 = arith.constant 2 : index
    %c0_27 = arith.constant 0 : index
    %c0_28 = arith.constant 0 : index
    %33 = vector.load %arg4[%c2_26, %c0_27, %c0_28] : memref<16x8x16xbf16, #tpu.memory_space<vmem>>, vector<1x8x16xbf16>
    %34 = vector.shape_cast %33 : vector<1x8x16xbf16> to vector<8x16xbf16>
    %cst_29 = arith.constant dense<0.000000e+00> : vector<32x16xf32>
    %35 = tpu.matmul %32, %34, %cst_29 {dimension_numbers = #tpu.dot_dimension_numbers<[1], [0], [0], [1], [0, 0, 1, 1], [], []>} : vector<32x8xbf16>, vector<8x16xbf16>, vector<32x16xf32> -> vector<32x16xf32>
    %36 = arith.addf %28, %35 : vector<32x16xf32>
    %c3 = arith.constant 3 : index
    %c0_30 = arith.constant 0 : index
    %c0_31 = arith.constant 0 : index
    %37 = vector.load %arg3[%c3, %c0_30, %c0_31] : memref<16x32x128xbf16, #tpu.memory_space<vmem>>, vector<1x32x128xbf16>
    %38 = vector.shape_cast %37 : vector<1x32x128xbf16> to vector<32x128xbf16>
    %cst_32 = arith.constant dense<0.000000e+00> : vector<32x8xf32>
    %39 = tpu.matmul %38, %11, %cst_32 {dimension_numbers = #tpu.dot_dimension_numbers<[1], [0], [0], [1], [0, 0, 1, 1], [], []>} : vector<32x128xbf16>, vector<128x8xbf16>, vector<32x8xf32> -> vector<32x8xf32>
    %40 = arith.truncf %39 : vector<32x8xf32> to vector<32x8xbf16>
    %c3_33 = arith.constant 3 : index
    %c0_34 = arith.constant 0 : index
    %c0_35 = arith.constant 0 : index
    %41 = vector.load %arg4[%c3_33, %c0_34, %c0_35] : memref<16x8x16xbf16, #tpu.memory_space<vmem>>, vector<1x8x16xbf16>
    %42 = vector.shape_cast %41 : vector<1x8x16xbf16> to vector<8x16xbf16>
    %cst_36 = arith.constant dense<0.000000e+00> : vector<32x16xf32>
    %43 = tpu.matmul %40, %42, %cst_36 {dimension_numbers = #tpu.dot_dimension_numbers<[1], [0], [0], [1], [0, 0, 1, 1], [], []>} : vector<32x8xbf16>, vector<8x16xbf16>, vector<32x16xf32> -> vector<32x16xf32>
    %44 = arith.addf %36, %43 : vector<32x16xf32>
    %c4 = arith.constant 4 : index
    %c0_37 = arith.constant 0 : index
    %c0_38 = arith.constant 0 : index
    %45 = vector.load %arg3[%c4, %c0_37, %c0_38] : memref<16x32x128xbf16, #tpu.memory_space<vmem>>, vector<1x32x128xbf16>
    %46 = vector.shape_cast %45 : vector<1x32x128xbf16> to vector<32x128xbf16>
    %cst_39 = arith.constant dense<0.000000e+00> : vector<32x8xf32>
    %47 = tpu.matmul %46, %11, %cst_39 {dimension_numbers = #tpu.dot_dimension_numbers<[1], [0], [0], [1], [0, 0, 1, 1], [], []>} : vector<32x128xbf16>, vector<128x8xbf16>, vector<32x8xf32> -> vector<32x8xf32>
    %48 = arith.truncf %47 : vector<32x8xf32> to vector<32x8xbf16>
    %c4_40 = arith.constant 4 : index
    %c0_41 = arith.constant 0 : index
    %c0_42 = arith.constant 0 : index
    %49 = vector.load %arg4[%c4_40, %c0_41, %c0_42] : memref<16x8x16xbf16, #tpu.memory_space<vmem>>, vector<1x8x16xbf16>
    %50 = vector.shape_cast %49 : vector<1x8x16xbf16> to vector<8x16xbf16>
    %cst_43 = arith.constant dense<0.000000e+00> : vector<32x16xf32>
    %51 = tpu.matmul %48, %50, %cst_43 {dimension_numbers = #tpu.dot_dimension_numbers<[1], [0], [0], [1], [0, 0, 1, 1], [], []>} : vector<32x8xbf16>, vector<8x16xbf16>, vector<32x16xf32> -> vector<32x16xf32>
    %52 = arith.addf %44, %51 : vector<32x16xf32>
    %c5 = arith.constant 5 : index
    %c0_44 = arith.constant 0 : index
    %c0_45 = arith.constant 0 : index
    %53 = vector.load %arg3[%c5, %c0_44, %c0_45] : memref<16x32x128xbf16, #tpu.memory_space<vmem>>, vector<1x32x128xbf16>
    %54 = vector.shape_cast %53 : vector<1x32x128xbf16> to vector<32x128xbf16>
    %cst_46 = arith.constant dense<0.000000e+00> : vector<32x8xf32>
    %55 = tpu.matmul %54, %11, %cst_46 {dimension_numbers = #tpu.dot_dimension_numbers<[1], [0], [0], [1], [0, 0, 1, 1], [], []>} : vector<32x128xbf16>, vector<128x8xbf16>, vector<32x8xf32> -> vector<32x8xf32>
    %56 = arith.truncf %55 : vector<32x8xf32> to vector<32x8xbf16>
    %c5_47 = arith.constant 5 : index
    %c0_48 = arith.constant 0 : index
    %c0_49 = arith.constant 0 : index
    %57 = vector.load %arg4[%c5_47, %c0_48, %c0_49] : memref<16x8x16xbf16, #tpu.memory_space<vmem>>, vector<1x8x16xbf16>
    %58 = vector.shape_cast %57 : vector<1x8x16xbf16> to vector<8x16xbf16>
    %cst_50 = arith.constant dense<0.000000e+00> : vector<32x16xf32>
    %59 = tpu.matmul %56, %58, %cst_50 {dimension_numbers = #tpu.dot_dimension_numbers<[1], [0], [0], [1], [0, 0, 1, 1], [], []>} : vector<32x8xbf16>, vector<8x16xbf16>, vector<32x16xf32> -> vector<32x16xf32>
    %60 = arith.addf %52, %59 : vector<32x16xf32>
    %c6 = arith.constant 6 : index
    %c0_51 = arith.constant 0 : index
    %c0_52 = arith.constant 0 : index
    %61 = vector.load %arg3[%c6, %c0_51, %c0_52] : memref<16x32x128xbf16, #tpu.memory_space<vmem>>, vector<1x32x128xbf16>
    %62 = vector.shape_cast %61 : vector<1x32x128xbf16> to vector<32x128xbf16>
    %cst_53 = arith.constant dense<0.000000e+00> : vector<32x8xf32>
    %63 = tpu.matmul %62, %11, %cst_53 {dimension_numbers = #tpu.dot_dimension_numbers<[1], [0], [0], [1], [0, 0, 1, 1], [], []>} : vector<32x128xbf16>, vector<128x8xbf16>, vector<32x8xf32> -> vector<32x8xf32>
    %64 = arith.truncf %63 : vector<32x8xf32> to vector<32x8xbf16>
    %c6_54 = arith.constant 6 : index
    %c0_55 = arith.constant 0 : index
    %c0_56 = arith.constant 0 : index
    %65 = vector.load %arg4[%c6_54, %c0_55, %c0_56] : memref<16x8x16xbf16, #tpu.memory_space<vmem>>, vector<1x8x16xbf16>
    %66 = vector.shape_cast %65 : vector<1x8x16xbf16> to vector<8x16xbf16>
    %cst_57 = arith.constant dense<0.000000e+00> : vector<32x16xf32>
    %67 = tpu.matmul %64, %66, %cst_57 {dimension_numbers = #tpu.dot_dimension_numbers<[1], [0], [0], [1], [0, 0, 1, 1], [], []>} : vector<32x8xbf16>, vector<8x16xbf16>, vector<32x16xf32> -> vector<32x16xf32>
    %68 = arith.addf %60, %67 : vector<32x16xf32>
    %c7 = arith.constant 7 : index
    %c0_58 = arith.constant 0 : index
    %c0_59 = arith.constant 0 : index
    %69 = vector.load %arg3[%c7, %c0_58, %c0_59] : memref<16x32x128xbf16, #tpu.memory_space<vmem>>, vector<1x32x128xbf16>
    %70 = vector.shape_cast %69 : vector<1x32x128xbf16> to vector<32x128xbf16>
    %cst_60 = arith.constant dense<0.000000e+00> : vector<32x8xf32>
    %71 = tpu.matmul %70, %11, %cst_60 {dimension_numbers = #tpu.dot_dimension_numbers<[1], [0], [0], [1], [0, 0, 1, 1], [], []>} : vector<32x128xbf16>, vector<128x8xbf16>, vector<32x8xf32> -> vector<32x8xf32>
    %72 = arith.truncf %71 : vector<32x8xf32> to vector<32x8xbf16>
    %c7_61 = arith.constant 7 : index
    %c0_62 = arith.constant 0 : index
    %c0_63 = arith.constant 0 : index
    %73 = vector.load %arg4[%c7_61, %c0_62, %c0_63] : memref<16x8x16xbf16, #tpu.memory_space<vmem>>, vector<1x8x16xbf16>
    %74 = vector.shape_cast %73 : vector<1x8x16xbf16> to vector<8x16xbf16>
    %cst_64 = arith.constant dense<0.000000e+00> : vector<32x16xf32>
    %75 = tpu.matmul %72, %74, %cst_64 {dimension_numbers = #tpu.dot_dimension_numbers<[1], [0], [0], [1], [0, 0, 1, 1], [], []>} : vector<32x8xbf16>, vector<8x16xbf16>, vector<32x16xf32> -> vector<32x16xf32>
    %76 = arith.addf %68, %75 : vector<32x16xf32>
    %c8 = arith.constant 8 : index
    %c0_65 = arith.constant 0 : index
    %c0_66 = arith.constant 0 : index
    %77 = vector.load %arg3[%c8, %c0_65, %c0_66] : memref<16x32x128xbf16, #tpu.memory_space<vmem>>, vector<1x32x128xbf16>
    %78 = vector.shape_cast %77 : vector<1x32x128xbf16> to vector<32x128xbf16>
    %cst_67 = arith.constant dense<0.000000e+00> : vector<32x8xf32>
    %79 = tpu.matmul %78, %11, %cst_67 {dimension_numbers = #tpu.dot_dimension_numbers<[1], [0], [0], [1], [0, 0, 1, 1], [], []>} : vector<32x128xbf16>, vector<128x8xbf16>, vector<32x8xf32> -> vector<32x8xf32>
    %80 = arith.truncf %79 : vector<32x8xf32> to vector<32x8xbf16>
    %c8_68 = arith.constant 8 : index
    %c0_69 = arith.constant 0 : index
    %c0_70 = arith.constant 0 : index
    %81 = vector.load %arg4[%c8_68, %c0_69, %c0_70] : memref<16x8x16xbf16, #tpu.memory_space<vmem>>, vector<1x8x16xbf16>
    %82 = vector.shape_cast %81 : vector<1x8x16xbf16> to vector<8x16xbf16>
    %cst_71 = arith.constant dense<0.000000e+00> : vector<32x16xf32>
    %83 = tpu.matmul %80, %82, %cst_71 {dimension_numbers = #tpu.dot_dimension_numbers<[1], [0], [0], [1], [0, 0, 1, 1], [], []>} : vector<32x8xbf16>, vector<8x16xbf16>, vector<32x16xf32> -> vector<32x16xf32>
    %84 = arith.addf %76, %83 : vector<32x16xf32>
    %c9 = arith.constant 9 : index
    %c0_72 = arith.constant 0 : index
    %c0_73 = arith.constant 0 : index
    %85 = vector.load %arg3[%c9, %c0_72, %c0_73] : memref<16x32x128xbf16, #tpu.memory_space<vmem>>, vector<1x32x128xbf16>
    %86 = vector.shape_cast %85 : vector<1x32x128xbf16> to vector<32x128xbf16>
    %cst_74 = arith.constant dense<0.000000e+00> : vector<32x8xf32>
    %87 = tpu.matmul %86, %11, %cst_74 {dimension_numbers = #tpu.dot_dimension_numbers<[1], [0], [0], [1], [0, 0, 1, 1], [], []>} : vector<32x128xbf16>, vector<128x8xbf16>, vector<32x8xf32> -> vector<32x8xf32>
    %88 = arith.truncf %87 : vector<32x8xf32> to vector<32x8xbf16>
    %c9_75 = arith.constant 9 : index
    %c0_76 = arith.constant 0 : index
    %c0_77 = arith.constant 0 : index
    %89 = vector.load %arg4[%c9_75, %c0_76, %c0_77] : memref<16x8x16xbf16, #tpu.memory_space<vmem>>, vector<1x8x16xbf16>
    %90 = vector.shape_cast %89 : vector<1x8x16xbf16> to vector<8x16xbf16>
    %cst_78 = arith.constant dense<0.000000e+00> : vector<32x16xf32>
    %91 = tpu.matmul %88, %90, %cst_78 {dimension_numbers = #tpu.dot_dimension_numbers<[1], [0], [0], [1], [0, 0, 1, 1], [], []>} : vector<32x8xbf16>, vector<8x16xbf16>, vector<32x16xf32> -> vector<32x16xf32>
    %92 = arith.addf %84, %91 : vector<32x16xf32>
    %c10 = arith.constant 10 : index
    %c0_79 = arith.constant 0 : index
    %c0_80 = arith.constant 0 : index
    %93 = vector.load %arg3[%c10, %c0_79, %c0_80] : memref<16x32x128xbf16, #tpu.memory_space<vmem>>, vector<1x32x128xbf16>
    %94 = vector.shape_cast %93 : vector<1x32x128xbf16> to vector<32x128xbf16>
    %cst_81 = arith.constant dense<0.000000e+00> : vector<32x8xf32>
    %95 = tpu.matmul %94, %11, %cst_81 {dimension_numbers = #tpu.dot_dimension_numbers<[1], [0], [0], [1], [0, 0, 1, 1], [], []>} : vector<32x128xbf16>, vector<128x8xbf16>, vector<32x8xf32> -> vector<32x8xf32>
    %96 = arith.truncf %95 : vector<32x8xf32> to vector<32x8xbf16>
    %c10_82 = arith.constant 10 : index
    %c0_83 = arith.constant 0 : index
    %c0_84 = arith.constant 0 : index
    %97 = vector.load %arg4[%c10_82, %c0_83, %c0_84] : memref<16x8x16xbf16, #tpu.memory_space<vmem>>, vector<1x8x16xbf16>
    %98 = vector.shape_cast %97 : vector<1x8x16xbf16> to vector<8x16xbf16>
    %cst_85 = arith.constant dense<0.000000e+00> : vector<32x16xf32>
    %99 = tpu.matmul %96, %98, %cst_85 {dimension_numbers = #tpu.dot_dimension_numbers<[1], [0], [0], [1], [0, 0, 1, 1], [], []>} : vector<32x8xbf16>, vector<8x16xbf16>, vector<32x16xf32> -> vector<32x16xf32>
    %100 = arith.addf %92, %99 : vector<32x16xf32>
    %c11 = arith.constant 11 : index
    %c0_86 = arith.constant 0 : index
    %c0_87 = arith.constant 0 : index
    %101 = vector.load %arg3[%c11, %c0_86, %c0_87] : memref<16x32x128xbf16, #tpu.memory_space<vmem>>, vector<1x32x128xbf16>
    %102 = vector.shape_cast %101 : vector<1x32x128xbf16> to vector<32x128xbf16>
    %cst_88 = arith.constant dense<0.000000e+00> : vector<32x8xf32>
    %103 = tpu.matmul %102, %11, %cst_88 {dimension_numbers = #tpu.dot_dimension_numbers<[1], [0], [0], [1], [0, 0, 1, 1], [], []>} : vector<32x128xbf16>, vector<128x8xbf16>, vector<32x8xf32> -> vector<32x8xf32>
    %104 = arith.truncf %103 : vector<32x8xf32> to vector<32x8xbf16>
    %c11_89 = arith.constant 11 : index
    %c0_90 = arith.constant 0 : index
    %c0_91 = arith.constant 0 : index
    %105 = vector.load %arg4[%c11_89, %c0_90, %c0_91] : memref<16x8x16xbf16, #tpu.memory_space<vmem>>, vector<1x8x16xbf16>
    %106 = vector.shape_cast %105 : vector<1x8x16xbf16> to vector<8x16xbf16>
    %cst_92 = arith.constant dense<0.000000e+00> : vector<32x16xf32>
    %107 = tpu.matmul %104, %106, %cst_92 {dimension_numbers = #tpu.dot_dimension_numbers<[1], [0], [0], [1], [0, 0, 1, 1], [], []>} : vector<32x8xbf16>, vector<8x16xbf16>, vector<32x16xf32> -> vector<32x16xf32>
    %108 = arith.addf %100, %107 : vector<32x16xf32>
    %c12 = arith.constant 12 : index
    %c0_93 = arith.constant 0 : index
    %c0_94 = arith.constant 0 : index
    %109 = vector.load %arg3[%c12, %c0_93, %c0_94] : memref<16x32x128xbf16, #tpu.memory_space<vmem>>, vector<1x32x128xbf16>
    %110 = vector.shape_cast %109 : vector<1x32x128xbf16> to vector<32x128xbf16>
    %cst_95 = arith.constant dense<0.000000e+00> : vector<32x8xf32>
    %111 = tpu.matmul %110, %11, %cst_95 {dimension_numbers = #tpu.dot_dimension_numbers<[1], [0], [0], [1], [0, 0, 1, 1], [], []>} : vector<32x128xbf16>, vector<128x8xbf16>, vector<32x8xf32> -> vector<32x8xf32>
    %112 = arith.truncf %111 : vector<32x8xf32> to vector<32x8xbf16>
    %c12_96 = arith.constant 12 : index
    %c0_97 = arith.constant 0 : index
    %c0_98 = arith.constant 0 : index
    %113 = vector.load %arg4[%c12_96, %c0_97, %c0_98] : memref<16x8x16xbf16, #tpu.memory_space<vmem>>, vector<1x8x16xbf16>
    %114 = vector.shape_cast %113 : vector<1x8x16xbf16> to vector<8x16xbf16>
    %cst_99 = arith.constant dense<0.000000e+00> : vector<32x16xf32>
    %115 = tpu.matmul %112, %114, %cst_99 {dimension_numbers = #tpu.dot_dimension_numbers<[1], [0], [0], [1], [0, 0, 1, 1], [], []>} : vector<32x8xbf16>, vector<8x16xbf16>, vector<32x16xf32> -> vector<32x16xf32>
    %116 = arith.addf %108, %115 : vector<32x16xf32>
    %c13 = arith.constant 13 : index
    %c0_100 = arith.constant 0 : index
    %c0_101 = arith.constant 0 : index
    %117 = vector.load %arg3[%c13, %c0_100, %c0_101] : memref<16x32x128xbf16, #tpu.memory_space<vmem>>, vector<1x32x128xbf16>
    %118 = vector.shape_cast %117 : vector<1x32x128xbf16> to vector<32x128xbf16>
    %cst_102 = arith.constant dense<0.000000e+00> : vector<32x8xf32>
    %119 = tpu.matmul %118, %11, %cst_102 {dimension_numbers = #tpu.dot_dimension_numbers<[1], [0], [0], [1], [0, 0, 1, 1], [], []>} : vector<32x128xbf16>, vector<128x8xbf16>, vector<32x8xf32> -> vector<32x8xf32>
    %120 = arith.truncf %119 : vector<32x8xf32> to vector<32x8xbf16>
    %c13_103 = arith.constant 13 : index
    %c0_104 = arith.constant 0 : index
    %c0_105 = arith.constant 0 : index
    %121 = vector.load %arg4[%c13_103, %c0_104, %c0_105] : memref<16x8x16xbf16, #tpu.memory_space<vmem>>, vector<1x8x16xbf16>
    %122 = vector.shape_cast %121 : vector<1x8x16xbf16> to vector<8x16xbf16>
    %cst_106 = arith.constant dense<0.000000e+00> : vector<32x16xf32>
    %123 = tpu.matmul %120, %122, %cst_106 {dimension_numbers = #tpu.dot_dimension_numbers<[1], [0], [0], [1], [0, 0, 1, 1], [], []>} : vector<32x8xbf16>, vector<8x16xbf16>, vector<32x16xf32> -> vector<32x16xf32>
    %124 = arith.addf %116, %123 : vector<32x16xf32>
    %c14 = arith.constant 14 : index
    %c0_107 = arith.constant 0 : index
    %c0_108 = arith.constant 0 : index
    %125 = vector.load %arg3[%c14, %c0_107, %c0_108] : memref<16x32x128xbf16, #tpu.memory_space<vmem>>, vector<1x32x128xbf16>
    %126 = vector.shape_cast %125 : vector<1x32x128xbf16> to vector<32x128xbf16>
    %cst_109 = arith.constant dense<0.000000e+00> : vector<32x8xf32>
    %127 = tpu.matmul %126, %11, %cst_109 {dimension_numbers = #tpu.dot_dimension_numbers<[1], [0], [0], [1], [0, 0, 1, 1], [], []>} : vector<32x128xbf16>, vector<128x8xbf16>, vector<32x8xf32> -> vector<32x8xf32>
    %128 = arith.truncf %127 : vector<32x8xf32> to vector<32x8xbf16>
    %c14_110 = arith.constant 14 : index
    %c0_111 = arith.constant 0 : index
    %c0_112 = arith.constant 0 : index
    %129 = vector.load %arg4[%c14_110, %c0_111, %c0_112] : memref<16x8x16xbf16, #tpu.memory_space<vmem>>, vector<1x8x16xbf16>
    %130 = vector.shape_cast %129 : vector<1x8x16xbf16> to vector<8x16xbf16>
    %cst_113 = arith.constant dense<0.000000e+00> : vector<32x16xf32>
    %131 = tpu.matmul %128, %130, %cst_113 {dimension_numbers = #tpu.dot_dimension_numbers<[1], [0], [0], [1], [0, 0, 1, 1], [], []>} : vector<32x8xbf16>, vector<8x16xbf16>, vector<32x16xf32> -> vector<32x16xf32>
    %132 = arith.addf %124, %131 : vector<32x16xf32>
    %c15 = arith.constant 15 : index
    %c0_114 = arith.constant 0 : index
    %c0_115 = arith.constant 0 : index
    %133 = vector.load %arg3[%c15, %c0_114, %c0_115] : memref<16x32x128xbf16, #tpu.memory_space<vmem>>, vector<1x32x128xbf16>
    %134 = vector.shape_cast %133 : vector<1x32x128xbf16> to vector<32x128xbf16>
    %cst_116 = arith.constant dense<0.000000e+00> : vector<32x8xf32>
    %135 = tpu.matmul %134, %11, %cst_116 {dimension_numbers = #tpu.dot_dimension_numbers<[1], [0], [0], [1], [0, 0, 1, 1], [], []>} : vector<32x128xbf16>, vector<128x8xbf16>, vector<32x8xf32> -> vector<32x8xf32>
    %136 = arith.truncf %135 : vector<32x8xf32> to vector<32x8xbf16>
    %c15_117 = arith.constant 15 : index
    %c0_118 = arith.constant 0 : index
    %c0_119 = arith.constant 0 : index
    %137 = vector.load %arg4[%c15_117, %c0_118, %c0_119] : memref<16x8x16xbf16, #tpu.memory_space<vmem>>, vector<1x8x16xbf16>
    %138 = vector.shape_cast %137 : vector<1x8x16xbf16> to vector<8x16xbf16>
    %cst_120 = arith.constant dense<0.000000e+00> : vector<32x16xf32>
    %139 = tpu.matmul %136, %138, %cst_120 {dimension_numbers = #tpu.dot_dimension_numbers<[1], [0], [0], [1], [0, 0, 1, 1], [], []>} : vector<32x8xbf16>, vector<8x16xbf16>, vector<32x16xf32> -> vector<32x16xf32>
    %140 = arith.addf %132, %139 : vector<32x16xf32>
    %c0_121 = arith.constant 0 : index
    %c0_122 = arith.constant 0 : index
    %141 = vector.load %arg5[%c0_121, %c0_122] : memref<1x16xf32, #tpu.memory_space<vmem>>, vector<1x16xf32>
    %142 = vector.broadcast %141 : vector<1x16xf32> to vector<32x16xf32>
    %143 = arith.addf %140, %142 : vector<32x16xf32>
    %cst_123 = arith.constant 0.000000e+00 : f32
    %144 = vector.broadcast %cst_123 : f32 to vector<32x16xf32>
    %145 = arith.cmpf ogt, %143, %144 : vector<32x16xf32>
    %cst_124 = arith.constant 2.000000e-01 : f32
    %146 = vector.broadcast %cst_124 : f32 to vector<32x16xf32>
    %147 = arith.mulf %146, %143 : vector<32x16xf32>
    %148 = arith.select %145, %143, %147 : vector<32x16xi1>, vector<32x16xf32>
    %149 = arith.truncf %148 : vector<32x16xf32> to vector<32x16xbf16>
    %cst_125 = arith.constant 0.000000e+00 : f32
    %150 = vector.broadcast %cst_125 : f32 to vector<8x32xf32>
    %c0_126 = arith.constant 0 : index
    %c0_127 = arith.constant 0 : index
    %c0_128 = arith.constant 0 : index
    %151 = vector.load %arg6[%c0_126, %c0_127, %c0_128] : memref<16x8x32xbf16, #tpu.memory_space<vmem>>, vector<1x8x32xbf16>
    %152 = vector.shape_cast %151 : vector<1x8x32xbf16> to vector<8x32xbf16>
    %cst_129 = arith.constant dense<0.000000e+00> : vector<8x16xf32>
    %153 = tpu.matmul %152, %149, %cst_129 {dimension_numbers = #tpu.dot_dimension_numbers<[1], [0], [0], [1], [0, 0, 1, 1], [], []>} : vector<8x32xbf16>, vector<32x16xbf16>, vector<8x16xf32> -> vector<8x16xf32>
    %154 = arith.truncf %153 : vector<8x16xf32> to vector<8x16xbf16>
    %c0_130 = arith.constant 0 : index
    %c0_131 = arith.constant 0 : index
    %c0_132 = arith.constant 0 : index
    %155 = vector.load %arg7[%c0_130, %c0_131, %c0_132] : memref<16x16x32xbf16, #tpu.memory_space<vmem>>, vector<1x16x32xbf16>
    %156 = vector.shape_cast %155 : vector<1x16x32xbf16> to vector<16x32xbf16>
    %cst_133 = arith.constant dense<0.000000e+00> : vector<8x32xf32>
    %157 = tpu.matmul %154, %156, %cst_133 {dimension_numbers = #tpu.dot_dimension_numbers<[1], [0], [0], [1], [0, 0, 1, 1], [], []>} : vector<8x16xbf16>, vector<16x32xbf16>, vector<8x32xf32> -> vector<8x32xf32>
    %158 = arith.addf %150, %157 : vector<8x32xf32>
    %c1_134 = arith.constant 1 : index
    %c0_135 = arith.constant 0 : index
    %c0_136 = arith.constant 0 : index
    %159 = vector.load %arg6[%c1_134, %c0_135, %c0_136] : memref<16x8x32xbf16, #tpu.memory_space<vmem>>, vector<1x8x32xbf16>
    %160 = vector.shape_cast %159 : vector<1x8x32xbf16> to vector<8x32xbf16>
    %cst_137 = arith.constant dense<0.000000e+00> : vector<8x16xf32>
    %161 = tpu.matmul %160, %149, %cst_137 {dimension_numbers = #tpu.dot_dimension_numbers<[1], [0], [0], [1], [0, 0, 1, 1], [], []>} : vector<8x32xbf16>, vector<32x16xbf16>, vector<8x16xf32> -> vector<8x16xf32>
    %162 = arith.truncf %161 : vector<8x16xf32> to vector<8x16xbf16>
    %c1_138 = arith.constant 1 : index
    %c0_139 = arith.constant 0 : index
    %c0_140 = arith.constant 0 : index
    %163 = vector.load %arg7[%c1_138, %c0_139, %c0_140] : memref<16x16x32xbf16, #tpu.memory_space<vmem>>, vector<1x16x32xbf16>
    %164 = vector.shape_cast %163 : vector<1x16x32xbf16> to vector<16x32xbf16>
    %cst_141 = arith.constant dense<0.000000e+00> : vector<8x32xf32>
    %165 = tpu.matmul %162, %164, %cst_141 {dimension_numbers = #tpu.dot_dimension_numbers<[1], [0], [0], [1], [0, 0, 1, 1], [], []>} : vector<8x16xbf16>, vector<16x32xbf16>, vector<8x32xf32> -> vector<8x32xf32>
    %166 = arith.addf %158, %165 : vector<8x32xf32>
    %c2_142 = arith.constant 2 : index
    %c0_143 = arith.constant 0 : index
    %c0_144 = arith.constant 0 : index
    %167 = vector.load %arg6[%c2_142, %c0_143, %c0_144] : memref<16x8x32xbf16, #tpu.memory_space<vmem>>, vector<1x8x32xbf16>
    %168 = vector.shape_cast %167 : vector<1x8x32xbf16> to vector<8x32xbf16>
    %cst_145 = arith.constant dense<0.000000e+00> : vector<8x16xf32>
    %169 = tpu.matmul %168, %149, %cst_145 {dimension_numbers = #tpu.dot_dimension_numbers<[1], [0], [0], [1], [0, 0, 1, 1], [], []>} : vector<8x32xbf16>, vector<32x16xbf16>, vector<8x16xf32> -> vector<8x16xf32>
    %170 = arith.truncf %169 : vector<8x16xf32> to vector<8x16xbf16>
    %c2_146 = arith.constant 2 : index
    %c0_147 = arith.constant 0 : index
    %c0_148 = arith.constant 0 : index
    %171 = vector.load %arg7[%c2_146, %c0_147, %c0_148] : memref<16x16x32xbf16, #tpu.memory_space<vmem>>, vector<1x16x32xbf16>
    %172 = vector.shape_cast %171 : vector<1x16x32xbf16> to vector<16x32xbf16>
    %cst_149 = arith.constant dense<0.000000e+00> : vector<8x32xf32>
    %173 = tpu.matmul %170, %172, %cst_149 {dimension_numbers = #tpu.dot_dimension_numbers<[1], [0], [0], [1], [0, 0, 1, 1], [], []>} : vector<8x16xbf16>, vector<16x32xbf16>, vector<8x32xf32> -> vector<8x32xf32>
    %174 = arith.addf %166, %173 : vector<8x32xf32>
    %c3_150 = arith.constant 3 : index
    %c0_151 = arith.constant 0 : index
    %c0_152 = arith.constant 0 : index
    %175 = vector.load %arg6[%c3_150, %c0_151, %c0_152] : memref<16x8x32xbf16, #tpu.memory_space<vmem>>, vector<1x8x32xbf16>
    %176 = vector.shape_cast %175 : vector<1x8x32xbf16> to vector<8x32xbf16>
    %cst_153 = arith.constant dense<0.000000e+00> : vector<8x16xf32>
    %177 = tpu.matmul %176, %149, %cst_153 {dimension_numbers = #tpu.dot_dimension_numbers<[1], [0], [0], [1], [0, 0, 1, 1], [], []>} : vector<8x32xbf16>, vector<32x16xbf16>, vector<8x16xf32> -> vector<8x16xf32>
    %178 = arith.truncf %177 : vector<8x16xf32> to vector<8x16xbf16>
    %c3_154 = arith.constant 3 : index
    %c0_155 = arith.constant 0 : index
    %c0_156 = arith.constant 0 : index
    %179 = vector.load %arg7[%c3_154, %c0_155, %c0_156] : memref<16x16x32xbf16, #tpu.memory_space<vmem>>, vector<1x16x32xbf16>
    %180 = vector.shape_cast %179 : vector<1x16x32xbf16> to vector<16x32xbf16>
    %cst_157 = arith.constant dense<0.000000e+00> : vector<8x32xf32>
    %181 = tpu.matmul %178, %180, %cst_157 {dimension_numbers = #tpu.dot_dimension_numbers<[1], [0], [0], [1], [0, 0, 1, 1], [], []>} : vector<8x16xbf16>, vector<16x32xbf16>, vector<8x32xf32> -> vector<8x32xf32>
    %182 = arith.addf %174, %181 : vector<8x32xf32>
    %c4_158 = arith.constant 4 : index
    %c0_159 = arith.constant 0 : index
    %c0_160 = arith.constant 0 : index
    %183 = vector.load %arg6[%c4_158, %c0_159, %c0_160] : memref<16x8x32xbf16, #tpu.memory_space<vmem>>, vector<1x8x32xbf16>
    %184 = vector.shape_cast %183 : vector<1x8x32xbf16> to vector<8x32xbf16>
    %cst_161 = arith.constant dense<0.000000e+00> : vector<8x16xf32>
    %185 = tpu.matmul %184, %149, %cst_161 {dimension_numbers = #tpu.dot_dimension_numbers<[1], [0], [0], [1], [0, 0, 1, 1], [], []>} : vector<8x32xbf16>, vector<32x16xbf16>, vector<8x16xf32> -> vector<8x16xf32>
    %186 = arith.truncf %185 : vector<8x16xf32> to vector<8x16xbf16>
    %c4_162 = arith.constant 4 : index
    %c0_163 = arith.constant 0 : index
    %c0_164 = arith.constant 0 : index
    %187 = vector.load %arg7[%c4_162, %c0_163, %c0_164] : memref<16x16x32xbf16, #tpu.memory_space<vmem>>, vector<1x16x32xbf16>
    %188 = vector.shape_cast %187 : vector<1x16x32xbf16> to vector<16x32xbf16>
    %cst_165 = arith.constant dense<0.000000e+00> : vector<8x32xf32>
    %189 = tpu.matmul %186, %188, %cst_165 {dimension_numbers = #tpu.dot_dimension_numbers<[1], [0], [0], [1], [0, 0, 1, 1], [], []>} : vector<8x16xbf16>, vector<16x32xbf16>, vector<8x32xf32> -> vector<8x32xf32>
    %190 = arith.addf %182, %189 : vector<8x32xf32>
    %c5_166 = arith.constant 5 : index
    %c0_167 = arith.constant 0 : index
    %c0_168 = arith.constant 0 : index
    %191 = vector.load %arg6[%c5_166, %c0_167, %c0_168] : memref<16x8x32xbf16, #tpu.memory_space<vmem>>, vector<1x8x32xbf16>
    %192 = vector.shape_cast %191 : vector<1x8x32xbf16> to vector<8x32xbf16>
    %cst_169 = arith.constant dense<0.000000e+00> : vector<8x16xf32>
    %193 = tpu.matmul %192, %149, %cst_169 {dimension_numbers = #tpu.dot_dimension_numbers<[1], [0], [0], [1], [0, 0, 1, 1], [], []>} : vector<8x32xbf16>, vector<32x16xbf16>, vector<8x16xf32> -> vector<8x16xf32>
    %194 = arith.truncf %193 : vector<8x16xf32> to vector<8x16xbf16>
    %c5_170 = arith.constant 5 : index
    %c0_171 = arith.constant 0 : index
    %c0_172 = arith.constant 0 : index
    %195 = vector.load %arg7[%c5_170, %c0_171, %c0_172] : memref<16x16x32xbf16, #tpu.memory_space<vmem>>, vector<1x16x32xbf16>
    %196 = vector.shape_cast %195 : vector<1x16x32xbf16> to vector<16x32xbf16>
    %cst_173 = arith.constant dense<0.000000e+00> : vector<8x32xf32>
    %197 = tpu.matmul %194, %196, %cst_173 {dimension_numbers = #tpu.dot_dimension_numbers<[1], [0], [0], [1], [0, 0, 1, 1], [], []>} : vector<8x16xbf16>, vector<16x32xbf16>, vector<8x32xf32> -> vector<8x32xf32>
    %198 = arith.addf %190, %197 : vector<8x32xf32>
    %c6_174 = arith.constant 6 : index
    %c0_175 = arith.constant 0 : index
    %c0_176 = arith.constant 0 : index
    %199 = vector.load %arg6[%c6_174, %c0_175, %c0_176] : memref<16x8x32xbf16, #tpu.memory_space<vmem>>, vector<1x8x32xbf16>
    %200 = vector.shape_cast %199 : vector<1x8x32xbf16> to vector<8x32xbf16>
    %cst_177 = arith.constant dense<0.000000e+00> : vector<8x16xf32>
    %201 = tpu.matmul %200, %149, %cst_177 {dimension_numbers = #tpu.dot_dimension_numbers<[1], [0], [0], [1], [0, 0, 1, 1], [], []>} : vector<8x32xbf16>, vector<32x16xbf16>, vector<8x16xf32> -> vector<8x16xf32>
    %202 = arith.truncf %201 : vector<8x16xf32> to vector<8x16xbf16>
    %c6_178 = arith.constant 6 : index
    %c0_179 = arith.constant 0 : index
    %c0_180 = arith.constant 0 : index
    %203 = vector.load %arg7[%c6_178, %c0_179, %c0_180] : memref<16x16x32xbf16, #tpu.memory_space<vmem>>, vector<1x16x32xbf16>
    %204 = vector.shape_cast %203 : vector<1x16x32xbf16> to vector<16x32xbf16>
    %cst_181 = arith.constant dense<0.000000e+00> : vector<8x32xf32>
    %205 = tpu.matmul %202, %204, %cst_181 {dimension_numbers = #tpu.dot_dimension_numbers<[1], [0], [0], [1], [0, 0, 1, 1], [], []>} : vector<8x16xbf16>, vector<16x32xbf16>, vector<8x32xf32> -> vector<8x32xf32>
    %206 = arith.addf %198, %205 : vector<8x32xf32>
    %c7_182 = arith.constant 7 : index
    %c0_183 = arith.constant 0 : index
    %c0_184 = arith.constant 0 : index
    %207 = vector.load %arg6[%c7_182, %c0_183, %c0_184] : memref<16x8x32xbf16, #tpu.memory_space<vmem>>, vector<1x8x32xbf16>
    %208 = vector.shape_cast %207 : vector<1x8x32xbf16> to vector<8x32xbf16>
    %cst_185 = arith.constant dense<0.000000e+00> : vector<8x16xf32>
    %209 = tpu.matmul %208, %149, %cst_185 {dimension_numbers = #tpu.dot_dimension_numbers<[1], [0], [0], [1], [0, 0, 1, 1], [], []>} : vector<8x32xbf16>, vector<32x16xbf16>, vector<8x16xf32> -> vector<8x16xf32>
    %210 = arith.truncf %209 : vector<8x16xf32> to vector<8x16xbf16>
    %c7_186 = arith.constant 7 : index
    %c0_187 = arith.constant 0 : index
    %c0_188 = arith.constant 0 : index
    %211 = vector.load %arg7[%c7_186, %c0_187, %c0_188] : memref<16x16x32xbf16, #tpu.memory_space<vmem>>, vector<1x16x32xbf16>
    %212 = vector.shape_cast %211 : vector<1x16x32xbf16> to vector<16x32xbf16>
    %cst_189 = arith.constant dense<0.000000e+00> : vector<8x32xf32>
    %213 = tpu.matmul %210, %212, %cst_189 {dimension_numbers = #tpu.dot_dimension_numbers<[1], [0], [0], [1], [0, 0, 1, 1], [], []>} : vector<8x16xbf16>, vector<16x32xbf16>, vector<8x32xf32> -> vector<8x32xf32>
    %214 = arith.addf %206, %213 : vector<8x32xf32>
    %c8_190 = arith.constant 8 : index
    %c0_191 = arith.constant 0 : index
    %c0_192 = arith.constant 0 : index
    %215 = vector.load %arg6[%c8_190, %c0_191, %c0_192] : memref<16x8x32xbf16, #tpu.memory_space<vmem>>, vector<1x8x32xbf16>
    %216 = vector.shape_cast %215 : vector<1x8x32xbf16> to vector<8x32xbf16>
    %cst_193 = arith.constant dense<0.000000e+00> : vector<8x16xf32>
    %217 = tpu.matmul %216, %149, %cst_193 {dimension_numbers = #tpu.dot_dimension_numbers<[1], [0], [0], [1], [0, 0, 1, 1], [], []>} : vector<8x32xbf16>, vector<32x16xbf16>, vector<8x16xf32> -> vector<8x16xf32>
    %218 = arith.truncf %217 : vector<8x16xf32> to vector<8x16xbf16>
    %c8_194 = arith.constant 8 : index
    %c0_195 = arith.constant 0 : index
    %c0_196 = arith.constant 0 : index
    %219 = vector.load %arg7[%c8_194, %c0_195, %c0_196] : memref<16x16x32xbf16, #tpu.memory_space<vmem>>, vector<1x16x32xbf16>
    %220 = vector.shape_cast %219 : vector<1x16x32xbf16> to vector<16x32xbf16>
    %cst_197 = arith.constant dense<0.000000e+00> : vector<8x32xf32>
    %221 = tpu.matmul %218, %220, %cst_197 {dimension_numbers = #tpu.dot_dimension_numbers<[1], [0], [0], [1], [0, 0, 1, 1], [], []>} : vector<8x16xbf16>, vector<16x32xbf16>, vector<8x32xf32> -> vector<8x32xf32>
    %222 = arith.addf %214, %221 : vector<8x32xf32>
    %c9_198 = arith.constant 9 : index
    %c0_199 = arith.constant 0 : index
    %c0_200 = arith.constant 0 : index
    %223 = vector.load %arg6[%c9_198, %c0_199, %c0_200] : memref<16x8x32xbf16, #tpu.memory_space<vmem>>, vector<1x8x32xbf16>
    %224 = vector.shape_cast %223 : vector<1x8x32xbf16> to vector<8x32xbf16>
    %cst_201 = arith.constant dense<0.000000e+00> : vector<8x16xf32>
    %225 = tpu.matmul %224, %149, %cst_201 {dimension_numbers = #tpu.dot_dimension_numbers<[1], [0], [0], [1], [0, 0, 1, 1], [], []>} : vector<8x32xbf16>, vector<32x16xbf16>, vector<8x16xf32> -> vector<8x16xf32>
    %226 = arith.truncf %225 : vector<8x16xf32> to vector<8x16xbf16>
    %c9_202 = arith.constant 9 : index
    %c0_203 = arith.constant 0 : index
    %c0_204 = arith.constant 0 : index
    %227 = vector.load %arg7[%c9_202, %c0_203, %c0_204] : memref<16x16x32xbf16, #tpu.memory_space<vmem>>, vector<1x16x32xbf16>
    %228 = vector.shape_cast %227 : vector<1x16x32xbf16> to vector<16x32xbf16>
    %cst_205 = arith.constant dense<0.000000e+00> : vector<8x32xf32>
    %229 = tpu.matmul %226, %228, %cst_205 {dimension_numbers = #tpu.dot_dimension_numbers<[1], [0], [0], [1], [0, 0, 1, 1], [], []>} : vector<8x16xbf16>, vector<16x32xbf16>, vector<8x32xf32> -> vector<8x32xf32>
    %230 = arith.addf %222, %229 : vector<8x32xf32>
    %c10_206 = arith.constant 10 : index
    %c0_207 = arith.constant 0 : index
    %c0_208 = arith.constant 0 : index
    %231 = vector.load %arg6[%c10_206, %c0_207, %c0_208] : memref<16x8x32xbf16, #tpu.memory_space<vmem>>, vector<1x8x32xbf16>
    %232 = vector.shape_cast %231 : vector<1x8x32xbf16> to vector<8x32xbf16>
    %cst_209 = arith.constant dense<0.000000e+00> : vector<8x16xf32>
    %233 = tpu.matmul %232, %149, %cst_209 {dimension_numbers = #tpu.dot_dimension_numbers<[1], [0], [0], [1], [0, 0, 1, 1], [], []>} : vector<8x32xbf16>, vector<32x16xbf16>, vector<8x16xf32> -> vector<8x16xf32>
    %234 = arith.truncf %233 : vector<8x16xf32> to vector<8x16xbf16>
    %c10_210 = arith.constant 10 : index
    %c0_211 = arith.constant 0 : index
    %c0_212 = arith.constant 0 : index
    %235 = vector.load %arg7[%c10_210, %c0_211, %c0_212] : memref<16x16x32xbf16, #tpu.memory_space<vmem>>, vector<1x16x32xbf16>
    %236 = vector.shape_cast %235 : vector<1x16x32xbf16> to vector<16x32xbf16>
    %cst_213 = arith.constant dense<0.000000e+00> : vector<8x32xf32>
    %237 = tpu.matmul %234, %236, %cst_213 {dimension_numbers = #tpu.dot_dimension_numbers<[1], [0], [0], [1], [0, 0, 1, 1], [], []>} : vector<8x16xbf16>, vector<16x32xbf16>, vector<8x32xf32> -> vector<8x32xf32>
    %238 = arith.addf %230, %237 : vector<8x32xf32>
    %c11_214 = arith.constant 11 : index
    %c0_215 = arith.constant 0 : index
    %c0_216 = arith.constant 0 : index
    %239 = vector.load %arg6[%c11_214, %c0_215, %c0_216] : memref<16x8x32xbf16, #tpu.memory_space<vmem>>, vector<1x8x32xbf16>
    %240 = vector.shape_cast %239 : vector<1x8x32xbf16> to vector<8x32xbf16>
    %cst_217 = arith.constant dense<0.000000e+00> : vector<8x16xf32>
    %241 = tpu.matmul %240, %149, %cst_217 {dimension_numbers = #tpu.dot_dimension_numbers<[1], [0], [0], [1], [0, 0, 1, 1], [], []>} : vector<8x32xbf16>, vector<32x16xbf16>, vector<8x16xf32> -> vector<8x16xf32>
    %242 = arith.truncf %241 : vector<8x16xf32> to vector<8x16xbf16>
    %c11_218 = arith.constant 11 : index
    %c0_219 = arith.constant 0 : index
    %c0_220 = arith.constant 0 : index
    %243 = vector.load %arg7[%c11_218, %c0_219, %c0_220] : memref<16x16x32xbf16, #tpu.memory_space<vmem>>, vector<1x16x32xbf16>
    %244 = vector.shape_cast %243 : vector<1x16x32xbf16> to vector<16x32xbf16>
    %cst_221 = arith.constant dense<0.000000e+00> : vector<8x32xf32>
    %245 = tpu.matmul %242, %244, %cst_221 {dimension_numbers = #tpu.dot_dimension_numbers<[1], [0], [0], [1], [0, 0, 1, 1], [], []>} : vector<8x16xbf16>, vector<16x32xbf16>, vector<8x32xf32> -> vector<8x32xf32>
    %246 = arith.addf %238, %245 : vector<8x32xf32>
    %c12_222 = arith.constant 12 : index
    %c0_223 = arith.constant 0 : index
    %c0_224 = arith.constant 0 : index
    %247 = vector.load %arg6[%c12_222, %c0_223, %c0_224] : memref<16x8x32xbf16, #tpu.memory_space<vmem>>, vector<1x8x32xbf16>
    %248 = vector.shape_cast %247 : vector<1x8x32xbf16> to vector<8x32xbf16>
    %cst_225 = arith.constant dense<0.000000e+00> : vector<8x16xf32>
    %249 = tpu.matmul %248, %149, %cst_225 {dimension_numbers = #tpu.dot_dimension_numbers<[1], [0], [0], [1], [0, 0, 1, 1], [], []>} : vector<8x32xbf16>, vector<32x16xbf16>, vector<8x16xf32> -> vector<8x16xf32>
    %250 = arith.truncf %249 : vector<8x16xf32> to vector<8x16xbf16>
    %c12_226 = arith.constant 12 : index
    %c0_227 = arith.constant 0 : index
    %c0_228 = arith.constant 0 : index
    %251 = vector.load %arg7[%c12_226, %c0_227, %c0_228] : memref<16x16x32xbf16, #tpu.memory_space<vmem>>, vector<1x16x32xbf16>
    %252 = vector.shape_cast %251 : vector<1x16x32xbf16> to vector<16x32xbf16>
    %cst_229 = arith.constant dense<0.000000e+00> : vector<8x32xf32>
    %253 = tpu.matmul %250, %252, %cst_229 {dimension_numbers = #tpu.dot_dimension_numbers<[1], [0], [0], [1], [0, 0, 1, 1], [], []>} : vector<8x16xbf16>, vector<16x32xbf16>, vector<8x32xf32> -> vector<8x32xf32>
    %254 = arith.addf %246, %253 : vector<8x32xf32>
    %c13_230 = arith.constant 13 : index
    %c0_231 = arith.constant 0 : index
    %c0_232 = arith.constant 0 : index
    %255 = vector.load %arg6[%c13_230, %c0_231, %c0_232] : memref<16x8x32xbf16, #tpu.memory_space<vmem>>, vector<1x8x32xbf16>
    %256 = vector.shape_cast %255 : vector<1x8x32xbf16> to vector<8x32xbf16>
    %cst_233 = arith.constant dense<0.000000e+00> : vector<8x16xf32>
    %257 = tpu.matmul %256, %149, %cst_233 {dimension_numbers = #tpu.dot_dimension_numbers<[1], [0], [0], [1], [0, 0, 1, 1], [], []>} : vector<8x32xbf16>, vector<32x16xbf16>, vector<8x16xf32> -> vector<8x16xf32>
    %258 = arith.truncf %257 : vector<8x16xf32> to vector<8x16xbf16>
    %c13_234 = arith.constant 13 : index
    %c0_235 = arith.constant 0 : index
    %c0_236 = arith.constant 0 : index
    %259 = vector.load %arg7[%c13_234, %c0_235, %c0_236] : memref<16x16x32xbf16, #tpu.memory_space<vmem>>, vector<1x16x32xbf16>
    %260 = vector.shape_cast %259 : vector<1x16x32xbf16> to vector<16x32xbf16>
    %cst_237 = arith.constant dense<0.000000e+00> : vector<8x32xf32>
    %261 = tpu.matmul %258, %260, %cst_237 {dimension_numbers = #tpu.dot_dimension_numbers<[1], [0], [0], [1], [0, 0, 1, 1], [], []>} : vector<8x16xbf16>, vector<16x32xbf16>, vector<8x32xf32> -> vector<8x32xf32>
    %262 = arith.addf %254, %261 : vector<8x32xf32>
    %c14_238 = arith.constant 14 : index
    %c0_239 = arith.constant 0 : index
    %c0_240 = arith.constant 0 : index
    %263 = vector.load %arg6[%c14_238, %c0_239, %c0_240] : memref<16x8x32xbf16, #tpu.memory_space<vmem>>, vector<1x8x32xbf16>
    %264 = vector.shape_cast %263 : vector<1x8x32xbf16> to vector<8x32xbf16>
    %cst_241 = arith.constant dense<0.000000e+00> : vector<8x16xf32>
    %265 = tpu.matmul %264, %149, %cst_241 {dimension_numbers = #tpu.dot_dimension_numbers<[1], [0], [0], [1], [0, 0, 1, 1], [], []>} : vector<8x32xbf16>, vector<32x16xbf16>, vector<8x16xf32> -> vector<8x16xf32>
    %266 = arith.truncf %265 : vector<8x16xf32> to vector<8x16xbf16>
    %c14_242 = arith.constant 14 : index
    %c0_243 = arith.constant 0 : index
    %c0_244 = arith.constant 0 : index
    %267 = vector.load %arg7[%c14_242, %c0_243, %c0_244] : memref<16x16x32xbf16, #tpu.memory_space<vmem>>, vector<1x16x32xbf16>
    %268 = vector.shape_cast %267 : vector<1x16x32xbf16> to vector<16x32xbf16>
    %cst_245 = arith.constant dense<0.000000e+00> : vector<8x32xf32>
    %269 = tpu.matmul %266, %268, %cst_245 {dimension_numbers = #tpu.dot_dimension_numbers<[1], [0], [0], [1], [0, 0, 1, 1], [], []>} : vector<8x16xbf16>, vector<16x32xbf16>, vector<8x32xf32> -> vector<8x32xf32>
    %270 = arith.addf %262, %269 : vector<8x32xf32>
    %c15_246 = arith.constant 15 : index
    %c0_247 = arith.constant 0 : index
    %c0_248 = arith.constant 0 : index
    %271 = vector.load %arg6[%c15_246, %c0_247, %c0_248] : memref<16x8x32xbf16, #tpu.memory_space<vmem>>, vector<1x8x32xbf16>
    %272 = vector.shape_cast %271 : vector<1x8x32xbf16> to vector<8x32xbf16>
    %cst_249 = arith.constant dense<0.000000e+00> : vector<8x16xf32>
    %273 = tpu.matmul %272, %149, %cst_249 {dimension_numbers = #tpu.dot_dimension_numbers<[1], [0], [0], [1], [0, 0, 1, 1], [], []>} : vector<8x32xbf16>, vector<32x16xbf16>, vector<8x16xf32> -> vector<8x16xf32>
    %274 = arith.truncf %273 : vector<8x16xf32> to vector<8x16xbf16>
    %c15_250 = arith.constant 15 : index
    %c0_251 = arith.constant 0 : index
    %c0_252 = arith.constant 0 : index
    %275 = vector.load %arg7[%c15_250, %c0_251, %c0_252] : memref<16x16x32xbf16, #tpu.memory_space<vmem>>, vector<1x16x32xbf16>
    %276 = vector.shape_cast %275 : vector<1x16x32xbf16> to vector<16x32xbf16>
    %cst_253 = arith.constant dense<0.000000e+00> : vector<8x32xf32>
    %277 = tpu.matmul %274, %276, %cst_253 {dimension_numbers = #tpu.dot_dimension_numbers<[1], [0], [0], [1], [0, 0, 1, 1], [], []>} : vector<8x16xbf16>, vector<16x32xbf16>, vector<8x32xf32> -> vector<8x32xf32>
    %278 = arith.addf %270, %277 : vector<8x32xf32>
    %c0_254 = arith.constant 0 : index
    %c0_255 = arith.constant 0 : index
    %279 = vector.load %arg8[%c0_254, %c0_255] : memref<1x32xf32, #tpu.memory_space<vmem>>, vector<1x32xf32>
    %280 = vector.broadcast %279 : vector<1x32xf32> to vector<8x32xf32>
    %281 = arith.addf %278, %280 : vector<8x32xf32>
    %cst_256 = arith.constant 0.000000e+00 : f32
    %282 = vector.broadcast %cst_256 : f32 to vector<8x32xf32>
    %283 = arith.cmpf ogt, %281, %282 : vector<8x32xf32>
    %cst_257 = arith.constant 2.000000e-01 : f32
    %284 = vector.broadcast %cst_257 : f32 to vector<8x32xf32>
    %285 = arith.mulf %284, %281 : vector<8x32xf32>
    %286 = arith.select %283, %281, %285 : vector<8x32xi1>, vector<8x32xf32>
    %287 = arith.truncf %286 : vector<8x32xf32> to vector<8x32xbf16>
    %cst_258 = arith.constant 0.000000e+00 : f32
    %288 = vector.broadcast %cst_258 : f32 to vector<2x32xf32>
    %c0_259 = arith.constant 0 : index
    %c0_260 = arith.constant 0 : index
    %c0_261 = arith.constant 0 : index
    %289 = vector.load %arg9[%c0_259, %c0_260, %c0_261] : memref<16x2x8xbf16, #tpu.memory_space<vmem>>, vector<1x2x8xbf16>
    %290 = vector.shape_cast %289 : vector<1x2x8xbf16> to vector<2x8xbf16>
    %cst_262 = arith.constant dense<0.000000e+00> : vector<2x32xf32>
    %291 = tpu.matmul %290, %287, %cst_262 {dimension_numbers = #tpu.dot_dimension_numbers<[1], [0], [0], [1], [0, 0, 1, 1], [], []>} : vector<2x8xbf16>, vector<8x32xbf16>, vector<2x32xf32> -> vector<2x32xf32>
    %292 = arith.truncf %291 : vector<2x32xf32> to vector<2x32xbf16>
    %c0_263 = arith.constant 0 : index
    %c0_264 = arith.constant 0 : index
    %c0_265 = arith.constant 0 : index
    %293 = vector.load %arg10[%c0_263, %c0_264, %c0_265] : memref<16x32x32xbf16, #tpu.memory_space<vmem>>, vector<1x32x32xbf16>
    %294 = vector.shape_cast %293 : vector<1x32x32xbf16> to vector<32x32xbf16>
    %cst_266 = arith.constant dense<0.000000e+00> : vector<2x32xf32>
    %295 = tpu.matmul %292, %294, %cst_266 {dimension_numbers = #tpu.dot_dimension_numbers<[1], [0], [0], [1], [0, 0, 1, 1], [], []>} : vector<2x32xbf16>, vector<32x32xbf16>, vector<2x32xf32> -> vector<2x32xf32>
    %296 = arith.addf %288, %295 : vector<2x32xf32>
    %c1_267 = arith.constant 1 : index
    %c0_268 = arith.constant 0 : index
    %c0_269 = arith.constant 0 : index
    %297 = vector.load %arg9[%c1_267, %c0_268, %c0_269] : memref<16x2x8xbf16, #tpu.memory_space<vmem>>, vector<1x2x8xbf16>
    %298 = vector.shape_cast %297 : vector<1x2x8xbf16> to vector<2x8xbf16>
    %cst_270 = arith.constant dense<0.000000e+00> : vector<2x32xf32>
    %299 = tpu.matmul %298, %287, %cst_270 {dimension_numbers = #tpu.dot_dimension_numbers<[1], [0], [0], [1], [0, 0, 1, 1], [], []>} : vector<2x8xbf16>, vector<8x32xbf16>, vector<2x32xf32> -> vector<2x32xf32>
    %300 = arith.truncf %299 : vector<2x32xf32> to vector<2x32xbf16>
    %c1_271 = arith.constant 1 : index
    %c0_272 = arith.constant 0 : index
    %c0_273 = arith.constant 0 : index
    %301 = vector.load %arg10[%c1_271, %c0_272, %c0_273] : memref<16x32x32xbf16, #tpu.memory_space<vmem>>, vector<1x32x32xbf16>
    %302 = vector.shape_cast %301 : vector<1x32x32xbf16> to vector<32x32xbf16>
    %cst_274 = arith.constant dense<0.000000e+00> : vector<2x32xf32>
    %303 = tpu.matmul %300, %302, %cst_274 {dimension_numbers = #tpu.dot_dimension_numbers<[1], [0], [0], [1], [0, 0, 1, 1], [], []>} : vector<2x32xbf16>, vector<32x32xbf16>, vector<2x32xf32> -> vector<2x32xf32>
    %304 = arith.addf %296, %303 : vector<2x32xf32>
    %c2_275 = arith.constant 2 : index
    %c0_276 = arith.constant 0 : index
    %c0_277 = arith.constant 0 : index
    %305 = vector.load %arg9[%c2_275, %c0_276, %c0_277] : memref<16x2x8xbf16, #tpu.memory_space<vmem>>, vector<1x2x8xbf16>
    %306 = vector.shape_cast %305 : vector<1x2x8xbf16> to vector<2x8xbf16>
    %cst_278 = arith.constant dense<0.000000e+00> : vector<2x32xf32>
    %307 = tpu.matmul %306, %287, %cst_278 {dimension_numbers = #tpu.dot_dimension_numbers<[1], [0], [0], [1], [0, 0, 1, 1], [], []>} : vector<2x8xbf16>, vector<8x32xbf16>, vector<2x32xf32> -> vector<2x32xf32>
    %308 = arith.truncf %307 : vector<2x32xf32> to vector<2x32xbf16>
    %c2_279 = arith.constant 2 : index
    %c0_280 = arith.constant 0 : index
    %c0_281 = arith.constant 0 : index
    %309 = vector.load %arg10[%c2_279, %c0_280, %c0_281] : memref<16x32x32xbf16, #tpu.memory_space<vmem>>, vector<1x32x32xbf16>
    %310 = vector.shape_cast %309 : vector<1x32x32xbf16> to vector<32x32xbf16>
    %cst_282 = arith.constant dense<0.000000e+00> : vector<2x32xf32>
    %311 = tpu.matmul %308, %310, %cst_282 {dimension_numbers = #tpu.dot_dimension_numbers<[1], [0], [0], [1], [0, 0, 1, 1], [], []>} : vector<2x32xbf16>, vector<32x32xbf16>, vector<2x32xf32> -> vector<2x32xf32>
    %312 = arith.addf %304, %311 : vector<2x32xf32>
    %c3_283 = arith.constant 3 : index
    %c0_284 = arith.constant 0 : index
    %c0_285 = arith.constant 0 : index
    %313 = vector.load %arg9[%c3_283, %c0_284, %c0_285] : memref<16x2x8xbf16, #tpu.memory_space<vmem>>, vector<1x2x8xbf16>
    %314 = vector.shape_cast %313 : vector<1x2x8xbf16> to vector<2x8xbf16>
    %cst_286 = arith.constant dense<0.000000e+00> : vector<2x32xf32>
    %315 = tpu.matmul %314, %287, %cst_286 {dimension_numbers = #tpu.dot_dimension_numbers<[1], [0], [0], [1], [0, 0, 1, 1], [], []>} : vector<2x8xbf16>, vector<8x32xbf16>, vector<2x32xf32> -> vector<2x32xf32>
    %316 = arith.truncf %315 : vector<2x32xf32> to vector<2x32xbf16>
    %c3_287 = arith.constant 3 : index
    %c0_288 = arith.constant 0 : index
    %c0_289 = arith.constant 0 : index
    %317 = vector.load %arg10[%c3_287, %c0_288, %c0_289] : memref<16x32x32xbf16, #tpu.memory_space<vmem>>, vector<1x32x32xbf16>
    %318 = vector.shape_cast %317 : vector<1x32x32xbf16> to vector<32x32xbf16>
    %cst_290 = arith.constant dense<0.000000e+00> : vector<2x32xf32>
    %319 = tpu.matmul %316, %318, %cst_290 {dimension_numbers = #tpu.dot_dimension_numbers<[1], [0], [0], [1], [0, 0, 1, 1], [], []>} : vector<2x32xbf16>, vector<32x32xbf16>, vector<2x32xf32> -> vector<2x32xf32>
    %320 = arith.addf %312, %319 : vector<2x32xf32>
    %c4_291 = arith.constant 4 : index
    %c0_292 = arith.constant 0 : index
    %c0_293 = arith.constant 0 : index
    %321 = vector.load %arg9[%c4_291, %c0_292, %c0_293] : memref<16x2x8xbf16, #tpu.memory_space<vmem>>, vector<1x2x8xbf16>
    %322 = vector.shape_cast %321 : vector<1x2x8xbf16> to vector<2x8xbf16>
    %cst_294 = arith.constant dense<0.000000e+00> : vector<2x32xf32>
    %323 = tpu.matmul %322, %287, %cst_294 {dimension_numbers = #tpu.dot_dimension_numbers<[1], [0], [0], [1], [0, 0, 1, 1], [], []>} : vector<2x8xbf16>, vector<8x32xbf16>, vector<2x32xf32> -> vector<2x32xf32>
    %324 = arith.truncf %323 : vector<2x32xf32> to vector<2x32xbf16>
    %c4_295 = arith.constant 4 : index
    %c0_296 = arith.constant 0 : index
    %c0_297 = arith.constant 0 : index
    %325 = vector.load %arg10[%c4_295, %c0_296, %c0_297] : memref<16x32x32xbf16, #tpu.memory_space<vmem>>, vector<1x32x32xbf16>
    %326 = vector.shape_cast %325 : vector<1x32x32xbf16> to vector<32x32xbf16>
    %cst_298 = arith.constant dense<0.000000e+00> : vector<2x32xf32>
    %327 = tpu.matmul %324, %326, %cst_298 {dimension_numbers = #tpu.dot_dimension_numbers<[1], [0], [0], [1], [0, 0, 1, 1], [], []>} : vector<2x32xbf16>, vector<32x32xbf16>, vector<2x32xf32> -> vector<2x32xf32>
    %328 = arith.addf %320, %327 : vector<2x32xf32>
    %c5_299 = arith.constant 5 : index
    %c0_300 = arith.constant 0 : index
    %c0_301 = arith.constant 0 : index
    %329 = vector.load %arg9[%c5_299, %c0_300, %c0_301] : memref<16x2x8xbf16, #tpu.memory_space<vmem>>, vector<1x2x8xbf16>
    %330 = vector.shape_cast %329 : vector<1x2x8xbf16> to vector<2x8xbf16>
    %cst_302 = arith.constant dense<0.000000e+00> : vector<2x32xf32>
    %331 = tpu.matmul %330, %287, %cst_302 {dimension_numbers = #tpu.dot_dimension_numbers<[1], [0], [0], [1], [0, 0, 1, 1], [], []>} : vector<2x8xbf16>, vector<8x32xbf16>, vector<2x32xf32> -> vector<2x32xf32>
    %332 = arith.truncf %331 : vector<2x32xf32> to vector<2x32xbf16>
    %c5_303 = arith.constant 5 : index
    %c0_304 = arith.constant 0 : index
    %c0_305 = arith.constant 0 : index
    %333 = vector.load %arg10[%c5_303, %c0_304, %c0_305] : memref<16x32x32xbf16, #tpu.memory_space<vmem>>, vector<1x32x32xbf16>
    %334 = vector.shape_cast %333 : vector<1x32x32xbf16> to vector<32x32xbf16>
    %cst_306 = arith.constant dense<0.000000e+00> : vector<2x32xf32>
    %335 = tpu.matmul %332, %334, %cst_306 {dimension_numbers = #tpu.dot_dimension_numbers<[1], [0], [0], [1], [0, 0, 1, 1], [], []>} : vector<2x32xbf16>, vector<32x32xbf16>, vector<2x32xf32> -> vector<2x32xf32>
    %336 = arith.addf %328, %335 : vector<2x32xf32>
    %c6_307 = arith.constant 6 : index
    %c0_308 = arith.constant 0 : index
    %c0_309 = arith.constant 0 : index
    %337 = vector.load %arg9[%c6_307, %c0_308, %c0_309] : memref<16x2x8xbf16, #tpu.memory_space<vmem>>, vector<1x2x8xbf16>
    %338 = vector.shape_cast %337 : vector<1x2x8xbf16> to vector<2x8xbf16>
    %cst_310 = arith.constant dense<0.000000e+00> : vector<2x32xf32>
    %339 = tpu.matmul %338, %287, %cst_310 {dimension_numbers = #tpu.dot_dimension_numbers<[1], [0], [0], [1], [0, 0, 1, 1], [], []>} : vector<2x8xbf16>, vector<8x32xbf16>, vector<2x32xf32> -> vector<2x32xf32>
    %340 = arith.truncf %339 : vector<2x32xf32> to vector<2x32xbf16>
    %c6_311 = arith.constant 6 : index
    %c0_312 = arith.constant 0 : index
    %c0_313 = arith.constant 0 : index
    %341 = vector.load %arg10[%c6_311, %c0_312, %c0_313] : memref<16x32x32xbf16, #tpu.memory_space<vmem>>, vector<1x32x32xbf16>
    %342 = vector.shape_cast %341 : vector<1x32x32xbf16> to vector<32x32xbf16>
    %cst_314 = arith.constant dense<0.000000e+00> : vector<2x32xf32>
    %343 = tpu.matmul %340, %342, %cst_314 {dimension_numbers = #tpu.dot_dimension_numbers<[1], [0], [0], [1], [0, 0, 1, 1], [], []>} : vector<2x32xbf16>, vector<32x32xbf16>, vector<2x32xf32> -> vector<2x32xf32>
    %344 = arith.addf %336, %343 : vector<2x32xf32>
    %c7_315 = arith.constant 7 : index
    %c0_316 = arith.constant 0 : index
    %c0_317 = arith.constant 0 : index
    %345 = vector.load %arg9[%c7_315, %c0_316, %c0_317] : memref<16x2x8xbf16, #tpu.memory_space<vmem>>, vector<1x2x8xbf16>
    %346 = vector.shape_cast %345 : vector<1x2x8xbf16> to vector<2x8xbf16>
    %cst_318 = arith.constant dense<0.000000e+00> : vector<2x32xf32>
    %347 = tpu.matmul %346, %287, %cst_318 {dimension_numbers = #tpu.dot_dimension_numbers<[1], [0], [0], [1], [0, 0, 1, 1], [], []>} : vector<2x8xbf16>, vector<8x32xbf16>, vector<2x32xf32> -> vector<2x32xf32>
    %348 = arith.truncf %347 : vector<2x32xf32> to vector<2x32xbf16>
    %c7_319 = arith.constant 7 : index
    %c0_320 = arith.constant 0 : index
    %c0_321 = arith.constant 0 : index
    %349 = vector.load %arg10[%c7_319, %c0_320, %c0_321] : memref<16x32x32xbf16, #tpu.memory_space<vmem>>, vector<1x32x32xbf16>
    %350 = vector.shape_cast %349 : vector<1x32x32xbf16> to vector<32x32xbf16>
    %cst_322 = arith.constant dense<0.000000e+00> : vector<2x32xf32>
    %351 = tpu.matmul %348, %350, %cst_322 {dimension_numbers = #tpu.dot_dimension_numbers<[1], [0], [0], [1], [0, 0, 1, 1], [], []>} : vector<2x32xbf16>, vector<32x32xbf16>, vector<2x32xf32> -> vector<2x32xf32>
    %352 = arith.addf %344, %351 : vector<2x32xf32>
    %c8_323 = arith.constant 8 : index
    %c0_324 = arith.constant 0 : index
    %c0_325 = arith.constant 0 : index
    %353 = vector.load %arg9[%c8_323, %c0_324, %c0_325] : memref<16x2x8xbf16, #tpu.memory_space<vmem>>, vector<1x2x8xbf16>
    %354 = vector.shape_cast %353 : vector<1x2x8xbf16> to vector<2x8xbf16>
    %cst_326 = arith.constant dense<0.000000e+00> : vector<2x32xf32>
    %355 = tpu.matmul %354, %287, %cst_326 {dimension_numbers = #tpu.dot_dimension_numbers<[1], [0], [0], [1], [0, 0, 1, 1], [], []>} : vector<2x8xbf16>, vector<8x32xbf16>, vector<2x32xf32> -> vector<2x32xf32>
    %356 = arith.truncf %355 : vector<2x32xf32> to vector<2x32xbf16>
    %c8_327 = arith.constant 8 : index
    %c0_328 = arith.constant 0 : index
    %c0_329 = arith.constant 0 : index
    %357 = vector.load %arg10[%c8_327, %c0_328, %c0_329] : memref<16x32x32xbf16, #tpu.memory_space<vmem>>, vector<1x32x32xbf16>
    %358 = vector.shape_cast %357 : vector<1x32x32xbf16> to vector<32x32xbf16>
    %cst_330 = arith.constant dense<0.000000e+00> : vector<2x32xf32>
    %359 = tpu.matmul %356, %358, %cst_330 {dimension_numbers = #tpu.dot_dimension_numbers<[1], [0], [0], [1], [0, 0, 1, 1], [], []>} : vector<2x32xbf16>, vector<32x32xbf16>, vector<2x32xf32> -> vector<2x32xf32>
    %360 = arith.addf %352, %359 : vector<2x32xf32>
    %c9_331 = arith.constant 9 : index
    %c0_332 = arith.constant 0 : index
    %c0_333 = arith.constant 0 : index
    %361 = vector.load %arg9[%c9_331, %c0_332, %c0_333] : memref<16x2x8xbf16, #tpu.memory_space<vmem>>, vector<1x2x8xbf16>
    %362 = vector.shape_cast %361 : vector<1x2x8xbf16> to vector<2x8xbf16>
    %cst_334 = arith.constant dense<0.000000e+00> : vector<2x32xf32>
    %363 = tpu.matmul %362, %287, %cst_334 {dimension_numbers = #tpu.dot_dimension_numbers<[1], [0], [0], [1], [0, 0, 1, 1], [], []>} : vector<2x8xbf16>, vector<8x32xbf16>, vector<2x32xf32> -> vector<2x32xf32>
    %364 = arith.truncf %363 : vector<2x32xf32> to vector<2x32xbf16>
    %c9_335 = arith.constant 9 : index
    %c0_336 = arith.constant 0 : index
    %c0_337 = arith.constant 0 : index
    %365 = vector.load %arg10[%c9_335, %c0_336, %c0_337] : memref<16x32x32xbf16, #tpu.memory_space<vmem>>, vector<1x32x32xbf16>
    %366 = vector.shape_cast %365 : vector<1x32x32xbf16> to vector<32x32xbf16>
    %cst_338 = arith.constant dense<0.000000e+00> : vector<2x32xf32>
    %367 = tpu.matmul %364, %366, %cst_338 {dimension_numbers = #tpu.dot_dimension_numbers<[1], [0], [0], [1], [0, 0, 1, 1], [], []>} : vector<2x32xbf16>, vector<32x32xbf16>, vector<2x32xf32> -> vector<2x32xf32>
    %368 = arith.addf %360, %367 : vector<2x32xf32>
    %c10_339 = arith.constant 10 : index
    %c0_340 = arith.constant 0 : index
    %c0_341 = arith.constant 0 : index
    %369 = vector.load %arg9[%c10_339, %c0_340, %c0_341] : memref<16x2x8xbf16, #tpu.memory_space<vmem>>, vector<1x2x8xbf16>
    %370 = vector.shape_cast %369 : vector<1x2x8xbf16> to vector<2x8xbf16>
    %cst_342 = arith.constant dense<0.000000e+00> : vector<2x32xf32>
    %371 = tpu.matmul %370, %287, %cst_342 {dimension_numbers = #tpu.dot_dimension_numbers<[1], [0], [0], [1], [0, 0, 1, 1], [], []>} : vector<2x8xbf16>, vector<8x32xbf16>, vector<2x32xf32> -> vector<2x32xf32>
    %372 = arith.truncf %371 : vector<2x32xf32> to vector<2x32xbf16>
    %c10_343 = arith.constant 10 : index
    %c0_344 = arith.constant 0 : index
    %c0_345 = arith.constant 0 : index
    %373 = vector.load %arg10[%c10_343, %c0_344, %c0_345] : memref<16x32x32xbf16, #tpu.memory_space<vmem>>, vector<1x32x32xbf16>
    %374 = vector.shape_cast %373 : vector<1x32x32xbf16> to vector<32x32xbf16>
    %cst_346 = arith.constant dense<0.000000e+00> : vector<2x32xf32>
    %375 = tpu.matmul %372, %374, %cst_346 {dimension_numbers = #tpu.dot_dimension_numbers<[1], [0], [0], [1], [0, 0, 1, 1], [], []>} : vector<2x32xbf16>, vector<32x32xbf16>, vector<2x32xf32> -> vector<2x32xf32>
    %376 = arith.addf %368, %375 : vector<2x32xf32>
    %c11_347 = arith.constant 11 : index
    %c0_348 = arith.constant 0 : index
    %c0_349 = arith.constant 0 : index
    %377 = vector.load %arg9[%c11_347, %c0_348, %c0_349] : memref<16x2x8xbf16, #tpu.memory_space<vmem>>, vector<1x2x8xbf16>
    %378 = vector.shape_cast %377 : vector<1x2x8xbf16> to vector<2x8xbf16>
    %cst_350 = arith.constant dense<0.000000e+00> : vector<2x32xf32>
    %379 = tpu.matmul %378, %287, %cst_350 {dimension_numbers = #tpu.dot_dimension_numbers<[1], [0], [0], [1], [0, 0, 1, 1], [], []>} : vector<2x8xbf16>, vector<8x32xbf16>, vector<2x32xf32> -> vector<2x32xf32>
    %380 = arith.truncf %379 : vector<2x32xf32> to vector<2x32xbf16>
    %c11_351 = arith.constant 11 : index
    %c0_352 = arith.constant 0 : index
    %c0_353 = arith.constant 0 : index
    %381 = vector.load %arg10[%c11_351, %c0_352, %c0_353] : memref<16x32x32xbf16, #tpu.memory_space<vmem>>, vector<1x32x32xbf16>
    %382 = vector.shape_cast %381 : vector<1x32x32xbf16> to vector<32x32xbf16>
    %cst_354 = arith.constant dense<0.000000e+00> : vector<2x32xf32>
    %383 = tpu.matmul %380, %382, %cst_354 {dimension_numbers = #tpu.dot_dimension_numbers<[1], [0], [0], [1], [0, 0, 1, 1], [], []>} : vector<2x32xbf16>, vector<32x32xbf16>, vector<2x32xf32> -> vector<2x32xf32>
    %384 = arith.addf %376, %383 : vector<2x32xf32>
    %c12_355 = arith.constant 12 : index
    %c0_356 = arith.constant 0 : index
    %c0_357 = arith.constant 0 : index
    %385 = vector.load %arg9[%c12_355, %c0_356, %c0_357] : memref<16x2x8xbf16, #tpu.memory_space<vmem>>, vector<1x2x8xbf16>
    %386 = vector.shape_cast %385 : vector<1x2x8xbf16> to vector<2x8xbf16>
    %cst_358 = arith.constant dense<0.000000e+00> : vector<2x32xf32>
    %387 = tpu.matmul %386, %287, %cst_358 {dimension_numbers = #tpu.dot_dimension_numbers<[1], [0], [0], [1], [0, 0, 1, 1], [], []>} : vector<2x8xbf16>, vector<8x32xbf16>, vector<2x32xf32> -> vector<2x32xf32>
    %388 = arith.truncf %387 : vector<2x32xf32> to vector<2x32xbf16>
    %c12_359 = arith.constant 12 : index
    %c0_360 = arith.constant 0 : index
    %c0_361 = arith.constant 0 : index
    %389 = vector.load %arg10[%c12_359, %c0_360, %c0_361] : memref<16x32x32xbf16, #tpu.memory_space<vmem>>, vector<1x32x32xbf16>
    %390 = vector.shape_cast %389 : vector<1x32x32xbf16> to vector<32x32xbf16>
    %cst_362 = arith.constant dense<0.000000e+00> : vector<2x32xf32>
    %391 = tpu.matmul %388, %390, %cst_362 {dimension_numbers = #tpu.dot_dimension_numbers<[1], [0], [0], [1], [0, 0, 1, 1], [], []>} : vector<2x32xbf16>, vector<32x32xbf16>, vector<2x32xf32> -> vector<2x32xf32>
    %392 = arith.addf %384, %391 : vector<2x32xf32>
    %c13_363 = arith.constant 13 : index
    %c0_364 = arith.constant 0 : index
    %c0_365 = arith.constant 0 : index
    %393 = vector.load %arg9[%c13_363, %c0_364, %c0_365] : memref<16x2x8xbf16, #tpu.memory_space<vmem>>, vector<1x2x8xbf16>
    %394 = vector.shape_cast %393 : vector<1x2x8xbf16> to vector<2x8xbf16>
    %cst_366 = arith.constant dense<0.000000e+00> : vector<2x32xf32>
    %395 = tpu.matmul %394, %287, %cst_366 {dimension_numbers = #tpu.dot_dimension_numbers<[1], [0], [0], [1], [0, 0, 1, 1], [], []>} : vector<2x8xbf16>, vector<8x32xbf16>, vector<2x32xf32> -> vector<2x32xf32>
    %396 = arith.truncf %395 : vector<2x32xf32> to vector<2x32xbf16>
    %c13_367 = arith.constant 13 : index
    %c0_368 = arith.constant 0 : index
    %c0_369 = arith.constant 0 : index
    %397 = vector.load %arg10[%c13_367, %c0_368, %c0_369] : memref<16x32x32xbf16, #tpu.memory_space<vmem>>, vector<1x32x32xbf16>
    %398 = vector.shape_cast %397 : vector<1x32x32xbf16> to vector<32x32xbf16>
    %cst_370 = arith.constant dense<0.000000e+00> : vector<2x32xf32>
    %399 = tpu.matmul %396, %398, %cst_370 {dimension_numbers = #tpu.dot_dimension_numbers<[1], [0], [0], [1], [0, 0, 1, 1], [], []>} : vector<2x32xbf16>, vector<32x32xbf16>, vector<2x32xf32> -> vector<2x32xf32>
    %400 = arith.addf %392, %399 : vector<2x32xf32>
    %c14_371 = arith.constant 14 : index
    %c0_372 = arith.constant 0 : index
    %c0_373 = arith.constant 0 : index
    %401 = vector.load %arg9[%c14_371, %c0_372, %c0_373] : memref<16x2x8xbf16, #tpu.memory_space<vmem>>, vector<1x2x8xbf16>
    %402 = vector.shape_cast %401 : vector<1x2x8xbf16> to vector<2x8xbf16>
    %cst_374 = arith.constant dense<0.000000e+00> : vector<2x32xf32>
    %403 = tpu.matmul %402, %287, %cst_374 {dimension_numbers = #tpu.dot_dimension_numbers<[1], [0], [0], [1], [0, 0, 1, 1], [], []>} : vector<2x8xbf16>, vector<8x32xbf16>, vector<2x32xf32> -> vector<2x32xf32>
    %404 = arith.truncf %403 : vector<2x32xf32> to vector<2x32xbf16>
    %c14_375 = arith.constant 14 : index
    %c0_376 = arith.constant 0 : index
    %c0_377 = arith.constant 0 : index
    %405 = vector.load %arg10[%c14_375, %c0_376, %c0_377] : memref<16x32x32xbf16, #tpu.memory_space<vmem>>, vector<1x32x32xbf16>
    %406 = vector.shape_cast %405 : vector<1x32x32xbf16> to vector<32x32xbf16>
    %cst_378 = arith.constant dense<0.000000e+00> : vector<2x32xf32>
    %407 = tpu.matmul %404, %406, %cst_378 {dimension_numbers = #tpu.dot_dimension_numbers<[1], [0], [0], [1], [0, 0, 1, 1], [], []>} : vector<2x32xbf16>, vector<32x32xbf16>, vector<2x32xf32> -> vector<2x32xf32>
    %408 = arith.addf %400, %407 : vector<2x32xf32>
    %c15_379 = arith.constant 15 : index
    %c0_380 = arith.constant 0 : index
    %c0_381 = arith.constant 0 : index
    %409 = vector.load %arg9[%c15_379, %c0_380, %c0_381] : memref<16x2x8xbf16, #tpu.memory_space<vmem>>, vector<1x2x8xbf16>
    %410 = vector.shape_cast %409 : vector<1x2x8xbf16> to vector<2x8xbf16>
    %cst_382 = arith.constant dense<0.000000e+00> : vector<2x32xf32>
    %411 = tpu.matmul %410, %287, %cst_382 {dimension_numbers = #tpu.dot_dimension_numbers<[1], [0], [0], [1], [0, 0, 1, 1], [], []>} : vector<2x8xbf16>, vector<8x32xbf16>, vector<2x32xf32> -> vector<2x32xf32>
    %412 = arith.truncf %411 : vector<2x32xf32> to vector<2x32xbf16>
    %c15_383 = arith.constant 15 : index
    %c0_384 = arith.constant 0 : index
    %c0_385 = arith.constant 0 : index
    %413 = vector.load %arg10[%c15_383, %c0_384, %c0_385] : memref<16x32x32xbf16, #tpu.memory_space<vmem>>, vector<1x32x32xbf16>
    %414 = vector.shape_cast %413 : vector<1x32x32xbf16> to vector<32x32xbf16>
    %cst_386 = arith.constant dense<0.000000e+00> : vector<2x32xf32>
    %415 = tpu.matmul %412, %414, %cst_386 {dimension_numbers = #tpu.dot_dimension_numbers<[1], [0], [0], [1], [0, 0, 1, 1], [], []>} : vector<2x32xbf16>, vector<32x32xbf16>, vector<2x32xf32> -> vector<2x32xf32>
    %416 = arith.addf %408, %415 : vector<2x32xf32>
    %c0_387 = arith.constant 0 : index
    %c0_388 = arith.constant 0 : index
    %417 = vector.load %arg11[%c0_387, %c0_388] : memref<1x32xf32, #tpu.memory_space<vmem>>, vector<1x32xf32>
    %418 = vector.broadcast %417 : vector<1x32xf32> to vector<2x32xf32>
    %419 = arith.addf %416, %418 : vector<2x32xf32>
    %c0_389 = arith.constant 0 : index
    %c0_390 = arith.constant 0 : index
    %420 = vector.load %arg12[%c0_389, %c0_390] : memref<2x32xf32, #tpu.memory_space<vmem>>, vector<2x32xf32>
    tpu.vector_store %arg12[%c0_389, %c0_390], %419 {strides = array<i32>} : memref<2x32xf32, #tpu.memory_space<vmem>>, vector<2x32xf32>,
    return
  }
}

</mosaic_0001>

<llo_original>
// kernel: _forward_impl.1
$region0: #{_forward_impl.1}
  #allocation0 [shape = 'u32[]', space=smem, size = 0x4, offset = 0x4, fixed_abs, tag = 'smem constant byte address 0x4 - core index']
  #allocation1 [shape = 'u32[144,128]{1,0:T(1,128)}', space=vmem, size = 0x12000, scoped, tag = 'internal scratch']
  %s0 = inlined_call_operand.vmem [shape: bf16[128,48], index: 0, kind: input, shape index: {}]
  %s1 = inlined_call_operand.vmem [shape: bf16[48,8], index: 1, kind: input, shape index: {}]
  %s2 = inlined_call_operand.vmem [shape: f32[1,8], index: 2, kind: input, shape index: {}]
  %s3 = inlined_call_operand.vmem [shape: bf16[16,32,128], index: 3, kind: input, shape index: {}]
  %s4 = inlined_call_operand.vmem [shape: bf16[16,8,16], index: 4, kind: input, shape index: {}]
  %s5 = inlined_call_operand.vmem [shape: f32[1,16], index: 5, kind: input, shape index: {}]
  %s6 = inlined_call_operand.vmem [shape: bf16[16,8,32], index: 6, kind: input, shape index: {}]
  %s7 = inlined_call_operand.vmem [shape: bf16[16,16,32], index: 7, kind: input, shape index: {}]
  %s8 = inlined_call_operand.vmem [shape: f32[1,32], index: 8, kind: input, shape index: {}, may-alias: {8,11}]
  %s9 = inlined_call_operand.vmem [shape: bf16[16,2,8], index: 9, kind: input, shape index: {}]
  %s10 = inlined_call_operand.vmem [shape: bf16[16,32,32], index: 10, kind: input, shape index: {}]
  %s11 = inlined_call_operand.vmem [shape: f32[1,32], index: 11, kind: input, shape index: {}, may-alias: {8,11}]
  %s12 = inlined_call_operand.hbm [shape: f32[2,32], index: 12, kind: output, shape index: {}]
  %s13 = sld [smem:[#allocation0]]
  $region58: #{_forward_impl.1} parent=0
    _
  %s15 = ssub.s32 1, %s13
  %s16 = scalar_select 0, %s15, %s13
  $region1: #{_forward_impl.1} parent=0
    #allocation2 [shape = 'u8[1024]{0}', space=vmem, size = 0x400, scoped, tag = 'output window, operand 0, single buffered']
    #allocation3 [shape = 's32[1]{0}', space=sflag, size = 0x4, scoped, tag = 'scoped memory for _forward_impl.1']
    %17 = vsyncpa [#allocation3], 0
    // Predicated region
    $region2: #{_forward_impl.1} parent=1 // pred_check
      _
    $region3: #{_forward_impl.1} parent=1 // pred_check_branch
      %19 = sbr.rel (0) target = $region5
    $region4: #{_forward_impl.1} parent=1 // pred_region
      _
    $region5: #{_forward_impl.1} parent=1 // pred_fallthru
      _
    // Predicated region
    $region6: #{_forward_impl.1} parent=1 // pred_check
      _
    $region7: #{_forward_impl.1} parent=1 // pred_check_branch
      %21 = sbr.rel (0) target = $region9
    $region8: #{_forward_impl.1} parent=1 // pred_region
      _
    $region9: #{_forward_impl.1} parent=1 // pred_fallthru
      _
    // Predicated region
    $region10: #{_forward_impl.1} parent=1 // pred_check
      _
    $region11: #{_forward_impl.1} parent=1 // pred_check_branch
      %23 = sbr.rel (0) target = $region13
    $region12: #{_forward_impl.1} parent=1 // pred_region
      _
    $region13: #{_forward_impl.1} parent=1 // pred_fallthru
      _
    // Predicated region
    $region14: #{_forward_impl.1} parent=1 // pred_check
      _
    $region15: #{_forward_impl.1} parent=1 // pred_check_branch
      %25 = sbr.rel (0) target = $region17
    $region16: #{_forward_impl.1} parent=1 // pred_region
      _
    $region17: #{_forward_impl.1} parent=1 // pred_fallthru
      _
    // Predicated region
    $region18: #{_forward_impl.1} parent=1 // pred_check
      _
    $region19: #{_forward_impl.1} parent=1 // pred_check_branch
      %27 = sbr.rel (0) target = $region21
    $region20: #{_forward_impl.1} parent=1 // pred_region
      _
    $region21: #{_forward_impl.1} parent=1 // pred_fallthru
      _
    // Predicated region
    $region22: #{_forward_impl.1} parent=1 // pred_check
      _
    $region23: #{_forward_impl.1} parent=1 // pred_check_branch
      %29 = sbr.rel (0) target = $region25
    $region24: #{_forward_impl.1} parent=1 // pred_region
      _
    $region25: #{_forward_impl.1} parent=1 // pred_fallthru
      _
    // Predicated region
    $region26: #{_forward_impl.1} parent=1 // pred_check
      _
    $region27: #{_forward_impl.1} parent=1 // pred_check_branch
      %31 = sbr.rel (0) target = $region29
    $region28: #{_forward_impl.1} parent=1 // pred_region
      _
    $region29: #{_forward_impl.1} parent=1 // pred_fallthru
      _
    // Predicated region
    $region30: #{_forward_impl.1} parent=1 // pred_check
      _
    $region31: #{_forward_impl.1} parent=1 // pred_check_branch
      %33 = sbr.rel (0) target = $region33
    $region32: #{_forward_impl.1} parent=1 // pred_region
      _
    $region33: #{_forward_impl.1} parent=1 // pred_fallthru
      _
    // Predicated region
    $region34: #{_forward_impl.1} parent=1 // pred_check
      _
    $region35: #{_forward_impl.1} parent=1 // pred_check_branch
      %35 = sbr.rel (0) target = $region37
    $region36: #{_forward_impl.1} parent=1 // pred_region
      _
    $region37: #{_forward_impl.1} parent=1 // pred_fallthru
      _
    // Predicated region
    $region38: #{_forward_impl.1} parent=1 // pred_check
      _
    $region39: #{_forward_impl.1} parent=1 // pred_check_branch
      %37 = sbr.rel (0) target = $region41
    $region40: #{_forward_impl.1} parent=1 // pred_region
      _
    $region41: #{_forward_impl.1} parent=1 // pred_fallthru
      _
    // Predicated region
    $region42: #{_forward_impl.1} parent=1 // pred_check
      _
    $region43: #{_forward_impl.1} parent=1 // pred_check_branch
      %39 = sbr.rel (0) target = $region45
    $region44: #{_forward_impl.1} parent=1 // pred_region
      _
    $region45: #{_forward_impl.1} parent=1 // pred_fallthru
      _
    // Predicated region
    $region46: #{_forward_impl.1} parent=1 // pred_check
      _
    $region47: #{_forward_impl.1} parent=1 // pred_check_branch
      %41 = sbr.rel (0) target = $region49
    $region48: #{_forward_impl.1} parent=1 // pred_region
      _
    $region49: #{_forward_impl.1} parent=1 // pred_fallthru
      _
    %v43 = vld [vmem:[%s0] sm:$0xf]
    %v44 = vld [vmem:[%s0 + $0x4] sm:$0xf]
    %v45 = vld [vmem:[%s0 + $0x8] sm:$0xf]
    %v46 = vld [vmem:[%s0 + $0xc] sm:$0xf]
    %v47 = vld [vmem:[%s0 + $0x10] sm:$0xf]
    %v48 = vld [vmem:[%s0 + $0x14] sm:$0xf]
    %v49 = vld [vmem:[%s0 + $0x18] sm:$0xf]
    %v50 = vld [vmem:[%s0 + $0x1c] sm:$0xf]
    %v51 = vld [vmem:[%s0 + $0x20] sm:$0xf]
    %v52 = vld [vmem:[%s0 + $0x24] sm:$0xf]
    %v53 = vld [vmem:[%s0 + $0x28] sm:$0xf]
    %v54 = vld [vmem:[%s0 + $0x2c] sm:$0xf]
    %v55 = vld [vmem:[%s0 + $0x30] sm:$0xf]
    %v56 = vld [vmem:[%s0 + $0x34] sm:$0xf]
    %v57 = vld [vmem:[%s0 + $0x38] sm:$0xf]
    %v58 = vld [vmem:[%s0 + $0x3c] sm:$0xf]
    %v59 = vld [vmem:[%s1] sm:$0xf]
    %v60 = vld [vmem:[%s1 + $0x4] sm:$0xf]
    %v61 = vld [vmem:[%s1 + $0x8] sm:$0xf]
    %v62 = vld [vmem:[%s1 + $0xc] sm:$0xf]
    %v63 = vld [vmem:[%s1 + $0x10] sm:$0xf]
    %v64 = vld [vmem:[%s1 + $0x14] sm:$0xf]
    %v65 = vld [vmem:[%s2] sm:$0x1]
    %v67 = vlaneseq
    %v68 = vshrl.u32 %v67, 7
    %v69 = vsub.s32 0, %v68
    %v70 = vrot.slane %v65, %v69
    %v88 = vunpack.c.l.b16 %v43
    %v89 = vunpack.c.l.b16 %v44
    %v90 = vunpack.c.l.b16 %v45
    %v91 = vunpack.c.l.b16 %v46
    %v92 = vunpack.c.l.b16 %v47
    %v93 = vunpack.c.l.b16 %v48
    %v94 = vunpack.c.l.b16 %v49
    %v95 = vunpack.c.l.b16 %v50
    %v96 = vunpack.c.l.b16 %v51
    %v97 = vunpack.c.l.b16 %v52
    %v98 = vunpack.c.l.b16 %v53
    %v99 = vunpack.c.l.b16 %v54
    %v100 = vunpack.c.l.b16 %v55
    %v101 = vunpack.c.l.b16 %v56
    %v102 = vunpack.c.l.b16 %v57
    %v103 = vunpack.c.l.b16 %v58
    %v104 = vpack.c.b16 %v89, %v88
    %v105 = vpack.c.b16 %v91, %v90
    %v106 = vpack.c.b16 %v93, %v92
    %v107 = vpack.c.b16 %v95, %v94
    %v108 = vpack.c.b16 %v97, %v96
    %v109 = vpack.c.b16 %v99, %v98
    %v110 = vpack.c.b16 %v101, %v100
    %v111 = vpack.c.b16 %v103, %v102
    %v118 = vunpack.c.l.b16 %v59
    %v119 = vunpack.c.l.b16 %v60
    %v120 = vunpack.c.l.b16 %v61
    %v121 = vunpack.c.l.b16 %v62
    %v122 = vunpack.c.l.b16 %v63
    %v123 = vunpack.c.l.b16 %v64
    %v124 = vpack.c.b16 %v119, %v118
    %v125 = vpack.c.b16 %v121, %v120
    %v126 = vpack.c.b16 %v123, %v122
    %vm130 = vcmask 392192
    %v132 = vsel %vm130, %v104, 0
    %v135 = vsel %vm130, %v105, 0
    %v138 = vsel %vm130, %v106, 0
    %v141 = vsel %vm130, %v107, 0
    %v144 = vsel %vm130, %v108, 0
    %v147 = vsel %vm130, %v109, 0
    %v150 = vsel %vm130, %v110, 0
    %v153 = vsel %vm130, %v111, 0
    %155 = vmatprep.subr.bf16.mxu0 0
    %156 = vmatpush1.bf16.msra.mxu0 %v124
    %157 = vmatprep.subr.bf16.mxu0 0
    %158 = vmatpush1.bf16.msra.mxu0 %v125
    %159 = vmatprep.subr.bf16.mxu0 0
    %160 = vmatpush1.bf16.msra.mxu0 %v126
    %161 = vmatprep.subr.bf16.mxu0 0
    %162 = vmatpush1.bf16.msra.mxu0 0
    %163 = vmatprep.subr.bf16.mxu0 0
    %164 = vmatpush1.bf16.msra.mxu0 0
    %165 = vmatprep.subr.bf16.mxu0 0
    %166 = vmatpush1.bf16.msra.mxu0 0
    %167 = vmatprep.subr.bf16.mxu0 0
    %168 = vmatpush1.bf16.msra.mxu0 0
    %169 = vmatprep.subr.bf16.mxu0 0
    %170 = vmatpush1.bf16.msra.mxu0 0
    %171 = vmatprep.subr.bf16.mxu0 0
    %172 = vmatpush1.bf16.msra.mxu0 0
    %173 = vmatprep.subr.bf16.mxu0 0
    %174 = vmatpush1.bf16.msra.mxu0 0
    %175 = vmatprep.subr.bf16.mxu0 0
    %176 = vmatpush1.bf16.msra.mxu0 0
    %177 = vmatprep.subr.bf16.mxu0 0
    %178 = vmatpush1.bf16.msra.mxu0 0
    %179 = vmatprep.subr.bf16.mxu0 0
    %180 = vmatpush1.bf16.msra.mxu0 0
    %181 = vmatprep.subr.bf16.mxu0 0
    %182 = vmatpush1.bf16.msra.mxu0 0
    %183 = vmatprep.subr.bf16.mxu0 0
    %184 = vmatpush1.bf16.msra.mxu0 0
    %185 = vmatprep.subr.bf16.mxu0 0
    %186 = vmatpush1.bf16.msra.mxu0 0
    %187 = vmatprep.mubr.bf16.mxu0 0
    %188 = vmatmul.mubr.bf16.gmra.mrb[0].mxu0 %v132
    %v189 = vpop.f32.mrb[0].mxu0
    %v190 = vadd.f32 %v70, %v189
    %v191 = vpop.f32.mrb[0].mxu0
    %v192 = vpop.f32.mrb[0].mxu0
    %v193 = vadd.f32 %v70, %v192
    %v194 = vpop.f32.mrb[0].mxu0
    %195 = vmatprep.mubr.bf16.mxu0 0
    %196 = vmatmul.mubr.bf16.gmra.mrb[0].mxu0 %v135
    %v197 = vpop.f32.mrb[0].mxu0
    %v198 = vadd.f32 %v70, %v197
    %v199 = vpop.f32.mrb[0].mxu0
    %v200 = vpop.f32.mrb[0].mxu0
    %v201 = vadd.f32 %v70, %v200
    %v202 = vpop.f32.mrb[0].mxu0
    %203 = vmatprep.mubr.bf16.mxu0 0
    %204 = vmatmul.mubr.bf16.gmra.mrb[0].mxu0 %v138
    %v205 = vpop.f32.mrb[0].mxu0
    %v206 = vadd.f32 %v70, %v205
    %v207 = vpop.f32.mrb[0].mxu0
    %v208 = vpop.f32.mrb[0].mxu0
    %v209 = vadd.f32 %v70, %v208
    %v210 = vpop.f32.mrb[0].mxu0
    %211 = vmatprep.mubr.bf16.mxu0 0
    %212 = vmatmul.mubr.bf16.gmra.mrb[0].mxu0 %v141
    %v213 = vpop.f32.mrb[0].mxu0
    %v214 = vadd.f32 %v70, %v213
    %v215 = vpop.f32.mrb[0].mxu0
    %v216 = vpop.f32.mrb[0].mxu0
    %v217 = vadd.f32 %v70, %v216
    %v218 = vpop.f32.mrb[0].mxu0
    %219 = vmatprep.mubr.bf16.mxu0 0
    %220 = vmatmul.mubr.bf16.gmra.mrb[0].mxu0 %v144
    %v221 = vpop.f32.mrb[0].mxu0
    %v222 = vadd.f32 %v70, %v221
    %v223 = vpop.f32.mrb[0].mxu0
    %v224 = vpop.f32.mrb[0].mxu0
    %v225 = vadd.f32 %v70, %v224
    %v226 = vpop.f32.mrb[0].mxu0
    %227 = vmatprep.mubr.bf16.mxu0 0
    %228 = vmatmul.mubr.bf16.gmra.mrb[0].mxu0 %v147
    %v229 = vpop.f32.mrb[0].mxu0
    %v230 = vadd.f32 %v70, %v229
    %v231 = vpop.f32.mrb[0].mxu0
    %v232 = vpop.f32.mrb[0].mxu0
    %v233 = vadd.f32 %v70, %v232
    %v234 = vpop.f32.mrb[0].mxu0
    %235 = vmatprep.mubr.bf16.mxu0 0
    %236 = vmatmul.mubr.bf16.gmra.mrb[0].mxu0 %v150
    %v237 = vpop.f32.mrb[0].mxu0
    %v238 = vadd.f32 %v70, %v237
    %v239 = vpop.f32.mrb[0].mxu0
    %v240 = vpop.f32.mrb[0].mxu0
    %v241 = vadd.f32 %v70, %v240
    %v242 = vpop.f32.mrb[0].mxu0
    %243 = vmatprep.mubr.bf16.mxu0 0
    %244 = vmatmul.mubr.bf16.gmra.mrb[0].mxu0 %v153
    %v245 = vpop.f32.mrb[0].mxu0
    %v246 = vadd.f32 %v70, %v245
    %v247 = vpop.f32.mrb[0].mxu0
    %v248 = vpop.f32.mrb[0].mxu0
    %v249 = vadd.f32 %v70, %v248
    %v250 = vpop.f32.mrb[0].mxu0
    %251 = vdwg.mxu0
    %vm252 = vcmp.gt.f32.partialorder %v190, 0.0
    %vm253 = vcmp.gt.f32.partialorder %v193, 0.0
    %vm254 = vcmp.gt.f32.partialorder %v198, 0.0
    %vm255 = vcmp.gt.f32.partialorder %v201, 0.0
    %vm256 = vcmp.gt.f32.partialorder %v206, 0.0
    %vm257 = vcmp.gt.f32.partialorder %v209, 0.0
    %vm258 = vcmp.gt.f32.partialorder %v214, 0.0
    %vm259 = vcmp.gt.f32.partialorder %v217, 0.0
    %vm260 = vcmp.gt.f32.partialorder %v222, 0.0
    %vm261 = vcmp.gt.f32.partialorder %v225, 0.0
    %vm262 = vcmp.gt.f32.partialorder %v230, 0.0
    %vm263 = vcmp.gt.f32.partialorder %v233, 0.0
    %vm264 = vcmp.gt.f32.partialorder %v238, 0.0
    %vm265 = vcmp.gt.f32.partialorder %v241, 0.0
    %vm266 = vcmp.gt.f32.partialorder %v246, 0.0
    %vm267 = vcmp.gt.f32.partialorder %v249, 0.0
    %v268 = vmul.f32 %v190, 0.2
    %v269 = vmul.f32 %v193, 0.2
    %v270 = vmul.f32 %v198, 0.2
    %v271 = vmul.f32 %v201, 0.2
    %v272 = vmul.f32 %v206, 0.2
    %v273 = vmul.f32 %v209, 0.2
    %v274 = vmul.f32 %v214, 0.2
    %v275 = vmul.f32 %v217, 0.2
    %v276 = vmul.f32 %v222, 0.2
    %v277 = vmul.f32 %v225, 0.2
    %v278 = vmul.f32 %v230, 0.2
    %v279 = vmul.f32 %v233, 0.2
    %v280 = vmul.f32 %v238, 0.2
    %v281 = vmul.f32 %v241, 0.2
    %v282 = vmul.f32 %v246, 0.2
    %v283 = vmul.f32 %v249, 0.2
    %v284 = vsel %vm252, %v190, %v268
    %v285 = vsel %vm253, %v193, %v269
    %v286 = vsel %vm254, %v198, %v270
    %v287 = vsel %vm255, %v201, %v271
    %v288 = vsel %vm256, %v206, %v272
    %v289 = vsel %vm257, %v209, %v273
    %v290 = vsel %vm258, %v214, %v274
    %v291 = vsel %vm259, %v217, %v275
    %v292 = vsel %vm260, %v222, %v276
    %v293 = vsel %vm261, %v225, %v277
    %v294 = vsel %vm262, %v230, %v278
    %v295 = vsel %vm263, %v233, %v279
    %v296 = vsel %vm264, %v238, %v280
    %v297 = vsel %vm265, %v241, %v281
    %v298 = vsel %vm266, %v246, %v282
    %v299 = vsel %vm267, %v249, %v283
    %v300 = vpack.c.bf16 %v285, %v284
    %v301 = vpack.c.bf16 %v287, %v286
    %v302 = vpack.c.bf16 %v289, %v288
    %v303 = vpack.c.bf16 %v291, %v290
    %v304 = vpack.c.bf16 %v293, %v292
    %v305 = vpack.c.bf16 %v295, %v294
    %v306 = vpack.c.bf16 %v297, %v296
    %v307 = vpack.c.bf16 %v299, %v298
    %v308 = vld [vmem:[%s3] sm:$0xf]
    %v309 = vld [vmem:[%s3 + $0x4] sm:$0xf]
    %v310 = vld [vmem:[%s3 + $0x8] sm:$0xf]
    %v311 = vld [vmem:[%s3 + $0xc] sm:$0xf]
    %v316 = vunpack.c.l.b16 %v308
    %v317 = vunpack.c.l.b16 %v309
    %v318 = vunpack.c.l.b16 %v310
    %v319 = vunpack.c.l.b16 %v311
    %v320 = vpack.c.b16 %v317, %v316
    %v321 = vpack.c.b16 %v319, %v318
    %324 = vmatprep.subr.bf16.mxu0 0
    %325 = vmatpush1.bf16.msra.mxu0 %v300
    %326 = vmatprep.subr.bf16.mxu0 0
    %327 = vmatpush1.bf16.msra.mxu0 %v301
    %328 = vmatprep.subr.bf16.mxu0 0
    %329 = vmatpush1.bf16.msra.mxu0 %v302
    %330 = vmatprep.subr.bf16.mxu0 0
    %331 = vmatpush1.bf16.msra.mxu0 %v303
    %332 = vmatprep.subr.bf16.mxu0 0
    %333 = vmatpush1.bf16.msra.mxu0 %v304
    %334 = vmatprep.subr.bf16.mxu0 0
    %335 = vmatpush1.bf16.msra.mxu0 %v305
    %336 = vmatprep.subr.bf16.mxu0 0
    %337 = vmatpush1.bf16.msra.mxu0 %v306
    %338 = vmatprep.subr.bf16.mxu0 0
    %339 = vmatpush1.bf16.msra.mxu0 %v307
    %340 = vmatprep.subr.bf16.mxu0 0
    %341 = vmatpush1.bf16.msra.mxu0 0
    %342 = vmatprep.subr.bf16.mxu0 0
    %343 = vmatpush1.bf16.msra.mxu0 0
    %344 = vmatprep.subr.bf16.mxu0 0
    %345 = vmatpush1.bf16.msra.mxu0 0
    %346 = vmatprep.subr.bf16.mxu0 0
    %347 = vmatpush1.bf16.msra.mxu0 0
    %348 = vmatprep.subr.bf16.mxu0 0
    %349 = vmatpush1.bf16.msra.mxu0 0
    %350 = vmatprep.subr.bf16.mxu0 0
    %351 = vmatpush1.bf16.msra.mxu0 0
    %352 = vmatprep.subr.bf16.mxu0 0
    %353 = vmatpush1.bf16.msra.mxu0 0
    %354 = vmatprep.subr.bf16.mxu0 0
    %355 = vmatpush1.bf16.msra.mxu0 0
    %356 = vmatprep.mubr.bf16.mxu0 0
    %357 = vmatmul.mubr.bf16.gmra.mrb[0].mxu0 %v320
    %v358 = vpop.f32.mrb[0].mxu0
    %v359 = vadd.f32 0.0, %v358
    %v360 = vpop.f32.mrb[0].mxu0
    %v361 = vpop.f32.mrb[0].mxu0
    %v362 = vadd.f32 0.0, %v361
    %v363 = vpop.f32.mrb[0].mxu0
    %364 = vmatprep.mubr.bf16.mxu0 0
    %365 = vmatmul.mubr.bf16.gmra.mrb[0].mxu0 %v321
    %v366 = vpop.f32.mrb[0].mxu0
    %v367 = vadd.f32 0.0, %v366
    %v368 = vpop.f32.mrb[0].mxu0
    %v369 = vpop.f32.mrb[0].mxu0
    %v370 = vadd.f32 0.0, %v369
    %v371 = vpop.f32.mrb[0].mxu0
    %372 = vdwg.mxu0
    %v373 = vpack.c.bf16 %v362, %v359
    %v374 = vpack.c.bf16 %v370, %v367
    %v375 = vld [vmem:[%s4] sm:$0xf]
    %s376 = scalar_lea.vmem %s3, 16
    %v377 = vld [vmem:[%s376] sm:$0xf]
    %v378 = vld [vmem:[%s376 + $0x4] sm:$0xf]
    %v379 = vld [vmem:[%s376 + $0x8] sm:$0xf]
    %v380 = vld [vmem:[%s376 + $0xc] sm:$0xf]
    %v385 = vunpack.c.l.b16 %v377
    %v386 = vunpack.c.l.b16 %v378
    %v387 = vunpack.c.l.b16 %v379
    %v388 = vunpack.c.l.b16 %v380
    %v389 = vpack.c.b16 %v386, %v385
    %v390 = vpack.c.b16 %v388, %v387
    %393 = vmatprep.subr.bf16.mxu0 0
    %394 = vmatpush1.bf16.msra.mxu0 %v300
    %395 = vmatprep.subr.bf16.mxu0 0
    %396 = vmatpush1.bf16.msra.mxu0 %v301
    %397 = vmatprep.subr.bf16.mxu0 0
    %398 = vmatpush1.bf16.msra.mxu0 %v302
    %399 = vmatprep.subr.bf16.mxu0 0
    %400 = vmatpush1.bf16.msra.mxu0 %v303
    %401 = vmatprep.subr.bf16.mxu0 0
    %402 = vmatpush1.bf16.msra.mxu0 %v304
    %403 = vmatprep.subr.bf16.mxu0 0
    %404 = vmatpush1.bf16.msra.mxu0 %v305
    %405 = vmatprep.subr.bf16.mxu0 0
    %406 = vmatpush1.bf16.msra.mxu0 %v306
    %407 = vmatprep.subr.bf16.mxu0 0
    %408 = vmatpush1.bf16.msra.mxu0 %v307
    %409 = vmatprep.subr.bf16.mxu0 0
    %410 = vmatpush1.bf16.msra.mxu0 0
    %411 = vmatprep.subr.bf16.mxu0 0
    %412 = vmatpush1.bf16.msra.mxu0 0
    %413 = vmatprep.subr.bf16.mxu0 0
    %414 = vmatpush1.bf16.msra.mxu0 0
    %415 = vmatprep.subr.bf16.mxu0 0
    %416 = vmatpush1.bf16.msra.mxu0 0
    %417 = vmatprep.subr.bf16.mxu0 0
    %418 = vmatpush1.bf16.msra.mxu0 0
    %419 = vmatprep.subr.bf16.mxu0 0
    %420 = vmatpush1.bf16.msra.mxu0 0
    %421 = vmatprep.subr.bf16.mxu0 0
    %422 = vmatpush1.bf16.msra.mxu0 0
    %423 = vmatprep.subr.bf16.mxu0 0
    %424 = vmatpush1.bf16.msra.mxu0 0
    %425 = vmatprep.mubr.bf16.mxu0 0
    %426 = vmatmul.mubr.bf16.gmra.mrb[0].mxu0 %v389
    %v427 = vpop.f32.mrb[0].mxu0
    %v428 = vadd.f32 0.0, %v427
    %v429 = vpop.f32.mrb[0].mxu0
    %v430 = vpop.f32.mrb[0].mxu0
    %v431 = vadd.f32 0.0, %v430
    %v432 = vpop.f32.mrb[0].mxu0
    %433 = vmatprep.mubr.bf16.mxu0 0
    %434 = vmatmul.mubr.bf16.gmra.mrb[0].mxu0 %v390
    %v435 = vpop.f32.mrb[0].mxu0
    %v436 = vadd.f32 0.0, %v435
    %v437 = vpop.f32.mrb[0].mxu0
    %v438 = vpop.f32.mrb[0].mxu0
    %v439 = vadd.f32 0.0, %v438
    %v440 = vpop.f32.mrb[0].mxu0
    %441 = vdwg.mxu0
    %v442 = vpack.c.bf16 %v431, %v428
    %v443 = vpack.c.bf16 %v439, %v436
    %s444 = scalar_lea.vmem %s4, 4
    %v445 = vld [vmem:[%s444] sm:$0xf]
    %vm446 = vcmask 64512
    %v448 = vsel %vm446, %v442, 0
    %v451 = vsel %vm446, %v443, 0
    %vm453 = vcmask 1043456
    %v455 = vsel %vm453, %v445, 0
    %457 = vmatprep.subr.bf16.mxu0 0
    %458 = vmatpush1.bf16.msra.mxu0 %v455
    %459 = vmatprep.subr.bf16.mxu0 0
    %460 = vmatpush1.bf16.msra.mxu0 0
    %461 = vmatprep.subr.bf16.mxu0 0
    %462 = vmatpush1.bf16.msra.mxu0 0
    %463 = vmatprep.subr.bf16.mxu0 0
    %464 = vmatpush1.bf16.msra.mxu0 0
    %465 = vmatprep.subr.bf16.mxu0 0
    %466 = vmatpush1.bf16.msra.mxu0 0
    %467 = vmatprep.subr.bf16.mxu0 0
    %468 = vmatpush1.bf16.msra.mxu0 0
    %469 = vmatprep.subr.bf16.mxu0 0
    %470 = vmatpush1.bf16.msra.mxu0 0
    %471 = vmatprep.subr.bf16.mxu0 0
    %472 = vmatpush1.bf16.msra.mxu0 0
    %473 = vmatprep.subr.bf16.mxu0 0
    %474 = vmatpush1.bf16.msra.mxu0 0
    %475 = vmatprep.subr.bf16.mxu0 0
    %476 = vmatpush1.bf16.msra.mxu0 0
    %477 = vmatprep.subr.bf16.mxu0 0
    %478 = vmatpush1.bf16.msra.mxu0 0
    %479 = vmatprep.subr.bf16.mxu0 0
    %480 = vmatpush1.bf16.msra.mxu0 0
    %481 = vmatprep.subr.bf16.mxu0 0
    %482 = vmatpush1.bf16.msra.mxu0 0
    %483 = vmatprep.subr.bf16.mxu0 0
    %484 = vmatpush1.bf16.msra.mxu0 0
    %485 = vmatprep.subr.bf16.mxu0 0
    %486 = vmatpush1.bf16.msra.mxu0 0
    %487 = vmatprep.subr.bf16.mxu0 0
    %488 = vmatpush1.bf16.msra.mxu0 0
    %489 = vmatprep.mubr.bf16.mxu0 0
    %490 = vmatmul.mubr.bf16.gmra.mrb[0].mxu0 %v448
    %v491 = vpop.f32.mrb[0].mxu0
    %v492 = vadd.f32 0.0, %v491
    %v493 = vpop.f32.mrb[0].mxu0
    %v494 = vpop.f32.mrb[0].mxu0
    %v495 = vadd.f32 0.0, %v494
    %v496 = vpop.f32.mrb[0].mxu0
    %497 = vmatprep.mubr.bf16.mxu0 0
    %498 = vmatmul.mubr.bf16.gmra.mrb[0].mxu0 %v451
    %v499 = vpop.f32.mrb[0].mxu0
    %v500 = vadd.f32 0.0, %v499
    %v501 = vpop.f32.mrb[0].mxu0
    %v502 = vpop.f32.mrb[0].mxu0
    %v503 = vadd.f32 0.0, %v502
    %v504 = vpop.f32.mrb[0].mxu0
    %505 = vdwg.mxu0
    %v507 = vsel %vm446, %v373, 0
    %v510 = vsel %vm446, %v374, 0
    %v513 = vsel %vm453, %v375, 0
    %515 = vmatprep.subr.bf16.mxu0 0
    %516 = vmatpush1.bf16.msra.mxu0 %v513
    %517 = vmatprep.subr.bf16.mxu0 0
    %518 = vmatpush1.bf16.msra.mxu0 0
    %519 = vmatprep.subr.bf16.mxu0 0
    %520 = vmatpush1.bf16.msra.mxu0 0
    %521 = vmatprep.subr.bf16.mxu0 0
    %522 = vmatpush1.bf16.msra.mxu0 0
    %523 = vmatprep.subr.bf16.mxu0 0
    %524 = vmatpush1.bf16.msra.mxu0 0
    %525 = vmatprep.subr.bf16.mxu0 0
    %526 = vmatpush1.bf16.msra.mxu0 0
    %527 = vmatprep.subr.bf16.mxu0 0
    %528 = vmatpush1.bf16.msra.mxu0 0
    %529 = vmatprep.subr.bf16.mxu0 0
    %530 = vmatpush1.bf16.msra.mxu0 0
    %531 = vmatprep.subr.bf16.mxu0 0
    %532 = vmatpush1.bf16.msra.mxu0 0
    %533 = vmatprep.subr.bf16.mxu0 0
    %534 = vmatpush1.bf16.msra.mxu0 0
    %535 = vmatprep.subr.bf16.mxu0 0
    %536 = vmatpush1.bf16.msra.mxu0 0
    %537 = vmatprep.subr.bf16.mxu0 0
    %538 = vmatpush1.bf16.msra.mxu0 0
    %539 = vmatprep.subr.bf16.mxu0 0
    %540 = vmatpush1.bf16.msra.mxu0 0
    %541 = vmatprep.subr.bf16.mxu0 0
    %542 = vmatpush1.bf16.msra.mxu0 0
    %543 = vmatprep.subr.bf16.mxu0 0
    %544 = vmatpush1.bf16.msra.mxu0 0
    %545 = vmatprep.subr.bf16.mxu0 0
    %546 = vmatpush1.bf16.msra.mxu0 0
    %547 = vmatprep.mubr.bf16.mxu0 0
    %548 = vmatmul.mubr.bf16.gmra.mrb[0].mxu0 %v507
    %v549 = vpop.f32.mrb[0].mxu0
    %v550 = vadd.f32 %v492, %v549
    %v551 = vpop.f32.mrb[0].mxu0
    %v552 = vpop.f32.mrb[0].mxu0
    %v553 = vadd.f32 %v495, %v552
    %v554 = vpop.f32.mrb[0].mxu0
    %555 = vmatprep.mubr.bf16.mxu0 0
    %556 = vmatmul.mubr.bf16.gmra.mrb[0].mxu0 %v510
    %v557 = vpop.f32.mrb[0].mxu0
    %v558 = vadd.f32 %v500, %v557
    %v559 = vpop.f32.mrb[0].mxu0
    %v560 = vpop.f32.mrb[0].mxu0
    %v561 = vadd.f32 %v503, %v560
    %v562 = vpop.f32.mrb[0].mxu0
    %563 = vdwg.mxu0
    %s564 = scalar_lea.vmem %s3, 32
    %v565 = vld [vmem:[%s564] sm:$0xf]
    %v566 = vld [vmem:[%s564 + $0x4] sm:$0xf]
    %v567 = vld [vmem:[%s564 + $0x8] sm:$0xf]
    %v568 = vld [vmem:[%s564 + $0xc] sm:$0xf]
    %v573 = vunpack.c.l.b16 %v565
    %v574 = vunpack.c.l.b16 %v566
    %v575 = vunpack.c.l.b16 %v567
    %v576 = vunpack.c.l.b16 %v568
    %v577 = vpack.c.b16 %v574, %v573
    %v578 = vpack.c.b16 %v576, %v575
    %581 = vmatprep.subr.bf16.mxu0 0
    %582 = vmatpush1.bf16.msra.mxu0 %v300
    %583 = vmatprep.subr.bf16.mxu0 0
    %584 = vmatpush1.bf16.msra.mxu0 %v301
    %585 = vmatprep.subr.bf16.mxu0 0
    %586 = vmatpush1.bf16.msra.mxu0 %v302
    %587 = vmatprep.subr.bf16.mxu0 0
    %588 = vmatpush1.bf16.msra.mxu0 %v303
    %589 = vmatprep.subr.bf16.mxu0 0
    %590 = vmatpush1.bf16.msra.mxu0 %v304
    %591 = vmatprep.subr.bf16.mxu0 0
    %592 = vmatpush1.bf16.msra.mxu0 %v305
    %593 = vmatprep.subr.bf16.mxu0 0
    %594 = vmatpush1.bf16.msra.mxu0 %v306
    %595 = vmatprep.subr.bf16.mxu0 0
    %596 = vmatpush1.bf16.msra.mxu0 %v307
    %597 = vmatprep.subr.bf16.mxu0 0
    %598 = vmatpush1.bf16.msra.mxu0 0
    %599 = vmatprep.subr.bf16.mxu0 0
    %600 = vmatpush1.bf16.msra.mxu0 0
    %601 = vmatprep.subr.bf16.mxu0 0
    %602 = vmatpush1.bf16.msra.mxu0 0
    %603 = vmatprep.subr.bf16.mxu0 0
    %604 = vmatpush1.bf16.msra.mxu0 0
    %605 = vmatprep.subr.bf16.mxu0 0
    %606 = vmatpush1.bf16.msra.mxu0 0
    %607 = vmatprep.subr.bf16.mxu0 0
    %608 = vmatpush1.bf16.msra.mxu0 0
    %609 = vmatprep.subr.bf16.mxu0 0
    %610 = vmatpush1.bf16.msra.mxu0 0
    %611 = vmatprep.subr.bf16.mxu0 0
    %612 = vmatpush1.bf16.msra.mxu0 0
    %613 = vmatprep.mubr.bf16.mxu0 0
    %614 = vmatmul.mubr.bf16.gmra.mrb[0].mxu0 %v577
    %v615 = vpop.f32.mrb[0].mxu0
    %v616 = vadd.f32 0.0, %v615
    %v617 = vpop.f32.mrb[0].mxu0
    %v618 = vpop.f32.mrb[0].mxu0
    %v619 = vadd.f32 0.0, %v618
    %v620 = vpop.f32.mrb[0].mxu0
    %621 = vmatprep.mubr.bf16.mxu0 0
    %622 = vmatmul.mubr.bf16.gmra.mrb[0].mxu0 %v578
    %v623 = vpop.f32.mrb[0].mxu0
    %v624 = vadd.f32 0.0, %v623
    %v625 = vpop.f32.mrb[0].mxu0
    %v626 = vpop.f32.mrb[0].mxu0
    %v627 = vadd.f32 0.0, %v626
    %v628 = vpop.f32.mrb[0].mxu0
    %629 = vdwg.mxu0
    %v630 = vpack.c.bf16 %v619, %v616
    %v631 = vpack.c.bf16 %v627, %v624
    %s632 = scalar_lea.vmem %s4, 8
    %v633 = vld [vmem:[%s632] sm:$0xf]
    %v635 = vsel %vm446, %v630, 0
    %v638 = vsel %vm446, %v631, 0
    %v641 = vsel %vm453, %v633, 0
    %643 = vmatprep.subr.bf16.mxu0 0
    %644 = vmatpush1.bf16.msra.mxu0 %v641
    %645 = vmatprep.subr.bf16.mxu0 0
    %646 = vmatpush1.bf16.msra.mxu0 0
    %647 = vmatprep.subr.bf16.mxu0 0
    %648 = vmatpush1.bf16.msra.mxu0 0
    %649 = vmatprep.subr.bf16.mxu0 0
    %650 = vmatpush1.bf16.msra.mxu0 0
    %651 = vmatprep.subr.bf16.mxu0 0
    %652 = vmatpush1.bf16.msra.mxu0 0
    %653 = vmatprep.subr.bf16.mxu0 0
    %654 = vmatpush1.bf16.msra.mxu0 0
    %655 = vmatprep.subr.bf16.mxu0 0
    %656 = vmatpush1.bf16.msra.mxu0 0
    %657 = vmatprep.subr.bf16.mxu0 0
    %658 = vmatpush1.bf16.msra.mxu0 0
    %659 = vmatprep.subr.bf16.mxu0 0
    %660 = vmatpush1.bf16.msra.mxu0 0
    %661 = vmatprep.subr.bf16.mxu0 0
    %662 = vmatpush1.bf16.msra.mxu0 0
    %663 = vmatprep.subr.bf16.mxu0 0
    %664 = vmatpush1.bf16.msra.mxu0 0
    %665 = vmatprep.subr.bf16.mxu0 0
    %666 = vmatpush1.bf16.msra.mxu0 0
    %667 = vmatprep.subr.bf16.mxu0 0
    %668 = vmatpush1.bf16.msra.mxu0 0
    %669 = vmatprep.subr.bf16.mxu0 0
    %670 = vmatpush1.bf16.msra.mxu0 0
    %671 = vmatprep.subr.bf16.mxu0 0
    %672 = vmatpush1.bf16.msra.mxu0 0
    %673 = vmatprep.subr.bf16.mxu0 0
    %674 = vmatpush1.bf16.msra.mxu0 0
    %675 = vmatprep.mubr.bf16.mxu0 0
    %676 = vmatmul.mubr.bf16.gmra.mrb[0].mxu0 %v635
    %v677 = vpop.f32.mrb[0].mxu0
    %v678 = vadd.f32 0.0, %v677
    %v679 = vpop.f32.mrb[0].mxu0
    %v680 = vpop.f32.mrb[0].mxu0
    %v681 = vadd.f32 0.0, %v680
    %v682 = vpop.f32.mrb[0].mxu0
    %683 = vmatprep.mubr.bf16.mxu0 0
    %684 = vmatmul.mubr.bf16.gmra.mrb[0].mxu0 %v638
    %v685 = vpop.f32.mrb[0].mxu0
    %v686 = vadd.f32 0.0, %v685
    %v687 = vpop.f32.mrb[0].mxu0
    %v688 = vpop.f32.mrb[0].mxu0
    %v689 = vadd.f32 0.0, %v688
    %v690 = vpop.f32.mrb[0].mxu0
    %691 = vdwg.mxu0
    %v692 = vadd.f32 %v550, %v678
    %v693 = vadd.f32 %v553, %v681
    %v694 = vadd.f32 %v558, %v686
    %v695 = vadd.f32 %v561, %v689
    %s696 = scalar_lea.vmem %s3, 48
    %v697 = vld [vmem:[%s696] sm:$0xf]
    %v698 = vld [vmem:[%s696 + $0x4] sm:$0xf]
    %v699 = vld [vmem:[%s696 + $0x8] sm:$0xf]
    %v700 = vld [vmem:[%s696 + $0xc] sm:$0xf]
    %v705 = vunpack.c.l.b16 %v697
    %v706 = vunpack.c.l.b16 %v698
    %v707 = vunpack.c.l.b16 %v699
    %v708 = vunpack.c.l.b16 %v700
    %v709 = vpack.c.b16 %v706, %v705
    %v710 = vpack.c.b16 %v708, %v707
    %713 = vmatprep.subr.bf16.mxu0 0
    %714 = vmatpush1.bf16.msra.mxu0 %v300
    %715 = vmatprep.subr.bf16.mxu0 0
    %716 = vmatpush1.bf16.msra.mxu0 %v301
    %717 = vmatprep.subr.bf16.mxu0 0
    %718 = vmatpush1.bf16.msra.mxu0 %v302
    %719 = vmatprep.subr.bf16.mxu0 0
    %720 = vmatpush1.bf16.msra.mxu0 %v303
    %721 = vmatprep.subr.bf16.mxu0 0
    %722 = vmatpush1.bf16.msra.mxu0 %v304
    %723 = vmatprep.subr.bf16.mxu0 0
    %724 = vmatpush1.bf16.msra.mxu0 %v305
    %725 = vmatprep.subr.bf16.mxu0 0
    %726 = vmatpush1.bf16.msra.mxu0 %v306
    %727 = vmatprep.subr.bf16.mxu0 0
    %728 = vmatpush1.bf16.msra.mxu0 %v307
    %729 = vmatprep.subr.bf16.mxu0 0
    %730 = vmatpush1.bf16.msra.mxu0 0
    %731 = vmatprep.subr.bf16.mxu0 0
    %732 = vmatpush1.bf16.msra.mxu0 0
    %733 = vmatprep.subr.bf16.mxu0 0
    %734 = vmatpush1.bf16.msra.mxu0 0
    %735 = vmatprep.subr.bf16.mxu0 0
    %736 = vmatpush1.bf16.msra.mxu0 0
    %737 = vmatprep.subr.bf16.mxu0 0
    %738 = vmatpush1.bf16.msra.mxu0 0
    %739 = vmatprep.subr.bf16.mxu0 0
    %740 = vmatpush1.bf16.msra.mxu0 0
    %741 = vmatprep.subr.bf16.mxu0 0
    %742 = vmatpush1.bf16.msra.mxu0 0
    %743 = vmatprep.subr.bf16.mxu0 0
    %744 = vmatpush1.bf16.msra.mxu0 0
    %745 = vmatprep.mubr.bf16.mxu0 0
    %746 = vmatmul.mubr.bf16.gmra.mrb[0].mxu0 %v709
    %v747 = vpop.f32.mrb[0].mxu0
    %v748 = vadd.f32 0.0, %v747
    %v749 = vpop.f32.mrb[0].mxu0
    %v750 = vpop.f32.mrb[0].mxu0
    %v751 = vadd.f32 0.0, %v750
    %v752 = vpop.f32.mrb[0].mxu0
    %753 = vmatprep.mubr.bf16.mxu0 0
    %754 = vmatmul.mubr.bf16.gmra.mrb[0].mxu0 %v710
    %v755 = vpop.f32.mrb[0].mxu0
    %v756 = vadd.f32 0.0, %v755
    %v757 = vpop.f32.mrb[0].mxu0
    %v758 = vpop.f32.mrb[0].mxu0
    %v759 = vadd.f32 0.0, %v758
    %v760 = vpop.f32.mrb[0].mxu0
    %761 = vdwg.mxu0
    %v762 = vpack.c.bf16 %v751, %v748
    %v763 = vpack.c.bf16 %v759, %v756
    %s764 = scalar_lea.vmem %s4, 12
    %v765 = vld [vmem:[%s764] sm:$0xf]
    %v767 = vsel %vm446, %v762, 0
    %v770 = vsel %vm446, %v763, 0
    %v773 = vsel %vm453, %v765, 0
    %775 = vmatprep.subr.bf16.mxu0 0
    %776 = vmatpush1.bf16.msra.mxu0 %v773
    %777 = vmatprep.subr.bf16.mxu0 0
    %778 = vmatpush1.bf16.msra.mxu0 0
    %779 = vmatprep.subr.bf16.mxu0 0
    %780 = vmatpush1.bf16.msra.mxu0 0
    %781 = vmatprep.subr.bf16.mxu0 0
    %782 = vmatpush1.bf16.msra.mxu0 0
    %783 = vmatprep.subr.bf16.mxu0 0
    %784 = vmatpush1.bf16.msra.mxu0 0
    %785 = vmatprep.subr.bf16.mxu0 0
    %786 = vmatpush1.bf16.msra.mxu0 0
    %787 = vmatprep.subr.bf16.mxu0 0
    %788 = vmatpush1.bf16.msra.mxu0 0
    %789 = vmatprep.subr.bf16.mxu0 0
    %790 = vmatpush1.bf16.msra.mxu0 0
    %791 = vmatprep.subr.bf16.mxu0 0
    %792 = vmatpush1.bf16.msra.mxu0 0
    %793 = vmatprep.subr.bf16.mxu0 0
    %794 = vmatpush1.bf16.msra.mxu0 0
    %795 = vmatprep.subr.bf16.mxu0 0
    %796 = vmatpush1.bf16.msra.mxu0 0
    %797 = vmatprep.subr.bf16.mxu0 0
    %798 = vmatpush1.bf16.msra.mxu0 0
    %799 = vmatprep.subr.bf16.mxu0 0
    %800 = vmatpush1.bf16.msra.mxu0 0
    %801 = vmatprep.subr.bf16.mxu0 0
    %802 = vmatpush1.bf16.msra.mxu0 0
    %803 = vmatprep.subr.bf16.mxu0 0
    %804 = vmatpush1.bf16.msra.mxu0 0
    %805 = vmatprep.subr.bf16.mxu0 0
    %806 = vmatpush1.bf16.msra.mxu0 0
    %807 = vmatprep.mubr.bf16.mxu0 0
    %808 = vmatmul.mubr.bf16.gmra.mrb[0].mxu0 %v767
    %v809 = vpop.f32.mrb[0].mxu0
    %v810 = vadd.f32 0.0, %v809
    %v811 = vpop.f32.mrb[0].mxu0
    %v812 = vpop.f32.mrb[0].mxu0
    %v813 = vadd.f32 0.0, %v812
    %v814 = vpop.f32.mrb[0].mxu0
    %815 = vmatprep.mubr.bf16.mxu0 0
    %816 = vmatmul.mubr.bf16.gmra.mrb[0].mxu0 %v770
    %v817 = vpop.f32.mrb[0].mxu0
    %v818 = vadd.f32 0.0, %v817
    %v819 = vpop.f32.mrb[0].mxu0
    %v820 = vpop.f32.mrb[0].mxu0
    %v821 = vadd.f32 0.0, %v820
    %v822 = vpop.f32.mrb[0].mxu0
    %823 = vdwg.mxu0
    %v824 = vadd.f32 %v692, %v810
    %v825 = vadd.f32 %v693, %v813
    %v826 = vadd.f32 %v694, %v818
    %v827 = vadd.f32 %v695, %v821
    %s828 = scalar_lea.vmem %s3, 64
    %v829 = vld [vmem:[%s828] sm:$0xf]
    %v830 = vld [vmem:[%s828 + $0x4] sm:$0xf]
    %v831 = vld [vmem:[%s828 + $0x8] sm:$0xf]
    %v832 = vld [vmem:[%s828 + $0xc] sm:$0xf]
    %v837 = vunpack.c.l.b16 %v829
    %v838 = vunpack.c.l.b16 %v830
    %v839 = vunpack.c.l.b16 %v831
    %v840 = vunpack.c.l.b16 %v832
    %v841 = vpack.c.b16 %v838, %v837
    %v842 = vpack.c.b16 %v840, %v839
    %845 = vmatprep.subr.bf16.mxu0 0
    %846 = vmatpush1.bf16.msra.mxu0 %v300
    %847 = vmatprep.subr.bf16.mxu0 0
    %848 = vmatpush1.bf16.msra.mxu0 %v301
    %849 = vmatprep.subr.bf16.mxu0 0
    %850 = vmatpush1.bf16.msra.mxu0 %v302
    %851 = vmatprep.subr.bf16.mxu0 0
    %852 = vmatpush1.bf16.msra.mxu0 %v303
    %853 = vmatprep.subr.bf16.mxu0 0
    %854 = vmatpush1.bf16.msra.mxu0 %v304
    %855 = vmatprep.subr.bf16.mxu0 0
    %856 = vmatpush1.bf16.msra.mxu0 %v305
    %857 = vmatprep.subr.bf16.mxu0 0
    %858 = vmatpush1.bf16.msra.mxu0 %v306
    %859 = vmatprep.subr.bf16.mxu0 0
    %860 = vmatpush1.bf16.msra.mxu0 %v307
    %861 = vmatprep.subr.bf16.mxu0 0
    %862 = vmatpush1.bf16.msra.mxu0 0
    %863 = vmatprep.subr.bf16.mxu0 0
    %864 = vmatpush1.bf16.msra.mxu0 0
    %865 = vmatprep.subr.bf16.mxu0 0
    %866 = vmatpush1.bf16.msra.mxu0 0
    %867 = vmatprep.subr.bf16.mxu0 0
    %868 = vmatpush1.bf16.msra.mxu0 0
    %869 = vmatprep.subr.bf16.mxu0 0
    %870 = vmatpush1.bf16.msra.mxu0 0
    %871 = vmatprep.subr.bf16.mxu0 0
    %872 = vmatpush1.bf16.msra.mxu0 0
    %873 = vmatprep.subr.bf16.mxu0 0
    %874 = vmatpush1.bf16.msra.mxu0 0
    %875 = vmatprep.subr.bf16.mxu0 0
    %876 = vmatpush1.bf16.msra.mxu0 0
    %877 = vmatprep.mubr.bf16.mxu0 0
    %878 = vmatmul.mubr.bf16.gmra.mrb[0].mxu0 %v841
    %v879 = vpop.f32.mrb[0].mxu0
    %v880 = vadd.f32 0.0, %v879
    %v881 = vpop.f32.mrb[0].mxu0
    %v882 = vpop.f32.mrb[0].mxu0
    %v883 = vadd.f32 0.0, %v882
    %v884 = vpop.f32.mrb[0].mxu0
    %885 = vmatprep.mubr.bf16.mxu0 0
    %886 = vmatmul.mubr.bf16.gmra.mrb[0].mxu0 %v842
    %v887 = vpop.f32.mrb[0].mxu0
    %v888 = vadd.f32 0.0, %v887
    %v889 = vpop.f32.mrb[0].mxu0
    %v890 = vpop.f32.mrb[0].mxu0
    %v891 = vadd.f32 0.0, %v890
    %v892 = vpop.f32.mrb[0].mxu0
    %893 = vdwg.mxu0
    %v894 = vpack.c.bf16 %v883, %v880
    %v895 = vpack.c.bf16 %v891, %v888
    %s896 = scalar_lea.vmem %s4, 16
    %v897 = vld [vmem:[%s896] sm:$0xf]
    %v899 = vsel %vm446, %v894, 0
    %v902 = vsel %vm446, %v895, 0
    %v905 = vsel %vm453, %v897, 0
    %907 = vmatprep.subr.bf16.mxu0 0
    %908 = vmatpush1.bf16.msra.mxu0 %v905
    %909 = vmatprep.subr.bf16.mxu0 0
    %910 = vmatpush1.bf16.msra.mxu0 0
    %911 = vmatprep.subr.bf16.mxu0 0
    %912 = vmatpush1.bf16.msra.mxu0 0
    %913 = vmatprep.subr.bf16.mxu0 0
    %914 = vmatpush1.bf16.msra.mxu0 0
    %915 = vmatprep.subr.bf16.mxu0 0
    %916 = vmatpush1.bf16.msra.mxu0 0
    %917 = vmatprep.subr.bf16.mxu0 0
    %918 = vmatpush1.bf16.msra.mxu0 0
    %919 = vmatprep.subr.bf16.mxu0 0
    %920 = vmatpush1.bf16.msra.mxu0 0
    %921 = vmatprep.subr.bf16.mxu0 0
    %922 = vmatpush1.bf16.msra.mxu0 0
    %923 = vmatprep.subr.bf16.mxu0 0
    %924 = vmatpush1.bf16.msra.mxu0 0
    %925 = vmatprep.subr.bf16.mxu0 0
    %926 = vmatpush1.bf16.msra.mxu0 0
    %927 = vmatprep.subr.bf16.mxu0 0
    %928 = vmatpush1.bf16.msra.mxu0 0
    %929 = vmatprep.subr.bf16.mxu0 0
    %930 = vmatpush1.bf16.msra.mxu0 0
    %931 = vmatprep.subr.bf16.mxu0 0
    %932 = vmatpush1.bf16.msra.mxu0 0
    %933 = vmatprep.subr.bf16.mxu0 0
    %934 = vmatpush1.bf16.msra.mxu0 0
    %935 = vmatprep.subr.bf16.mxu0 0
    %936 = vmatpush1.bf16.msra.mxu0 0
    %937 = vmatprep.subr.bf16.mxu0 0
    %938 = vmatpush1.bf16.msra.mxu0 0
    %939 = vmatprep.mubr.bf16.mxu0 0
    %940 = vmatmul.mubr.bf16.gmra.mrb[0].mxu0 %v899
    %v941 = vpop.f32.mrb[0].mxu0
    %v942 = vadd.f32 0.0, %v941
    %v943 = vpop.f32.mrb[0].mxu0
    %v944 = vpop.f32.mrb[0].mxu0
    %v945 = vadd.f32 0.0, %v944
    %v946 = vpop.f32.mrb[0].mxu0
    %947 = vmatprep.mubr.bf16.mxu0 0
    %948 = vmatmul.mubr.bf16.gmra.mrb[0].mxu0 %v902
    %v949 = vpop.f32.mrb[0].mxu0
    %v950 = vadd.f32 0.0, %v949
    %v951 = vpop.f32.mrb[0].mxu0
    %v952 = vpop.f32.mrb[0].mxu0
    %v953 = vadd.f32 0.0, %v952
    %v954 = vpop.f32.mrb[0].mxu0
    %955 = vdwg.mxu0
    %v956 = vadd.f32 %v824, %v942
    %v957 = vadd.f32 %v825, %v945
    %v958 = vadd.f32 %v826, %v950
    %v959 = vadd.f32 %v827, %v953
    %s960 = scalar_lea.vmem %s3, 80
    %v961 = vld [vmem:[%s960] sm:$0xf]
    %v962 = vld [vmem:[%s960 + $0x4] sm:$0xf]
    %v963 = vld [vmem:[%s960 + $0x8] sm:$0xf]
    %v964 = vld [vmem:[%s960 + $0xc] sm:$0xf]
    %v969 = vunpack.c.l.b16 %v961
    %v970 = vunpack.c.l.b16 %v962
    %v971 = vunpack.c.l.b16 %v963
    %v972 = vunpack.c.l.b16 %v964
    %v973 = vpack.c.b16 %v970, %v969
    %v974 = vpack.c.b16 %v972, %v971
    %977 = vmatprep.subr.bf16.mxu0 0
    %978 = vmatpush1.bf16.msra.mxu0 %v300
    %979 = vmatprep.subr.bf16.mxu0 0
    %980 = vmatpush1.bf16.msra.mxu0 %v301
    %981 = vmatprep.subr.bf16.mxu0 0
    %982 = vmatpush1.bf16.msra.mxu0 %v302
    %983 = vmatprep.subr.bf16.mxu0 0
    %984 = vmatpush1.bf16.msra.mxu0 %v303
    %985 = vmatprep.subr.bf16.mxu0 0
    %986 = vmatpush1.bf16.msra.mxu0 %v304
    %987 = vmatprep.subr.bf16.mxu0 0
    %988 = vmatpush1.bf16.msra.mxu0 %v305
    %989 = vmatprep.subr.bf16.mxu0 0
    %990 = vmatpush1.bf16.msra.mxu0 %v306
    %991 = vmatprep.subr.bf16.mxu0 0
    %992 = vmatpush1.bf16.msra.mxu0 %v307
    %993 = vmatprep.subr.bf16.mxu0 0
    %994 = vmatpush1.bf16.msra.mxu0 0
    %995 = vmatprep.subr.bf16.mxu0 0
    %996 = vmatpush1.bf16.msra.mxu0 0
    %997 = vmatprep.subr.bf16.mxu0 0
    %998 = vmatpush1.bf16.msra.mxu0 0
    %999 = vmatprep.subr.bf16.mxu0 0
    %1000 = vmatpush1.bf16.msra.mxu0 0
    %1001 = vmatprep.subr.bf16.mxu0 0
    %1002 = vmatpush1.bf16.msra.mxu0 0
    %1003 = vmatprep.subr.bf16.mxu0 0
    %1004 = vmatpush1.bf16.msra.mxu0 0
    %1005 = vmatprep.subr.bf16.mxu0 0
    %1006 = vmatpush1.bf16.msra.mxu0 0
    %1007 = vmatprep.subr.bf16.mxu0 0
    %1008 = vmatpush1.bf16.msra.mxu0 0
    %1009 = vmatprep.mubr.bf16.mxu0 0
    %1010 = vmatmul.mubr.bf16.gmra.mrb[0].mxu0 %v973
    %v1011 = vpop.f32.mrb[0].mxu0
    %v1012 = vadd.f32 0.0, %v1011
    %v1013 = vpop.f32.mrb[0].mxu0
    %v1014 = vpop.f32.mrb[0].mxu0
    %v1015 = vadd.f32 0.0, %v1014
    %v1016 = vpop.f32.mrb[0].mxu0
    %1017 = vmatprep.mubr.bf16.mxu0 0
    %1018 = vmatmul.mubr.bf16.gmra.mrb[0].mxu0 %v974
    %v1019 = vpop.f32.mrb[0].mxu0
    %v1020 = vadd.f32 0.0, %v1019
    %v1021 = vpop.f32.mrb[0].mxu0
    %v1022 = vpop.f32.mrb[0].mxu0
    %v1023 = vadd.f32 0.0, %v1022
    %v1024 = vpop.f32.mrb[0].mxu0
    %1025 = vdwg.mxu0
    %v1026 = vpack.c.bf16 %v1015, %v1012
    %v1027 = vpack.c.bf16 %v1023, %v1020
    %s1028 = scalar_lea.vmem %s4, 20
    %v1029 = vld [vmem:[%s1028] sm:$0xf]
    %v1031 = vsel %vm446, %v1026, 0
    %v1034 = vsel %vm446, %v1027, 0
    %v1037 = vsel %vm453, %v1029, 0
    %1039 = vmatprep.subr.bf16.mxu0 0
    %1040 = vmatpush1.bf16.msra.mxu0 %v1037
    %1041 = vmatprep.subr.bf16.mxu0 0
    %1042 = vmatpush1.bf16.msra.mxu0 0
    %1043 = vmatprep.subr.bf16.mxu0 0
    %1044 = vmatpush1.bf16.msra.mxu0 0
    %1045 = vmatprep.subr.bf16.mxu0 0
    %1046 = vmatpush1.bf16.msra.mxu0 0
    %1047 = vmatprep.subr.bf16.mxu0 0
    %1048 = vmatpush1.bf16.msra.mxu0 0
    %1049 = vmatprep.subr.bf16.mxu0 0
    %1050 = vmatpush1.bf16.msra.mxu0 0
    %1051 = vmatprep.subr.bf16.mxu0 0
    %1052 = vmatpush1.bf16.msra.mxu0 0
    %1053 = vmatprep.subr.bf16.mxu0 0
    %1054 = vmatpush1.bf16.msra.mxu0 0
    %1055 = vmatprep.subr.bf16.mxu0 0
    %1056 = vmatpush1.bf16.msra.mxu0 0
    %1057 = vmatprep.subr.bf16.mxu0 0
    %1058 = vmatpush1.bf16.msra.mxu0 0
    %1059 = vmatprep.subr.bf16.mxu0 0
    %1060 = vmatpush1.bf16.msra.mxu0 0
    %1061 = vmatprep.subr.bf16.mxu0 0
    %1062 = vmatpush1.bf16.msra.mxu0 0
    %1063 = vmatprep.subr.bf16.mxu0 0
    %1064 = vmatpush1.bf16.msra.mxu0 0
    %1065 = vmatprep.subr.bf16.mxu0 0
    %1066 = vmatpush1.bf16.msra.mxu0 0
    %1067 = vmatprep.subr.bf16.mxu0 0
    %1068 = vmatpush1.bf16.msra.mxu0 0
    %1069 = vmatprep.subr.bf16.mxu0 0
    %1070 = vmatpush1.bf16.msra.mxu0 0
    %1071 = vmatprep.mubr.bf16.mxu0 0
    %1072 = vmatmul.mubr.bf16.gmra.mrb[0].mxu0 %v1031
    %v1073 = vpop.f32.mrb[0].mxu0
    %v1074 = vadd.f32 0.0, %v1073
    %v1075 = vpop.f32.mrb[0].mxu0
    %v1076 = vpop.f32.mrb[0].mxu0
    %v1077 = vadd.f32 0.0, %v1076
    %v1078 = vpop.f32.mrb[0].mxu0
    %1079 = vmatprep.mubr.bf16.mxu0 0
    %1080 = vmatmul.mubr.bf16.gmra.mrb[0].mxu0 %v1034
    %v1081 = vpop.f32.mrb[0].mxu0
    %v1082 = vadd.f32 0.0, %v1081
    %v1083 = vpop.f32.mrb[0].mxu0
    %v1084 = vpop.f32.mrb[0].mxu0
    %v1085 = vadd.f32 0.0, %v1084
    %v1086 = vpop.f32.mrb[0].mxu0
    %1087 = vdwg.mxu0
    %v1088 = vadd.f32 %v956, %v1074
    %v1089 = vadd.f32 %v957, %v1077
    %v1090 = vadd.f32 %v958, %v1082
    %v1091 = vadd.f32 %v959, %v1085
    %s1092 = scalar_lea.vmem %s3, 96
    %v1093 = vld [vmem:[%s1092] sm:$0xf]
    %v1094 = vld [vmem:[%s1092 + $0x4] sm:$0xf]
    %v1095 = vld [vmem:[%s1092 + $0x8] sm:$0xf]
    %v1096 = vld [vmem:[%s1092 + $0xc] sm:$0xf]
    %v1101 = vunpack.c.l.b16 %v1093
    %v1102 = vunpack.c.l.b16 %v1094
    %v1103 = vunpack.c.l.b16 %v1095
    %v1104 = vunpack.c.l.b16 %v1096
    %v1105 = vpack.c.b16 %v1102, %v1101
    %v1106 = vpack.c.b16 %v1104, %v1103
    %1109 = vmatprep.subr.bf16.mxu0 0
    %1110 = vmatpush1.bf16.msra.mxu0 %v300
    %1111 = vmatprep.subr.bf16.mxu0 0
    %1112 = vmatpush1.bf16.msra.mxu0 %v301
    %1113 = vmatprep.subr.bf16.mxu0 0
    %1114 = vmatpush1.bf16.msra.mxu0 %v302
    %1115 = vmatprep.subr.bf16.mxu0 0
    %1116 = vmatpush1.bf16.msra.mxu0 %v303
    %1117 = vmatprep.subr.bf16.mxu0 0
    %1118 = vmatpush1.bf16.msra.mxu0 %v304
    %1119 = vmatprep.subr.bf16.mxu0 0
    %1120 = vmatpush1.bf16.msra.mxu0 %v305
    %1121 = vmatprep.subr.bf16.mxu0 0
    %1122 = vmatpush1.bf16.msra.mxu0 %v306
    %1123 = vmatprep.subr.bf16.mxu0 0
    %1124 = vmatpush1.bf16.msra.mxu0 %v307
    %1125 = vmatprep.subr.bf16.mxu0 0
    %1126 = vmatpush1.bf16.msra.mxu0 0
    %1127 = vmatprep.subr.bf16.mxu0 0
    %1128 = vmatpush1.bf16.msra.mxu0 0
    %1129 = vmatprep.subr.bf16.mxu0 0
    %1130 = vmatpush1.bf16.msra.mxu0 0
    %1131 = vmatprep.subr.bf16.mxu0 0
    %1132 = vmatpush1.bf16.msra.mxu0 0
    %1133 = vmatprep.subr.bf16.mxu0 0
    %1134 = vmatpush1.bf16.msra.mxu0 0
    %1135 = vmatprep.subr.bf16.mxu0 0
    %1136 = vmatpush1.bf16.msra.mxu0 0
    %1137 = vmatprep.subr.bf16.mxu0 0
    %1138 = vmatpush1.bf16.msra.mxu0 0
    %1139 = vmatprep.subr.bf16.mxu0 0
    %1140 = vmatpush1.bf16.msra.mxu0 0
    %1141 = vmatprep.mubr.bf16.mxu0 0
    %1142 = vmatmul.mubr.bf16.gmra.mrb[0].mxu0 %v1105
    %v1143 = vpop.f32.mrb[0].mxu0
    %v1144 = vadd.f32 0.0, %v1143
    %v1145 = vpop.f32.mrb[0].mxu0
    %v1146 = vpop.f32.mrb[0].mxu0
    %v1147 = vadd.f32 0.0, %v1146
    %v1148 = vpop.f32.mrb[0].mxu0
    %1149 = vmatprep.mubr.bf16.mxu0 0
    %1150 = vmatmul.mubr.bf16.gmra.mrb[0].mxu0 %v1106
    %v1151 = vpop.f32.mrb[0].mxu0
    %v1152 = vadd.f32 0.0, %v1151
    %v1153 = vpop.f32.mrb[0].mxu0
    %v1154 = vpop.f32.mrb[0].mxu0
    %v1155 = vadd.f32 0.0, %v1154
    %v1156 = vpop.f32.mrb[0].mxu0
    %1157 = vdwg.mxu0
    %v1158 = vpack.c.bf16 %v1147, %v1144
    %v1159 = vpack.c.bf16 %v1155, %v1152
    %s1160 = scalar_lea.vmem %s4, 24
    %v1161 = vld [vmem:[%s1160] sm:$0xf]
    %v1163 = vsel %vm446, %v1158, 0
    %v1166 = vsel %vm446, %v1159, 0
    %v1169 = vsel %vm453, %v1161, 0
    %1171 = vmatprep.subr.bf16.mxu0 0
    %1172 = vmatpush1.bf16.msra.mxu0 %v1169
    %1173 = vmatprep.subr.bf16.mxu0 0
    %1174 = vmatpush1.bf16.msra.mxu0 0
    %1175 = vmatprep.subr.bf16.mxu0 0
    %1176 = vmatpush1.bf16.msra.mxu0 0
    %1177 = vmatprep.subr.bf16.mxu0 0
    %1178 = vmatpush1.bf16.msra.mxu0 0
    %1179 = vmatprep.subr.bf16.mxu0 0
    %1180 = vmatpush1.bf16.msra.mxu0 0
    %1181 = vmatprep.subr.bf16.mxu0 0
    %1182 = vmatpush1.bf16.msra.mxu0 0
    %1183 = vmatprep.subr.bf16.mxu0 0
    %1184 = vmatpush1.bf16.msra.mxu0 0
    %1185 = vmatprep.subr.bf16.mxu0 0
    %1186 = vmatpush1.bf16.msra.mxu0 0
    %1187 = vmatprep.subr.bf16.mxu0 0
    %1188 = vmatpush1.bf16.msra.mxu0 0
    %1189 = vmatprep.subr.bf16.mxu0 0
    %1190 = vmatpush1.bf16.msra.mxu0 0
    %1191 = vmatprep.subr.bf16.mxu0 0
    %1192 = vmatpush1.bf16.msra.mxu0 0
    %1193 = vmatprep.subr.bf16.mxu0 0
    %1194 = vmatpush1.bf16.msra.mxu0 0
    %1195 = vmatprep.subr.bf16.mxu0 0
    %1196 = vmatpush1.bf16.msra.mxu0 0
    %1197 = vmatprep.subr.bf16.mxu0 0
    %1198 = vmatpush1.bf16.msra.mxu0 0
    %1199 = vmatprep.subr.bf16.mxu0 0
    %1200 = vmatpush1.bf16.msra.mxu0 0
    %1201 = vmatprep.subr.bf16.mxu0 0
    %1202 = vmatpush1.bf16.msra.mxu0 0
    %1203 = vmatprep.mubr.bf16.mxu0 0
    %1204 = vmatmul.mubr.bf16.gmra.mrb[0].mxu0 %v1163
    %v1205 = vpop.f32.mrb[0].mxu0
    %v1206 = vadd.f32 0.0, %v1205
    %v1207 = vpop.f32.mrb[0].mxu0
    %v1208 = vpop.f32.mrb[0].mxu0
    %v1209 = vadd.f32 0.0, %v1208
    %v1210 = vpop.f32.mrb[0].mxu0
    %1211 = vmatprep.mubr.bf16.mxu0 0
    %1212 = vmatmul.mubr.bf16.gmra.mrb[0].mxu0 %v1166
    %v1213 = vpop.f32.mrb[0].mxu0
    %v1214 = vadd.f32 0.0, %v1213
    %v1215 = vpop.f32.mrb[0].mxu0
    %v1216 = vpop.f32.mrb[0].mxu0
    %v1217 = vadd.f32 0.0, %v1216
    %v1218 = vpop.f32.mrb[0].mxu0
    %1219 = vdwg.mxu0
    %v1220 = vadd.f32 %v1088, %v1206
    %v1221 = vadd.f32 %v1089, %v1209
    %v1222 = vadd.f32 %v1090, %v1214
    %v1223 = vadd.f32 %v1091, %v1217
    %s1224 = scalar_lea.vmem %s3, 112
    %v1225 = vld [vmem:[%s1224] sm:$0xf]
    %v1226 = vld [vmem:[%s1224 + $0x4] sm:$0xf]
    %v1227 = vld [vmem:[%s1224 + $0x8] sm:$0xf]
    %v1228 = vld [vmem:[%s1224 + $0xc] sm:$0xf]
    %v1233 = vunpack.c.l.b16 %v1225
    %v1234 = vunpack.c.l.b16 %v1226
    %v1235 = vunpack.c.l.b16 %v1227
    %v1236 = vunpack.c.l.b16 %v1228
    %v1237 = vpack.c.b16 %v1234, %v1233
    %v1238 = vpack.c.b16 %v1236, %v1235
    %1241 = vmatprep.subr.bf16.mxu0 0
    %1242 = vmatpush1.bf16.msra.mxu0 %v300
    %1243 = vmatprep.subr.bf16.mxu0 0
    %1244 = vmatpush1.bf16.msra.mxu0 %v301
    %1245 = vmatprep.subr.bf16.mxu0 0
    %1246 = vmatpush1.bf16.msra.mxu0 %v302
    %1247 = vmatprep.subr.bf16.mxu0 0
    %1248 = vmatpush1.bf16.msra.mxu0 %v303
    %1249 = vmatprep.subr.bf16.mxu0 0
    %1250 = vmatpush1.bf16.msra.mxu0 %v304
    %1251 = vmatprep.subr.bf16.mxu0 0
    %1252 = vmatpush1.bf16.msra.mxu0 %v305
    %1253 = vmatprep.subr.bf16.mxu0 0
    %1254 = vmatpush1.bf16.msra.mxu0 %v306
    %1255 = vmatprep.subr.bf16.mxu0 0
    %1256 = vmatpush1.bf16.msra.mxu0 %v307
    %1257 = vmatprep.subr.bf16.mxu0 0
    %1258 = vmatpush1.bf16.msra.mxu0 0
    %1259 = vmatprep.subr.bf16.mxu0 0
    %1260 = vmatpush1.bf16.msra.mxu0 0
    %1261 = vmatprep.subr.bf16.mxu0 0
    %1262 = vmatpush1.bf16.msra.mxu0 0
    %1263 = vmatprep.subr.bf16.mxu0 0
    %1264 = vmatpush1.bf16.msra.mxu0 0
    %1265 = vmatprep.subr.bf16.mxu0 0
    %1266 = vmatpush1.bf16.msra.mxu0 0
    %1267 = vmatprep.subr.bf16.mxu0 0
    %1268 = vmatpush1.bf16.msra.mxu0 0
    %1269 = vmatprep.subr.bf16.mxu0 0
    %1270 = vmatpush1.bf16.msra.mxu0 0
    %1271 = vmatprep.subr.bf16.mxu0 0
    %1272 = vmatpush1.bf16.msra.mxu0 0
    %1273 = vmatprep.mubr.bf16.mxu0 0
    %1274 = vmatmul.mubr.bf16.gmra.mrb[0].mxu0 %v1237
    %v1275 = vpop.f32.mrb[0].mxu0
    %v1276 = vadd.f32 0.0, %v1275
    %v1277 = vpop.f32.mrb[0].mxu0
    %v1278 = vpop.f32.mrb[0].mxu0
    %v1279 = vadd.f32 0.0, %v1278
    %v1280 = vpop.f32.mrb[0].mxu0
    %1281 = vmatprep.mubr.bf16.mxu0 0
    %1282 = vmatmul.mubr.bf16.gmra.mrb[0].mxu0 %v1238
    %v1283 = vpop.f32.mrb[0].mxu0
    %v1284 = vadd.f32 0.0, %v1283
    %v1285 = vpop.f32.mrb[0].mxu0
    %v1286 = vpop.f32.mrb[0].mxu0
    %v1287 = vadd.f32 0.0, %v1286
    %v1288 = vpop.f32.mrb[0].mxu0
    %1289 = vdwg.mxu0
    %v1290 = vpack.c.bf16 %v1279, %v1276
    %v1291 = vpack.c.bf16 %v1287, %v1284
    %s1292 = scalar_lea.vmem %s4, 28
    %v1293 = vld [vmem:[%s1292] sm:$0xf]
    %v1295 = vsel %vm446, %v1290, 0
    %v1298 = vsel %vm446, %v1291, 0
    %v1301 = vsel %vm453, %v1293, 0
    %1303 = vmatprep.subr.bf16.mxu0 0
    %1304 = vmatpush1.bf16.msra.mxu0 %v1301
    %1305 = vmatprep.subr.bf16.mxu0 0
    %1306 = vmatpush1.bf16.msra.mxu0 0
    %1307 = vmatprep.subr.bf16.mxu0 0
    %1308 = vmatpush1.bf16.msra.mxu0 0
    %1309 = vmatprep.subr.bf16.mxu0 0
    %1310 = vmatpush1.bf16.msra.mxu0 0
    %1311 = vmatprep.subr.bf16.mxu0 0
    %1312 = vmatpush1.bf16.msra.mxu0 0
    %1313 = vmatprep.subr.bf16.mxu0 0
    %1314 = vmatpush1.bf16.msra.mxu0 0
    %1315 = vmatprep.subr.bf16.mxu0 0
    %1316 = vmatpush1.bf16.msra.mxu0 0
    %1317 = vmatprep.subr.bf16.mxu0 0
    %1318 = vmatpush1.bf16.msra.mxu0 0
    %1319 = vmatprep.subr.bf16.mxu0 0
    %1320 = vmatpush1.bf16.msra.mxu0 0
    %1321 = vmatprep.subr.bf16.mxu0 0
    %1322 = vmatpush1.bf16.msra.mxu0 0
    %1323 = vmatprep.subr.bf16.mxu0 0
    %1324 = vmatpush1.bf16.msra.mxu0 0
    %1325 = vmatprep.subr.bf16.mxu0 0
    %1326 = vmatpush1.bf16.msra.mxu0 0
    %1327 = vmatprep.subr.bf16.mxu0 0
    %1328 = vmatpush1.bf16.msra.mxu0 0
    %1329 = vmatprep.subr.bf16.mxu0 0
    %1330 = vmatpush1.bf16.msra.mxu0 0
    %1331 = vmatprep.subr.bf16.mxu0 0
    %1332 = vmatpush1.bf16.msra.mxu0 0
    %1333 = vmatprep.subr.bf16.mxu0 0
    %1334 = vmatpush1.bf16.msra.mxu0 0
    %1335 = vmatprep.mubr.bf16.mxu0 0
    %1336 = vmatmul.mubr.bf16.gmra.mrb[0].mxu0 %v1295
    %v1337 = vpop.f32.mrb[0].mxu0
    %v1338 = vadd.f32 0.0, %v1337
    %v1339 = vpop.f32.mrb[0].mxu0
    %v1340 = vpop.f32.mrb[0].mxu0
    %v1341 = vadd.f32 0.0, %v1340
    %v1342 = vpop.f32.mrb[0].mxu0
    %1343 = vmatprep.mubr.bf16.mxu0 0
    %1344 = vmatmul.mubr.bf16.gmra.mrb[0].mxu0 %v1298
    %v1345 = vpop.f32.mrb[0].mxu0
    %v1346 = vadd.f32 0.0, %v1345
    %v1347 = vpop.f32.mrb[0].mxu0
    %v1348 = vpop.f32.mrb[0].mxu0
    %v1349 = vadd.f32 0.0, %v1348
    %v1350 = vpop.f32.mrb[0].mxu0
    %1351 = vdwg.mxu0
    %v1352 = vadd.f32 %v1220, %v1338
    %v1353 = vadd.f32 %v1221, %v1341
    %v1354 = vadd.f32 %v1222, %v1346
    %v1355 = vadd.f32 %v1223, %v1349
    %s1356 = scalar_lea.vmem %s3, 128
    %v1357 = vld [vmem:[%s1356] sm:$0xf]
    %v1358 = vld [vmem:[%s1356 + $0x4] sm:$0xf]
    %v1359 = vld [vmem:[%s1356 + $0x8] sm:$0xf]
    %v1360 = vld [vmem:[%s1356 + $0xc] sm:$0xf]
    %v1365 = vunpack.c.l.b16 %v1357
    %v1366 = vunpack.c.l.b16 %v1358
    %v1367 = vunpack.c.l.b16 %v1359
    %v1368 = vunpack.c.l.b16 %v1360
    %v1369 = vpack.c.b16 %v1366, %v1365
    %v1370 = vpack.c.b16 %v1368, %v1367
    %1373 = vmatprep.subr.bf16.mxu0 0
    %1374 = vmatpush1.bf16.msra.mxu0 %v300
    %1375 = vmatprep.subr.bf16.mxu0 0
    %1376 = vmatpush1.bf16.msra.mxu0 %v301
    %1377 = vmatprep.subr.bf16.mxu0 0
    %1378 = vmatpush1.bf16.msra.mxu0 %v302
    %1379 = vmatprep.subr.bf16.mxu0 0
    %1380 = vmatpush1.bf16.msra.mxu0 %v303
    %1381 = vmatprep.subr.bf16.mxu0 0
    %1382 = vmatpush1.bf16.msra.mxu0 %v304
    %1383 = vmatprep.subr.bf16.mxu0 0
    %1384 = vmatpush1.bf16.msra.mxu0 %v305
    %1385 = vmatprep.subr.bf16.mxu0 0
    %1386 = vmatpush1.bf16.msra.mxu0 %v306
    %1387 = vmatprep.subr.bf16.mxu0 0
    %1388 = vmatpush1.bf16.msra.mxu0 %v307
    %1389 = vmatprep.subr.bf16.mxu0 0
    %1390 = vmatpush1.bf16.msra.mxu0 0
    %1391 = vmatprep.subr.bf16.mxu0 0
    %1392 = vmatpush1.bf16.msra.mxu0 0
    %1393 = vmatprep.subr.bf16.mxu0 0
    %1394 = vmatpush1.bf16.msra.mxu0 0
    %1395 = vmatprep.subr.bf16.mxu0 0
    %1396 = vmatpush1.bf16.msra.mxu0 0
    %1397 = vmatprep.subr.bf16.mxu0 0
    %1398 = vmatpush1.bf16.msra.mxu0 0
    %1399 = vmatprep.subr.bf16.mxu0 0
    %1400 = vmatpush1.bf16.msra.mxu0 0
    %1401 = vmatprep.subr.bf16.mxu0 0
    %1402 = vmatpush1.bf16.msra.mxu0 0
    %1403 = vmatprep.subr.bf16.mxu0 0
    %1404 = vmatpush1.bf16.msra.mxu0 0
    %1405 = vmatprep.mubr.bf16.mxu0 0
    %1406 = vmatmul.mubr.bf16.gmra.mrb[0].mxu0 %v1369
    %v1407 = vpop.f32.mrb[0].mxu0
    %v1408 = vadd.f32 0.0, %v1407
    %v1409 = vpop.f32.mrb[0].mxu0
    %v1410 = vpop.f32.mrb[0].mxu0
    %v1411 = vadd.f32 0.0, %v1410
    %v1412 = vpop.f32.mrb[0].mxu0
    %1413 = vmatprep.mubr.bf16.mxu0 0
    %1414 = vmatmul.mubr.bf16.gmra.mrb[0].mxu0 %v1370
    %v1415 = vpop.f32.mrb[0].mxu0
    %v1416 = vadd.f32 0.0, %v1415
    %v1417 = vpop.f32.mrb[0].mxu0
    %v1418 = vpop.f32.mrb[0].mxu0
    %v1419 = vadd.f32 0.0, %v1418
    %v1420 = vpop.f32.mrb[0].mxu0
    %1421 = vdwg.mxu0
    %v1422 = vpack.c.bf16 %v1411, %v1408
    %v1423 = vpack.c.bf16 %v1419, %v1416
    %s1424 = scalar_lea.vmem %s4, 32
    %v1425 = vld [vmem:[%s1424] sm:$0xf]
    %v1427 = vsel %vm446, %v1422, 0
    %v1430 = vsel %vm446, %v1423, 0
    %v1433 = vsel %vm453, %v1425, 0
    %1435 = vmatprep.subr.bf16.mxu0 0
    %1436 = vmatpush1.bf16.msra.mxu0 %v1433
    %1437 = vmatprep.subr.bf16.mxu0 0
    %1438 = vmatpush1.bf16.msra.mxu0 0
    %1439 = vmatprep.subr.bf16.mxu0 0
    %1440 = vmatpush1.bf16.msra.mxu0 0
    %1441 = vmatprep.subr.bf16.mxu0 0
    %1442 = vmatpush1.bf16.msra.mxu0 0
    %1443 = vmatprep.subr.bf16.mxu0 0
    %1444 = vmatpush1.bf16.msra.mxu0 0
    %1445 = vmatprep.subr.bf16.mxu0 0
    %1446 = vmatpush1.bf16.msra.mxu0 0
    %1447 = vmatprep.subr.bf16.mxu0 0
    %1448 = vmatpush1.bf16.msra.mxu0 0
    %1449 = vmatprep.subr.bf16.mxu0 0
    %1450 = vmatpush1.bf16.msra.mxu0 0
    %1451 = vmatprep.subr.bf16.mxu0 0
    %1452 = vmatpush1.bf16.msra.mxu0 0
    %1453 = vmatprep.subr.bf16.mxu0 0
    %1454 = vmatpush1.bf16.msra.mxu0 0
    %1455 = vmatprep.subr.bf16.mxu0 0
    %1456 = vmatpush1.bf16.msra.mxu0 0
    %1457 = vmatprep.subr.bf16.mxu0 0
    %1458 = vmatpush1.bf16.msra.mxu0 0
    %1459 = vmatprep.subr.bf16.mxu0 0
    %1460 = vmatpush1.bf16.msra.mxu0 0
    %1461 = vmatprep.subr.bf16.mxu0 0
    %1462 = vmatpush1.bf16.msra.mxu0 0
    %1463 = vmatprep.subr.bf16.mxu0 0
    %1464 = vmatpush1.bf16.msra.mxu0 0
    %1465 = vmatprep.subr.bf16.mxu0 0
    %1466 = vmatpush1.bf16.msra.mxu0 0
    %1467 = vmatprep.mubr.bf16.mxu0 0
    %1468 = vmatmul.mubr.bf16.gmra.mrb[0].mxu0 %v1427
    %v1469 = vpop.f32.mrb[0].mxu0
    %v1470 = vadd.f32 0.0, %v1469
    %v1471 = vpop.f32.mrb[0].mxu0
    %v1472 = vpop.f32.mrb[0].mxu0
    %v1473 = vadd.f32 0.0, %v1472
    %v1474 = vpop.f32.mrb[0].mxu0
    %1475 = vmatprep.mubr.bf16.mxu0 0
    %1476 = vmatmul.mubr.bf16.gmra.mrb[0].mxu0 %v1430
    %v1477 = vpop.f32.mrb[0].mxu0
    %v1478 = vadd.f32 0.0, %v1477
    %v1479 = vpop.f32.mrb[0].mxu0
    %v1480 = vpop.f32.mrb[0].mxu0
    %v1481 = vadd.f32 0.0, %v1480
    %v1482 = vpop.f32.mrb[0].mxu0
    %1483 = vdwg.mxu0
    %v1484 = vadd.f32 %v1352, %v1470
    %v1485 = vadd.f32 %v1353, %v1473
    %v1486 = vadd.f32 %v1354, %v1478
    %v1487 = vadd.f32 %v1355, %v1481
    %s1488 = scalar_lea.vmem %s3, 144
    %v1489 = vld [vmem:[%s1488] sm:$0xf]
    %v1490 = vld [vmem:[%s1488 + $0x4] sm:$0xf]
    %v1491 = vld [vmem:[%s1488 + $0x8] sm:$0xf]
    %v1492 = vld [vmem:[%s1488 + $0xc] sm:$0xf]
    %v1497 = vunpack.c.l.b16 %v1489
    %v1498 = vunpack.c.l.b16 %v1490
    %v1499 = vunpack.c.l.b16 %v1491
    %v1500 = vunpack.c.l.b16 %v1492
    %v1501 = vpack.c.b16 %v1498, %v1497
    %v1502 = vpack.c.b16 %v1500, %v1499
    %1505 = vmatprep.subr.bf16.mxu0 0
    %1506 = vmatpush1.bf16.msra.mxu0 %v300
    %1507 = vmatprep.subr.bf16.mxu0 0
    %1508 = vmatpush1.bf16.msra.mxu0 %v301
    %1509 = vmatprep.subr.bf16.mxu0 0
    %1510 = vmatpush1.bf16.msra.mxu0 %v302
    %1511 = vmatprep.subr.bf16.mxu0 0
    %1512 = vmatpush1.bf16.msra.mxu0 %v303
    %1513 = vmatprep.subr.bf16.mxu0 0
    %1514 = vmatpush1.bf16.msra.mxu0 %v304
    %1515 = vmatprep.subr.bf16.mxu0 0
    %1516 = vmatpush1.bf16.msra.mxu0 %v305
    %1517 = vmatprep.subr.bf16.mxu0 0
    %1518 = vmatpush1.bf16.msra.mxu0 %v306
    %1519 = vmatprep.subr.bf16.mxu0 0
    %1520 = vmatpush1.bf16.msra.mxu0 %v307
    %1521 = vmatprep.subr.bf16.mxu0 0
    %1522 = vmatpush1.bf16.msra.mxu0 0
    %1523 = vmatprep.subr.bf16.mxu0 0
    %1524 = vmatpush1.bf16.msra.mxu0 0
    %1525 = vmatprep.subr.bf16.mxu0 0
    %1526 = vmatpush1.bf16.msra.mxu0 0
    %1527 = vmatprep.subr.bf16.mxu0 0
    %1528 = vmatpush1.bf16.msra.mxu0 0
    %1529 = vmatprep.subr.bf16.mxu0 0
    %1530 = vmatpush1.bf16.msra.mxu0 0
    %1531 = vmatprep.subr.bf16.mxu0 0
    %1532 = vmatpush1.bf16.msra.mxu0 0
    %1533 = vmatprep.subr.bf16.mxu0 0
    %1534 = vmatpush1.bf16.msra.mxu0 0
    %1535 = vmatprep.subr.bf16.mxu0 0
    %1536 = vmatpush1.bf16.msra.mxu0 0
    %1537 = vmatprep.mubr.bf16.mxu0 0
    %1538 = vmatmul.mubr.bf16.gmra.mrb[0].mxu0 %v1501
    %v1539 = vpop.f32.mrb[0].mxu0
    %v1540 = vadd.f32 0.0, %v1539
    %v1541 = vpop.f32.mrb[0].mxu0
    %v1542 = vpop.f32.mrb[0].mxu0
    %v1543 = vadd.f32 0.0, %v1542
    %v1544 = vpop.f32.mrb[0].mxu0
    %1545 = vmatprep.mubr.bf16.mxu0 0
    %1546 = vmatmul.mubr.bf16.gmra.mrb[0].mxu0 %v1502
    %v1547 = vpop.f32.mrb[0].mxu0
    %v1548 = vadd.f32 0.0, %v1547
    %v1549 = vpop.f32.mrb[0].mxu0
    %v1550 = vpop.f32.mrb[0].mxu0
    %v1551 = vadd.f32 0.0, %v1550
    %v1552 = vpop.f32.mrb[0].mxu0
    %1553 = vdwg.mxu0
    %v1554 = vpack.c.bf16 %v1543, %v1540
    %v1555 = vpack.c.bf16 %v1551, %v1548
    %s1556 = scalar_lea.vmem %s4, 36
    %v1557 = vld [vmem:[%s1556] sm:$0xf]
    %v1559 = vsel %vm446, %v1554, 0
    %v1562 = vsel %vm446, %v1555, 0
    %v1565 = vsel %vm453, %v1557, 0
    %1567 = vmatprep.subr.bf16.mxu0 0
    %1568 = vmatpush1.bf16.msra.mxu0 %v1565
    %1569 = vmatprep.subr.bf16.mxu0 0
    %1570 = vmatpush1.bf16.msra.mxu0 0
    %1571 = vmatprep.subr.bf16.mxu0 0
    %1572 = vmatpush1.bf16.msra.mxu0 0
    %1573 = vmatprep.subr.bf16.mxu0 0
    %1574 = vmatpush1.bf16.msra.mxu0 0
    %1575 = vmatprep.subr.bf16.mxu0 0
    %1576 = vmatpush1.bf16.msra.mxu0 0
    %1577 = vmatprep.subr.bf16.mxu0 0
    %1578 = vmatpush1.bf16.msra.mxu0 0
    %1579 = vmatprep.subr.bf16.mxu0 0
    %1580 = vmatpush1.bf16.msra.mxu0 0
    %1581 = vmatprep.subr.bf16.mxu0 0
    %1582 = vmatpush1.bf16.msra.mxu0 0
    %1583 = vmatprep.subr.bf16.mxu0 0
    %1584 = vmatpush1.bf16.msra.mxu0 0
    %1585 = vmatprep.subr.bf16.mxu0 0
    %1586 = vmatpush1.bf16.msra.mxu0 0
    %1587 = vmatprep.subr.bf16.mxu0 0
    %1588 = vmatpush1.bf16.msra.mxu0 0
    %1589 = vmatprep.subr.bf16.mxu0 0
    %1590 = vmatpush1.bf16.msra.mxu0 0
    %1591 = vmatprep.subr.bf16.mxu0 0
    %1592 = vmatpush1.bf16.msra.mxu0 0
    %1593 = vmatprep.subr.bf16.mxu0 0
    %1594 = vmatpush1.bf16.msra.mxu0 0
    %1595 = vmatprep.subr.bf16.mxu0 0
    %1596 = vmatpush1.bf16.msra.mxu0 0
    %1597 = vmatprep.subr.bf16.mxu0 0
    %1598 = vmatpush1.bf16.msra.mxu0 0
    %1599 = vmatprep.mubr.bf16.mxu0 0
    %1600 = vmatmul.mubr.bf16.gmra.mrb[0].mxu0 %v1559
    %v1601 = vpop.f32.mrb[0].mxu0
    %v1602 = vadd.f32 0.0, %v1601
    %v1603 = vpop.f32.mrb[0].mxu0
    %v1604 = vpop.f32.mrb[0].mxu0
    %v1605 = vadd.f32 0.0, %v1604
    %v1606 = vpop.f32.mrb[0].mxu0
    %1607 = vmatprep.mubr.bf16.mxu0 0
    %1608 = vmatmul.mubr.bf16.gmra.mrb[0].mxu0 %v1562
    %v1609 = vpop.f32.mrb[0].mxu0
    %v1610 = vadd.f32 0.0, %v1609
    %v1611 = vpop.f32.mrb[0].mxu0
    %v1612 = vpop.f32.mrb[0].mxu0
    %v1613 = vadd.f32 0.0, %v1612
    %v1614 = vpop.f32.mrb[0].mxu0
    %1615 = vdwg.mxu0
    %v1616 = vadd.f32 %v1484, %v1602
    %v1617 = vadd.f32 %v1485, %v1605
    %v1618 = vadd.f32 %v1486, %v1610
    %v1619 = vadd.f32 %v1487, %v1613
    %s1620 = scalar_lea.vmem %s3, 160
    %v1621 = vld [vmem:[%s1620] sm:$0xf]
    %v1622 = vld [vmem:[%s1620 + $0x4] sm:$0xf]
    %v1623 = vld [vmem:[%s1620 + $0x8] sm:$0xf]
    %v1624 = vld [vmem:[%s1620 + $0xc] sm:$0xf]
    %v1629 = vunpack.c.l.b16 %v1621
    %v1630 = vunpack.c.l.b16 %v1622
    %v1631 = vunpack.c.l.b16 %v1623
    %v1632 = vunpack.c.l.b16 %v1624
    %v1633 = vpack.c.b16 %v1630, %v1629
    %v1634 = vpack.c.b16 %v1632, %v1631
    %1637 = vmatprep.subr.bf16.mxu0 0
    %1638 = vmatpush1.bf16.msra.mxu0 %v300
    %1639 = vmatprep.subr.bf16.mxu0 0
    %1640 = vmatpush1.bf16.msra.mxu0 %v301
    %1641 = vmatprep.subr.bf16.mxu0 0
    %1642 = vmatpush1.bf16.msra.mxu0 %v302
    %1643 = vmatprep.subr.bf16.mxu0 0
    %1644 = vmatpush1.bf16.msra.mxu0 %v303
    %1645 = vmatprep.subr.bf16.mxu0 0
    %1646 = vmatpush1.bf16.msra.mxu0 %v304
    %1647 = vmatprep.subr.bf16.mxu0 0
    %1648 = vmatpush1.bf16.msra.mxu0 %v305
    %1649 = vmatprep.subr.bf16.mxu0 0
    %1650 = vmatpush1.bf16.msra.mxu0 %v306
    %1651 = vmatprep.subr.bf16.mxu0 0
    %1652 = vmatpush1.bf16.msra.mxu0 %v307
    %1653 = vmatprep.subr.bf16.mxu0 0
    %1654 = vmatpush1.bf16.msra.mxu0 0
    %1655 = vmatprep.subr.bf16.mxu0 0
    %1656 = vmatpush1.bf16.msra.mxu0 0
    %1657 = vmatprep.subr.bf16.mxu0 0
    %1658 = vmatpush1.bf16.msra.mxu0 0
    %1659 = vmatprep.subr.bf16.mxu0 0
    %1660 = vmatpush1.bf16.msra.mxu0 0
    %1661 = vmatprep.subr.bf16.mxu0 0
    %1662 = vmatpush1.bf16.msra.mxu0 0
    %1663 = vmatprep.subr.bf16.mxu0 0
    %1664 = vmatpush1.bf16.msra.mxu0 0
    %1665 = vmatprep.subr.bf16.mxu0 0
    %1666 = vmatpush1.bf16.msra.mxu0 0
    %1667 = vmatprep.subr.bf16.mxu0 0
    %1668 = vmatpush1.bf16.msra.mxu0 0
    %1669 = vmatprep.mubr.bf16.mxu0 0
    %1670 = vmatmul.mubr.bf16.gmra.mrb[0].mxu0 %v1633
    %v1671 = vpop.f32.mrb[0].mxu0
    %v1672 = vadd.f32 0.0, %v1671
    %v1673 = vpop.f32.mrb[0].mxu0
    %v1674 = vpop.f32.mrb[0].mxu0
    %v1675 = vadd.f32 0.0, %v1674
    %v1676 = vpop.f32.mrb[0].mxu0
    %1677 = vmatprep.mubr.bf16.mxu0 0
    %1678 = vmatmul.mubr.bf16.gmra.mrb[0].mxu0 %v1634
    %v1679 = vpop.f32.mrb[0].mxu0
    %v1680 = vadd.f32 0.0, %v1679
    %v1681 = vpop.f32.mrb[0].mxu0
    %v1682 = vpop.f32.mrb[0].mxu0
    %v1683 = vadd.f32 0.0, %v1682
    %v1684 = vpop.f32.mrb[0].mxu0
    %1685 = vdwg.mxu0
    %v1686 = vpack.c.bf16 %v1675, %v1672
    %v1687 = vpack.c.bf16 %v1683, %v1680
    %s1688 = scalar_lea.vmem %s4, 40
    %v1689 = vld [vmem:[%s1688] sm:$0xf]
    %v1691 = vsel %vm446, %v1686, 0
    %v1694 = vsel %vm446, %v1687, 0
    %v1697 = vsel %vm453, %v1689, 0
    %1699 = vmatprep.subr.bf16.mxu0 0
    %1700 = vmatpush1.bf16.msra.mxu0 %v1697
    %1701 = vmatprep.subr.bf16.mxu0 0
    %1702 = vmatpush1.bf16.msra.mxu0 0
    %1703 = vmatprep.subr.bf16.mxu0 0
    %1704 = vmatpush1.bf16.msra.mxu0 0
    %1705 = vmatprep.subr.bf16.mxu0 0
    %1706 = vmatpush1.bf16.msra.mxu0 0
    %1707 = vmatprep.subr.bf16.mxu0 0
    %1708 = vmatpush1.bf16.msra.mxu0 0
    %1709 = vmatprep.subr.bf16.mxu0 0
    %1710 = vmatpush1.bf16.msra.mxu0 0
    %1711 = vmatprep.subr.bf16.mxu0 0
    %1712 = vmatpush1.bf16.msra.mxu0 0
    %1713 = vmatprep.subr.bf16.mxu0 0
    %1714 = vmatpush1.bf16.msra.mxu0 0
    %1715 = vmatprep.subr.bf16.mxu0 0
    %1716 = vmatpush1.bf16.msra.mxu0 0
    %1717 = vmatprep.subr.bf16.mxu0 0
    %1718 = vmatpush1.bf16.msra.mxu0 0
    %1719 = vmatprep.subr.bf16.mxu0 0
    %1720 = vmatpush1.bf16.msra.mxu0 0
    %1721 = vmatprep.subr.bf16.mxu0 0
    %1722 = vmatpush1.bf16.msra.mxu0 0
    %1723 = vmatprep.subr.bf16.mxu0 0
    %1724 = vmatpush1.bf16.msra.mxu0 0
    %1725 = vmatprep.subr.bf16.mxu0 0
    %1726 = vmatpush1.bf16.msra.mxu0 0
    %1727 = vmatprep.subr.bf16.mxu0 0
    %1728 = vmatpush1.bf16.msra.mxu0 0
    %1729 = vmatprep.subr.bf16.mxu0 0
    %1730 = vmatpush1.bf16.msra.mxu0 0
    %1731 = vmatprep.mubr.bf16.mxu0 0
    %1732 = vmatmul.mubr.bf16.gmra.mrb[0].mxu0 %v1691
    %v1733 = vpop.f32.mrb[0].mxu0
    %v1734 = vadd.f32 0.0, %v1733
    %v1735 = vpop.f32.mrb[0].mxu0
    %v1736 = vpop.f32.mrb[0].mxu0
    %v1737 = vadd.f32 0.0, %v1736
    %v1738 = vpop.f32.mrb[0].mxu0
    %1739 = vmatprep.mubr.bf16.mxu0 0
    %1740 = vmatmul.mubr.bf16.gmra.mrb[0].mxu0 %v1694
    %v1741 = vpop.f32.mrb[0].mxu0
    %v1742 = vadd.f32 0.0, %v1741
    %v1743 = vpop.f32.mrb[0].mxu0
    %v1744 = vpop.f32.mrb[0].mxu0
    %v1745 = vadd.f32 0.0, %v1744
    %v1746 = vpop.f32.mrb[0].mxu0
    %1747 = vdwg.mxu0
    %v1748 = vadd.f32 %v1616, %v1734
    %v1749 = vadd.f32 %v1617, %v1737
    %v1750 = vadd.f32 %v1618, %v1742
    %v1751 = vadd.f32 %v1619, %v1745
    %s1752 = scalar_lea.vmem %s3, 176
    %v1753 = vld [vmem:[%s1752] sm:$0xf]
    %v1754 = vld [vmem:[%s1752 + $0x4] sm:$0xf]
    %v1755 = vld [vmem:[%s1752 + $0x8] sm:$0xf]
    %v1756 = vld [vmem:[%s1752 + $0xc] sm:$0xf]
    %v1761 = vunpack.c.l.b16 %v1753
    %v1762 = vunpack.c.l.b16 %v1754
    %v1763 = vunpack.c.l.b16 %v1755
    %v1764 = vunpack.c.l.b16 %v1756
    %v1765 = vpack.c.b16 %v1762, %v1761
    %v1766 = vpack.c.b16 %v1764, %v1763
    %1769 = vmatprep.subr.bf16.mxu0 0
    %1770 = vmatpush1.bf16.msra.mxu0 %v300
    %1771 = vmatprep.subr.bf16.mxu0 0
    %1772 = vmatpush1.bf16.msra.mxu0 %v301
    %1773 = vmatprep.subr.bf16.mxu0 0
    %1774 = vmatpush1.bf16.msra.mxu0 %v302
    %1775 = vmatprep.subr.bf16.mxu0 0
    %1776 = vmatpush1.bf16.msra.mxu0 %v303
    %1777 = vmatprep.subr.bf16.mxu0 0
    %1778 = vmatpush1.bf16.msra.mxu0 %v304
    %1779 = vmatprep.subr.bf16.mxu0 0
    %1780 = vmatpush1.bf16.msra.mxu0 %v305
    %1781 = vmatprep.subr.bf16.mxu0 0
    %1782 = vmatpush1.bf16.msra.mxu0 %v306
    %1783 = vmatprep.subr.bf16.mxu0 0
    %1784 = vmatpush1.bf16.msra.mxu0 %v307
    %1785 = vmatprep.subr.bf16.mxu0 0
    %1786 = vmatpush1.bf16.msra.mxu0 0
    %1787 = vmatprep.subr.bf16.mxu0 0
    %1788 = vmatpush1.bf16.msra.mxu0 0
    %1789 = vmatprep.subr.bf16.mxu0 0
    %1790 = vmatpush1.bf16.msra.mxu0 0
    %1791 = vmatprep.subr.bf16.mxu0 0
    %1792 = vmatpush1.bf16.msra.mxu0 0
    %1793 = vmatprep.subr.bf16.mxu0 0
    %1794 = vmatpush1.bf16.msra.mxu0 0
    %1795 = vmatprep.subr.bf16.mxu0 0
    %1796 = vmatpush1.bf16.msra.mxu0 0
    %1797 = vmatprep.subr.bf16.mxu0 0
    %1798 = vmatpush1.bf16.msra.mxu0 0
    %1799 = vmatprep.subr.bf16.mxu0 0
    %1800 = vmatpush1.bf16.msra.mxu0 0
    %1801 = vmatprep.mubr.bf16.mxu0 0
    %1802 = vmatmul.mubr.bf16.gmra.mrb[0].mxu0 %v1765
    %v1803 = vpop.f32.mrb[0].mxu0
    %v1804 = vadd.f32 0.0, %v1803
    %v1805 = vpop.f32.mrb[0].mxu0
    %v1806 = vpop.f32.mrb[0].mxu0
    %v1807 = vadd.f32 0.0, %v1806
    %v1808 = vpop.f32.mrb[0].mxu0
    %1809 = vmatprep.mubr.bf16.mxu0 0
    %1810 = vmatmul.mubr.bf16.gmra.mrb[0].mxu0 %v1766
    %v1811 = vpop.f32.mrb[0].mxu0
    %v1812 = vadd.f32 0.0, %v1811
    %v1813 = vpop.f32.mrb[0].mxu0
    %v1814 = vpop.f32.mrb[0].mxu0
    %v1815 = vadd.f32 0.0, %v1814
    %v1816 = vpop.f32.mrb[0].mxu0
    %1817 = vdwg.mxu0
    %v1818 = vpack.c.bf16 %v1807, %v1804
    %v1819 = vpack.c.bf16 %v1815, %v1812
    %s1820 = scalar_lea.vmem %s4, 44
    %v1821 = vld [vmem:[%s1820] sm:$0xf]
    %v1823 = vsel %vm446, %v1818, 0
    %v1826 = vsel %vm446, %v1819, 0
    %v1829 = vsel %vm453, %v1821, 0
    %1831 = vmatprep.subr.bf16.mxu0 0
    %1832 = vmatpush1.bf16.msra.mxu0 %v1829
    %1833 = vmatprep.subr.bf16.mxu0 0
    %1834 = vmatpush1.bf16.msra.mxu0 0
    %1835 = vmatprep.subr.bf16.mxu0 0
    %1836 = vmatpush1.bf16.msra.mxu0 0
    %1837 = vmatprep.subr.bf16.mxu0 0
    %1838 = vmatpush1.bf16.msra.mxu0 0
    %1839 = vmatprep.subr.bf16.mxu0 0
    %1840 = vmatpush1.bf16.msra.mxu0 0
    %1841 = vmatprep.subr.bf16.mxu0 0
    %1842 = vmatpush1.bf16.msra.mxu0 0
    %1843 = vmatprep.subr.bf16.mxu0 0
    %1844 = vmatpush1.bf16.msra.mxu0 0
    %1845 = vmatprep.subr.bf16.mxu0 0
    %1846 = vmatpush1.bf16.msra.mxu0 0
    %1847 = vmatprep.subr.bf16.mxu0 0
    %1848 = vmatpush1.bf16.msra.mxu0 0
    %1849 = vmatprep.subr.bf16.mxu0 0
    %1850 = vmatpush1.bf16.msra.mxu0 0
    %1851 = vmatprep.subr.bf16.mxu0 0
    %1852 = vmatpush1.bf16.msra.mxu0 0
    %1853 = vmatprep.subr.bf16.mxu0 0
    %1854 = vmatpush1.bf16.msra.mxu0 0
    %1855 = vmatprep.subr.bf16.mxu0 0
    %1856 = vmatpush1.bf16.msra.mxu0 0
    %1857 = vmatprep.subr.bf16.mxu0 0
    %1858 = vmatpush1.bf16.msra.mxu0 0
    %1859 = vmatprep.subr.bf16.mxu0 0
    %1860 = vmatpush1.bf16.msra.mxu0 0
    %1861 = vmatprep.subr.bf16.mxu0 0
    %1862 = vmatpush1.bf16.msra.mxu0 0
    %1863 = vmatprep.mubr.bf16.mxu0 0
    %1864 = vmatmul.mubr.bf16.gmra.mrb[0].mxu0 %v1823
    %v1865 = vpop.f32.mrb[0].mxu0
    %v1866 = vadd.f32 0.0, %v1865
    %v1867 = vpop.f32.mrb[0].mxu0
    %v1868 = vpop.f32.mrb[0].mxu0
    %v1869 = vadd.f32 0.0, %v1868
    %v1870 = vpop.f32.mrb[0].mxu0
    %1871 = vmatprep.mubr.bf16.mxu0 0
    %1872 = vmatmul.mubr.bf16.gmra.mrb[0].mxu0 %v1826
    %v1873 = vpop.f32.mrb[0].mxu0
    %v1874 = vadd.f32 0.0, %v1873
    %v1875 = vpop.f32.mrb[0].mxu0
    %v1876 = vpop.f32.mrb[0].mxu0
    %v1877 = vadd.f32 0.0, %v1876
    %v1878 = vpop.f32.mrb[0].mxu0
    %1879 = vdwg.mxu0
    %v1880 = vadd.f32 %v1748, %v1866
    %v1881 = vadd.f32 %v1749, %v1869
    %v1882 = vadd.f32 %v1750, %v1874
    %v1883 = vadd.f32 %v1751, %v1877
    %s1884 = scalar_lea.vmem %s3, 192
    %v1885 = vld [vmem:[%s1884] sm:$0xf]
    %v1886 = vld [vmem:[%s1884 + $0x4] sm:$0xf]
    %v1887 = vld [vmem:[%s1884 + $0x8] sm:$0xf]
    %v1888 = vld [vmem:[%s1884 + $0xc] sm:$0xf]
    %v1893 = vunpack.c.l.b16 %v1885
    %v1894 = vunpack.c.l.b16 %v1886
    %v1895 = vunpack.c.l.b16 %v1887
    %v1896 = vunpack.c.l.b16 %v1888
    %v1897 = vpack.c.b16 %v1894, %v1893
    %v1898 = vpack.c.b16 %v1896, %v1895
    %1901 = vmatprep.subr.bf16.mxu0 0
    %1902 = vmatpush1.bf16.msra.mxu0 %v300
    %1903 = vmatprep.subr.bf16.mxu0 0
    %1904 = vmatpush1.bf16.msra.mxu0 %v301
    %1905 = vmatprep.subr.bf16.mxu0 0
    %1906 = vmatpush1.bf16.msra.mxu0 %v302
    %1907 = vmatprep.subr.bf16.mxu0 0
    %1908 = vmatpush1.bf16.msra.mxu0 %v303
    %1909 = vmatprep.subr.bf16.mxu0 0
    %1910 = vmatpush1.bf16.msra.mxu0 %v304
    %1911 = vmatprep.subr.bf16.mxu0 0
    %1912 = vmatpush1.bf16.msra.mxu0 %v305
    %1913 = vmatprep.subr.bf16.mxu0 0
    %1914 = vmatpush1.bf16.msra.mxu0 %v306
    %1915 = vmatprep.subr.bf16.mxu0 0
    %1916 = vmatpush1.bf16.msra.mxu0 %v307
    %1917 = vmatprep.subr.bf16.mxu0 0
    %1918 = vmatpush1.bf16.msra.mxu0 0
    %1919 = vmatprep.subr.bf16.mxu0 0
    %1920 = vmatpush1.bf16.msra.mxu0 0
    %1921 = vmatprep.subr.bf16.mxu0 0
    %1922 = vmatpush1.bf16.msra.mxu0 0
    %1923 = vmatprep.subr.bf16.mxu0 0
    %1924 = vmatpush1.bf16.msra.mxu0 0
    %1925 = vmatprep.subr.bf16.mxu0 0
    %1926 = vmatpush1.bf16.msra.mxu0 0
    %1927 = vmatprep.subr.bf16.mxu0 0
    %1928 = vmatpush1.bf16.msra.mxu0 0
    %1929 = vmatprep.subr.bf16.mxu0 0
    %1930 = vmatpush1.bf16.msra.mxu0 0
    %1931 = vmatprep.subr.bf16.mxu0 0
    %1932 = vmatpush1.bf16.msra.mxu0 0
    %1933 = vmatprep.mubr.bf16.mxu0 0
    %1934 = vmatmul.mubr.bf16.gmra.mrb[0].mxu0 %v1897
    %v1935 = vpop.f32.mrb[0].mxu0
    %v1936 = vadd.f32 0.0, %v1935
    %v1937 = vpop.f32.mrb[0].mxu0
    %v1938 = vpop.f32.mrb[0].mxu0
    %v1939 = vadd.f32 0.0, %v1938
    %v1940 = vpop.f32.mrb[0].mxu0
    %1941 = vmatprep.mubr.bf16.mxu0 0
    %1942 = vmatmul.mubr.bf16.gmra.mrb[0].mxu0 %v1898
    %v1943 = vpop.f32.mrb[0].mxu0
    %v1944 = vadd.f32 0.0, %v1943
    %v1945 = vpop.f32.mrb[0].mxu0
    %v1946 = vpop.f32.mrb[0].mxu0
    %v1947 = vadd.f32 0.0, %v1946
    %v1948 = vpop.f32.mrb[0].mxu0
    %1949 = vdwg.mxu0
    %v1950 = vpack.c.bf16 %v1939, %v1936
    %v1951 = vpack.c.bf16 %v1947, %v1944
    %s1952 = scalar_lea.vmem %s4, 48
    %v1953 = vld [vmem:[%s1952] sm:$0xf]
    %v1955 = vsel %vm446, %v1950, 0
    %v1958 = vsel %vm446, %v1951, 0
    %v1961 = vsel %vm453, %v1953, 0
    %1963 = vmatprep.subr.bf16.mxu0 0
    %1964 = vmatpush1.bf16.msra.mxu0 %v1961
    %1965 = vmatprep.subr.bf16.mxu0 0
    %1966 = vmatpush1.bf16.msra.mxu0 0
    %1967 = vmatprep.subr.bf16.mxu0 0
    %1968 = vmatpush1.bf16.msra.mxu0 0
    %1969 = vmatprep.subr.bf16.mxu0 0
    %1970 = vmatpush1.bf16.msra.mxu0 0
    %1971 = vmatprep.subr.bf16.mxu0 0
    %1972 = vmatpush1.bf16.msra.mxu0 0
    %1973 = vmatprep.subr.bf16.mxu0 0
    %1974 = vmatpush1.bf16.msra.mxu0 0
    %1975 = vmatprep.subr.bf16.mxu0 0
    %1976 = vmatpush1.bf16.msra.mxu0 0
    %1977 = vmatprep.subr.bf16.mxu0 0
    %1978 = vmatpush1.bf16.msra.mxu0 0
    %1979 = vmatprep.subr.bf16.mxu0 0
    %1980 = vmatpush1.bf16.msra.mxu0 0
    %1981 = vmatprep.subr.bf16.mxu0 0
    %1982 = vmatpush1.bf16.msra.mxu0 0
    %1983 = vmatprep.subr.bf16.mxu0 0
    %1984 = vmatpush1.bf16.msra.mxu0 0
    %1985 = vmatprep.subr.bf16.mxu0 0
    %1986 = vmatpush1.bf16.msra.mxu0 0
    %1987 = vmatprep.subr.bf16.mxu0 0
    %1988 = vmatpush1.bf16.msra.mxu0 0
    %1989 = vmatprep.subr.bf16.mxu0 0
    %1990 = vmatpush1.bf16.msra.mxu0 0
    %1991 = vmatprep.subr.bf16.mxu0 0
    %1992 = vmatpush1.bf16.msra.mxu0 0
    %1993 = vmatprep.subr.bf16.mxu0 0
    %1994 = vmatpush1.bf16.msra.mxu0 0
    %1995 = vmatprep.mubr.bf16.mxu0 0
    %1996 = vmatmul.mubr.bf16.gmra.mrb[0].mxu0 %v1955
    %v1997 = vpop.f32.mrb[0].mxu0
    %v1998 = vadd.f32 0.0, %v1997
    %v1999 = vpop.f32.mrb[0].mxu0
    %v2000 = vpop.f32.mrb[0].mxu0
    %v2001 = vadd.f32 0.0, %v2000
    %v2002 = vpop.f32.mrb[0].mxu0
    %2003 = vmatprep.mubr.bf16.mxu0 0
    %2004 = vmatmul.mubr.bf16.gmra.mrb[0].mxu0 %v1958
    %v2005 = vpop.f32.mrb[0].mxu0
    %v2006 = vadd.f32 0.0, %v2005
    %v2007 = vpop.f32.mrb[0].mxu0
    %v2008 = vpop.f32.mrb[0].mxu0
    %v2009 = vadd.f32 0.0, %v2008
    %v2010 = vpop.f32.mrb[0].mxu0
    %2011 = vdwg.mxu0
    %v2012 = vadd.f32 %v1880, %v1998
    %v2013 = vadd.f32 %v1881, %v2001
    %v2014 = vadd.f32 %v1882, %v2006
    %v2015 = vadd.f32 %v1883, %v2009
    %s2016 = scalar_lea.vmem %s3, 208
    %v2017 = vld [vmem:[%s2016] sm:$0xf]
    %v2018 = vld [vmem:[%s2016 + $0x4] sm:$0xf]
    %v2019 = vld [vmem:[%s2016 + $0x8] sm:$0xf]
    %v2020 = vld [vmem:[%s2016 + $0xc] sm:$0xf]
    %v2025 = vunpack.c.l.b16 %v2017
    %v2026 = vunpack.c.l.b16 %v2018
    %v2027 = vunpack.c.l.b16 %v2019
    %v2028 = vunpack.c.l.b16 %v2020
    %v2029 = vpack.c.b16 %v2026, %v2025
    %v2030 = vpack.c.b16 %v2028, %v2027
    %2033 = vmatprep.subr.bf16.mxu0 0
    %2034 = vmatpush1.bf16.msra.mxu0 %v300
    %2035 = vmatprep.subr.bf16.mxu0 0
    %2036 = vmatpush1.bf16.msra.mxu0 %v301
    %2037 = vmatprep.subr.bf16.mxu0 0
    %2038 = vmatpush1.bf16.msra.mxu0 %v302
    %2039 = vmatprep.subr.bf16.mxu0 0
    %2040 = vmatpush1.bf16.msra.mxu0 %v303
    %2041 = vmatprep.subr.bf16.mxu0 0
    %2042 = vmatpush1.bf16.msra.mxu0 %v304
    %2043 = vmatprep.subr.bf16.mxu0 0
    %2044 = vmatpush1.bf16.msra.mxu0 %v305
    %2045 = vmatprep.subr.bf16.mxu0 0
    %2046 = vmatpush1.bf16.msra.mxu0 %v306
    %2047 = vmatprep.subr.bf16.mxu0 0
    %2048 = vmatpush1.bf16.msra.mxu0 %v307
    %2049 = vmatprep.subr.bf16.mxu0 0
    %2050 = vmatpush1.bf16.msra.mxu0 0
    %2051 = vmatprep.subr.bf16.mxu0 0
    %2052 = vmatpush1.bf16.msra.mxu0 0
    %2053 = vmatprep.subr.bf16.mxu0 0
    %2054 = vmatpush1.bf16.msra.mxu0 0
    %2055 = vmatprep.subr.bf16.mxu0 0
    %2056 = vmatpush1.bf16.msra.mxu0 0
    %2057 = vmatprep.subr.bf16.mxu0 0
    %2058 = vmatpush1.bf16.msra.mxu0 0
    %2059 = vmatprep.subr.bf16.mxu0 0
    %2060 = vmatpush1.bf16.msra.mxu0 0
    %2061 = vmatprep.subr.bf16.mxu0 0
    %2062 = vmatpush1.bf16.msra.mxu0 0
    %2063 = vmatprep.subr.bf16.mxu0 0
    %2064 = vmatpush1.bf16.msra.mxu0 0
    %2065 = vmatprep.mubr.bf16.mxu0 0
    %2066 = vmatmul.mubr.bf16.gmra.mrb[0].mxu0 %v2029
    %v2067 = vpop.f32.mrb[0].mxu0
    %v2068 = vadd.f32 0.0, %v2067
    %v2069 = vpop.f32.mrb[0].mxu0
    %v2070 = vpop.f32.mrb[0].mxu0
    %v2071 = vadd.f32 0.0, %v2070
    %v2072 = vpop.f32.mrb[0].mxu0
    %2073 = vmatprep.mubr.bf16.mxu0 0
    %2074 = vmatmul.mubr.bf16.gmra.mrb[0].mxu0 %v2030
    %v2075 = vpop.f32.mrb[0].mxu0
    %v2076 = vadd.f32 0.0, %v2075
    %v2077 = vpop.f32.mrb[0].mxu0
    %v2078 = vpop.f32.mrb[0].mxu0
    %v2079 = vadd.f32 0.0, %v2078
    %v2080 = vpop.f32.mrb[0].mxu0
    %2081 = vdwg.mxu0
    %v2082 = vpack.c.bf16 %v2071, %v2068
    %v2083 = vpack.c.bf16 %v2079, %v2076
    %s2084 = scalar_lea.vmem %s4, 52
    %v2085 = vld [vmem:[%s2084] sm:$0xf]
    %v2087 = vsel %vm446, %v2082, 0
    %v2090 = vsel %vm446, %v2083, 0
    %v2093 = vsel %vm453, %v2085, 0
    %2095 = vmatprep.subr.bf16.mxu0 0
    %2096 = vmatpush1.bf16.msra.mxu0 %v2093
    %2097 = vmatprep.subr.bf16.mxu0 0
    %2098 = vmatpush1.bf16.msra.mxu0 0
    %2099 = vmatprep.subr.bf16.mxu0 0
    %2100 = vmatpush1.bf16.msra.mxu0 0
    %2101 = vmatprep.subr.bf16.mxu0 0
    %2102 = vmatpush1.bf16.msra.mxu0 0
    %2103 = vmatprep.subr.bf16.mxu0 0
    %2104 = vmatpush1.bf16.msra.mxu0 0
    %2105 = vmatprep.subr.bf16.mxu0 0
    %2106 = vmatpush1.bf16.msra.mxu0 0
    %2107 = vmatprep.subr.bf16.mxu0 0
    %2108 = vmatpush1.bf16.msra.mxu0 0
    %2109 = vmatprep.subr.bf16.mxu0 0
    %2110 = vmatpush1.bf16.msra.mxu0 0
    %2111 = vmatprep.subr.bf16.mxu0 0
    %2112 = vmatpush1.bf16.msra.mxu0 0
    %2113 = vmatprep.subr.bf16.mxu0 0
    %2114 = vmatpush1.bf16.msra.mxu0 0
    %2115 = vmatprep.subr.bf16.mxu0 0
    %2116 = vmatpush1.bf16.msra.mxu0 0
    %2117 = vmatprep.subr.bf16.mxu0 0
    %2118 = vmatpush1.bf16.msra.mxu0 0
    %2119 = vmatprep.subr.bf16.mxu0 0
    %2120 = vmatpush1.bf16.msra.mxu0 0
    %2121 = vmatprep.subr.bf16.mxu0 0
    %2122 = vmatpush1.bf16.msra.mxu0 0
    %2123 = vmatprep.subr.bf16.mxu0 0
    %2124 = vmatpush1.bf16.msra.mxu0 0
    %2125 = vmatprep.subr.bf16.mxu0 0
    %2126 = vmatpush1.bf16.msra.mxu0 0
    %2127 = vmatprep.mubr.bf16.mxu0 0
    %2128 = vmatmul.mubr.bf16.gmra.mrb[0].mxu0 %v2087
    %v2129 = vpop.f32.mrb[0].mxu0
    %v2130 = vadd.f32 0.0, %v2129
    %v2131 = vpop.f32.mrb[0].mxu0
    %v2132 = vpop.f32.mrb[0].mxu0
    %v2133 = vadd.f32 0.0, %v2132
    %v2134 = vpop.f32.mrb[0].mxu0
    %2135 = vmatprep.mubr.bf16.mxu0 0
    %2136 = vmatmul.mubr.bf16.gmra.mrb[0].mxu0 %v2090
    %v2137 = vpop.f32.mrb[0].mxu0
    %v2138 = vadd.f32 0.0, %v2137
    %v2139 = vpop.f32.mrb[0].mxu0
    %v2140 = vpop.f32.mrb[0].mxu0
    %v2141 = vadd.f32 0.0, %v2140
    %v2142 = vpop.f32.mrb[0].mxu0
    %2143 = vdwg.mxu0
    %v2144 = vadd.f32 %v2012, %v2130
    %v2145 = vadd.f32 %v2013, %v2133
    %v2146 = vadd.f32 %v2014, %v2138
    %v2147 = vadd.f32 %v2015, %v2141
    %s2148 = scalar_lea.vmem %s3, 224
    %v2149 = vld [vmem:[%s2148] sm:$0xf]
    %v2150 = vld [vmem:[%s2148 + $0x4] sm:$0xf]
    %v2151 = vld [vmem:[%s2148 + $0x8] sm:$0xf]
    %v2152 = vld [vmem:[%s2148 + $0xc] sm:$0xf]
    %v2157 = vunpack.c.l.b16 %v2149
    %v2158 = vunpack.c.l.b16 %v2150
    %v2159 = vunpack.c.l.b16 %v2151
    %v2160 = vunpack.c.l.b16 %v2152
    %v2161 = vpack.c.b16 %v2158, %v2157
    %v2162 = vpack.c.b16 %v2160, %v2159
    %2165 = vmatprep.subr.bf16.mxu0 0
    %2166 = vmatpush1.bf16.msra.mxu0 %v300
    %2167 = vmatprep.subr.bf16.mxu0 0
    %2168 = vmatpush1.bf16.msra.mxu0 %v301
    %2169 = vmatprep.subr.bf16.mxu0 0
    %2170 = vmatpush1.bf16.msra.mxu0 %v302
    %2171 = vmatprep.subr.bf16.mxu0 0
    %2172 = vmatpush1.bf16.msra.mxu0 %v303
    %2173 = vmatprep.subr.bf16.mxu0 0
    %2174 = vmatpush1.bf16.msra.mxu0 %v304
    %2175 = vmatprep.subr.bf16.mxu0 0
    %2176 = vmatpush1.bf16.msra.mxu0 %v305
    %2177 = vmatprep.subr.bf16.mxu0 0
    %2178 = vmatpush1.bf16.msra.mxu0 %v306
    %2179 = vmatprep.subr.bf16.mxu0 0
    %2180 = vmatpush1.bf16.msra.mxu0 %v307
    %2181 = vmatprep.subr.bf16.mxu0 0
    %2182 = vmatpush1.bf16.msra.mxu0 0
    %2183 = vmatprep.subr.bf16.mxu0 0
    %2184 = vmatpush1.bf16.msra.mxu0 0
    %2185 = vmatprep.subr.bf16.mxu0 0
    %2186 = vmatpush1.bf16.msra.mxu0 0
    %2187 = vmatprep.subr.bf16.mxu0 0
    %2188 = vmatpush1.bf16.msra.mxu0 0
    %2189 = vmatprep.subr.bf16.mxu0 0
    %2190 = vmatpush1.bf16.msra.mxu0 0
    %2191 = vmatprep.subr.bf16.mxu0 0
    %2192 = vmatpush1.bf16.msra.mxu0 0
    %2193 = vmatprep.subr.bf16.mxu0 0
    %2194 = vmatpush1.bf16.msra.mxu0 0
    %2195 = vmatprep.subr.bf16.mxu0 0
    %2196 = vmatpush1.bf16.msra.mxu0 0
    %2197 = vmatprep.mubr.bf16.mxu0 0
    %2198 = vmatmul.mubr.bf16.gmra.mrb[0].mxu0 %v2161
    %v2199 = vpop.f32.mrb[0].mxu0
    %v2200 = vadd.f32 0.0, %v2199
    %v2201 = vpop.f32.mrb[0].mxu0
    %v2202 = vpop.f32.mrb[0].mxu0
    %v2203 = vadd.f32 0.0, %v2202
    %v2204 = vpop.f32.mrb[0].mxu0
    %2205 = vmatprep.mubr.bf16.mxu0 0
    %2206 = vmatmul.mubr.bf16.gmra.mrb[0].mxu0 %v2162
    %v2207 = vpop.f32.mrb[0].mxu0
    %v2208 = vadd.f32 0.0, %v2207
    %v2209 = vpop.f32.mrb[0].mxu0
    %v2210 = vpop.f32.mrb[0].mxu0
    %v2211 = vadd.f32 0.0, %v2210
    %v2212 = vpop.f32.mrb[0].mxu0
    %2213 = vdwg.mxu0
    %v2214 = vpack.c.bf16 %v2203, %v2200
    %v2215 = vpack.c.bf16 %v2211, %v2208
    %s2216 = scalar_lea.vmem %s4, 56
    %v2217 = vld [vmem:[%s2216] sm:$0xf]
    %v2219 = vsel %vm446, %v2214, 0
    %v2222 = vsel %vm446, %v2215, 0
    %v2225 = vsel %vm453, %v2217, 0
    %2227 = vmatprep.subr.bf16.mxu0 0
    %2228 = vmatpush1.bf16.msra.mxu0 %v2225
    %2229 = vmatprep.subr.bf16.mxu0 0
    %2230 = vmatpush1.bf16.msra.mxu0 0
    %2231 = vmatprep.subr.bf16.mxu0 0
    %2232 = vmatpush1.bf16.msra.mxu0 0
    %2233 = vmatprep.subr.bf16.mxu0 0
    %2234 = vmatpush1.bf16.msra.mxu0 0
    %2235 = vmatprep.subr.bf16.mxu0 0
    %2236 = vmatpush1.bf16.msra.mxu0 0
    %2237 = vmatprep.subr.bf16.mxu0 0
    %2238 = vmatpush1.bf16.msra.mxu0 0
    %2239 = vmatprep.subr.bf16.mxu0 0
    %2240 = vmatpush1.bf16.msra.mxu0 0
    %2241 = vmatprep.subr.bf16.mxu0 0
    %2242 = vmatpush1.bf16.msra.mxu0 0
    %2243 = vmatprep.subr.bf16.mxu0 0
    %2244 = vmatpush1.bf16.msra.mxu0 0
    %2245 = vmatprep.subr.bf16.mxu0 0
    %2246 = vmatpush1.bf16.msra.mxu0 0
    %2247 = vmatprep.subr.bf16.mxu0 0
    %2248 = vmatpush1.bf16.msra.mxu0 0
    %2249 = vmatprep.subr.bf16.mxu0 0
    %2250 = vmatpush1.bf16.msra.mxu0 0
    %2251 = vmatprep.subr.bf16.mxu0 0
    %2252 = vmatpush1.bf16.msra.mxu0 0
    %2253 = vmatprep.subr.bf16.mxu0 0
    %2254 = vmatpush1.bf16.msra.mxu0 0
    %2255 = vmatprep.subr.bf16.mxu0 0
    %2256 = vmatpush1.bf16.msra.mxu0 0
    %2257 = vmatprep.subr.bf16.mxu0 0
    %2258 = vmatpush1.bf16.msra.mxu0 0
    %2259 = vmatprep.mubr.bf16.mxu0 0
    %2260 = vmatmul.mubr.bf16.gmra.mrb[0].mxu0 %v2219
    %v2261 = vpop.f32.mrb[0].mxu0
    %v2262 = vadd.f32 0.0, %v2261
    %v2263 = vpop.f32.mrb[0].mxu0
    %v2264 = vpop.f32.mrb[0].mxu0
    %v2265 = vadd.f32 0.0, %v2264
    %v2266 = vpop.f32.mrb[0].mxu0
    %2267 = vmatprep.mubr.bf16.mxu0 0
    %2268 = vmatmul.mubr.bf16.gmra.mrb[0].mxu0 %v2222
    %v2269 = vpop.f32.mrb[0].mxu0
    %v2270 = vadd.f32 0.0, %v2269
    %v2271 = vpop.f32.mrb[0].mxu0
    %v2272 = vpop.f32.mrb[0].mxu0
    %v2273 = vadd.f32 0.0, %v2272
    %v2274 = vpop.f32.mrb[0].mxu0
    %2275 = vdwg.mxu0
    %v2276 = vadd.f32 %v2144, %v2262
    %v2277 = vadd.f32 %v2145, %v2265
    %v2278 = vadd.f32 %v2146, %v2270
    %v2279 = vadd.f32 %v2147, %v2273
    %s2280 = scalar_lea.vmem %s3, 240
    %v2281 = vld [vmem:[%s2280] sm:$0xf]
    %v2282 = vld [vmem:[%s2280 + $0x4] sm:$0xf]
    %v2283 = vld [vmem:[%s2280 + $0x8] sm:$0xf]
    %v2284 = vld [vmem:[%s2280 + $0xc] sm:$0xf]
    %v2289 = vunpack.c.l.b16 %v2281
    %v2290 = vunpack.c.l.b16 %v2282
    %v2291 = vunpack.c.l.b16 %v2283
    %v2292 = vunpack.c.l.b16 %v2284
    %v2293 = vpack.c.b16 %v2290, %v2289
    %v2294 = vpack.c.b16 %v2292, %v2291
    %2297 = vmatprep.subr.bf16.mxu0 0
    %2298 = vmatpush1.bf16.msra.mxu0 %v300
    %2299 = vmatprep.subr.bf16.mxu0 0
    %2300 = vmatpush1.bf16.msra.mxu0 %v301
    %2301 = vmatprep.subr.bf16.mxu0 0
    %2302 = vmatpush1.bf16.msra.mxu0 %v302
    %2303 = vmatprep.subr.bf16.mxu0 0
    %2304 = vmatpush1.bf16.msra.mxu0 %v303
    %2305 = vmatprep.subr.bf16.mxu0 0
    %2306 = vmatpush1.bf16.msra.mxu0 %v304
    %2307 = vmatprep.subr.bf16.mxu0 0
    %2308 = vmatpush1.bf16.msra.mxu0 %v305
    %2309 = vmatprep.subr.bf16.mxu0 0
    %2310 = vmatpush1.bf16.msra.mxu0 %v306
    %2311 = vmatprep.subr.bf16.mxu0 0
    %2312 = vmatpush1.bf16.msra.mxu0 %v307
    %2313 = vmatprep.subr.bf16.mxu0 0
    %2314 = vmatpush1.bf16.msra.mxu0 0
    %2315 = vmatprep.subr.bf16.mxu0 0
    %2316 = vmatpush1.bf16.msra.mxu0 0
    %2317 = vmatprep.subr.bf16.mxu0 0
    %2318 = vmatpush1.bf16.msra.mxu0 0
    %2319 = vmatprep.subr.bf16.mxu0 0
    %2320 = vmatpush1.bf16.msra.mxu0 0
    %2321 = vmatprep.subr.bf16.mxu0 0
    %2322 = vmatpush1.bf16.msra.mxu0 0
    %2323 = vmatprep.subr.bf16.mxu0 0
    %2324 = vmatpush1.bf16.msra.mxu0 0
    %2325 = vmatprep.subr.bf16.mxu0 0
    %2326 = vmatpush1.bf16.msra.mxu0 0
    %2327 = vmatprep.subr.bf16.mxu0 0
    %2328 = vmatpush1.bf16.msra.mxu0 0
    %2329 = vmatprep.mubr.bf16.mxu0 0
    %2330 = vmatmul.mubr.bf16.gmra.mrb[0].mxu0 %v2293
    %v2331 = vpop.f32.mrb[0].mxu0
    %v2332 = vadd.f32 0.0, %v2331
    %v2333 = vpop.f32.mrb[0].mxu0
    %v2334 = vpop.f32.mrb[0].mxu0
    %v2335 = vadd.f32 0.0, %v2334
    %v2336 = vpop.f32.mrb[0].mxu0
    %2337 = vmatprep.mubr.bf16.mxu0 0
    %2338 = vmatmul.mubr.bf16.gmra.mrb[0].mxu0 %v2294
    %v2339 = vpop.f32.mrb[0].mxu0
    %v2340 = vadd.f32 0.0, %v2339
    %v2341 = vpop.f32.mrb[0].mxu0
    %v2342 = vpop.f32.mrb[0].mxu0
    %v2343 = vadd.f32 0.0, %v2342
    %v2344 = vpop.f32.mrb[0].mxu0
    %2345 = vdwg.mxu0
    %v2346 = vpack.c.bf16 %v2335, %v2332
    %v2347 = vpack.c.bf16 %v2343, %v2340
    %s2348 = scalar_lea.vmem %s4, 60
    %v2349 = vld [vmem:[%s2348] sm:$0xf]
    %v2351 = vsel %vm446, %v2346, 0
    %v2354 = vsel %vm446, %v2347, 0
    %v2357 = vsel %vm453, %v2349, 0
    %2359 = vmatprep.subr.bf16.mxu0 0
    %2360 = vmatpush1.bf16.msra.mxu0 %v2357
    %2361 = vmatprep.subr.bf16.mxu0 0
    %2362 = vmatpush1.bf16.msra.mxu0 0
    %2363 = vmatprep.subr.bf16.mxu0 0
    %2364 = vmatpush1.bf16.msra.mxu0 0
    %2365 = vmatprep.subr.bf16.mxu0 0
    %2366 = vmatpush1.bf16.msra.mxu0 0
    %2367 = vmatprep.subr.bf16.mxu0 0
    %2368 = vmatpush1.bf16.msra.mxu0 0
    %2369 = vmatprep.subr.bf16.mxu0 0
    %2370 = vmatpush1.bf16.msra.mxu0 0
    %2371 = vmatprep.subr.bf16.mxu0 0
    %2372 = vmatpush1.bf16.msra.mxu0 0
    %2373 = vmatprep.subr.bf16.mxu0 0
    %2374 = vmatpush1.bf16.msra.mxu0 0
    %2375 = vmatprep.subr.bf16.mxu0 0
    %2376 = vmatpush1.bf16.msra.mxu0 0
    %2377 = vmatprep.subr.bf16.mxu0 0
    %2378 = vmatpush1.bf16.msra.mxu0 0
    %2379 = vmatprep.subr.bf16.mxu0 0
    %2380 = vmatpush1.bf16.msra.mxu0 0
    %2381 = vmatprep.subr.bf16.mxu0 0
    %2382 = vmatpush1.bf16.msra.mxu0 0
    %2383 = vmatprep.subr.bf16.mxu0 0
    %2384 = vmatpush1.bf16.msra.mxu0 0
    %2385 = vmatprep.subr.bf16.mxu0 0
    %2386 = vmatpush1.bf16.msra.mxu0 0
    %2387 = vmatprep.subr.bf16.mxu0 0
    %2388 = vmatpush1.bf16.msra.mxu0 0
    %2389 = vmatprep.subr.bf16.mxu0 0
    %2390 = vmatpush1.bf16.msra.mxu0 0
    %2391 = vmatprep.mubr.bf16.mxu0 0
    %2392 = vmatmul.mubr.bf16.gmra.mrb[0].mxu0 %v2351
    %v2393 = vpop.f32.mrb[0].mxu0
    %v2394 = vadd.f32 0.0, %v2393
    %v2395 = vpop.f32.mrb[0].mxu0
    %v2396 = vpop.f32.mrb[0].mxu0
    %v2397 = vadd.f32 0.0, %v2396
    %v2398 = vpop.f32.mrb[0].mxu0
    %2399 = vmatprep.mubr.bf16.mxu0 0
    %2400 = vmatmul.mubr.bf16.gmra.mrb[0].mxu0 %v2354
    %v2401 = vpop.f32.mrb[0].mxu0
    %v2402 = vadd.f32 0.0, %v2401
    %v2403 = vpop.f32.mrb[0].mxu0
    %v2404 = vpop.f32.mrb[0].mxu0
    %v2405 = vadd.f32 0.0, %v2404
    %v2406 = vpop.f32.mrb[0].mxu0
    %2407 = vdwg.mxu0
    %v2408 = vadd.f32 %v2276, %v2394
    %v2409 = vadd.f32 %v2277, %v2397
    %v2410 = vadd.f32 %v2278, %v2402
    %v2411 = vadd.f32 %v2279, %v2405
    %v2412 = vld [vmem:[%s5] sm:$0x1]
    %v2414 = vlaneseq
    %v2415 = vshrl.u32 %v2414, 7
    %v2416 = vsub.s32 0, %v2415
    %v2417 = vrot.slane %v2412, %v2416
    %v2419 = vadd.f32 %v2408, %v2417
    %v2420 = vadd.f32 %v2409, %v2417
    %v2421 = vadd.f32 %v2410, %v2417
    %v2422 = vadd.f32 %v2411, %v2417
    %vm2423 = vcmp.gt.f32.partialorder %v2419, 0.0
    %vm2424 = vcmp.gt.f32.partialorder %v2420, 0.0
    %vm2425 = vcmp.gt.f32.partialorder %v2421, 0.0
    %vm2426 = vcmp.gt.f32.partialorder %v2422, 0.0
    %v2427 = vmul.f32 %v2419, 0.2
    %v2428 = vmul.f32 %v2420, 0.2
    %v2429 = vmul.f32 %v2421, 0.2
    %v2430 = vmul.f32 %v2422, 0.2
    %v2431 = vsel %vm2423, %v2419, %v2427
    %v2432 = vsel %vm2424, %v2420, %v2428
    %v2433 = vsel %vm2425, %v2421, %v2429
    %v2434 = vsel %vm2426, %v2422, %v2430
    %v2435 = vpack.c.bf16 %v2432, %v2431
    %v2436 = vpack.c.bf16 %v2434, %v2433
    %v2437 = vld [vmem:[%s6] sm:$0xf]
    %vm2438 = vcmask 261120
    %v2440 = vsel %vm2438, %v2437, 0
    %2442 = vmatprep.subr.bf16.mxu0 0
    %2443 = vmatpush1.bf16.msra.mxu0 %v2435
    %2444 = vmatprep.subr.bf16.mxu0 0
    %2445 = vmatpush1.bf16.msra.mxu0 %v2436
    %2446 = vmatprep.subr.bf16.mxu0 0
    %2447 = vmatpush1.bf16.msra.mxu0 0
    %2448 = vmatprep.subr.bf16.mxu0 0
    %2449 = vmatpush1.bf16.msra.mxu0 0
    %2450 = vmatprep.subr.bf16.mxu0 0
    %2451 = vmatpush1.bf16.msra.mxu0 0
    %2452 = vmatprep.subr.bf16.mxu0 0
    %2453 = vmatpush1.bf16.msra.mxu0 0
    %2454 = vmatprep.subr.bf16.mxu0 0
    %2455 = vmatpush1.bf16.msra.mxu0 0
    %2456 = vmatprep.subr.bf16.mxu0 0
    %2457 = vmatpush1.bf16.msra.mxu0 0
    %2458 = vmatprep.subr.bf16.mxu0 0
    %2459 = vmatpush1.bf16.msra.mxu0 0
    %2460 = vmatprep.subr.bf16.mxu0 0
    %2461 = vmatpush1.bf16.msra.mxu0 0
    %2462 = vmatprep.subr.bf16.mxu0 0
    %2463 = vmatpush1.bf16.msra.mxu0 0
    %2464 = vmatprep.subr.bf16.mxu0 0
    %2465 = vmatpush1.bf16.msra.mxu0 0
    %2466 = vmatprep.subr.bf16.mxu0 0
    %2467 = vmatpush1.bf16.msra.mxu0 0
    %2468 = vmatprep.subr.bf16.mxu0 0
    %2469 = vmatpush1.bf16.msra.mxu0 0
    %2470 = vmatprep.subr.bf16.mxu0 0
    %2471 = vmatpush1.bf16.msra.mxu0 0
    %2472 = vmatprep.subr.bf16.mxu0 0
    %2473 = vmatpush1.bf16.msra.mxu0 0
    %2474 = vmatprep.mubr.bf16.mxu0 0
    %2475 = vmatmul.mubr.bf16.gmra.mrb[0].mxu0 %v2440
    %v2476 = vpop.f32.mrb[0].mxu0
    %v2477 = vadd.f32 0.0, %v2476
    %v2478 = vpop.f32.mrb[0].mxu0
    %v2479 = vpop.f32.mrb[0].mxu0
    %v2480 = vpop.f32.mrb[0].mxu0
    %2481 = vdwg.mxu0
    %v2482 = vpack.c.bf16 %v2477, %v2477
    %v2483 = vld [vmem:[%s7] sm:$0xf]
    %v2484 = vld [vmem:[%s7 + $0x4] sm:$0xf]
    %s2485 = scalar_lea.vmem %s6, 4
    %v2486 = vld [vmem:[%s2485] sm:$0xf]
    %v2488 = vsel %vm2438, %v2486, 0
    %2490 = vmatprep.subr.bf16.mxu0 0
    %2491 = vmatpush1.bf16.msra.mxu0 %v2435
    %2492 = vmatprep.subr.bf16.mxu0 0
    %2493 = vmatpush1.bf16.msra.mxu0 %v2436
    %2494 = vmatprep.subr.bf16.mxu0 0
    %2495 = vmatpush1.bf16.msra.mxu0 0
    %2496 = vmatprep.subr.bf16.mxu0 0
    %2497 = vmatpush1.bf16.msra.mxu0 0
    %2498 = vmatprep.subr.bf16.mxu0 0
    %2499 = vmatpush1.bf16.msra.mxu0 0
    %2500 = vmatprep.subr.bf16.mxu0 0
    %2501 = vmatpush1.bf16.msra.mxu0 0
    %2502 = vmatprep.subr.bf16.mxu0 0
    %2503 = vmatpush1.bf16.msra.mxu0 0
    %2504 = vmatprep.subr.bf16.mxu0 0
    %2505 = vmatpush1.bf16.msra.mxu0 0
    %2506 = vmatprep.subr.bf16.mxu0 0
    %2507 = vmatpush1.bf16.msra.mxu0 0
    %2508 = vmatprep.subr.bf16.mxu0 0
    %2509 = vmatpush1.bf16.msra.mxu0 0
    %2510 = vmatprep.subr.bf16.mxu0 0
    %2511 = vmatpush1.bf16.msra.mxu0 0
    %2512 = vmatprep.subr.bf16.mxu0 0
    %2513 = vmatpush1.bf16.msra.mxu0 0
    %2514 = vmatprep.subr.bf16.mxu0 0
    %2515 = vmatpush1.bf16.msra.mxu0 0
    %2516 = vmatprep.subr.bf16.mxu0 0
    %2517 = vmatpush1.bf16.msra.mxu0 0
    %2518 = vmatprep.subr.bf16.mxu0 0
    %2519 = vmatpush1.bf16.msra.mxu0 0
    %2520 = vmatprep.subr.bf16.mxu0 0
    %2521 = vmatpush1.bf16.msra.mxu0 0
    %2522 = vmatprep.mubr.bf16.mxu0 0
    %2523 = vmatmul.mubr.bf16.gmra.mrb[0].mxu0 %v2488
    %v2524 = vpop.f32.mrb[0].mxu0
    %v2525 = vadd.f32 0.0, %v2524
    %v2526 = vpop.f32.mrb[0].mxu0
    %v2527 = vpop.f32.mrb[0].mxu0
    %v2528 = vpop.f32.mrb[0].mxu0
    %2529 = vdwg.mxu0
    %v2530 = vpack.c.bf16 %v2525, %v2525
    %s2531 = scalar_lea.vmem %s7, 8
    %v2532 = vld [vmem:[%s2531] sm:$0xf]
    %v2533 = vld [vmem:[%s2531 + $0x4] sm:$0xf]
    %v2536 = vunpack.c.l.b16 %v2532
    %v2537 = vunpack.c.l.b16 %v2533
    %v2538 = vpack.c.b16 %v2537, %v2536
    %vm2540 = vcmask 130048
    %v2542 = vsel %vm2540, %v2530, 0
    %2544 = vmatprep.subr.bf16.mxu0 0
    %2545 = vmatpush1.bf16.msra.mxu0 %v2538
    %2546 = vmatprep.subr.bf16.mxu0 0
    %2547 = vmatpush1.bf16.msra.mxu0 0
    %2548 = vmatprep.subr.bf16.mxu0 0
    %2549 = vmatpush1.bf16.msra.mxu0 0
    %2550 = vmatprep.subr.bf16.mxu0 0
    %2551 = vmatpush1.bf16.msra.mxu0 0
    %2552 = vmatprep.subr.bf16.mxu0 0
    %2553 = vmatpush1.bf16.msra.mxu0 0
    %2554 = vmatprep.subr.bf16.mxu0 0
    %2555 = vmatpush1.bf16.msra.mxu0 0
    %2556 = vmatprep.subr.bf16.mxu0 0
    %2557 = vmatpush1.bf16.msra.mxu0 0
    %2558 = vmatprep.subr.bf16.mxu0 0
    %2559 = vmatpush1.bf16.msra.mxu0 0
    %2560 = vmatprep.subr.bf16.mxu0 0
    %2561 = vmatpush1.bf16.msra.mxu0 0
    %2562 = vmatprep.subr.bf16.mxu0 0
    %2563 = vmatpush1.bf16.msra.mxu0 0
    %2564 = vmatprep.subr.bf16.mxu0 0
    %2565 = vmatpush1.bf16.msra.mxu0 0
    %2566 = vmatprep.subr.bf16.mxu0 0
    %2567 = vmatpush1.bf16.msra.mxu0 0
    %2568 = vmatprep.subr.bf16.mxu0 0
    %2569 = vmatpush1.bf16.msra.mxu0 0
    %2570 = vmatprep.subr.bf16.mxu0 0
    %2571 = vmatpush1.bf16.msra.mxu0 0
    %2572 = vmatprep.subr.bf16.mxu0 0
    %2573 = vmatpush1.bf16.msra.mxu0 0
    %2574 = vmatprep.subr.bf16.mxu0 0
    %2575 = vmatpush1.bf16.msra.mxu0 0
    %2576 = vmatprep.mubr.bf16.mxu0 0
    %2577 = vmatmul.mubr.bf16.gmra.mrb[0].mxu0 %v2542
    %v2578 = vpop.f32.mrb[0].mxu0
    %v2579 = vadd.f32 0.0, %v2578
    %v2580 = vpop.f32.mrb[0].mxu0
    %v2581 = vpop.f32.mrb[0].mxu0
    %v2582 = vpop.f32.mrb[0].mxu0
    %2583 = vdwg.mxu0
    %v2586 = vunpack.c.l.b16 %v2483
    %v2587 = vunpack.c.l.b16 %v2484
    %v2588 = vpack.c.b16 %v2587, %v2586
    %v2591 = vsel %vm2540, %v2482, 0
    %2593 = vmatprep.subr.bf16.mxu0 0
    %2594 = vmatpush1.bf16.msra.mxu0 %v2588
    %2595 = vmatprep.subr.bf16.mxu0 0
    %2596 = vmatpush1.bf16.msra.mxu0 0
    %2597 = vmatprep.subr.bf16.mxu0 0
    %2598 = vmatpush1.bf16.msra.mxu0 0
    %2599 = vmatprep.subr.bf16.mxu0 0
    %2600 = vmatpush1.bf16.msra.mxu0 0
    %2601 = vmatprep.subr.bf16.mxu0 0
    %2602 = vmatpush1.bf16.msra.mxu0 0
    %2603 = vmatprep.subr.bf16.mxu0 0
    %2604 = vmatpush1.bf16.msra.mxu0 0
    %2605 = vmatprep.subr.bf16.mxu0 0
    %2606 = vmatpush1.bf16.msra.mxu0 0
    %2607 = vmatprep.subr.bf16.mxu0 0
    %2608 = vmatpush1.bf16.msra.mxu0 0
    %2609 = vmatprep.subr.bf16.mxu0 0
    %2610 = vmatpush1.bf16.msra.mxu0 0
    %2611 = vmatprep.subr.bf16.mxu0 0
    %2612 = vmatpush1.bf16.msra.mxu0 0
    %2613 = vmatprep.subr.bf16.mxu0 0
    %2614 = vmatpush1.bf16.msra.mxu0 0
    %2615 = vmatprep.subr.bf16.mxu0 0
    %2616 = vmatpush1.bf16.msra.mxu0 0
    %2617 = vmatprep.subr.bf16.mxu0 0
    %2618 = vmatpush1.bf16.msra.mxu0 0
    %2619 = vmatprep.subr.bf16.mxu0 0
    %2620 = vmatpush1.bf16.msra.mxu0 0
    %2621 = vmatprep.subr.bf16.mxu0 0
    %2622 = vmatpush1.bf16.msra.mxu0 0
    %2623 = vmatprep.subr.bf16.mxu0 0
    %2624 = vmatpush1.bf16.msra.mxu0 0
    %2625 = vmatprep.mubr.bf16.mxu0 0
    %2626 = vmatmul.mubr.bf16.gmra.mrb[0].mxu0 %v2591
    %v2627 = vpop.f32.mrb[0].mxu0
    %v2628 = vadd.f32 %v2579, %v2627
    %v2629 = vpop.f32.mrb[0].mxu0
    %v2630 = vpop.f32.mrb[0].mxu0
    %v2631 = vpop.f32.mrb[0].mxu0
    %2632 = vdwg.mxu0
    %s2633 = scalar_lea.vmem %s6, 8
    %v2634 = vld [vmem:[%s2633] sm:$0xf]
    %v2636 = vsel %vm2438, %v2634, 0
    %2638 = vmatprep.subr.bf16.mxu0 0
    %2639 = vmatpush1.bf16.msra.mxu0 %v2435
    %2640 = vmatprep.subr.bf16.mxu0 0
    %2641 = vmatpush1.bf16.msra.mxu0 %v2436
    %2642 = vmatprep.subr.bf16.mxu0 0
    %2643 = vmatpush1.bf16.msra.mxu0 0
    %2644 = vmatprep.subr.bf16.mxu0 0
    %2645 = vmatpush1.bf16.msra.mxu0 0
    %2646 = vmatprep.subr.bf16.mxu0 0
    %2647 = vmatpush1.bf16.msra.mxu0 0
    %2648 = vmatprep.subr.bf16.mxu0 0
    %2649 = vmatpush1.bf16.msra.mxu0 0
    %2650 = vmatprep.subr.bf16.mxu0 0
    %2651 = vmatpush1.bf16.msra.mxu0 0
    %2652 = vmatprep.subr.bf16.mxu0 0
    %2653 = vmatpush1.bf16.msra.mxu0 0
    %2654 = vmatprep.subr.bf16.mxu0 0
    %2655 = vmatpush1.bf16.msra.mxu0 0
    %2656 = vmatprep.subr.bf16.mxu0 0
    %2657 = vmatpush1.bf16.msra.mxu0 0
    %2658 = vmatprep.subr.bf16.mxu0 0
    %2659 = vmatpush1.bf16.msra.mxu0 0
    %2660 = vmatprep.subr.bf16.mxu0 0
    %2661 = vmatpush1.bf16.msra.mxu0 0
    %2662 = vmatprep.subr.bf16.mxu0 0
    %2663 = vmatpush1.bf16.msra.mxu0 0
    %2664 = vmatprep.subr.bf16.mxu0 0
    %2665 = vmatpush1.bf16.msra.mxu0 0
    %2666 = vmatprep.subr.bf16.mxu0 0
    %2667 = vmatpush1.bf16.msra.mxu0 0
    %2668 = vmatprep.subr.bf16.mxu0 0
    %2669 = vmatpush1.bf16.msra.mxu0 0
    %2670 = vmatprep.mubr.bf16.mxu0 0
    %2671 = vmatmul.mubr.bf16.gmra.mrb[0].mxu0 %v2636
    %v2672 = vpop.f32.mrb[0].mxu0
    %v2673 = vadd.f32 0.0, %v2672
    %v2674 = vpop.f32.mrb[0].mxu0
    %v2675 = vpop.f32.mrb[0].mxu0
    %v2676 = vpop.f32.mrb[0].mxu0
    %2677 = vdwg.mxu0
    %v2678 = vpack.c.bf16 %v2673, %v2673
    %s2679 = scalar_lea.vmem %s7, 16
    %v2680 = vld [vmem:[%s2679] sm:$0xf]
    %v2681 = vld [vmem:[%s2679 + $0x4] sm:$0xf]
    %v2684 = vunpack.c.l.b16 %v2680
    %v2685 = vunpack.c.l.b16 %v2681
    %v2686 = vpack.c.b16 %v2685, %v2684
    %v2689 = vsel %vm2540, %v2678, 0
    %2691 = vmatprep.subr.bf16.mxu0 0
    %2692 = vmatpush1.bf16.msra.mxu0 %v2686
    %2693 = vmatprep.subr.bf16.mxu0 0
    %2694 = vmatpush1.bf16.msra.mxu0 0
    %2695 = vmatprep.subr.bf16.mxu0 0
    %2696 = vmatpush1.bf16.msra.mxu0 0
    %2697 = vmatprep.subr.bf16.mxu0 0
    %2698 = vmatpush1.bf16.msra.mxu0 0
    %2699 = vmatprep.subr.bf16.mxu0 0
    %2700 = vmatpush1.bf16.msra.mxu0 0
    %2701 = vmatprep.subr.bf16.mxu0 0
    %2702 = vmatpush1.bf16.msra.mxu0 0
    %2703 = vmatprep.subr.bf16.mxu0 0
    %2704 = vmatpush1.bf16.msra.mxu0 0
    %2705 = vmatprep.subr.bf16.mxu0 0
    %2706 = vmatpush1.bf16.msra.mxu0 0
    %2707 = vmatprep.subr.bf16.mxu0 0
    %2708 = vmatpush1.bf16.msra.mxu0 0
    %2709 = vmatprep.subr.bf16.mxu0 0
    %2710 = vmatpush1.bf16.msra.mxu0 0
    %2711 = vmatprep.subr.bf16.mxu0 0
    %2712 = vmatpush1.bf16.msra.mxu0 0
    %2713 = vmatprep.subr.bf16.mxu0 0
    %2714 = vmatpush1.bf16.msra.mxu0 0
    %2715 = vmatprep.subr.bf16.mxu0 0
    %2716 = vmatpush1.bf16.msra.mxu0 0
    %2717 = vmatprep.subr.bf16.mxu0 0
    %2718 = vmatpush1.bf16.msra.mxu0 0
    %2719 = vmatprep.subr.bf16.mxu0 0
    %2720 = vmatpush1.bf16.msra.mxu0 0
    %2721 = vmatprep.subr.bf16.mxu0 0
    %2722 = vmatpush1.bf16.msra.mxu0 0
    %2723 = vmatprep.mubr.bf16.mxu0 0
    %2724 = vmatmul.mubr.bf16.gmra.mrb[0].mxu0 %v2689
    %v2725 = vpop.f32.mrb[0].mxu0
    %v2726 = vadd.f32 0.0, %v2725
    %v2727 = vpop.f32.mrb[0].mxu0
    %v2728 = vpop.f32.mrb[0].mxu0
    %v2729 = vpop.f32.mrb[0].mxu0
    %2730 = vdwg.mxu0
    %v2731 = vadd.f32 %v2628, %v2726
    %s2732 = scalar_lea.vmem %s6, 12
    %v2733 = vld [vmem:[%s2732] sm:$0xf]
    %v2735 = vsel %vm2438, %v2733, 0
    %2737 = vmatprep.subr.bf16.mxu0 0
    %2738 = vmatpush1.bf16.msra.mxu0 %v2435
    %2739 = vmatprep.subr.bf16.mxu0 0
    %2740 = vmatpush1.bf16.msra.mxu0 %v2436
    %2741 = vmatprep.subr.bf16.mxu0 0
    %2742 = vmatpush1.bf16.msra.mxu0 0
    %2743 = vmatprep.subr.bf16.mxu0 0
    %2744 = vmatpush1.bf16.msra.mxu0 0
    %2745 = vmatprep.subr.bf16.mxu0 0
    %2746 = vmatpush1.bf16.msra.mxu0 0
    %2747 = vmatprep.subr.bf16.mxu0 0
    %2748 = vmatpush1.bf16.msra.mxu0 0
    %2749 = vmatprep.subr.bf16.mxu0 0
    %2750 = vmatpush1.bf16.msra.mxu0 0
    %2751 = vmatprep.subr.bf16.mxu0 0
    %2752 = vmatpush1.bf16.msra.mxu0 0
    %2753 = vmatprep.subr.bf16.mxu0 0
    %2754 = vmatpush1.bf16.msra.mxu0 0
    %2755 = vmatprep.subr.bf16.mxu0 0
    %2756 = vmatpush1.bf16.msra.mxu0 0
    %2757 = vmatprep.subr.bf16.mxu0 0
    %2758 = vmatpush1.bf16.msra.mxu0 0
    %2759 = vmatprep.subr.bf16.mxu0 0
    %2760 = vmatpush1.bf16.msra.mxu0 0
    %2761 = vmatprep.subr.bf16.mxu0 0
    %2762 = vmatpush1.bf16.msra.mxu0 0
    %2763 = vmatprep.subr.bf16.mxu0 0
    %2764 = vmatpush1.bf16.msra.mxu0 0
    %2765 = vmatprep.subr.bf16.mxu0 0
    %2766 = vmatpush1.bf16.msra.mxu0 0
    %2767 = vmatprep.subr.bf16.mxu0 0
    %2768 = vmatpush1.bf16.msra.mxu0 0
    %2769 = vmatprep.mubr.bf16.mxu0 0
    %2770 = vmatmul.mubr.bf16.gmra.mrb[0].mxu0 %v2735
    %v2771 = vpop.f32.mrb[0].mxu0
    %v2772 = vadd.f32 0.0, %v2771
    %v2773 = vpop.f32.mrb[0].mxu0
    %v2774 = vpop.f32.mrb[0].mxu0
    %v2775 = vpop.f32.mrb[0].mxu0
    %2776 = vdwg.mxu0
    %v2777 = vpack.c.bf16 %v2772, %v2772
    %s2778 = scalar_lea.vmem %s7, 24
    %v2779 = vld [vmem:[%s2778] sm:$0xf]
    %v2780 = vld [vmem:[%s2778 + $0x4] sm:$0xf]
    %v2783 = vunpack.c.l.b16 %v2779
    %v2784 = vunpack.c.l.b16 %v2780
    %v2785 = vpack.c.b16 %v2784, %v2783
    %v2788 = vsel %vm2540, %v2777, 0
    %2790 = vmatprep.subr.bf16.mxu0 0
    %2791 = vmatpush1.bf16.msra.mxu0 %v2785
    %2792 = vmatprep.subr.bf16.mxu0 0
    %2793 = vmatpush1.bf16.msra.mxu0 0
    %2794 = vmatprep.subr.bf16.mxu0 0
    %2795 = vmatpush1.bf16.msra.mxu0 0
    %2796 = vmatprep.subr.bf16.mxu0 0
    %2797 = vmatpush1.bf16.msra.mxu0 0
    %2798 = vmatprep.subr.bf16.mxu0 0
    %2799 = vmatpush1.bf16.msra.mxu0 0
    %2800 = vmatprep.subr.bf16.mxu0 0
    %2801 = vmatpush1.bf16.msra.mxu0 0
    %2802 = vmatprep.subr.bf16.mxu0 0
    %2803 = vmatpush1.bf16.msra.mxu0 0
    %2804 = vmatprep.subr.bf16.mxu0 0
    %2805 = vmatpush1.bf16.msra.mxu0 0
    %2806 = vmatprep.subr.bf16.mxu0 0
    %2807 = vmatpush1.bf16.msra.mxu0 0
    %2808 = vmatprep.subr.bf16.mxu0 0
    %2809 = vmatpush1.bf16.msra.mxu0 0
    %2810 = vmatprep.subr.bf16.mxu0 0
    %2811 = vmatpush1.bf16.msra.mxu0 0
    %2812 = vmatprep.subr.bf16.mxu0 0
    %2813 = vmatpush1.bf16.msra.mxu0 0
    %2814 = vmatprep.subr.bf16.mxu0 0
    %2815 = vmatpush1.bf16.msra.mxu0 0
    %2816 = vmatprep.subr.bf16.mxu0 0
    %2817 = vmatpush1.bf16.msra.mxu0 0
    %2818 = vmatprep.subr.bf16.mxu0 0
    %2819 = vmatpush1.bf16.msra.mxu0 0
    %2820 = vmatprep.subr.bf16.mxu0 0
    %2821 = vmatpush1.bf16.msra.mxu0 0
    %2822 = vmatprep.mubr.bf16.mxu0 0
    %2823 = vmatmul.mubr.bf16.gmra.mrb[0].mxu0 %v2788
    %v2824 = vpop.f32.mrb[0].mxu0
    %v2825 = vadd.f32 0.0, %v2824
    %v2826 = vpop.f32.mrb[0].mxu0
    %v2827 = vpop.f32.mrb[0].mxu0
    %v2828 = vpop.f32.mrb[0].mxu0
    %2829 = vdwg.mxu0
    %v2830 = vadd.f32 %v2731, %v2825
    %s2831 = scalar_lea.vmem %s6, 16
    %v2832 = vld [vmem:[%s2831] sm:$0xf]
    %v2834 = vsel %vm2438, %v2832, 0
    %2836 = vmatprep.subr.bf16.mxu0 0
    %2837 = vmatpush1.bf16.msra.mxu0 %v2435
    %2838 = vmatprep.subr.bf16.mxu0 0
    %2839 = vmatpush1.bf16.msra.mxu0 %v2436
    %2840 = vmatprep.subr.bf16.mxu0 0
    %2841 = vmatpush1.bf16.msra.mxu0 0
    %2842 = vmatprep.subr.bf16.mxu0 0
    %2843 = vmatpush1.bf16.msra.mxu0 0
    %2844 = vmatprep.subr.bf16.mxu0 0
    %2845 = vmatpush1.bf16.msra.mxu0 0
    %2846 = vmatprep.subr.bf16.mxu0 0
    %2847 = vmatpush1.bf16.msra.mxu0 0
    %2848 = vmatprep.subr.bf16.mxu0 0
    %2849 = vmatpush1.bf16.msra.mxu0 0
    %2850 = vmatprep.subr.bf16.mxu0 0
    %2851 = vmatpush1.bf16.msra.mxu0 0
    %2852 = vmatprep.subr.bf16.mxu0 0
    %2853 = vmatpush1.bf16.msra.mxu0 0
    %2854 = vmatprep.subr.bf16.mxu0 0
    %2855 = vmatpush1.bf16.msra.mxu0 0
    %2856 = vmatprep.subr.bf16.mxu0 0
    %2857 = vmatpush1.bf16.msra.mxu0 0
    %2858 = vmatprep.subr.bf16.mxu0 0
    %2859 = vmatpush1.bf16.msra.mxu0 0
    %2860 = vmatprep.subr.bf16.mxu0 0
    %2861 = vmatpush1.bf16.msra.mxu0 0
    %2862 = vmatprep.subr.bf16.mxu0 0
    %2863 = vmatpush1.bf16.msra.mxu0 0
    %2864 = vmatprep.subr.bf16.mxu0 0
    %2865 = vmatpush1.bf16.msra.mxu0 0
    %2866 = vmatprep.subr.bf16.mxu0 0
    %2867 = vmatpush1.bf16.msra.mxu0 0
    %2868 = vmatprep.mubr.bf16.mxu0 0
    %2869 = vmatmul.mubr.bf16.gmra.mrb[0].mxu0 %v2834
    %v2870 = vpop.f32.mrb[0].mxu0
    %v2871 = vadd.f32 0.0, %v2870
    %v2872 = vpop.f32.mrb[0].mxu0
    %v2873 = vpop.f32.mrb[0].mxu0
    %v2874 = vpop.f32.mrb[0].mxu0
    %2875 = vdwg.mxu0
    %v2876 = vpack.c.bf16 %v2871, %v2871
    %s2877 = scalar_lea.vmem %s7, 32
    %v2878 = vld [vmem:[%s2877] sm:$0xf]
    %v2879 = vld [vmem:[%s2877 + $0x4] sm:$0xf]
    %v2882 = vunpack.c.l.b16 %v2878
    %v2883 = vunpack.c.l.b16 %v2879
    %v2884 = vpack.c.b16 %v2883, %v2882
    %v2887 = vsel %vm2540, %v2876, 0
    %2889 = vmatprep.subr.bf16.mxu0 0
    %2890 = vmatpush1.bf16.msra.mxu0 %v2884
    %2891 = vmatprep.subr.bf16.mxu0 0
    %2892 = vmatpush1.bf16.msra.mxu0 0
    %2893 = vmatprep.subr.bf16.mxu0 0
    %2894 = vmatpush1.bf16.msra.mxu0 0
    %2895 = vmatprep.subr.bf16.mxu0 0
    %2896 = vmatpush1.bf16.msra.mxu0 0
    %2897 = vmatprep.subr.bf16.mxu0 0
    %2898 = vmatpush1.bf16.msra.mxu0 0
    %2899 = vmatprep.subr.bf16.mxu0 0
    %2900 = vmatpush1.bf16.msra.mxu0 0
    %2901 = vmatprep.subr.bf16.mxu0 0
    %2902 = vmatpush1.bf16.msra.mxu0 0
    %2903 = vmatprep.subr.bf16.mxu0 0
    %2904 = vmatpush1.bf16.msra.mxu0 0
    %2905 = vmatprep.subr.bf16.mxu0 0
    %2906 = vmatpush1.bf16.msra.mxu0 0
    %2907 = vmatprep.subr.bf16.mxu0 0
    %2908 = vmatpush1.bf16.msra.mxu0 0
    %2909 = vmatprep.subr.bf16.mxu0 0
    %2910 = vmatpush1.bf16.msra.mxu0 0
    %2911 = vmatprep.subr.bf16.mxu0 0
    %2912 = vmatpush1.bf16.msra.mxu0 0
    %2913 = vmatprep.subr.bf16.mxu0 0
    %2914 = vmatpush1.bf16.msra.mxu0 0
    %2915 = vmatprep.subr.bf16.mxu0 0
    %2916 = vmatpush1.bf16.msra.mxu0 0
    %2917 = vmatprep.subr.bf16.mxu0 0
    %2918 = vmatpush1.bf16.msra.mxu0 0
    %2919 = vmatprep.subr.bf16.mxu0 0
    %2920 = vmatpush1.bf16.msra.mxu0 0
    %2921 = vmatprep.mubr.bf16.mxu0 0
    %2922 = vmatmul.mubr.bf16.gmra.mrb[0].mxu0 %v2887
    %v2923 = vpop.f32.mrb[0].mxu0
    %v2924 = vadd.f32 0.0, %v2923
    %v2925 = vpop.f32.mrb[0].mxu0
    %v2926 = vpop.f32.mrb[0].mxu0
    %v2927 = vpop.f32.mrb[0].mxu0
    %2928 = vdwg.mxu0
    %v2929 = vadd.f32 %v2830, %v2924
    %s2930 = scalar_lea.vmem %s6, 20
    %v2931 = vld [vmem:[%s2930] sm:$0xf]
    %v2933 = vsel %vm2438, %v2931, 0
    %2935 = vmatprep.subr.bf16.mxu0 0
    %2936 = vmatpush1.bf16.msra.mxu0 %v2435
    %2937 = vmatprep.subr.bf16.mxu0 0
    %2938 = vmatpush1.bf16.msra.mxu0 %v2436
    %2939 = vmatprep.subr.bf16.mxu0 0
    %2940 = vmatpush1.bf16.msra.mxu0 0
    %2941 = vmatprep.subr.bf16.mxu0 0
    %2942 = vmatpush1.bf16.msra.mxu0 0
    %2943 = vmatprep.subr.bf16.mxu0 0
    %2944 = vmatpush1.bf16.msra.mxu0 0
    %2945 = vmatprep.subr.bf16.mxu0 0
    %2946 = vmatpush1.bf16.msra.mxu0 0
    %2947 = vmatprep.subr.bf16.mxu0 0
    %2948 = vmatpush1.bf16.msra.mxu0 0
    %2949 = vmatprep.subr.bf16.mxu0 0
    %2950 = vmatpush1.bf16.msra.mxu0 0
    %2951 = vmatprep.subr.bf16.mxu0 0
    %2952 = vmatpush1.bf16.msra.mxu0 0
    %2953 = vmatprep.subr.bf16.mxu0 0
    %2954 = vmatpush1.bf16.msra.mxu0 0
    %2955 = vmatprep.subr.bf16.mxu0 0
    %2956 = vmatpush1.bf16.msra.mxu0 0
    %2957 = vmatprep.subr.bf16.mxu0 0
    %2958 = vmatpush1.bf16.msra.mxu0 0
    %2959 = vmatprep.subr.bf16.mxu0 0
    %2960 = vmatpush1.bf16.msra.mxu0 0
    %2961 = vmatprep.subr.bf16.mxu0 0
    %2962 = vmatpush1.bf16.msra.mxu0 0
    %2963 = vmatprep.subr.bf16.mxu0 0
    %2964 = vmatpush1.bf16.msra.mxu0 0
    %2965 = vmatprep.subr.bf16.mxu0 0
    %2966 = vmatpush1.bf16.msra.mxu0 0
    %2967 = vmatprep.mubr.bf16.mxu0 0
    %2968 = vmatmul.mubr.bf16.gmra.mrb[0].mxu0 %v2933
    %v2969 = vpop.f32.mrb[0].mxu0
    %v2970 = vadd.f32 0.0, %v2969
    %v2971 = vpop.f32.mrb[0].mxu0
    %v2972 = vpop.f32.mrb[0].mxu0
    %v2973 = vpop.f32.mrb[0].mxu0
    %2974 = vdwg.mxu0
    %v2975 = vpack.c.bf16 %v2970, %v2970
    %s2976 = scalar_lea.vmem %s7, 40
    %v2977 = vld [vmem:[%s2976] sm:$0xf]
    %v2978 = vld [vmem:[%s2976 + $0x4] sm:$0xf]
    %v2981 = vunpack.c.l.b16 %v2977
    %v2982 = vunpack.c.l.b16 %v2978
    %v2983 = vpack.c.b16 %v2982, %v2981
    %v2986 = vsel %vm2540, %v2975, 0
    %2988 = vmatprep.subr.bf16.mxu0 0
    %2989 = vmatpush1.bf16.msra.mxu0 %v2983
    %2990 = vmatprep.subr.bf16.mxu0 0
    %2991 = vmatpush1.bf16.msra.mxu0 0
    %2992 = vmatprep.subr.bf16.mxu0 0
    %2993 = vmatpush1.bf16.msra.mxu0 0
    %2994 = vmatprep.subr.bf16.mxu0 0
    %2995 = vmatpush1.bf16.msra.mxu0 0
    %2996 = vmatprep.subr.bf16.mxu0 0
    %2997 = vmatpush1.bf16.msra.mxu0 0
    %2998 = vmatprep.subr.bf16.mxu0 0
    %2999 = vmatpush1.bf16.msra.mxu0 0
    %3000 = vmatprep.subr.bf16.mxu0 0
    %3001 = vmatpush1.bf16.msra.mxu0 0
    %3002 = vmatprep.subr.bf16.mxu0 0
    %3003 = vmatpush1.bf16.msra.mxu0 0
    %3004 = vmatprep.subr.bf16.mxu0 0
    %3005 = vmatpush1.bf16.msra.mxu0 0
    %3006 = vmatprep.subr.bf16.mxu0 0
    %3007 = vmatpush1.bf16.msra.mxu0 0
    %3008 = vmatprep.subr.bf16.mxu0 0
    %3009 = vmatpush1.bf16.msra.mxu0 0
    %3010 = vmatprep.subr.bf16.mxu0 0
    %3011 = vmatpush1.bf16.msra.mxu0 0
    %3012 = vmatprep.subr.bf16.mxu0 0
    %3013 = vmatpush1.bf16.msra.mxu0 0
    %3014 = vmatprep.subr.bf16.mxu0 0
    %3015 = vmatpush1.bf16.msra.mxu0 0
    %3016 = vmatprep.subr.bf16.mxu0 0
    %3017 = vmatpush1.bf16.msra.mxu0 0
    %3018 = vmatprep.subr.bf16.mxu0 0
    %3019 = vmatpush1.bf16.msra.mxu0 0
    %3020 = vmatprep.mubr.bf16.mxu0 0
    %3021 = vmatmul.mubr.bf16.gmra.mrb[0].mxu0 %v2986
    %v3022 = vpop.f32.mrb[0].mxu0
    %v3023 = vadd.f32 0.0, %v3022
    %v3024 = vpop.f32.mrb[0].mxu0
    %v3025 = vpop.f32.mrb[0].mxu0
    %v3026 = vpop.f32.mrb[0].mxu0
    %3027 = vdwg.mxu0
    %v3028 = vadd.f32 %v2929, %v3023
    %s3029 = scalar_lea.vmem %s6, 24
    %v3030 = vld [vmem:[%s3029] sm:$0xf]
    %v3032 = vsel %vm2438, %v3030, 0
    %3034 = vmatprep.subr.bf16.mxu0 0
    %3035 = vmatpush1.bf16.msra.mxu0 %v2435
    %3036 = vmatprep.subr.bf16.mxu0 0
    %3037 = vmatpush1.bf16.msra.mxu0 %v2436
    %3038 = vmatprep.subr.bf16.mxu0 0
    %3039 = vmatpush1.bf16.msra.mxu0 0
    %3040 = vmatprep.subr.bf16.mxu0 0
    %3041 = vmatpush1.bf16.msra.mxu0 0
    %3042 = vmatprep.subr.bf16.mxu0 0
    %3043 = vmatpush1.bf16.msra.mxu0 0
    %3044 = vmatprep.subr.bf16.mxu0 0
    %3045 = vmatpush1.bf16.msra.mxu0 0
    %3046 = vmatprep.subr.bf16.mxu0 0
    %3047 = vmatpush1.bf16.msra.mxu0 0
    %3048 = vmatprep.subr.bf16.mxu0 0
    %3049 = vmatpush1.bf16.msra.mxu0 0
    %3050 = vmatprep.subr.bf16.mxu0 0
    %3051 = vmatpush1.bf16.msra.mxu0 0
    %3052 = vmatprep.subr.bf16.mxu0 0
    %3053 = vmatpush1.bf16.msra.mxu0 0
    %3054 = vmatprep.subr.bf16.mxu0 0
    %3055 = vmatpush1.bf16.msra.mxu0 0
    %3056 = vmatprep.subr.bf16.mxu0 0
    %3057 = vmatpush1.bf16.msra.mxu0 0
    %3058 = vmatprep.subr.bf16.mxu0 0
    %3059 = vmatpush1.bf16.msra.mxu0 0
    %3060 = vmatprep.subr.bf16.mxu0 0
    %3061 = vmatpush1.bf16.msra.mxu0 0
    %3062 = vmatprep.subr.bf16.mxu0 0
    %3063 = vmatpush1.bf16.msra.mxu0 0
    %3064 = vmatprep.subr.bf16.mxu0 0
    %3065 = vmatpush1.bf16.msra.mxu0 0
    %3066 = vmatprep.mubr.bf16.mxu0 0
    %3067 = vmatmul.mubr.bf16.gmra.mrb[0].mxu0 %v3032
    %v3068 = vpop.f32.mrb[0].mxu0
    %v3069 = vadd.f32 0.0, %v3068
    %v3070 = vpop.f32.mrb[0].mxu0
    %v3071 = vpop.f32.mrb[0].mxu0
    %v3072 = vpop.f32.mrb[0].mxu0
    %3073 = vdwg.mxu0
    %v3074 = vpack.c.bf16 %v3069, %v3069
    %s3075 = scalar_lea.vmem %s7, 48
    %v3076 = vld [vmem:[%s3075] sm:$0xf]
    %v3077 = vld [vmem:[%s3075 + $0x4] sm:$0xf]
    %v3080 = vunpack.c.l.b16 %v3076
    %v3081 = vunpack.c.l.b16 %v3077
    %v3082 = vpack.c.b16 %v3081, %v3080
    %v3085 = vsel %vm2540, %v3074, 0
    %3087 = vmatprep.subr.bf16.mxu0 0
    %3088 = vmatpush1.bf16.msra.mxu0 %v3082
    %3089 = vmatprep.subr.bf16.mxu0 0
    %3090 = vmatpush1.bf16.msra.mxu0 0
    %3091 = vmatprep.subr.bf16.mxu0 0
    %3092 = vmatpush1.bf16.msra.mxu0 0
    %3093 = vmatprep.subr.bf16.mxu0 0
    %3094 = vmatpush1.bf16.msra.mxu0 0
    %3095 = vmatprep.subr.bf16.mxu0 0
    %3096 = vmatpush1.bf16.msra.mxu0 0
    %3097 = vmatprep.subr.bf16.mxu0 0
    %3098 = vmatpush1.bf16.msra.mxu0 0
    %3099 = vmatprep.subr.bf16.mxu0 0
    %3100 = vmatpush1.bf16.msra.mxu0 0
    %3101 = vmatprep.subr.bf16.mxu0 0
    %3102 = vmatpush1.bf16.msra.mxu0 0
    %3103 = vmatprep.subr.bf16.mxu0 0
    %3104 = vmatpush1.bf16.msra.mxu0 0
    %3105 = vmatprep.subr.bf16.mxu0 0
    %3106 = vmatpush1.bf16.msra.mxu0 0
    %3107 = vmatprep.subr.bf16.mxu0 0
    %3108 = vmatpush1.bf16.msra.mxu0 0
    %3109 = vmatprep.subr.bf16.mxu0 0
    %3110 = vmatpush1.bf16.msra.mxu0 0
    %3111 = vmatprep.subr.bf16.mxu0 0
    %3112 = vmatpush1.bf16.msra.mxu0 0
    %3113 = vmatprep.subr.bf16.mxu0 0
    %3114 = vmatpush1.bf16.msra.mxu0 0
    %3115 = vmatprep.subr.bf16.mxu0 0
    %3116 = vmatpush1.bf16.msra.mxu0 0
    %3117 = vmatprep.subr.bf16.mxu0 0
    %3118 = vmatpush1.bf16.msra.mxu0 0
    %3119 = vmatprep.mubr.bf16.mxu0 0
    %3120 = vmatmul.mubr.bf16.gmra.mrb[0].mxu0 %v3085
    %v3121 = vpop.f32.mrb[0].mxu0
    %v3122 = vadd.f32 0.0, %v3121
    %v3123 = vpop.f32.mrb[0].mxu0
    %v3124 = vpop.f32.mrb[0].mxu0
    %v3125 = vpop.f32.mrb[0].mxu0
    %3126 = vdwg.mxu0
    %v3127 = vadd.f32 %v3028, %v3122
    %s3128 = scalar_lea.vmem %s6, 28
    %v3129 = vld [vmem:[%s3128] sm:$0xf]
    %v3131 = vsel %vm2438, %v3129, 0
    %3133 = vmatprep.subr.bf16.mxu0 0
    %3134 = vmatpush1.bf16.msra.mxu0 %v2435
    %3135 = vmatprep.subr.bf16.mxu0 0
    %3136 = vmatpush1.bf16.msra.mxu0 %v2436
    %3137 = vmatprep.subr.bf16.mxu0 0
    %3138 = vmatpush1.bf16.msra.mxu0 0
    %3139 = vmatprep.subr.bf16.mxu0 0
    %3140 = vmatpush1.bf16.msra.mxu0 0
    %3141 = vmatprep.subr.bf16.mxu0 0
    %3142 = vmatpush1.bf16.msra.mxu0 0
    %3143 = vmatprep.subr.bf16.mxu0 0
    %3144 = vmatpush1.bf16.msra.mxu0 0
    %3145 = vmatprep.subr.bf16.mxu0 0
    %3146 = vmatpush1.bf16.msra.mxu0 0
    %3147 = vmatprep.subr.bf16.mxu0 0
    %3148 = vmatpush1.bf16.msra.mxu0 0
    %3149 = vmatprep.subr.bf16.mxu0 0
    %3150 = vmatpush1.bf16.msra.mxu0 0
    %3151 = vmatprep.subr.bf16.mxu0 0
    %3152 = vmatpush1.bf16.msra.mxu0 0
    %3153 = vmatprep.subr.bf16.mxu0 0
    %3154 = vmatpush1.bf16.msra.mxu0 0
    %3155 = vmatprep.subr.bf16.mxu0 0
    %3156 = vmatpush1.bf16.msra.mxu0 0
    %3157 = vmatprep.subr.bf16.mxu0 0
    %3158 = vmatpush1.bf16.msra.mxu0 0
    %3159 = vmatprep.subr.bf16.mxu0 0
    %3160 = vmatpush1.bf16.msra.mxu0 0
    %3161 = vmatprep.subr.bf16.mxu0 0
    %3162 = vmatpush1.bf16.msra.mxu0 0
    %3163 = vmatprep.subr.bf16.mxu0 0
    %3164 = vmatpush1.bf16.msra.mxu0 0
    %3165 = vmatprep.mubr.bf16.mxu0 0
    %3166 = vmatmul.mubr.bf16.gmra.mrb[0].mxu0 %v3131
    %v3167 = vpop.f32.mrb[0].mxu0
    %v3168 = vadd.f32 0.0, %v3167
    %v3169 = vpop.f32.mrb[0].mxu0
    %v3170 = vpop.f32.mrb[0].mxu0
    %v3171 = vpop.f32.mrb[0].mxu0
    %3172 = vdwg.mxu0
    %v3173 = vpack.c.bf16 %v3168, %v3168
    %s3174 = scalar_lea.vmem %s7, 56
    %v3175 = vld [vmem:[%s3174] sm:$0xf]
    %v3176 = vld [vmem:[%s3174 + $0x4] sm:$0xf]
    %v3179 = vunpack.c.l.b16 %v3175
    %v3180 = vunpack.c.l.b16 %v3176
    %v3181 = vpack.c.b16 %v3180, %v3179
    %v3184 = vsel %vm2540, %v3173, 0
    %3186 = vmatprep.subr.bf16.mxu0 0
    %3187 = vmatpush1.bf16.msra.mxu0 %v3181
    %3188 = vmatprep.subr.bf16.mxu0 0
    %3189 = vmatpush1.bf16.msra.mxu0 0
    %3190 = vmatprep.subr.bf16.mxu0 0
    %3191 = vmatpush1.bf16.msra.mxu0 0
    %3192 = vmatprep.subr.bf16.mxu0 0
    %3193 = vmatpush1.bf16.msra.mxu0 0
    %3194 = vmatprep.subr.bf16.mxu0 0
    %3195 = vmatpush1.bf16.msra.mxu0 0
    %3196 = vmatprep.subr.bf16.mxu0 0
    %3197 = vmatpush1.bf16.msra.mxu0 0
    %3198 = vmatprep.subr.bf16.mxu0 0
    %3199 = vmatpush1.bf16.msra.mxu0 0
    %3200 = vmatprep.subr.bf16.mxu0 0
    %3201 = vmatpush1.bf16.msra.mxu0 0
    %3202 = vmatprep.subr.bf16.mxu0 0
    %3203 = vmatpush1.bf16.msra.mxu0 0
    %3204 = vmatprep.subr.bf16.mxu0 0
    %3205 = vmatpush1.bf16.msra.mxu0 0
    %3206 = vmatprep.subr.bf16.mxu0 0
    %3207 = vmatpush1.bf16.msra.mxu0 0
    %3208 = vmatprep.subr.bf16.mxu0 0
    %3209 = vmatpush1.bf16.msra.mxu0 0
    %3210 = vmatprep.subr.bf16.mxu0 0
    %3211 = vmatpush1.bf16.msra.mxu0 0
    %3212 = vmatprep.subr.bf16.mxu0 0
    %3213 = vmatpush1.bf16.msra.mxu0 0
    %3214 = vmatprep.subr.bf16.mxu0 0
    %3215 = vmatpush1.bf16.msra.mxu0 0
    %3216 = vmatprep.subr.bf16.mxu0 0
    %3217 = vmatpush1.bf16.msra.mxu0 0
    %3218 = vmatprep.mubr.bf16.mxu0 0
    %3219 = vmatmul.mubr.bf16.gmra.mrb[0].mxu0 %v3184
    %v3220 = vpop.f32.mrb[0].mxu0
    %v3221 = vadd.f32 0.0, %v3220
    %v3222 = vpop.f32.mrb[0].mxu0
    %v3223 = vpop.f32.mrb[0].mxu0
    %v3224 = vpop.f32.mrb[0].mxu0
    %3225 = vdwg.mxu0
    %v3226 = vadd.f32 %v3127, %v3221
    %s3227 = scalar_lea.vmem %s6, 32
    %v3228 = vld [vmem:[%s3227] sm:$0xf]
    %v3230 = vsel %vm2438, %v3228, 0
    %3232 = vmatprep.subr.bf16.mxu0 0
    %3233 = vmatpush1.bf16.msra.mxu0 %v2435
    %3234 = vmatprep.subr.bf16.mxu0 0
    %3235 = vmatpush1.bf16.msra.mxu0 %v2436
    %3236 = vmatprep.subr.bf16.mxu0 0
    %3237 = vmatpush1.bf16.msra.mxu0 0
    %3238 = vmatprep.subr.bf16.mxu0 0
    %3239 = vmatpush1.bf16.msra.mxu0 0
    %3240 = vmatprep.subr.bf16.mxu0 0
    %3241 = vmatpush1.bf16.msra.mxu0 0
    %3242 = vmatprep.subr.bf16.mxu0 0
    %3243 = vmatpush1.bf16.msra.mxu0 0
    %3244 = vmatprep.subr.bf16.mxu0 0
    %3245 = vmatpush1.bf16.msra.mxu0 0
    %3246 = vmatprep.subr.bf16.mxu0 0
    %3247 = vmatpush1.bf16.msra.mxu0 0
    %3248 = vmatprep.subr.bf16.mxu0 0
    %3249 = vmatpush1.bf16.msra.mxu0 0
    %3250 = vmatprep.subr.bf16.mxu0 0
    %3251 = vmatpush1.bf16.msra.mxu0 0
    %3252 = vmatprep.subr.bf16.mxu0 0
    %3253 = vmatpush1.bf16.msra.mxu0 0
    %3254 = vmatprep.subr.bf16.mxu0 0
    %3255 = vmatpush1.bf16.msra.mxu0 0
    %3256 = vmatprep.subr.bf16.mxu0 0
    %3257 = vmatpush1.bf16.msra.mxu0 0
    %3258 = vmatprep.subr.bf16.mxu0 0
    %3259 = vmatpush1.bf16.msra.mxu0 0
    %3260 = vmatprep.subr.bf16.mxu0 0
    %3261 = vmatpush1.bf16.msra.mxu0 0
    %3262 = vmatprep.subr.bf16.mxu0 0
    %3263 = vmatpush1.bf16.msra.mxu0 0
    %3264 = vmatprep.mubr.bf16.mxu0 0
    %3265 = vmatmul.mubr.bf16.gmra.mrb[0].mxu0 %v3230
    %v3266 = vpop.f32.mrb[0].mxu0
    %v3267 = vadd.f32 0.0, %v3266
    %v3268 = vpop.f32.mrb[0].mxu0
    %v3269 = vpop.f32.mrb[0].mxu0
    %v3270 = vpop.f32.mrb[0].mxu0
    %3271 = vdwg.mxu0
    %v3272 = vpack.c.bf16 %v3267, %v3267
    %s3273 = scalar_lea.vmem %s7, 64
    %v3274 = vld [vmem:[%s3273] sm:$0xf]
    %v3275 = vld [vmem:[%s3273 + $0x4] sm:$0xf]
    %v3278 = vunpack.c.l.b16 %v3274
    %v3279 = vunpack.c.l.b16 %v3275
    %v3280 = vpack.c.b16 %v3279, %v3278
    %v3283 = vsel %vm2540, %v3272, 0
    %3285 = vmatprep.subr.bf16.mxu0 0
    %3286 = vmatpush1.bf16.msra.mxu0 %v3280
    %3287 = vmatprep.subr.bf16.mxu0 0
    %3288 = vmatpush1.bf16.msra.mxu0 0
    %3289 = vmatprep.subr.bf16.mxu0 0
    %3290 = vmatpush1.bf16.msra.mxu0 0
    %3291 = vmatprep.subr.bf16.mxu0 0
    %3292 = vmatpush1.bf16.msra.mxu0 0
    %3293 = vmatprep.subr.bf16.mxu0 0
    %3294 = vmatpush1.bf16.msra.mxu0 0
    %3295 = vmatprep.subr.bf16.mxu0 0
    %3296 = vmatpush1.bf16.msra.mxu0 0
    %3297 = vmatprep.subr.bf16.mxu0 0
    %3298 = vmatpush1.bf16.msra.mxu0 0
    %3299 = vmatprep.subr.bf16.mxu0 0
    %3300 = vmatpush1.bf16.msra.mxu0 0
    %3301 = vmatprep.subr.bf16.mxu0 0
    %3302 = vmatpush1.bf16.msra.mxu0 0
    %3303 = vmatprep.subr.bf16.mxu0 0
    %3304 = vmatpush1.bf16.msra.mxu0 0
    %3305 = vmatprep.subr.bf16.mxu0 0
    %3306 = vmatpush1.bf16.msra.mxu0 0
    %3307 = vmatprep.subr.bf16.mxu0 0
    %3308 = vmatpush1.bf16.msra.mxu0 0
    %3309 = vmatprep.subr.bf16.mxu0 0
    %3310 = vmatpush1.bf16.msra.mxu0 0
    %3311 = vmatprep.subr.bf16.mxu0 0
    %3312 = vmatpush1.bf16.msra.mxu0 0
    %3313 = vmatprep.subr.bf16.mxu0 0
    %3314 = vmatpush1.bf16.msra.mxu0 0
    %3315 = vmatprep.subr.bf16.mxu0 0
    %3316 = vmatpush1.bf16.msra.mxu0 0
    %3317 = vmatprep.mubr.bf16.mxu0 0
    %3318 = vmatmul.mubr.bf16.gmra.mrb[0].mxu0 %v3283
    %v3319 = vpop.f32.mrb[0].mxu0
    %v3320 = vadd.f32 0.0, %v3319
    %v3321 = vpop.f32.mrb[0].mxu0
    %v3322 = vpop.f32.mrb[0].mxu0
    %v3323 = vpop.f32.mrb[0].mxu0
    %3324 = vdwg.mxu0
    %v3325 = vadd.f32 %v3226, %v3320
    %s3326 = scalar_lea.vmem %s6, 36
    %v3327 = vld [vmem:[%s3326] sm:$0xf]
    %v3329 = vsel %vm2438, %v3327, 0
    %3331 = vmatprep.subr.bf16.mxu0 0
    %3332 = vmatpush1.bf16.msra.mxu0 %v2435
    %3333 = vmatprep.subr.bf16.mxu0 0
    %3334 = vmatpush1.bf16.msra.mxu0 %v2436
    %3335 = vmatprep.subr.bf16.mxu0 0
    %3336 = vmatpush1.bf16.msra.mxu0 0
    %3337 = vmatprep.subr.bf16.mxu0 0
    %3338 = vmatpush1.bf16.msra.mxu0 0
    %3339 = vmatprep.subr.bf16.mxu0 0
    %3340 = vmatpush1.bf16.msra.mxu0 0
    %3341 = vmatprep.subr.bf16.mxu0 0
    %3342 = vmatpush1.bf16.msra.mxu0 0
    %3343 = vmatprep.subr.bf16.mxu0 0
    %3344 = vmatpush1.bf16.msra.mxu0 0
    %3345 = vmatprep.subr.bf16.mxu0 0
    %3346 = vmatpush1.bf16.msra.mxu0 0
    %3347 = vmatprep.subr.bf16.mxu0 0
    %3348 = vmatpush1.bf16.msra.mxu0 0
    %3349 = vmatprep.subr.bf16.mxu0 0
    %3350 = vmatpush1.bf16.msra.mxu0 0
    %3351 = vmatprep.subr.bf16.mxu0 0
    %3352 = vmatpush1.bf16.msra.mxu0 0
    %3353 = vmatprep.subr.bf16.mxu0 0
    %3354 = vmatpush1.bf16.msra.mxu0 0
    %3355 = vmatprep.subr.bf16.mxu0 0
    %3356 = vmatpush1.bf16.msra.mxu0 0
    %3357 = vmatprep.subr.bf16.mxu0 0
    %3358 = vmatpush1.bf16.msra.mxu0 0
    %3359 = vmatprep.subr.bf16.mxu0 0
    %3360 = vmatpush1.bf16.msra.mxu0 0
    %3361 = vmatprep.subr.bf16.mxu0 0
    %3362 = vmatpush1.bf16.msra.mxu0 0
    %3363 = vmatprep.mubr.bf16.mxu0 0
    %3364 = vmatmul.mubr.bf16.gmra.mrb[0].mxu0 %v3329
    %v3365 = vpop.f32.mrb[0].mxu0
    %v3366 = vadd.f32 0.0, %v3365
    %v3367 = vpop.f32.mrb[0].mxu0
    %v3368 = vpop.f32.mrb[0].mxu0
    %v3369 = vpop.f32.mrb[0].mxu0
    %3370 = vdwg.mxu0
    %v3371 = vpack.c.bf16 %v3366, %v3366
    %s3372 = scalar_lea.vmem %s7, 72
    %v3373 = vld [vmem:[%s3372] sm:$0xf]
    %v3374 = vld [vmem:[%s3372 + $0x4] sm:$0xf]
    %v3377 = vunpack.c.l.b16 %v3373
    %v3378 = vunpack.c.l.b16 %v3374
    %v3379 = vpack.c.b16 %v3378, %v3377
    %v3382 = vsel %vm2540, %v3371, 0
    %3384 = vmatprep.subr.bf16.mxu0 0
    %3385 = vmatpush1.bf16.msra.mxu0 %v3379
    %3386 = vmatprep.subr.bf16.mxu0 0
    %3387 = vmatpush1.bf16.msra.mxu0 0
    %3388 = vmatprep.subr.bf16.mxu0 0
    %3389 = vmatpush1.bf16.msra.mxu0 0
    %3390 = vmatprep.subr.bf16.mxu0 0
    %3391 = vmatpush1.bf16.msra.mxu0 0
    %3392 = vmatprep.subr.bf16.mxu0 0
    %3393 = vmatpush1.bf16.msra.mxu0 0
    %3394 = vmatprep.subr.bf16.mxu0 0
    %3395 = vmatpush1.bf16.msra.mxu0 0
    %3396 = vmatprep.subr.bf16.mxu0 0
    %3397 = vmatpush1.bf16.msra.mxu0 0
    %3398 = vmatprep.subr.bf16.mxu0 0
    %3399 = vmatpush1.bf16.msra.mxu0 0
    %3400 = vmatprep.subr.bf16.mxu0 0
    %3401 = vmatpush1.bf16.msra.mxu0 0
    %3402 = vmatprep.subr.bf16.mxu0 0
    %3403 = vmatpush1.bf16.msra.mxu0 0
    %3404 = vmatprep.subr.bf16.mxu0 0
    %3405 = vmatpush1.bf16.msra.mxu0 0
    %3406 = vmatprep.subr.bf16.mxu0 0
    %3407 = vmatpush1.bf16.msra.mxu0 0
    %3408 = vmatprep.subr.bf16.mxu0 0
    %3409 = vmatpush1.bf16.msra.mxu0 0
    %3410 = vmatprep.subr.bf16.mxu0 0
    %3411 = vmatpush1.bf16.msra.mxu0 0
    %3412 = vmatprep.subr.bf16.mxu0 0
    %3413 = vmatpush1.bf16.msra.mxu0 0
    %3414 = vmatprep.subr.bf16.mxu0 0
    %3415 = vmatpush1.bf16.msra.mxu0 0
    %3416 = vmatprep.mubr.bf16.mxu0 0
    %3417 = vmatmul.mubr.bf16.gmra.mrb[0].mxu0 %v3382
    %v3418 = vpop.f32.mrb[0].mxu0
    %v3419 = vadd.f32 0.0, %v3418
    %v3420 = vpop.f32.mrb[0].mxu0
    %v3421 = vpop.f32.mrb[0].mxu0
    %v3422 = vpop.f32.mrb[0].mxu0
    %3423 = vdwg.mxu0
    %v3424 = vadd.f32 %v3325, %v3419
    %s3425 = scalar_lea.vmem %s6, 40
    %v3426 = vld [vmem:[%s3425] sm:$0xf]
    %v3428 = vsel %vm2438, %v3426, 0
    %3430 = vmatprep.subr.bf16.mxu0 0
    %3431 = vmatpush1.bf16.msra.mxu0 %v2435
    %3432 = vmatprep.subr.bf16.mxu0 0
    %3433 = vmatpush1.bf16.msra.mxu0 %v2436
    %3434 = vmatprep.subr.bf16.mxu0 0
    %3435 = vmatpush1.bf16.msra.mxu0 0
    %3436 = vmatprep.subr.bf16.mxu0 0
    %3437 = vmatpush1.bf16.msra.mxu0 0
    %3438 = vmatprep.subr.bf16.mxu0 0
    %3439 = vmatpush1.bf16.msra.mxu0 0
    %3440 = vmatprep.subr.bf16.mxu0 0
    %3441 = vmatpush1.bf16.msra.mxu0 0
    %3442 = vmatprep.subr.bf16.mxu0 0
    %3443 = vmatpush1.bf16.msra.mxu0 0
    %3444 = vmatprep.subr.bf16.mxu0 0
    %3445 = vmatpush1.bf16.msra.mxu0 0
    %3446 = vmatprep.subr.bf16.mxu0 0
    %3447 = vmatpush1.bf16.msra.mxu0 0
    %3448 = vmatprep.subr.bf16.mxu0 0
    %3449 = vmatpush1.bf16.msra.mxu0 0
    %3450 = vmatprep.subr.bf16.mxu0 0
    %3451 = vmatpush1.bf16.msra.mxu0 0
    %3452 = vmatprep.subr.bf16.mxu0 0
    %3453 = vmatpush1.bf16.msra.mxu0 0
    %3454 = vmatprep.subr.bf16.mxu0 0
    %3455 = vmatpush1.bf16.msra.mxu0 0
    %3456 = vmatprep.subr.bf16.mxu0 0
    %3457 = vmatpush1.bf16.msra.mxu0 0
    %3458 = vmatprep.subr.bf16.mxu0 0
    %3459 = vmatpush1.bf16.msra.mxu0 0
    %3460 = vmatprep.subr.bf16.mxu0 0
    %3461 = vmatpush1.bf16.msra.mxu0 0
    %3462 = vmatprep.mubr.bf16.mxu0 0
    %3463 = vmatmul.mubr.bf16.gmra.mrb[0].mxu0 %v3428
    %v3464 = vpop.f32.mrb[0].mxu0
    %v3465 = vadd.f32 0.0, %v3464
    %v3466 = vpop.f32.mrb[0].mxu0
    %v3467 = vpop.f32.mrb[0].mxu0
    %v3468 = vpop.f32.mrb[0].mxu0
    %3469 = vdwg.mxu0
    %v3470 = vpack.c.bf16 %v3465, %v3465
    %s3471 = scalar_lea.vmem %s7, 80
    %v3472 = vld [vmem:[%s3471] sm:$0xf]
    %v3473 = vld [vmem:[%s3471 + $0x4] sm:$0xf]
    %v3476 = vunpack.c.l.b16 %v3472
    %v3477 = vunpack.c.l.b16 %v3473
    %v3478 = vpack.c.b16 %v3477, %v3476
    %v3481 = vsel %vm2540, %v3470, 0
    %3483 = vmatprep.subr.bf16.mxu0 0
    %3484 = vmatpush1.bf16.msra.mxu0 %v3478
    %3485 = vmatprep.subr.bf16.mxu0 0
    %3486 = vmatpush1.bf16.msra.mxu0 0
    %3487 = vmatprep.subr.bf16.mxu0 0
    %3488 = vmatpush1.bf16.msra.mxu0 0
    %3489 = vmatprep.subr.bf16.mxu0 0
    %3490 = vmatpush1.bf16.msra.mxu0 0
    %3491 = vmatprep.subr.bf16.mxu0 0
    %3492 = vmatpush1.bf16.msra.mxu0 0
    %3493 = vmatprep.subr.bf16.mxu0 0
    %3494 = vmatpush1.bf16.msra.mxu0 0
    %3495 = vmatprep.subr.bf16.mxu0 0
    %3496 = vmatpush1.bf16.msra.mxu0 0
    %3497 = vmatprep.subr.bf16.mxu0 0
    %3498 = vmatpush1.bf16.msra.mxu0 0
    %3499 = vmatprep.subr.bf16.mxu0 0
    %3500 = vmatpush1.bf16.msra.mxu0 0
    %3501 = vmatprep.subr.bf16.mxu0 0
    %3502 = vmatpush1.bf16.msra.mxu0 0
    %3503 = vmatprep.subr.bf16.mxu0 0
    %3504 = vmatpush1.bf16.msra.mxu0 0
    %3505 = vmatprep.subr.bf16.mxu0 0
    %3506 = vmatpush1.bf16.msra.mxu0 0
    %3507 = vmatprep.subr.bf16.mxu0 0
    %3508 = vmatpush1.bf16.msra.mxu0 0
    %3509 = vmatprep.subr.bf16.mxu0 0
    %3510 = vmatpush1.bf16.msra.mxu0 0
    %3511 = vmatprep.subr.bf16.mxu0 0
    %3512 = vmatpush1.bf16.msra.mxu0 0
    %3513 = vmatprep.subr.bf16.mxu0 0
    %3514 = vmatpush1.bf16.msra.mxu0 0
    %3515 = vmatprep.mubr.bf16.mxu0 0
    %3516 = vmatmul.mubr.bf16.gmra.mrb[0].mxu0 %v3481
    %v3517 = vpop.f32.mrb[0].mxu0
    %v3518 = vadd.f32 0.0, %v3517
    %v3519 = vpop.f32.mrb[0].mxu0
    %v3520 = vpop.f32.mrb[0].mxu0
    %v3521 = vpop.f32.mrb[0].mxu0
    %3522 = vdwg.mxu0
    %v3523 = vadd.f32 %v3424, %v3518
    %s3524 = scalar_lea.vmem %s6, 44
    %v3525 = vld [vmem:[%s3524] sm:$0xf]
    %v3527 = vsel %vm2438, %v3525, 0
    %3529 = vmatprep.subr.bf16.mxu0 0
    %3530 = vmatpush1.bf16.msra.mxu0 %v2435
    %3531 = vmatprep.subr.bf16.mxu0 0
    %3532 = vmatpush1.bf16.msra.mxu0 %v2436
    %3533 = vmatprep.subr.bf16.mxu0 0
    %3534 = vmatpush1.bf16.msra.mxu0 0
    %3535 = vmatprep.subr.bf16.mxu0 0
    %3536 = vmatpush1.bf16.msra.mxu0 0
    %3537 = vmatprep.subr.bf16.mxu0 0
    %3538 = vmatpush1.bf16.msra.mxu0 0
    %3539 = vmatprep.subr.bf16.mxu0 0
    %3540 = vmatpush1.bf16.msra.mxu0 0
    %3541 = vmatprep.subr.bf16.mxu0 0
    %3542 = vmatpush1.bf16.msra.mxu0 0
    %3543 = vmatprep.subr.bf16.mxu0 0
    %3544 = vmatpush1.bf16.msra.mxu0 0
    %3545 = vmatprep.subr.bf16.mxu0 0
    %3546 = vmatpush1.bf16.msra.mxu0 0
    %3547 = vmatprep.subr.bf16.mxu0 0
    %3548 = vmatpush1.bf16.msra.mxu0 0
    %3549 = vmatprep.subr.bf16.mxu0 0
    %3550 = vmatpush1.bf16.msra.mxu0 0
    %3551 = vmatprep.subr.bf16.mxu0 0
    %3552 = vmatpush1.bf16.msra.mxu0 0
    %3553 = vmatprep.subr.bf16.mxu0 0
    %3554 = vmatpush1.bf16.msra.mxu0 0
    %3555 = vmatprep.subr.bf16.mxu0 0
    %3556 = vmatpush1.bf16.msra.mxu0 0
    %3557 = vmatprep.subr.bf16.mxu0 0
    %3558 = vmatpush1.bf16.msra.mxu0 0
    %3559 = vmatprep.subr.bf16.mxu0 0
    %3560 = vmatpush1.bf16.msra.mxu0 0
    %3561 = vmatprep.mubr.bf16.mxu0 0
    %3562 = vmatmul.mubr.bf16.gmra.mrb[0].mxu0 %v3527
    %v3563 = vpop.f32.mrb[0].mxu0
    %v3564 = vadd.f32 0.0, %v3563
    %v3565 = vpop.f32.mrb[0].mxu0
    %v3566 = vpop.f32.mrb[0].mxu0
    %v3567 = vpop.f32.mrb[0].mxu0
    %3568 = vdwg.mxu0
    %v3569 = vpack.c.bf16 %v3564, %v3564
    %s3570 = scalar_lea.vmem %s7, 88
    %v3571 = vld [vmem:[%s3570] sm:$0xf]
    %v3572 = vld [vmem:[%s3570 + $0x4] sm:$0xf]
    %v3575 = vunpack.c.l.b16 %v3571
    %v3576 = vunpack.c.l.b16 %v3572
    %v3577 = vpack.c.b16 %v3576, %v3575
    %v3580 = vsel %vm2540, %v3569, 0
    %3582 = vmatprep.subr.bf16.mxu0 0
    %3583 = vmatpush1.bf16.msra.mxu0 %v3577
    %3584 = vmatprep.subr.bf16.mxu0 0
    %3585 = vmatpush1.bf16.msra.mxu0 0
    %3586 = vmatprep.subr.bf16.mxu0 0
    %3587 = vmatpush1.bf16.msra.mxu0 0
    %3588 = vmatprep.subr.bf16.mxu0 0
    %3589 = vmatpush1.bf16.msra.mxu0 0
    %3590 = vmatprep.subr.bf16.mxu0 0
    %3591 = vmatpush1.bf16.msra.mxu0 0
    %3592 = vmatprep.subr.bf16.mxu0 0
    %3593 = vmatpush1.bf16.msra.mxu0 0
    %3594 = vmatprep.subr.bf16.mxu0 0
    %3595 = vmatpush1.bf16.msra.mxu0 0
    %3596 = vmatprep.subr.bf16.mxu0 0
    %3597 = vmatpush1.bf16.msra.mxu0 0
    %3598 = vmatprep.subr.bf16.mxu0 0
    %3599 = vmatpush1.bf16.msra.mxu0 0
    %3600 = vmatprep.subr.bf16.mxu0 0
    %3601 = vmatpush1.bf16.msra.mxu0 0
    %3602 = vmatprep.subr.bf16.mxu0 0
    %3603 = vmatpush1.bf16.msra.mxu0 0
    %3604 = vmatprep.subr.bf16.mxu0 0
    %3605 = vmatpush1.bf16.msra.mxu0 0
    %3606 = vmatprep.subr.bf16.mxu0 0
    %3607 = vmatpush1.bf16.msra.mxu0 0
    %3608 = vmatprep.subr.bf16.mxu0 0
    %3609 = vmatpush1.bf16.msra.mxu0 0
    %3610 = vmatprep.subr.bf16.mxu0 0
    %3611 = vmatpush1.bf16.msra.mxu0 0
    %3612 = vmatprep.subr.bf16.mxu0 0
    %3613 = vmatpush1.bf16.msra.mxu0 0
    %3614 = vmatprep.mubr.bf16.mxu0 0
    %3615 = vmatmul.mubr.bf16.gmra.mrb[0].mxu0 %v3580
    %v3616 = vpop.f32.mrb[0].mxu0
    %v3617 = vadd.f32 0.0, %v3616
    %v3618 = vpop.f32.mrb[0].mxu0
    %v3619 = vpop.f32.mrb[0].mxu0
    %v3620 = vpop.f32.mrb[0].mxu0
    %3621 = vdwg.mxu0
    %v3622 = vadd.f32 %v3523, %v3617
    %s3623 = scalar_lea.vmem %s6, 48
    %v3624 = vld [vmem:[%s3623] sm:$0xf]
    %v3626 = vsel %vm2438, %v3624, 0
    %3628 = vmatprep.subr.bf16.mxu0 0
    %3629 = vmatpush1.bf16.msra.mxu0 %v2435
    %3630 = vmatprep.subr.bf16.mxu0 0
    %3631 = vmatpush1.bf16.msra.mxu0 %v2436
    %3632 = vmatprep.subr.bf16.mxu0 0
    %3633 = vmatpush1.bf16.msra.mxu0 0
    %3634 = vmatprep.subr.bf16.mxu0 0
    %3635 = vmatpush1.bf16.msra.mxu0 0
    %3636 = vmatprep.subr.bf16.mxu0 0
    %3637 = vmatpush1.bf16.msra.mxu0 0
    %3638 = vmatprep.subr.bf16.mxu0 0
    %3639 = vmatpush1.bf16.msra.mxu0 0
    %3640 = vmatprep.subr.bf16.mxu0 0
    %3641 = vmatpush1.bf16.msra.mxu0 0
    %3642 = vmatprep.subr.bf16.mxu0 0
    %3643 = vmatpush1.bf16.msra.mxu0 0
    %3644 = vmatprep.subr.bf16.mxu0 0
    %3645 = vmatpush1.bf16.msra.mxu0 0
    %3646 = vmatprep.subr.bf16.mxu0 0
    %3647 = vmatpush1.bf16.msra.mxu0 0
    %3648 = vmatprep.subr.bf16.mxu0 0
    %3649 = vmatpush1.bf16.msra.mxu0 0
    %3650 = vmatprep.subr.bf16.mxu0 0
    %3651 = vmatpush1.bf16.msra.mxu0 0
    %3652 = vmatprep.subr.bf16.mxu0 0
    %3653 = vmatpush1.bf16.msra.mxu0 0
    %3654 = vmatprep.subr.bf16.mxu0 0
    %3655 = vmatpush1.bf16.msra.mxu0 0
    %3656 = vmatprep.subr.bf16.mxu0 0
    %3657 = vmatpush1.bf16.msra.mxu0 0
    %3658 = vmatprep.subr.bf16.mxu0 0
    %3659 = vmatpush1.bf16.msra.mxu0 0
    %3660 = vmatprep.mubr.bf16.mxu0 0
    %3661 = vmatmul.mubr.bf16.gmra.mrb[0].mxu0 %v3626
    %v3662 = vpop.f32.mrb[0].mxu0
    %v3663 = vadd.f32 0.0, %v3662
    %v3664 = vpop.f32.mrb[0].mxu0
    %v3665 = vpop.f32.mrb[0].mxu0
    %v3666 = vpop.f32.mrb[0].mxu0
    %3667 = vdwg.mxu0
    %v3668 = vpack.c.bf16 %v3663, %v3663
    %s3669 = scalar_lea.vmem %s7, 96
    %v3670 = vld [vmem:[%s3669] sm:$0xf]
    %v3671 = vld [vmem:[%s3669 + $0x4] sm:$0xf]
    %v3674 = vunpack.c.l.b16 %v3670
    %v3675 = vunpack.c.l.b16 %v3671
    %v3676 = vpack.c.b16 %v3675, %v3674
    %v3679 = vsel %vm2540, %v3668, 0
    %3681 = vmatprep.subr.bf16.mxu0 0
    %3682 = vmatpush1.bf16.msra.mxu0 %v3676
    %3683 = vmatprep.subr.bf16.mxu0 0
    %3684 = vmatpush1.bf16.msra.mxu0 0
    %3685 = vmatprep.subr.bf16.mxu0 0
    %3686 = vmatpush1.bf16.msra.mxu0 0
    %3687 = vmatprep.subr.bf16.mxu0 0
    %3688 = vmatpush1.bf16.msra.mxu0 0
    %3689 = vmatprep.subr.bf16.mxu0 0
    %3690 = vmatpush1.bf16.msra.mxu0 0
    %3691 = vmatprep.subr.bf16.mxu0 0
    %3692 = vmatpush1.bf16.msra.mxu0 0
    %3693 = vmatprep.subr.bf16.mxu0 0
    %3694 = vmatpush1.bf16.msra.mxu0 0
    %3695 = vmatprep.subr.bf16.mxu0 0
    %3696 = vmatpush1.bf16.msra.mxu0 0
    %3697 = vmatprep.subr.bf16.mxu0 0
    %3698 = vmatpush1.bf16.msra.mxu0 0
    %3699 = vmatprep.subr.bf16.mxu0 0
    %3700 = vmatpush1.bf16.msra.mxu0 0
    %3701 = vmatprep.subr.bf16.mxu0 0
    %3702 = vmatpush1.bf16.msra.mxu0 0
    %3703 = vmatprep.subr.bf16.mxu0 0
    %3704 = vmatpush1.bf16.msra.mxu0 0
    %3705 = vmatprep.subr.bf16.mxu0 0
    %3706 = vmatpush1.bf16.msra.mxu0 0
    %3707 = vmatprep.subr.bf16.mxu0 0
    %3708 = vmatpush1.bf16.msra.mxu0 0
    %3709 = vmatprep.subr.bf16.mxu0 0
    %3710 = vmatpush1.bf16.msra.mxu0 0
    %3711 = vmatprep.subr.bf16.mxu0 0
    %3712 = vmatpush1.bf16.msra.mxu0 0
    %3713 = vmatprep.mubr.bf16.mxu0 0
    %3714 = vmatmul.mubr.bf16.gmra.mrb[0].mxu0 %v3679
    %v3715 = vpop.f32.mrb[0].mxu0
    %v3716 = vadd.f32 0.0, %v3715
    %v3717 = vpop.f32.mrb[0].mxu0
    %v3718 = vpop.f32.mrb[0].mxu0
    %v3719 = vpop.f32.mrb[0].mxu0
    %3720 = vdwg.mxu0
    %v3721 = vadd.f32 %v3622, %v3716
    %s3722 = scalar_lea.vmem %s6, 52
    %v3723 = vld [vmem:[%s3722] sm:$0xf]
    %v3725 = vsel %vm2438, %v3723, 0
    %3727 = vmatprep.subr.bf16.mxu0 0
    %3728 = vmatpush1.bf16.msra.mxu0 %v2435
    %3729 = vmatprep.subr.bf16.mxu0 0
    %3730 = vmatpush1.bf16.msra.mxu0 %v2436
    %3731 = vmatprep.subr.bf16.mxu0 0
    %3732 = vmatpush1.bf16.msra.mxu0 0
    %3733 = vmatprep.subr.bf16.mxu0 0
    %3734 = vmatpush1.bf16.msra.mxu0 0
    %3735 = vmatprep.subr.bf16.mxu0 0
    %3736 = vmatpush1.bf16.msra.mxu0 0
    %3737 = vmatprep.subr.bf16.mxu0 0
    %3738 = vmatpush1.bf16.msra.mxu0 0
    %3739 = vmatprep.subr.bf16.mxu0 0
    %3740 = vmatpush1.bf16.msra.mxu0 0
    %3741 = vmatprep.subr.bf16.mxu0 0
    %3742 = vmatpush1.bf16.msra.mxu0 0
    %3743 = vmatprep.subr.bf16.mxu0 0
    %3744 = vmatpush1.bf16.msra.mxu0 0
    %3745 = vmatprep.subr.bf16.mxu0 0
    %3746 = vmatpush1.bf16.msra.mxu0 0
    %3747 = vmatprep.subr.bf16.mxu0 0
    %3748 = vmatpush1.bf16.msra.mxu0 0
    %3749 = vmatprep.subr.bf16.mxu0 0
    %3750 = vmatpush1.bf16.msra.mxu0 0
    %3751 = vmatprep.subr.bf16.mxu0 0
    %3752 = vmatpush1.bf16.msra.mxu0 0
    %3753 = vmatprep.subr.bf16.mxu0 0
    %3754 = vmatpush1.bf16.msra.mxu0 0
    %3755 = vmatprep.subr.bf16.mxu0 0
    %3756 = vmatpush1.bf16.msra.mxu0 0
    %3757 = vmatprep.subr.bf16.mxu0 0
    %3758 = vmatpush1.bf16.msra.mxu0 0
    %3759 = vmatprep.mubr.bf16.mxu0 0
    %3760 = vmatmul.mubr.bf16.gmra.mrb[0].mxu0 %v3725
    %v3761 = vpop.f32.mrb[0].mxu0
    %v3762 = vadd.f32 0.0, %v3761
    %v3763 = vpop.f32.mrb[0].mxu0
    %v3764 = vpop.f32.mrb[0].mxu0
    %v3765 = vpop.f32.mrb[0].mxu0
    %3766 = vdwg.mxu0
    %v3767 = vpack.c.bf16 %v3762, %v3762
    %s3768 = scalar_lea.vmem %s7, 104
    %v3769 = vld [vmem:[%s3768] sm:$0xf]
    %v3770 = vld [vmem:[%s3768 + $0x4] sm:$0xf]
    %v3773 = vunpack.c.l.b16 %v3769
    %v3774 = vunpack.c.l.b16 %v3770
    %v3775 = vpack.c.b16 %v3774, %v3773
    %v3778 = vsel %vm2540, %v3767, 0
    %3780 = vmatprep.subr.bf16.mxu0 0
    %3781 = vmatpush1.bf16.msra.mxu0 %v3775
    %3782 = vmatprep.subr.bf16.mxu0 0
    %3783 = vmatpush1.bf16.msra.mxu0 0
    %3784 = vmatprep.subr.bf16.mxu0 0
    %3785 = vmatpush1.bf16.msra.mxu0 0
    %3786 = vmatprep.subr.bf16.mxu0 0
    %3787 = vmatpush1.bf16.msra.mxu0 0
    %3788 = vmatprep.subr.bf16.mxu0 0
    %3789 = vmatpush1.bf16.msra.mxu0 0
    %3790 = vmatprep.subr.bf16.mxu0 0
    %3791 = vmatpush1.bf16.msra.mxu0 0
    %3792 = vmatprep.subr.bf16.mxu0 0
    %3793 = vmatpush1.bf16.msra.mxu0 0
    %3794 = vmatprep.subr.bf16.mxu0 0
    %3795 = vmatpush1.bf16.msra.mxu0 0
    %3796 = vmatprep.subr.bf16.mxu0 0
    %3797 = vmatpush1.bf16.msra.mxu0 0
    %3798 = vmatprep.subr.bf16.mxu0 0
    %3799 = vmatpush1.bf16.msra.mxu0 0
    %3800 = vmatprep.subr.bf16.mxu0 0
    %3801 = vmatpush1.bf16.msra.mxu0 0
    %3802 = vmatprep.subr.bf16.mxu0 0
    %3803 = vmatpush1.bf16.msra.mxu0 0
    %3804 = vmatprep.subr.bf16.mxu0 0
    %3805 = vmatpush1.bf16.msra.mxu0 0
    %3806 = vmatprep.subr.bf16.mxu0 0
    %3807 = vmatpush1.bf16.msra.mxu0 0
    %3808 = vmatprep.subr.bf16.mxu0 0
    %3809 = vmatpush1.bf16.msra.mxu0 0
    %3810 = vmatprep.subr.bf16.mxu0 0
    %3811 = vmatpush1.bf16.msra.mxu0 0
    %3812 = vmatprep.mubr.bf16.mxu0 0
    %3813 = vmatmul.mubr.bf16.gmra.mrb[0].mxu0 %v3778
    %v3814 = vpop.f32.mrb[0].mxu0
    %v3815 = vadd.f32 0.0, %v3814
    %v3816 = vpop.f32.mrb[0].mxu0
    %v3817 = vpop.f32.mrb[0].mxu0
    %v3818 = vpop.f32.mrb[0].mxu0
    %3819 = vdwg.mxu0
    %v3820 = vadd.f32 %v3721, %v3815
    %s3821 = scalar_lea.vmem %s6, 56
    %v3822 = vld [vmem:[%s3821] sm:$0xf]
    %v3824 = vsel %vm2438, %v3822, 0
    %3826 = vmatprep.subr.bf16.mxu0 0
    %3827 = vmatpush1.bf16.msra.mxu0 %v2435
    %3828 = vmatprep.subr.bf16.mxu0 0
    %3829 = vmatpush1.bf16.msra.mxu0 %v2436
    %3830 = vmatprep.subr.bf16.mxu0 0
    %3831 = vmatpush1.bf16.msra.mxu0 0
    %3832 = vmatprep.subr.bf16.mxu0 0
    %3833 = vmatpush1.bf16.msra.mxu0 0
    %3834 = vmatprep.subr.bf16.mxu0 0
    %3835 = vmatpush1.bf16.msra.mxu0 0
    %3836 = vmatprep.subr.bf16.mxu0 0
    %3837 = vmatpush1.bf16.msra.mxu0 0
    %3838 = vmatprep.subr.bf16.mxu0 0
    %3839 = vmatpush1.bf16.msra.mxu0 0
    %3840 = vmatprep.subr.bf16.mxu0 0
    %3841 = vmatpush1.bf16.msra.mxu0 0
    %3842 = vmatprep.subr.bf16.mxu0 0
    %3843 = vmatpush1.bf16.msra.mxu0 0
    %3844 = vmatprep.subr.bf16.mxu0 0
    %3845 = vmatpush1.bf16.msra.mxu0 0
    %3846 = vmatprep.subr.bf16.mxu0 0
    %3847 = vmatpush1.bf16.msra.mxu0 0
    %3848 = vmatprep.subr.bf16.mxu0 0
    %3849 = vmatpush1.bf16.msra.mxu0 0
    %3850 = vmatprep.subr.bf16.mxu0 0
    %3851 = vmatpush1.bf16.msra.mxu0 0
    %3852 = vmatprep.subr.bf16.mxu0 0
    %3853 = vmatpush1.bf16.msra.mxu0 0
    %3854 = vmatprep.subr.bf16.mxu0 0
    %3855 = vmatpush1.bf16.msra.mxu0 0
    %3856 = vmatprep.subr.bf16.mxu0 0
    %3857 = vmatpush1.bf16.msra.mxu0 0
    %3858 = vmatprep.mubr.bf16.mxu0 0
    %3859 = vmatmul.mubr.bf16.gmra.mrb[0].mxu0 %v3824
    %v3860 = vpop.f32.mrb[0].mxu0
    %v3861 = vadd.f32 0.0, %v3860
    %v3862 = vpop.f32.mrb[0].mxu0
    %v3863 = vpop.f32.mrb[0].mxu0
    %v3864 = vpop.f32.mrb[0].mxu0
    %3865 = vdwg.mxu0
    %v3866 = vpack.c.bf16 %v3861, %v3861
    %s3867 = scalar_lea.vmem %s7, 112
    %v3868 = vld [vmem:[%s3867] sm:$0xf]
    %v3869 = vld [vmem:[%s3867 + $0x4] sm:$0xf]
    %v3872 = vunpack.c.l.b16 %v3868
    %v3873 = vunpack.c.l.b16 %v3869
    %v3874 = vpack.c.b16 %v3873, %v3872
    %v3877 = vsel %vm2540, %v3866, 0
    %3879 = vmatprep.subr.bf16.mxu0 0
    %3880 = vmatpush1.bf16.msra.mxu0 %v3874
    %3881 = vmatprep.subr.bf16.mxu0 0
    %3882 = vmatpush1.bf16.msra.mxu0 0
    %3883 = vmatprep.subr.bf16.mxu0 0
    %3884 = vmatpush1.bf16.msra.mxu0 0
    %3885 = vmatprep.subr.bf16.mxu0 0
    %3886 = vmatpush1.bf16.msra.mxu0 0
    %3887 = vmatprep.subr.bf16.mxu0 0
    %3888 = vmatpush1.bf16.msra.mxu0 0
    %3889 = vmatprep.subr.bf16.mxu0 0
    %3890 = vmatpush1.bf16.msra.mxu0 0
    %3891 = vmatprep.subr.bf16.mxu0 0
    %3892 = vmatpush1.bf16.msra.mxu0 0
    %3893 = vmatprep.subr.bf16.mxu0 0
    %3894 = vmatpush1.bf16.msra.mxu0 0
    %3895 = vmatprep.subr.bf16.mxu0 0
    %3896 = vmatpush1.bf16.msra.mxu0 0
    %3897 = vmatprep.subr.bf16.mxu0 0
    %3898 = vmatpush1.bf16.msra.mxu0 0
    %3899 = vmatprep.subr.bf16.mxu0 0
    %3900 = vmatpush1.bf16.msra.mxu0 0
    %3901 = vmatprep.subr.bf16.mxu0 0
    %3902 = vmatpush1.bf16.msra.mxu0 0
    %3903 = vmatprep.subr.bf16.mxu0 0
    %3904 = vmatpush1.bf16.msra.mxu0 0
    %3905 = vmatprep.subr.bf16.mxu0 0
    %3906 = vmatpush1.bf16.msra.mxu0 0
    %3907 = vmatprep.subr.bf16.mxu0 0
    %3908 = vmatpush1.bf16.msra.mxu0 0
    %3909 = vmatprep.subr.bf16.mxu0 0
    %3910 = vmatpush1.bf16.msra.mxu0 0
    %3911 = vmatprep.mubr.bf16.mxu0 0
    %3912 = vmatmul.mubr.bf16.gmra.mrb[0].mxu0 %v3877
    %v3913 = vpop.f32.mrb[0].mxu0
    %v3914 = vadd.f32 0.0, %v3913
    %v3915 = vpop.f32.mrb[0].mxu0
    %v3916 = vpop.f32.mrb[0].mxu0
    %v3917 = vpop.f32.mrb[0].mxu0
    %3918 = vdwg.mxu0
    %v3919 = vadd.f32 %v3820, %v3914
    %s3920 = scalar_lea.vmem %s6, 60
    %v3921 = vld [vmem:[%s3920] sm:$0xf]
    %v3923 = vsel %vm2438, %v3921, 0
    %3925 = vmatprep.subr.bf16.mxu0 0
    %3926 = vmatpush1.bf16.msra.mxu0 %v2435
    %3927 = vmatprep.subr.bf16.mxu0 0
    %3928 = vmatpush1.bf16.msra.mxu0 %v2436
    %3929 = vmatprep.subr.bf16.mxu0 0
    %3930 = vmatpush1.bf16.msra.mxu0 0
    %3931 = vmatprep.subr.bf16.mxu0 0
    %3932 = vmatpush1.bf16.msra.mxu0 0
    %3933 = vmatprep.subr.bf16.mxu0 0
    %3934 = vmatpush1.bf16.msra.mxu0 0
    %3935 = vmatprep.subr.bf16.mxu0 0
    %3936 = vmatpush1.bf16.msra.mxu0 0
    %3937 = vmatprep.subr.bf16.mxu0 0
    %3938 = vmatpush1.bf16.msra.mxu0 0
    %3939 = vmatprep.subr.bf16.mxu0 0
    %3940 = vmatpush1.bf16.msra.mxu0 0
    %3941 = vmatprep.subr.bf16.mxu0 0
    %3942 = vmatpush1.bf16.msra.mxu0 0
    %3943 = vmatprep.subr.bf16.mxu0 0
    %3944 = vmatpush1.bf16.msra.mxu0 0
    %3945 = vmatprep.subr.bf16.mxu0 0
    %3946 = vmatpush1.bf16.msra.mxu0 0
    %3947 = vmatprep.subr.bf16.mxu0 0
    %3948 = vmatpush1.bf16.msra.mxu0 0
    %3949 = vmatprep.subr.bf16.mxu0 0
    %3950 = vmatpush1.bf16.msra.mxu0 0
    %3951 = vmatprep.subr.bf16.mxu0 0
    %3952 = vmatpush1.bf16.msra.mxu0 0
    %3953 = vmatprep.subr.bf16.mxu0 0
    %3954 = vmatpush1.bf16.msra.mxu0 0
    %3955 = vmatprep.subr.bf16.mxu0 0
    %3956 = vmatpush1.bf16.msra.mxu0 0
    %3957 = vmatprep.mubr.bf16.mxu0 0
    %3958 = vmatmul.mubr.bf16.gmra.mrb[0].mxu0 %v3923
    %v3959 = vpop.f32.mrb[0].mxu0
    %v3960 = vadd.f32 0.0, %v3959
    %v3961 = vpop.f32.mrb[0].mxu0
    %v3962 = vpop.f32.mrb[0].mxu0
    %v3963 = vpop.f32.mrb[0].mxu0
    %3964 = vdwg.mxu0
    %v3965 = vpack.c.bf16 %v3960, %v3960
    %s3966 = scalar_lea.vmem %s7, 120
    %v3967 = vld [vmem:[%s3966] sm:$0xf]
    %v3968 = vld [vmem:[%s3966 + $0x4] sm:$0xf]
    %v3971 = vunpack.c.l.b16 %v3967
    %v3972 = vunpack.c.l.b16 %v3968
    %v3973 = vpack.c.b16 %v3972, %v3971
    %v3976 = vsel %vm2540, %v3965, 0
    %3978 = vmatprep.subr.bf16.mxu0 0
    %3979 = vmatpush1.bf16.msra.mxu0 %v3973
    %3980 = vmatprep.subr.bf16.mxu0 0
    %3981 = vmatpush1.bf16.msra.mxu0 0
    %3982 = vmatprep.subr.bf16.mxu0 0
    %3983 = vmatpush1.bf16.msra.mxu0 0
    %3984 = vmatprep.subr.bf16.mxu0 0
    %3985 = vmatpush1.bf16.msra.mxu0 0
    %3986 = vmatprep.subr.bf16.mxu0 0
    %3987 = vmatpush1.bf16.msra.mxu0 0
    %3988 = vmatprep.subr.bf16.mxu0 0
    %3989 = vmatpush1.bf16.msra.mxu0 0
    %3990 = vmatprep.subr.bf16.mxu0 0
    %3991 = vmatpush1.bf16.msra.mxu0 0
    %3992 = vmatprep.subr.bf16.mxu0 0
    %3993 = vmatpush1.bf16.msra.mxu0 0
    %3994 = vmatprep.subr.bf16.mxu0 0
    %3995 = vmatpush1.bf16.msra.mxu0 0
    %3996 = vmatprep.subr.bf16.mxu0 0
    %3997 = vmatpush1.bf16.msra.mxu0 0
    %3998 = vmatprep.subr.bf16.mxu0 0
    %3999 = vmatpush1.bf16.msra.mxu0 0
    %4000 = vmatprep.subr.bf16.mxu0 0
    %4001 = vmatpush1.bf16.msra.mxu0 0
    %4002 = vmatprep.subr.bf16.mxu0 0
    %4003 = vmatpush1.bf16.msra.mxu0 0
    %4004 = vmatprep.subr.bf16.mxu0 0
    %4005 = vmatpush1.bf16.msra.mxu0 0
    %4006 = vmatprep.subr.bf16.mxu0 0
    %4007 = vmatpush1.bf16.msra.mxu0 0
    %4008 = vmatprep.subr.bf16.mxu0 0
    %4009 = vmatpush1.bf16.msra.mxu0 0
    %4010 = vmatprep.mubr.bf16.mxu0 0
    %4011 = vmatmul.mubr.bf16.gmra.mrb[0].mxu0 %v3976
    %v4012 = vpop.f32.mrb[0].mxu0
    %v4013 = vadd.f32 0.0, %v4012
    %v4014 = vpop.f32.mrb[0].mxu0
    %v4015 = vpop.f32.mrb[0].mxu0
    %v4016 = vpop.f32.mrb[0].mxu0
    %4017 = vdwg.mxu0
    %v4018 = vadd.f32 %v3919, %v4013
    %v4019 = vld [vmem:[%s8] sm:$0x1]
    %v4021 = vlaneseq
    %v4022 = vshrl.u32 %v4021, 7
    %v4023 = vsub.s32 0, %v4022
    %v4024 = vrot.slane %v4019, %v4023
    %v4026 = vadd.f32 %v4018, %v4024
    %vm4027 = vcmp.gt.f32.partialorder %v4026, 0.0
    %v4028 = vmul.f32 %v4026, 0.2
    %v4029 = vsel %vm4027, %v4026, %v4028
    %v4030 = vpack.c.bf16 %v4029, %v4029
    %v4031 = vld [vmem:[%s9] sm:$0x1]
    %v4033 = vsel %vm446, %v4031, 0
    %v4036 = vsel %vm453, %v4030, 0
    %4038 = vmatprep.subr.bf16.mxu0 0
    %4039 = vmatpush1.bf16.msra.mxu0 %v4036
    %4040 = vmatprep.subr.bf16.mxu0 0
    %4041 = vmatpush1.bf16.msra.mxu0 0
    %4042 = vmatprep.subr.bf16.mxu0 0
    %4043 = vmatpush1.bf16.msra.mxu0 0
    %4044 = vmatprep.subr.bf16.mxu0 0
    %4045 = vmatpush1.bf16.msra.mxu0 0
    %4046 = vmatprep.subr.bf16.mxu0 0
    %4047 = vmatpush1.bf16.msra.mxu0 0
    %4048 = vmatprep.subr.bf16.mxu0 0
    %4049 = vmatpush1.bf16.msra.mxu0 0
    %4050 = vmatprep.subr.bf16.mxu0 0
    %4051 = vmatpush1.bf16.msra.mxu0 0
    %4052 = vmatprep.subr.bf16.mxu0 0
    %4053 = vmatpush1.bf16.msra.mxu0 0
    %4054 = vmatprep.subr.bf16.mxu0 0
    %4055 = vmatpush1.bf16.msra.mxu0 0
    %4056 = vmatprep.subr.bf16.mxu0 0
    %4057 = vmatpush1.bf16.msra.mxu0 0
    %4058 = vmatprep.subr.bf16.mxu0 0
    %4059 = vmatpush1.bf16.msra.mxu0 0
    %4060 = vmatprep.subr.bf16.mxu0 0
    %4061 = vmatpush1.bf16.msra.mxu0 0
    %4062 = vmatprep.subr.bf16.mxu0 0
    %4063 = vmatpush1.bf16.msra.mxu0 0
    %4064 = vmatprep.subr.bf16.mxu0 0
    %4065 = vmatpush1.bf16.msra.mxu0 0
    %4066 = vmatprep.subr.bf16.mxu0 0
    %4067 = vmatpush1.bf16.msra.mxu0 0
    %4068 = vmatprep.subr.bf16.mxu0 0
    %4069 = vmatpush1.bf16.msra.mxu0 0
    %4070 = vmatprep.mubr.bf16.mxu0 0
    %4071 = vmatmul.mubr.bf16.gmra.mrb[0].mxu0 %v4033
    %v4072 = vpop.f32.mrb[0].mxu0
    %v4073 = vadd.f32 0.0, %v4072
    %v4074 = vpop.f32.mrb[0].mxu0
    %v4075 = vpop.f32.mrb[0].mxu0
    %v4076 = vpop.f32.mrb[0].mxu0
    %4077 = vdwg.mxu0
    %v4078 = vpack.c.bf16 %v4073, %v4073
    %v4079 = vld [vmem:[%s10] sm:$0xf]
    %v4080 = vld [vmem:[%s10 + $0x4] sm:$0xf]
    %v4081 = vld [vmem:[%s10 + $0x8] sm:$0xf]
    %v4082 = vld [vmem:[%s10 + $0xc] sm:$0xf]
    %s4083 = scalar_lea.vmem %s9, 1
    %v4084 = vld [vmem:[%s4083] sm:$0x1]
    %v4086 = vsel %vm446, %v4084, 0
    %4088 = vmatprep.subr.bf16.mxu0 0
    %4089 = vmatpush1.bf16.msra.mxu0 %v4036
    %4090 = vmatprep.subr.bf16.mxu0 0
    %4091 = vmatpush1.bf16.msra.mxu0 0
    %4092 = vmatprep.subr.bf16.mxu0 0
    %4093 = vmatpush1.bf16.msra.mxu0 0
    %4094 = vmatprep.subr.bf16.mxu0 0
    %4095 = vmatpush1.bf16.msra.mxu0 0
    %4096 = vmatprep.subr.bf16.mxu0 0
    %4097 = vmatpush1.bf16.msra.mxu0 0
    %4098 = vmatprep.subr.bf16.mxu0 0
    %4099 = vmatpush1.bf16.msra.mxu0 0
    %4100 = vmatprep.subr.bf16.mxu0 0
    %4101 = vmatpush1.bf16.msra.mxu0 0
    %4102 = vmatprep.subr.bf16.mxu0 0
    %4103 = vmatpush1.bf16.msra.mxu0 0
    %4104 = vmatprep.subr.bf16.mxu0 0
    %4105 = vmatpush1.bf16.msra.mxu0 0
    %4106 = vmatprep.subr.bf16.mxu0 0
    %4107 = vmatpush1.bf16.msra.mxu0 0
    %4108 = vmatprep.subr.bf16.mxu0 0
    %4109 = vmatpush1.bf16.msra.mxu0 0
    %4110 = vmatprep.subr.bf16.mxu0 0
    %4111 = vmatpush1.bf16.msra.mxu0 0
    %4112 = vmatprep.subr.bf16.mxu0 0
    %4113 = vmatpush1.bf16.msra.mxu0 0
    %4114 = vmatprep.subr.bf16.mxu0 0
    %4115 = vmatpush1.bf16.msra.mxu0 0
    %4116 = vmatprep.subr.bf16.mxu0 0
    %4117 = vmatpush1.bf16.msra.mxu0 0
    %4118 = vmatprep.subr.bf16.mxu0 0
    %4119 = vmatpush1.bf16.msra.mxu0 0
    %4120 = vmatprep.mubr.bf16.mxu0 0
    %4121 = vmatmul.mubr.bf16.gmra.mrb[0].mxu0 %v4086
    %v4122 = vpop.f32.mrb[0].mxu0
    %v4123 = vadd.f32 0.0, %v4122
    %v4124 = vpop.f32.mrb[0].mxu0
    %v4125 = vpop.f32.mrb[0].mxu0
    %v4126 = vpop.f32.mrb[0].mxu0
    %4127 = vdwg.mxu0
    %v4128 = vpack.c.bf16 %v4123, %v4123
    %s4129 = scalar_lea.vmem %s10, 16
    %v4130 = vld [vmem:[%s4129] sm:$0xf]
    %v4131 = vld [vmem:[%s4129 + $0x4] sm:$0xf]
    %v4132 = vld [vmem:[%s4129 + $0x8] sm:$0xf]
    %v4133 = vld [vmem:[%s4129 + $0xc] sm:$0xf]
    %v4138 = vunpack.c.l.b16 %v4130
    %v4139 = vunpack.c.l.b16 %v4131
    %v4140 = vunpack.c.l.b16 %v4132
    %v4141 = vunpack.c.l.b16 %v4133
    %v4142 = vpack.c.b16 %v4139, %v4138
    %v4143 = vpack.c.b16 %v4141, %v4140
    %v4147 = vsel %vm2438, %v4128, 0
    %4149 = vmatprep.subr.bf16.mxu0 0
    %4150 = vmatpush1.bf16.msra.mxu0 %v4142
    %4151 = vmatprep.subr.bf16.mxu0 0
    %4152 = vmatpush1.bf16.msra.mxu0 %v4143
    %4153 = vmatprep.subr.bf16.mxu0 0
    %4154 = vmatpush1.bf16.msra.mxu0 0
    %4155 = vmatprep.subr.bf16.mxu0 0
    %4156 = vmatpush1.bf16.msra.mxu0 0
    %4157 = vmatprep.subr.bf16.mxu0 0
    %4158 = vmatpush1.bf16.msra.mxu0 0
    %4159 = vmatprep.subr.bf16.mxu0 0
    %4160 = vmatpush1.bf16.msra.mxu0 0
    %4161 = vmatprep.subr.bf16.mxu0 0
    %4162 = vmatpush1.bf16.msra.mxu0 0
    %4163 = vmatprep.subr.bf16.mxu0 0
    %4164 = vmatpush1.bf16.msra.mxu0 0
    %4165 = vmatprep.subr.bf16.mxu0 0
    %4166 = vmatpush1.bf16.msra.mxu0 0
    %4167 = vmatprep.subr.bf16.mxu0 0
    %4168 = vmatpush1.bf16.msra.mxu0 0
    %4169 = vmatprep.subr.bf16.mxu0 0
    %4170 = vmatpush1.bf16.msra.mxu0 0
    %4171 = vmatprep.subr.bf16.mxu0 0
    %4172 = vmatpush1.bf16.msra.mxu0 0
    %4173 = vmatprep.subr.bf16.mxu0 0
    %4174 = vmatpush1.bf16.msra.mxu0 0
    %4175 = vmatprep.subr.bf16.mxu0 0
    %4176 = vmatpush1.bf16.msra.mxu0 0
    %4177 = vmatprep.subr.bf16.mxu0 0
    %4178 = vmatpush1.bf16.msra.mxu0 0
    %4179 = vmatprep.subr.bf16.mxu0 0
    %4180 = vmatpush1.bf16.msra.mxu0 0
    %4181 = vmatprep.mubr.bf16.mxu0 0
    %4182 = vmatmul.mubr.bf16.gmra.mrb[0].mxu0 %v4147
    %v4183 = vpop.f32.mrb[0].mxu0
    %v4184 = vadd.f32 0.0, %v4183
    %v4185 = vpop.f32.mrb[0].mxu0
    %v4186 = vpop.f32.mrb[0].mxu0
    %v4187 = vpop.f32.mrb[0].mxu0
    %4188 = vdwg.mxu0
    %v4193 = vunpack.c.l.b16 %v4079
    %v4194 = vunpack.c.l.b16 %v4080
    %v4195 = vunpack.c.l.b16 %v4081
    %v4196 = vunpack.c.l.b16 %v4082
    %v4197 = vpack.c.b16 %v4194, %v4193
    %v4198 = vpack.c.b16 %v4196, %v4195
    %v4202 = vsel %vm2438, %v4078, 0
    %4204 = vmatprep.subr.bf16.mxu0 0
    %4205 = vmatpush1.bf16.msra.mxu0 %v4197
    %4206 = vmatprep.subr.bf16.mxu0 0
    %4207 = vmatpush1.bf16.msra.mxu0 %v4198
    %4208 = vmatprep.subr.bf16.mxu0 0
    %4209 = vmatpush1.bf16.msra.mxu0 0
    %4210 = vmatprep.subr.bf16.mxu0 0
    %4211 = vmatpush1.bf16.msra.mxu0 0
    %4212 = vmatprep.subr.bf16.mxu0 0
    %4213 = vmatpush1.bf16.msra.mxu0 0
    %4214 = vmatprep.subr.bf16.mxu0 0
    %4215 = vmatpush1.bf16.msra.mxu0 0
    %4216 = vmatprep.subr.bf16.mxu0 0
    %4217 = vmatpush1.bf16.msra.mxu0 0
    %4218 = vmatprep.subr.bf16.mxu0 0
    %4219 = vmatpush1.bf16.msra.mxu0 0
    %4220 = vmatprep.subr.bf16.mxu0 0
    %4221 = vmatpush1.bf16.msra.mxu0 0
    %4222 = vmatprep.subr.bf16.mxu0 0
    %4223 = vmatpush1.bf16.msra.mxu0 0
    %4224 = vmatprep.subr.bf16.mxu0 0
    %4225 = vmatpush1.bf16.msra.mxu0 0
    %4226 = vmatprep.subr.bf16.mxu0 0
    %4227 = vmatpush1.bf16.msra.mxu0 0
    %4228 = vmatprep.subr.bf16.mxu0 0
    %4229 = vmatpush1.bf16.msra.mxu0 0
    %4230 = vmatprep.subr.bf16.mxu0 0
    %4231 = vmatpush1.bf16.msra.mxu0 0
    %4232 = vmatprep.subr.bf16.mxu0 0
    %4233 = vmatpush1.bf16.msra.mxu0 0
    %4234 = vmatprep.subr.bf16.mxu0 0
    %4235 = vmatpush1.bf16.msra.mxu0 0
    %4236 = vmatprep.mubr.bf16.mxu0 0
    %4237 = vmatmul.mubr.bf16.gmra.mrb[0].mxu0 %v4202
    %v4238 = vpop.f32.mrb[0].mxu0
    %v4239 = vadd.f32 %v4184, %v4238
    %v4240 = vpop.f32.mrb[0].mxu0
    %v4241 = vpop.f32.mrb[0].mxu0
    %v4242 = vpop.f32.mrb[0].mxu0
    %4243 = vdwg.mxu0
    %s4244 = scalar_lea.vmem %s9, 2
    %v4245 = vld [vmem:[%s4244] sm:$0x1]
    %v4247 = vsel %vm446, %v4245, 0
    %4249 = vmatprep.subr.bf16.mxu0 0
    %4250 = vmatpush1.bf16.msra.mxu0 %v4036
    %4251 = vmatprep.subr.bf16.mxu0 0
    %4252 = vmatpush1.bf16.msra.mxu0 0
    %4253 = vmatprep.subr.bf16.mxu0 0
    %4254 = vmatpush1.bf16.msra.mxu0 0
    %4255 = vmatprep.subr.bf16.mxu0 0
    %4256 = vmatpush1.bf16.msra.mxu0 0
    %4257 = vmatprep.subr.bf16.mxu0 0
    %4258 = vmatpush1.bf16.msra.mxu0 0
    %4259 = vmatprep.subr.bf16.mxu0 0
    %4260 = vmatpush1.bf16.msra.mxu0 0
    %4261 = vmatprep.subr.bf16.mxu0 0
    %4262 = vmatpush1.bf16.msra.mxu0 0
    %4263 = vmatprep.subr.bf16.mxu0 0
    %4264 = vmatpush1.bf16.msra.mxu0 0
    %4265 = vmatprep.subr.bf16.mxu0 0
    %4266 = vmatpush1.bf16.msra.mxu0 0
    %4267 = vmatprep.subr.bf16.mxu0 0
    %4268 = vmatpush1.bf16.msra.mxu0 0
    %4269 = vmatprep.subr.bf16.mxu0 0
    %4270 = vmatpush1.bf16.msra.mxu0 0
    %4271 = vmatprep.subr.bf16.mxu0 0
    %4272 = vmatpush1.bf16.msra.mxu0 0
    %4273 = vmatprep.subr.bf16.mxu0 0
    %4274 = vmatpush1.bf16.msra.mxu0 0
    %4275 = vmatprep.subr.bf16.mxu0 0
    %4276 = vmatpush1.bf16.msra.mxu0 0
    %4277 = vmatprep.subr.bf16.mxu0 0
    %4278 = vmatpush1.bf16.msra.mxu0 0
    %4279 = vmatprep.subr.bf16.mxu0 0
    %4280 = vmatpush1.bf16.msra.mxu0 0
    %4281 = vmatprep.mubr.bf16.mxu0 0
    %4282 = vmatmul.mubr.bf16.gmra.mrb[0].mxu0 %v4247
    %v4283 = vpop.f32.mrb[0].mxu0
    %v4284 = vadd.f32 0.0, %v4283
    %v4285 = vpop.f32.mrb[0].mxu0
    %v4286 = vpop.f32.mrb[0].mxu0
    %v4287 = vpop.f32.mrb[0].mxu0
    %4288 = vdwg.mxu0
    %v4289 = vpack.c.bf16 %v4284, %v4284
    %s4290 = scalar_lea.vmem %s10, 32
    %v4291 = vld [vmem:[%s4290] sm:$0xf]
    %v4292 = vld [vmem:[%s4290 + $0x4] sm:$0xf]
    %v4293 = vld [vmem:[%s4290 + $0x8] sm:$0xf]
    %v4294 = vld [vmem:[%s4290 + $0xc] sm:$0xf]
    %v4299 = vunpack.c.l.b16 %v4291
    %v4300 = vunpack.c.l.b16 %v4292
    %v4301 = vunpack.c.l.b16 %v4293
    %v4302 = vunpack.c.l.b16 %v4294
    %v4303 = vpack.c.b16 %v4300, %v4299
    %v4304 = vpack.c.b16 %v4302, %v4301
    %v4308 = vsel %vm2438, %v4289, 0
    %4310 = vmatprep.subr.bf16.mxu0 0
    %4311 = vmatpush1.bf16.msra.mxu0 %v4303
    %4312 = vmatprep.subr.bf16.mxu0 0
    %4313 = vmatpush1.bf16.msra.mxu0 %v4304
    %4314 = vmatprep.subr.bf16.mxu0 0
    %4315 = vmatpush1.bf16.msra.mxu0 0
    %4316 = vmatprep.subr.bf16.mxu0 0
    %4317 = vmatpush1.bf16.msra.mxu0 0
    %4318 = vmatprep.subr.bf16.mxu0 0
    %4319 = vmatpush1.bf16.msra.mxu0 0
    %4320 = vmatprep.subr.bf16.mxu0 0
    %4321 = vmatpush1.bf16.msra.mxu0 0
    %4322 = vmatprep.subr.bf16.mxu0 0
    %4323 = vmatpush1.bf16.msra.mxu0 0
    %4324 = vmatprep.subr.bf16.mxu0 0
    %4325 = vmatpush1.bf16.msra.mxu0 0
    %4326 = vmatprep.subr.bf16.mxu0 0
    %4327 = vmatpush1.bf16.msra.mxu0 0
    %4328 = vmatprep.subr.bf16.mxu0 0
    %4329 = vmatpush1.bf16.msra.mxu0 0
    %4330 = vmatprep.subr.bf16.mxu0 0
    %4331 = vmatpush1.bf16.msra.mxu0 0
    %4332 = vmatprep.subr.bf16.mxu0 0
    %4333 = vmatpush1.bf16.msra.mxu0 0
    %4334 = vmatprep.subr.bf16.mxu0 0
    %4335 = vmatpush1.bf16.msra.mxu0 0
    %4336 = vmatprep.subr.bf16.mxu0 0
    %4337 = vmatpush1.bf16.msra.mxu0 0
    %4338 = vmatprep.subr.bf16.mxu0 0
    %4339 = vmatpush1.bf16.msra.mxu0 0
    %4340 = vmatprep.subr.bf16.mxu0 0
    %4341 = vmatpush1.bf16.msra.mxu0 0
    %4342 = vmatprep.mubr.bf16.mxu0 0
    %4343 = vmatmul.mubr.bf16.gmra.mrb[0].mxu0 %v4308
    %v4344 = vpop.f32.mrb[0].mxu0
    %v4345 = vadd.f32 0.0, %v4344
    %v4346 = vpop.f32.mrb[0].mxu0
    %v4347 = vpop.f32.mrb[0].mxu0
    %v4348 = vpop.f32.mrb[0].mxu0
    %4349 = vdwg.mxu0
    %v4350 = vadd.f32 %v4239, %v4345
    %s4351 = scalar_lea.vmem %s9, 3
    %v4352 = vld [vmem:[%s4351] sm:$0x1]
    %v4354 = vsel %vm446, %v4352, 0
    %4356 = vmatprep.subr.bf16.mxu0 0
    %4357 = vmatpush1.bf16.msra.mxu0 %v4036
    %4358 = vmatprep.subr.bf16.mxu0 0
    %4359 = vmatpush1.bf16.msra.mxu0 0
    %4360 = vmatprep.subr.bf16.mxu0 0
    %4361 = vmatpush1.bf16.msra.mxu0 0
    %4362 = vmatprep.subr.bf16.mxu0 0
    %4363 = vmatpush1.bf16.msra.mxu0 0
    %4364 = vmatprep.subr.bf16.mxu0 0
    %4365 = vmatpush1.bf16.msra.mxu0 0
    %4366 = vmatprep.subr.bf16.mxu0 0
    %4367 = vmatpush1.bf16.msra.mxu0 0
    %4368 = vmatprep.subr.bf16.mxu0 0
    %4369 = vmatpush1.bf16.msra.mxu0 0
    %4370 = vmatprep.subr.bf16.mxu0 0
    %4371 = vmatpush1.bf16.msra.mxu0 0
    %4372 = vmatprep.subr.bf16.mxu0 0
    %4373 = vmatpush1.bf16.msra.mxu0 0
    %4374 = vmatprep.subr.bf16.mxu0 0
    %4375 = vmatpush1.bf16.msra.mxu0 0
    %4376 = vmatprep.subr.bf16.mxu0 0
    %4377 = vmatpush1.bf16.msra.mxu0 0
    %4378 = vmatprep.subr.bf16.mxu0 0
    %4379 = vmatpush1.bf16.msra.mxu0 0
    %4380 = vmatprep.subr.bf16.mxu0 0
    %4381 = vmatpush1.bf16.msra.mxu0 0
    %4382 = vmatprep.subr.bf16.mxu0 0
    %4383 = vmatpush1.bf16.msra.mxu0 0
    %4384 = vmatprep.subr.bf16.mxu0 0
    %4385 = vmatpush1.bf16.msra.mxu0 0
    %4386 = vmatprep.subr.bf16.mxu0 0
    %4387 = vmatpush1.bf16.msra.mxu0 0
    %4388 = vmatprep.mubr.bf16.mxu0 0
    %4389 = vmatmul.mubr.bf16.gmra.mrb[0].mxu0 %v4354
    %v4390 = vpop.f32.mrb[0].mxu0
    %v4391 = vadd.f32 0.0, %v4390
    %v4392 = vpop.f32.mrb[0].mxu0
    %v4393 = vpop.f32.mrb[0].mxu0
    %v4394 = vpop.f32.mrb[0].mxu0
    %4395 = vdwg.mxu0
    %v4396 = vpack.c.bf16 %v4391, %v4391
    %s4397 = scalar_lea.vmem %s10, 48
    %v4398 = vld [vmem:[%s4397] sm:$0xf]
    %v4399 = vld [vmem:[%s4397 + $0x4] sm:$0xf]
    %v4400 = vld [vmem:[%s4397 + $0x8] sm:$0xf]
    %v4401 = vld [vmem:[%s4397 + $0xc] sm:$0xf]
    %v4406 = vunpack.c.l.b16 %v4398
    %v4407 = vunpack.c.l.b16 %v4399
    %v4408 = vunpack.c.l.b16 %v4400
    %v4409 = vunpack.c.l.b16 %v4401
    %v4410 = vpack.c.b16 %v4407, %v4406
    %v4411 = vpack.c.b16 %v4409, %v4408
    %v4415 = vsel %vm2438, %v4396, 0
    %4417 = vmatprep.subr.bf16.mxu0 0
    %4418 = vmatpush1.bf16.msra.mxu0 %v4410
    %4419 = vmatprep.subr.bf16.mxu0 0
    %4420 = vmatpush1.bf16.msra.mxu0 %v4411
    %4421 = vmatprep.subr.bf16.mxu0 0
    %4422 = vmatpush1.bf16.msra.mxu0 0
    %4423 = vmatprep.subr.bf16.mxu0 0
    %4424 = vmatpush1.bf16.msra.mxu0 0
    %4425 = vmatprep.subr.bf16.mxu0 0
    %4426 = vmatpush1.bf16.msra.mxu0 0
    %4427 = vmatprep.subr.bf16.mxu0 0
    %4428 = vmatpush1.bf16.msra.mxu0 0
    %4429 = vmatprep.subr.bf16.mxu0 0
    %4430 = vmatpush1.bf16.msra.mxu0 0
    %4431 = vmatprep.subr.bf16.mxu0 0
    %4432 = vmatpush1.bf16.msra.mxu0 0
    %4433 = vmatprep.subr.bf16.mxu0 0
    %4434 = vmatpush1.bf16.msra.mxu0 0
    %4435 = vmatprep.subr.bf16.mxu0 0
    %4436 = vmatpush1.bf16.msra.mxu0 0
    %4437 = vmatprep.subr.bf16.mxu0 0
    %4438 = vmatpush1.bf16.msra.mxu0 0
    %4439 = vmatprep.subr.bf16.mxu0 0
    %4440 = vmatpush1.bf16.msra.mxu0 0
    %4441 = vmatprep.subr.bf16.mxu0 0
    %4442 = vmatpush1.bf16.msra.mxu0 0
    %4443 = vmatprep.subr.bf16.mxu0 0
    %4444 = vmatpush1.bf16.msra.mxu0 0
    %4445 = vmatprep.subr.bf16.mxu0 0
    %4446 = vmatpush1.bf16.msra.mxu0 0
    %4447 = vmatprep.subr.bf16.mxu0 0
    %4448 = vmatpush1.bf16.msra.mxu0 0
    %4449 = vmatprep.mubr.bf16.mxu0 0
    %4450 = vmatmul.mubr.bf16.gmra.mrb[0].mxu0 %v4415
    %v4451 = vpop.f32.mrb[0].mxu0
    %v4452 = vadd.f32 0.0, %v4451
    %v4453 = vpop.f32.mrb[0].mxu0
    %v4454 = vpop.f32.mrb[0].mxu0
    %v4455 = vpop.f32.mrb[0].mxu0
    %4456 = vdwg.mxu0
    %v4457 = vadd.f32 %v4350, %v4452
    %s4458 = scalar_lea.vmem %s9, 4
    %v4459 = vld [vmem:[%s4458] sm:$0x1]
    %v4461 = vsel %vm446, %v4459, 0
    %4463 = vmatprep.subr.bf16.mxu0 0
    %4464 = vmatpush1.bf16.msra.mxu0 %v4036
    %4465 = vmatprep.subr.bf16.mxu0 0
    %4466 = vmatpush1.bf16.msra.mxu0 0
    %4467 = vmatprep.subr.bf16.mxu0 0
    %4468 = vmatpush1.bf16.msra.mxu0 0
    %4469 = vmatprep.subr.bf16.mxu0 0
    %4470 = vmatpush1.bf16.msra.mxu0 0
    %4471 = vmatprep.subr.bf16.mxu0 0
    %4472 = vmatpush1.bf16.msra.mxu0 0
    %4473 = vmatprep.subr.bf16.mxu0 0
    %4474 = vmatpush1.bf16.msra.mxu0 0
    %4475 = vmatprep.subr.bf16.mxu0 0
    %4476 = vmatpush1.bf16.msra.mxu0 0
    %4477 = vmatprep.subr.bf16.mxu0 0
    %4478 = vmatpush1.bf16.msra.mxu0 0
    %4479 = vmatprep.subr.bf16.mxu0 0
    %4480 = vmatpush1.bf16.msra.mxu0 0
    %4481 = vmatprep.subr.bf16.mxu0 0
    %4482 = vmatpush1.bf16.msra.mxu0 0
    %4483 = vmatprep.subr.bf16.mxu0 0
    %4484 = vmatpush1.bf16.msra.mxu0 0
    %4485 = vmatprep.subr.bf16.mxu0 0
    %4486 = vmatpush1.bf16.msra.mxu0 0
    %4487 = vmatprep.subr.bf16.mxu0 0
    %4488 = vmatpush1.bf16.msra.mxu0 0
    %4489 = vmatprep.subr.bf16.mxu0 0
    %4490 = vmatpush1.bf16.msra.mxu0 0
    %4491 = vmatprep.subr.bf16.mxu0 0
    %4492 = vmatpush1.bf16.msra.mxu0 0
    %4493 = vmatprep.subr.bf16.mxu0 0
    %4494 = vmatpush1.bf16.msra.mxu0 0
    %4495 = vmatprep.mubr.bf16.mxu0 0
    %4496 = vmatmul.mubr.bf16.gmra.mrb[0].mxu0 %v4461
    %v4497 = vpop.f32.mrb[0].mxu0
    %v4498 = vadd.f32 0.0, %v4497
    %v4499 = vpop.f32.mrb[0].mxu0
    %v4500 = vpop.f32.mrb[0].mxu0
    %v4501 = vpop.f32.mrb[0].mxu0
    %4502 = vdwg.mxu0
    %v4503 = vpack.c.bf16 %v4498, %v4498
    %s4504 = scalar_lea.vmem %s10, 64
    %v4505 = vld [vmem:[%s4504] sm:$0xf]
    %v4506 = vld [vmem:[%s4504 + $0x4] sm:$0xf]
    %v4507 = vld [vmem:[%s4504 + $0x8] sm:$0xf]
    %v4508 = vld [vmem:[%s4504 + $0xc] sm:$0xf]
    %v4513 = vunpack.c.l.b16 %v4505
    %v4514 = vunpack.c.l.b16 %v4506
    %v4515 = vunpack.c.l.b16 %v4507
    %v4516 = vunpack.c.l.b16 %v4508
    %v4517 = vpack.c.b16 %v4514, %v4513
    %v4518 = vpack.c.b16 %v4516, %v4515
    %v4522 = vsel %vm2438, %v4503, 0
    %4524 = vmatprep.subr.bf16.mxu0 0
    %4525 = vmatpush1.bf16.msra.mxu0 %v4517
    %4526 = vmatprep.subr.bf16.mxu0 0
    %4527 = vmatpush1.bf16.msra.mxu0 %v4518
    %4528 = vmatprep.subr.bf16.mxu0 0
    %4529 = vmatpush1.bf16.msra.mxu0 0
    %4530 = vmatprep.subr.bf16.mxu0 0
    %4531 = vmatpush1.bf16.msra.mxu0 0
    %4532 = vmatprep.subr.bf16.mxu0 0
    %4533 = vmatpush1.bf16.msra.mxu0 0
    %4534 = vmatprep.subr.bf16.mxu0 0
    %4535 = vmatpush1.bf16.msra.mxu0 0
    %4536 = vmatprep.subr.bf16.mxu0 0
    %4537 = vmatpush1.bf16.msra.mxu0 0
    %4538 = vmatprep.subr.bf16.mxu0 0
    %4539 = vmatpush1.bf16.msra.mxu0 0
    %4540 = vmatprep.subr.bf16.mxu0 0
    %4541 = vmatpush1.bf16.msra.mxu0 0
    %4542 = vmatprep.subr.bf16.mxu0 0
    %4543 = vmatpush1.bf16.msra.mxu0 0
    %4544 = vmatprep.subr.bf16.mxu0 0
    %4545 = vmatpush1.bf16.msra.mxu0 0
    %4546 = vmatprep.subr.bf16.mxu0 0
    %4547 = vmatpush1.bf16.msra.mxu0 0
    %4548 = vmatprep.subr.bf16.mxu0 0
    %4549 = vmatpush1.bf16.msra.mxu0 0
    %4550 = vmatprep.subr.bf16.mxu0 0
    %4551 = vmatpush1.bf16.msra.mxu0 0
    %4552 = vmatprep.subr.bf16.mxu0 0
    %4553 = vmatpush1.bf16.msra.mxu0 0
    %4554 = vmatprep.subr.bf16.mxu0 0
    %4555 = vmatpush1.bf16.msra.mxu0 0
    %4556 = vmatprep.mubr.bf16.mxu0 0
    %4557 = vmatmul.mubr.bf16.gmra.mrb[0].mxu0 %v4522
    %v4558 = vpop.f32.mrb[0].mxu0
    %v4559 = vadd.f32 0.0, %v4558
    %v4560 = vpop.f32.mrb[0].mxu0
    %v4561 = vpop.f32.mrb[0].mxu0
    %v4562 = vpop.f32.mrb[0].mxu0
    %4563 = vdwg.mxu0
    %v4564 = vadd.f32 %v4457, %v4559
    %s4565 = scalar_lea.vmem %s9, 5
    %v4566 = vld [vmem:[%s4565] sm:$0x1]
    %v4568 = vsel %vm446, %v4566, 0
    %4570 = vmatprep.subr.bf16.mxu0 0
    %4571 = vmatpush1.bf16.msra.mxu0 %v4036
    %4572 = vmatprep.subr.bf16.mxu0 0
    %4573 = vmatpush1.bf16.msra.mxu0 0
    %4574 = vmatprep.subr.bf16.mxu0 0
    %4575 = vmatpush1.bf16.msra.mxu0 0
    %4576 = vmatprep.subr.bf16.mxu0 0
    %4577 = vmatpush1.bf16.msra.mxu0 0
    %4578 = vmatprep.subr.bf16.mxu0 0
    %4579 = vmatpush1.bf16.msra.mxu0 0
    %4580 = vmatprep.subr.bf16.mxu0 0
    %4581 = vmatpush1.bf16.msra.mxu0 0
    %4582 = vmatprep.subr.bf16.mxu0 0
    %4583 = vmatpush1.bf16.msra.mxu0 0
    %4584 = vmatprep.subr.bf16.mxu0 0
    %4585 = vmatpush1.bf16.msra.mxu0 0
    %4586 = vmatprep.subr.bf16.mxu0 0
    %4587 = vmatpush1.bf16.msra.mxu0 0
    %4588 = vmatprep.subr.bf16.mxu0 0
    %4589 = vmatpush1.bf16.msra.mxu0 0
    %4590 = vmatprep.subr.bf16.mxu0 0
    %4591 = vmatpush1.bf16.msra.mxu0 0
    %4592 = vmatprep.subr.bf16.mxu0 0
    %4593 = vmatpush1.bf16.msra.mxu0 0
    %4594 = vmatprep.subr.bf16.mxu0 0
    %4595 = vmatpush1.bf16.msra.mxu0 0
    %4596 = vmatprep.subr.bf16.mxu0 0
    %4597 = vmatpush1.bf16.msra.mxu0 0
    %4598 = vmatprep.subr.bf16.mxu0 0
    %4599 = vmatpush1.bf16.msra.mxu0 0
    %4600 = vmatprep.subr.bf16.mxu0 0
    %4601 = vmatpush1.bf16.msra.mxu0 0
    %4602 = vmatprep.mubr.bf16.mxu0 0
    %4603 = vmatmul.mubr.bf16.gmra.mrb[0].mxu0 %v4568
    %v4604 = vpop.f32.mrb[0].mxu0
    %v4605 = vadd.f32 0.0, %v4604
    %v4606 = vpop.f32.mrb[0].mxu0
    %v4607 = vpop.f32.mrb[0].mxu0
    %v4608 = vpop.f32.mrb[0].mxu0
    %4609 = vdwg.mxu0
    %v4610 = vpack.c.bf16 %v4605, %v4605
    %s4611 = scalar_lea.vmem %s10, 80
    %v4612 = vld [vmem:[%s4611] sm:$0xf]
    %v4613 = vld [vmem:[%s4611 + $0x4] sm:$0xf]
    %v4614 = vld [vmem:[%s4611 + $0x8] sm:$0xf]
    %v4615 = vld [vmem:[%s4611 + $0xc] sm:$0xf]
    %v4620 = vunpack.c.l.b16 %v4612
    %v4621 = vunpack.c.l.b16 %v4613
    %v4622 = vunpack.c.l.b16 %v4614
    %v4623 = vunpack.c.l.b16 %v4615
    %v4624 = vpack.c.b16 %v4621, %v4620
    %v4625 = vpack.c.b16 %v4623, %v4622
    %v4629 = vsel %vm2438, %v4610, 0
    %4631 = vmatprep.subr.bf16.mxu0 0
    %4632 = vmatpush1.bf16.msra.mxu0 %v4624
    %4633 = vmatprep.subr.bf16.mxu0 0
    %4634 = vmatpush1.bf16.msra.mxu0 %v4625
    %4635 = vmatprep.subr.bf16.mxu0 0
    %4636 = vmatpush1.bf16.msra.mxu0 0
    %4637 = vmatprep.subr.bf16.mxu0 0
    %4638 = vmatpush1.bf16.msra.mxu0 0
    %4639 = vmatprep.subr.bf16.mxu0 0
    %4640 = vmatpush1.bf16.msra.mxu0 0
    %4641 = vmatprep.subr.bf16.mxu0 0
    %4642 = vmatpush1.bf16.msra.mxu0 0
    %4643 = vmatprep.subr.bf16.mxu0 0
    %4644 = vmatpush1.bf16.msra.mxu0 0
    %4645 = vmatprep.subr.bf16.mxu0 0
    %4646 = vmatpush1.bf16.msra.mxu0 0
    %4647 = vmatprep.subr.bf16.mxu0 0
    %4648 = vmatpush1.bf16.msra.mxu0 0
    %4649 = vmatprep.subr.bf16.mxu0 0
    %4650 = vmatpush1.bf16.msra.mxu0 0
    %4651 = vmatprep.subr.bf16.mxu0 0
    %4652 = vmatpush1.bf16.msra.mxu0 0
    %4653 = vmatprep.subr.bf16.mxu0 0
    %4654 = vmatpush1.bf16.msra.mxu0 0
    %4655 = vmatprep.subr.bf16.mxu0 0
    %4656 = vmatpush1.bf16.msra.mxu0 0
    %4657 = vmatprep.subr.bf16.mxu0 0
    %4658 = vmatpush1.bf16.msra.mxu0 0
    %4659 = vmatprep.subr.bf16.mxu0 0
    %4660 = vmatpush1.bf16.msra.mxu0 0
    %4661 = vmatprep.subr.bf16.mxu0 0
    %4662 = vmatpush1.bf16.msra.mxu0 0
    %4663 = vmatprep.mubr.bf16.mxu0 0
    %4664 = vmatmul.mubr.bf16.gmra.mrb[0].mxu0 %v4629
    %v4665 = vpop.f32.mrb[0].mxu0
    %v4666 = vadd.f32 0.0, %v4665
    %v4667 = vpop.f32.mrb[0].mxu0
    %v4668 = vpop.f32.mrb[0].mxu0
    %v4669 = vpop.f32.mrb[0].mxu0
    %4670 = vdwg.mxu0
    %v4671 = vadd.f32 %v4564, %v4666
    %s4672 = scalar_lea.vmem %s9, 6
    %v4673 = vld [vmem:[%s4672] sm:$0x1]
    %v4675 = vsel %vm446, %v4673, 0
    %4677 = vmatprep.subr.bf16.mxu0 0
    %4678 = vmatpush1.bf16.msra.mxu0 %v4036
    %4679 = vmatprep.subr.bf16.mxu0 0
    %4680 = vmatpush1.bf16.msra.mxu0 0
    %4681 = vmatprep.subr.bf16.mxu0 0
    %4682 = vmatpush1.bf16.msra.mxu0 0
    %4683 = vmatprep.subr.bf16.mxu0 0
    %4684 = vmatpush1.bf16.msra.mxu0 0
    %4685 = vmatprep.subr.bf16.mxu0 0
    %4686 = vmatpush1.bf16.msra.mxu0 0
    %4687 = vmatprep.subr.bf16.mxu0 0
    %4688 = vmatpush1.bf16.msra.mxu0 0
    %4689 = vmatprep.subr.bf16.mxu0 0
    %4690 = vmatpush1.bf16.msra.mxu0 0
    %4691 = vmatprep.subr.bf16.mxu0 0
    %4692 = vmatpush1.bf16.msra.mxu0 0
    %4693 = vmatprep.subr.bf16.mxu0 0
    %4694 = vmatpush1.bf16.msra.mxu0 0
    %4695 = vmatprep.subr.bf16.mxu0 0
    %4696 = vmatpush1.bf16.msra.mxu0 0
    %4697 = vmatprep.subr.bf16.mxu0 0
    %4698 = vmatpush1.bf16.msra.mxu0 0
    %4699 = vmatprep.subr.bf16.mxu0 0
    %4700 = vmatpush1.bf16.msra.mxu0 0
    %4701 = vmatprep.subr.bf16.mxu0 0
    %4702 = vmatpush1.bf16.msra.mxu0 0
    %4703 = vmatprep.subr.bf16.mxu0 0
    %4704 = vmatpush1.bf16.msra.mxu0 0
    %4705 = vmatprep.subr.bf16.mxu0 0
    %4706 = vmatpush1.bf16.msra.mxu0 0
    %4707 = vmatprep.subr.bf16.mxu0 0
    %4708 = vmatpush1.bf16.msra.mxu0 0
    %4709 = vmatprep.mubr.bf16.mxu0 0
    %4710 = vmatmul.mubr.bf16.gmra.mrb[0].mxu0 %v4675
    %v4711 = vpop.f32.mrb[0].mxu0
    %v4712 = vadd.f32 0.0, %v4711
    %v4713 = vpop.f32.mrb[0].mxu0
    %v4714 = vpop.f32.mrb[0].mxu0
    %v4715 = vpop.f32.mrb[0].mxu0
    %4716 = vdwg.mxu0
    %v4717 = vpack.c.bf16 %v4712, %v4712
    %s4718 = scalar_lea.vmem %s10, 96
    %v4719 = vld [vmem:[%s4718] sm:$0xf]
    %v4720 = vld [vmem:[%s4718 + $0x4] sm:$0xf]
    %v4721 = vld [vmem:[%s4718 + $0x8] sm:$0xf]
    %v4722 = vld [vmem:[%s4718 + $0xc] sm:$0xf]
    %v4727 = vunpack.c.l.b16 %v4719
    %v4728 = vunpack.c.l.b16 %v4720
    %v4729 = vunpack.c.l.b16 %v4721
    %v4730 = vunpack.c.l.b16 %v4722
    %v4731 = vpack.c.b16 %v4728, %v4727
    %v4732 = vpack.c.b16 %v4730, %v4729
    %v4736 = vsel %vm2438, %v4717, 0
    %4738 = vmatprep.subr.bf16.mxu0 0
    %4739 = vmatpush1.bf16.msra.mxu0 %v4731
    %4740 = vmatprep.subr.bf16.mxu0 0
    %4741 = vmatpush1.bf16.msra.mxu0 %v4732
    %4742 = vmatprep.subr.bf16.mxu0 0
    %4743 = vmatpush1.bf16.msra.mxu0 0
    %4744 = vmatprep.subr.bf16.mxu0 0
    %4745 = vmatpush1.bf16.msra.mxu0 0
    %4746 = vmatprep.subr.bf16.mxu0 0
    %4747 = vmatpush1.bf16.msra.mxu0 0
    %4748 = vmatprep.subr.bf16.mxu0 0
    %4749 = vmatpush1.bf16.msra.mxu0 0
    %4750 = vmatprep.subr.bf16.mxu0 0
    %4751 = vmatpush1.bf16.msra.mxu0 0
    %4752 = vmatprep.subr.bf16.mxu0 0
    %4753 = vmatpush1.bf16.msra.mxu0 0
    %4754 = vmatprep.subr.bf16.mxu0 0
    %4755 = vmatpush1.bf16.msra.mxu0 0
    %4756 = vmatprep.subr.bf16.mxu0 0
    %4757 = vmatpush1.bf16.msra.mxu0 0
    %4758 = vmatprep.subr.bf16.mxu0 0
    %4759 = vmatpush1.bf16.msra.mxu0 0
    %4760 = vmatprep.subr.bf16.mxu0 0
    %4761 = vmatpush1.bf16.msra.mxu0 0
    %4762 = vmatprep.subr.bf16.mxu0 0
    %4763 = vmatpush1.bf16.msra.mxu0 0
    %4764 = vmatprep.subr.bf16.mxu0 0
    %4765 = vmatpush1.bf16.msra.mxu0 0
    %4766 = vmatprep.subr.bf16.mxu0 0
    %4767 = vmatpush1.bf16.msra.mxu0 0
    %4768 = vmatprep.subr.bf16.mxu0 0
    %4769 = vmatpush1.bf16.msra.mxu0 0
    %4770 = vmatprep.mubr.bf16.mxu0 0
    %4771 = vmatmul.mubr.bf16.gmra.mrb[0].mxu0 %v4736
    %v4772 = vpop.f32.mrb[0].mxu0
    %v4773 = vadd.f32 0.0, %v4772
    %v4774 = vpop.f32.mrb[0].mxu0
    %v4775 = vpop.f32.mrb[0].mxu0
    %v4776 = vpop.f32.mrb[0].mxu0
    %4777 = vdwg.mxu0
    %v4778 = vadd.f32 %v4671, %v4773
    %s4779 = scalar_lea.vmem %s9, 7
    %v4780 = vld [vmem:[%s4779] sm:$0x1]
    %v4782 = vsel %vm446, %v4780, 0
    %4784 = vmatprep.subr.bf16.mxu0 0
    %4785 = vmatpush1.bf16.msra.mxu0 %v4036
    %4786 = vmatprep.subr.bf16.mxu0 0
    %4787 = vmatpush1.bf16.msra.mxu0 0
    %4788 = vmatprep.subr.bf16.mxu0 0
    %4789 = vmatpush1.bf16.msra.mxu0 0
    %4790 = vmatprep.subr.bf16.mxu0 0
    %4791 = vmatpush1.bf16.msra.mxu0 0
    %4792 = vmatprep.subr.bf16.mxu0 0
    %4793 = vmatpush1.bf16.msra.mxu0 0
    %4794 = vmatprep.subr.bf16.mxu0 0
    %4795 = vmatpush1.bf16.msra.mxu0 0
    %4796 = vmatprep.subr.bf16.mxu0 0
    %4797 = vmatpush1.bf16.msra.mxu0 0
    %4798 = vmatprep.subr.bf16.mxu0 0
    %4799 = vmatpush1.bf16.msra.mxu0 0
    %4800 = vmatprep.subr.bf16.mxu0 0
    %4801 = vmatpush1.bf16.msra.mxu0 0
    %4802 = vmatprep.subr.bf16.mxu0 0
    %4803 = vmatpush1.bf16.msra.mxu0 0
    %4804 = vmatprep.subr.bf16.mxu0 0
    %4805 = vmatpush1.bf16.msra.mxu0 0
    %4806 = vmatprep.subr.bf16.mxu0 0
    %4807 = vmatpush1.bf16.msra.mxu0 0
    %4808 = vmatprep.subr.bf16.mxu0 0
    %4809 = vmatpush1.bf16.msra.mxu0 0
    %4810 = vmatprep.subr.bf16.mxu0 0
    %4811 = vmatpush1.bf16.msra.mxu0 0
    %4812 = vmatprep.subr.bf16.mxu0 0
    %4813 = vmatpush1.bf16.msra.mxu0 0
    %4814 = vmatprep.subr.bf16.mxu0 0
    %4815 = vmatpush1.bf16.msra.mxu0 0
    %4816 = vmatprep.mubr.bf16.mxu0 0
    %4817 = vmatmul.mubr.bf16.gmra.mrb[0].mxu0 %v4782
    %v4818 = vpop.f32.mrb[0].mxu0
    %v4819 = vadd.f32 0.0, %v4818
    %v4820 = vpop.f32.mrb[0].mxu0
    %v4821 = vpop.f32.mrb[0].mxu0
    %v4822 = vpop.f32.mrb[0].mxu0
    %4823 = vdwg.mxu0
    %v4824 = vpack.c.bf16 %v4819, %v4819
    %s4825 = scalar_lea.vmem %s10, 112
    %v4826 = vld [vmem:[%s4825] sm:$0xf]
    %v4827 = vld [vmem:[%s4825 + $0x4] sm:$0xf]
    %v4828 = vld [vmem:[%s4825 + $0x8] sm:$0xf]
    %v4829 = vld [vmem:[%s4825 + $0xc] sm:$0xf]
    %v4834 = vunpack.c.l.b16 %v4826
    %v4835 = vunpack.c.l.b16 %v4827
    %v4836 = vunpack.c.l.b16 %v4828
    %v4837 = vunpack.c.l.b16 %v4829
    %v4838 = vpack.c.b16 %v4835, %v4834
    %v4839 = vpack.c.b16 %v4837, %v4836
    %v4843 = vsel %vm2438, %v4824, 0
    %4845 = vmatprep.subr.bf16.mxu0 0
    %4846 = vmatpush1.bf16.msra.mxu0 %v4838
    %4847 = vmatprep.subr.bf16.mxu0 0
    %4848 = vmatpush1.bf16.msra.mxu0 %v4839
    %4849 = vmatprep.subr.bf16.mxu0 0
    %4850 = vmatpush1.bf16.msra.mxu0 0
    %4851 = vmatprep.subr.bf16.mxu0 0
    %4852 = vmatpush1.bf16.msra.mxu0 0
    %4853 = vmatprep.subr.bf16.mxu0 0
    %4854 = vmatpush1.bf16.msra.mxu0 0
    %4855 = vmatprep.subr.bf16.mxu0 0
    %4856 = vmatpush1.bf16.msra.mxu0 0
    %4857 = vmatprep.subr.bf16.mxu0 0
    %4858 = vmatpush1.bf16.msra.mxu0 0
    %4859 = vmatprep.subr.bf16.mxu0 0
    %4860 = vmatpush1.bf16.msra.mxu0 0
    %4861 = vmatprep.subr.bf16.mxu0 0
    %4862 = vmatpush1.bf16.msra.mxu0 0
    %4863 = vmatprep.subr.bf16.mxu0 0
    %4864 = vmatpush1.bf16.msra.mxu0 0
    %4865 = vmatprep.subr.bf16.mxu0 0
    %4866 = vmatpush1.bf16.msra.mxu0 0
    %4867 = vmatprep.subr.bf16.mxu0 0
    %4868 = vmatpush1.bf16.msra.mxu0 0
    %4869 = vmatprep.subr.bf16.mxu0 0
    %4870 = vmatpush1.bf16.msra.mxu0 0
    %4871 = vmatprep.subr.bf16.mxu0 0
    %4872 = vmatpush1.bf16.msra.mxu0 0
    %4873 = vmatprep.subr.bf16.mxu0 0
    %4874 = vmatpush1.bf16.msra.mxu0 0
    %4875 = vmatprep.subr.bf16.mxu0 0
    %4876 = vmatpush1.bf16.msra.mxu0 0
    %4877 = vmatprep.mubr.bf16.mxu0 0
    %4878 = vmatmul.mubr.bf16.gmra.mrb[0].mxu0 %v4843
    %v4879 = vpop.f32.mrb[0].mxu0
    %v4880 = vadd.f32 0.0, %v4879
    %v4881 = vpop.f32.mrb[0].mxu0
    %v4882 = vpop.f32.mrb[0].mxu0
    %v4883 = vpop.f32.mrb[0].mxu0
    %4884 = vdwg.mxu0
    %v4885 = vadd.f32 %v4778, %v4880
    %s4886 = scalar_lea.vmem %s9, 8
    %v4887 = vld [vmem:[%s4886] sm:$0x1]
    %v4889 = vsel %vm446, %v4887, 0
    %4891 = vmatprep.subr.bf16.mxu0 0
    %4892 = vmatpush1.bf16.msra.mxu0 %v4036
    %4893 = vmatprep.subr.bf16.mxu0 0
    %4894 = vmatpush1.bf16.msra.mxu0 0
    %4895 = vmatprep.subr.bf16.mxu0 0
    %4896 = vmatpush1.bf16.msra.mxu0 0
    %4897 = vmatprep.subr.bf16.mxu0 0
    %4898 = vmatpush1.bf16.msra.mxu0 0
    %4899 = vmatprep.subr.bf16.mxu0 0
    %4900 = vmatpush1.bf16.msra.mxu0 0
    %4901 = vmatprep.subr.bf16.mxu0 0
    %4902 = vmatpush1.bf16.msra.mxu0 0
    %4903 = vmatprep.subr.bf16.mxu0 0
    %4904 = vmatpush1.bf16.msra.mxu0 0
    %4905 = vmatprep.subr.bf16.mxu0 0
    %4906 = vmatpush1.bf16.msra.mxu0 0
    %4907 = vmatprep.subr.bf16.mxu0 0
    %4908 = vmatpush1.bf16.msra.mxu0 0
    %4909 = vmatprep.subr.bf16.mxu0 0
    %4910 = vmatpush1.bf16.msra.mxu0 0
    %4911 = vmatprep.subr.bf16.mxu0 0
    %4912 = vmatpush1.bf16.msra.mxu0 0
    %4913 = vmatprep.subr.bf16.mxu0 0
    %4914 = vmatpush1.bf16.msra.mxu0 0
    %4915 = vmatprep.subr.bf16.mxu0 0
    %4916 = vmatpush1.bf16.msra.mxu0 0
    %4917 = vmatprep.subr.bf16.mxu0 0
    %4918 = vmatpush1.bf16.msra.mxu0 0
    %4919 = vmatprep.subr.bf16.mxu0 0
    %4920 = vmatpush1.bf16.msra.mxu0 0
    %4921 = vmatprep.subr.bf16.mxu0 0
    %4922 = vmatpush1.bf16.msra.mxu0 0
    %4923 = vmatprep.mubr.bf16.mxu0 0
    %4924 = vmatmul.mubr.bf16.gmra.mrb[0].mxu0 %v4889
    %v4925 = vpop.f32.mrb[0].mxu0
    %v4926 = vadd.f32 0.0, %v4925
    %v4927 = vpop.f32.mrb[0].mxu0
    %v4928 = vpop.f32.mrb[0].mxu0
    %v4929 = vpop.f32.mrb[0].mxu0
    %4930 = vdwg.mxu0
    %v4931 = vpack.c.bf16 %v4926, %v4926
    %s4932 = scalar_lea.vmem %s10, 128
    %v4933 = vld [vmem:[%s4932] sm:$0xf]
    %v4934 = vld [vmem:[%s4932 + $0x4] sm:$0xf]
    %v4935 = vld [vmem:[%s4932 + $0x8] sm:$0xf]
    %v4936 = vld [vmem:[%s4932 + $0xc] sm:$0xf]
    %v4941 = vunpack.c.l.b16 %v4933
    %v4942 = vunpack.c.l.b16 %v4934
    %v4943 = vunpack.c.l.b16 %v4935
    %v4944 = vunpack.c.l.b16 %v4936
    %v4945 = vpack.c.b16 %v4942, %v4941
    %v4946 = vpack.c.b16 %v4944, %v4943
    %v4950 = vsel %vm2438, %v4931, 0
    %4952 = vmatprep.subr.bf16.mxu0 0
    %4953 = vmatpush1.bf16.msra.mxu0 %v4945
    %4954 = vmatprep.subr.bf16.mxu0 0
    %4955 = vmatpush1.bf16.msra.mxu0 %v4946
    %4956 = vmatprep.subr.bf16.mxu0 0
    %4957 = vmatpush1.bf16.msra.mxu0 0
    %4958 = vmatprep.subr.bf16.mxu0 0
    %4959 = vmatpush1.bf16.msra.mxu0 0
    %4960 = vmatprep.subr.bf16.mxu0 0
    %4961 = vmatpush1.bf16.msra.mxu0 0
    %4962 = vmatprep.subr.bf16.mxu0 0
    %4963 = vmatpush1.bf16.msra.mxu0 0
    %4964 = vmatprep.subr.bf16.mxu0 0
    %4965 = vmatpush1.bf16.msra.mxu0 0
    %4966 = vmatprep.subr.bf16.mxu0 0
    %4967 = vmatpush1.bf16.msra.mxu0 0
    %4968 = vmatprep.subr.bf16.mxu0 0
    %4969 = vmatpush1.bf16.msra.mxu0 0
    %4970 = vmatprep.subr.bf16.mxu0 0
    %4971 = vmatpush1.bf16.msra.mxu0 0
    %4972 = vmatprep.subr.bf16.mxu0 0
    %4973 = vmatpush1.bf16.msra.mxu0 0
    %4974 = vmatprep.subr.bf16.mxu0 0
    %4975 = vmatpush1.bf16.msra.mxu0 0
    %4976 = vmatprep.subr.bf16.mxu0 0
    %4977 = vmatpush1.bf16.msra.mxu0 0
    %4978 = vmatprep.subr.bf16.mxu0 0
    %4979 = vmatpush1.bf16.msra.mxu0 0
    %4980 = vmatprep.subr.bf16.mxu0 0
    %4981 = vmatpush1.bf16.msra.mxu0 0
    %4982 = vmatprep.subr.bf16.mxu0 0
    %4983 = vmatpush1.bf16.msra.mxu0 0
    %4984 = vmatprep.mubr.bf16.mxu0 0
    %4985 = vmatmul.mubr.bf16.gmra.mrb[0].mxu0 %v4950
    %v4986 = vpop.f32.mrb[0].mxu0
    %v4987 = vadd.f32 0.0, %v4986
    %v4988 = vpop.f32.mrb[0].mxu0
    %v4989 = vpop.f32.mrb[0].mxu0
    %v4990 = vpop.f32.mrb[0].mxu0
    %4991 = vdwg.mxu0
    %v4992 = vadd.f32 %v4885, %v4987
    %s4993 = scalar_lea.vmem %s9, 9
    %v4994 = vld [vmem:[%s4993] sm:$0x1]
    %v4996 = vsel %vm446, %v4994, 0
    %4998 = vmatprep.subr.bf16.mxu0 0
    %4999 = vmatpush1.bf16.msra.mxu0 %v4036
    %5000 = vmatprep.subr.bf16.mxu0 0
    %5001 = vmatpush1.bf16.msra.mxu0 0
    %5002 = vmatprep.subr.bf16.mxu0 0
    %5003 = vmatpush1.bf16.msra.mxu0 0
    %5004 = vmatprep.subr.bf16.mxu0 0
    %5005 = vmatpush1.bf16.msra.mxu0 0
    %5006 = vmatprep.subr.bf16.mxu0 0
    %5007 = vmatpush1.bf16.msra.mxu0 0
    %5008 = vmatprep.subr.bf16.mxu0 0
    %5009 = vmatpush1.bf16.msra.mxu0 0
    %5010 = vmatprep.subr.bf16.mxu0 0
    %5011 = vmatpush1.bf16.msra.mxu0 0
    %5012 = vmatprep.subr.bf16.mxu0 0
    %5013 = vmatpush1.bf16.msra.mxu0 0
    %5014 = vmatprep.subr.bf16.mxu0 0
    %5015 = vmatpush1.bf16.msra.mxu0 0
    %5016 = vmatprep.subr.bf16.mxu0 0
    %5017 = vmatpush1.bf16.msra.mxu0 0
    %5018 = vmatprep.subr.bf16.mxu0 0
    %5019 = vmatpush1.bf16.msra.mxu0 0
    %5020 = vmatprep.subr.bf16.mxu0 0
    %5021 = vmatpush1.bf16.msra.mxu0 0
    %5022 = vmatprep.subr.bf16.mxu0 0
    %5023 = vmatpush1.bf16.msra.mxu0 0
    %5024 = vmatprep.subr.bf16.mxu0 0
    %5025 = vmatpush1.bf16.msra.mxu0 0
    %5026 = vmatprep.subr.bf16.mxu0 0
    %5027 = vmatpush1.bf16.msra.mxu0 0
    %5028 = vmatprep.subr.bf16.mxu0 0
    %5029 = vmatpush1.bf16.msra.mxu0 0
    %5030 = vmatprep.mubr.bf16.mxu0 0
    %5031 = vmatmul.mubr.bf16.gmra.mrb[0].mxu0 %v4996
    %v5032 = vpop.f32.mrb[0].mxu0
    %v5033 = vadd.f32 0.0, %v5032
    %v5034 = vpop.f32.mrb[0].mxu0
    %v5035 = vpop.f32.mrb[0].mxu0
    %v5036 = vpop.f32.mrb[0].mxu0
    %5037 = vdwg.mxu0
    %v5038 = vpack.c.bf16 %v5033, %v5033
    %s5039 = scalar_lea.vmem %s10, 144
    %v5040 = vld [vmem:[%s5039] sm:$0xf]
    %v5041 = vld [vmem:[%s5039 + $0x4] sm:$0xf]
    %v5042 = vld [vmem:[%s5039 + $0x8] sm:$0xf]
    %v5043 = vld [vmem:[%s5039 + $0xc] sm:$0xf]
    %v5048 = vunpack.c.l.b16 %v5040
    %v5049 = vunpack.c.l.b16 %v5041
    %v5050 = vunpack.c.l.b16 %v5042
    %v5051 = vunpack.c.l.b16 %v5043
    %v5052 = vpack.c.b16 %v5049, %v5048
    %v5053 = vpack.c.b16 %v5051, %v5050
    %v5057 = vsel %vm2438, %v5038, 0
    %5059 = vmatprep.subr.bf16.mxu0 0
    %5060 = vmatpush1.bf16.msra.mxu0 %v5052
    %5061 = vmatprep.subr.bf16.mxu0 0
    %5062 = vmatpush1.bf16.msra.mxu0 %v5053
    %5063 = vmatprep.subr.bf16.mxu0 0
    %5064 = vmatpush1.bf16.msra.mxu0 0
    %5065 = vmatprep.subr.bf16.mxu0 0
    %5066 = vmatpush1.bf16.msra.mxu0 0
    %5067 = vmatprep.subr.bf16.mxu0 0
    %5068 = vmatpush1.bf16.msra.mxu0 0
    %5069 = vmatprep.subr.bf16.mxu0 0
    %5070 = vmatpush1.bf16.msra.mxu0 0
    %5071 = vmatprep.subr.bf16.mxu0 0
    %5072 = vmatpush1.bf16.msra.mxu0 0
    %5073 = vmatprep.subr.bf16.mxu0 0
    %5074 = vmatpush1.bf16.msra.mxu0 0
    %5075 = vmatprep.subr.bf16.mxu0 0
    %5076 = vmatpush1.bf16.msra.mxu0 0
    %5077 = vmatprep.subr.bf16.mxu0 0
    %5078 = vmatpush1.bf16.msra.mxu0 0
    %5079 = vmatprep.subr.bf16.mxu0 0
    %5080 = vmatpush1.bf16.msra.mxu0 0
    %5081 = vmatprep.subr.bf16.mxu0 0
    %5082 = vmatpush1.bf16.msra.mxu0 0
    %5083 = vmatprep.subr.bf16.mxu0 0
    %5084 = vmatpush1.bf16.msra.mxu0 0
    %5085 = vmatprep.subr.bf16.mxu0 0
    %5086 = vmatpush1.bf16.msra.mxu0 0
    %5087 = vmatprep.subr.bf16.mxu0 0
    %5088 = vmatpush1.bf16.msra.mxu0 0
    %5089 = vmatprep.subr.bf16.mxu0 0
    %5090 = vmatpush1.bf16.msra.mxu0 0
    %5091 = vmatprep.mubr.bf16.mxu0 0
    %5092 = vmatmul.mubr.bf16.gmra.mrb[0].mxu0 %v5057
    %v5093 = vpop.f32.mrb[0].mxu0
    %v5094 = vadd.f32 0.0, %v5093
    %v5095 = vpop.f32.mrb[0].mxu0
    %v5096 = vpop.f32.mrb[0].mxu0
    %v5097 = vpop.f32.mrb[0].mxu0
    %5098 = vdwg.mxu0
    %v5099 = vadd.f32 %v4992, %v5094
    %s5100 = scalar_lea.vmem %s9, 10
    %v5101 = vld [vmem:[%s5100] sm:$0x1]
    %v5103 = vsel %vm446, %v5101, 0
    %5105 = vmatprep.subr.bf16.mxu0 0
    %5106 = vmatpush1.bf16.msra.mxu0 %v4036
    %5107 = vmatprep.subr.bf16.mxu0 0
    %5108 = vmatpush1.bf16.msra.mxu0 0
    %5109 = vmatprep.subr.bf16.mxu0 0
    %5110 = vmatpush1.bf16.msra.mxu0 0
    %5111 = vmatprep.subr.bf16.mxu0 0
    %5112 = vmatpush1.bf16.msra.mxu0 0
    %5113 = vmatprep.subr.bf16.mxu0 0
    %5114 = vmatpush1.bf16.msra.mxu0 0
    %5115 = vmatprep.subr.bf16.mxu0 0
    %5116 = vmatpush1.bf16.msra.mxu0 0
    %5117 = vmatprep.subr.bf16.mxu0 0
    %5118 = vmatpush1.bf16.msra.mxu0 0
    %5119 = vmatprep.subr.bf16.mxu0 0
    %5120 = vmatpush1.bf16.msra.mxu0 0
    %5121 = vmatprep.subr.bf16.mxu0 0
    %5122 = vmatpush1.bf16.msra.mxu0 0
    %5123 = vmatprep.subr.bf16.mxu0 0
    %5124 = vmatpush1.bf16.msra.mxu0 0
    %5125 = vmatprep.subr.bf16.mxu0 0
    %5126 = vmatpush1.bf16.msra.mxu0 0
    %5127 = vmatprep.subr.bf16.mxu0 0
    %5128 = vmatpush1.bf16.msra.mxu0 0
    %5129 = vmatprep.subr.bf16.mxu0 0
    %5130 = vmatpush1.bf16.msra.mxu0 0
    %5131 = vmatprep.subr.bf16.mxu0 0
    %5132 = vmatpush1.bf16.msra.mxu0 0
    %5133 = vmatprep.subr.bf16.mxu0 0
    %5134 = vmatpush1.bf16.msra.mxu0 0
    %5135 = vmatprep.subr.bf16.mxu0 0
    %5136 = vmatpush1.bf16.msra.mxu0 0
    %5137 = vmatprep.mubr.bf16.mxu0 0
    %5138 = vmatmul.mubr.bf16.gmra.mrb[0].mxu0 %v5103
    %v5139 = vpop.f32.mrb[0].mxu0
    %v5140 = vadd.f32 0.0, %v5139
    %v5141 = vpop.f32.mrb[0].mxu0
    %v5142 = vpop.f32.mrb[0].mxu0
    %v5143 = vpop.f32.mrb[0].mxu0
    %5144 = vdwg.mxu0
    %v5145 = vpack.c.bf16 %v5140, %v5140
    %s5146 = scalar_lea.vmem %s10, 160
    %v5147 = vld [vmem:[%s5146] sm:$0xf]
    %v5148 = vld [vmem:[%s5146 + $0x4] sm:$0xf]
    %v5149 = vld [vmem:[%s5146 + $0x8] sm:$0xf]
    %v5150 = vld [vmem:[%s5146 + $0xc] sm:$0xf]
    %v5155 = vunpack.c.l.b16 %v5147
    %v5156 = vunpack.c.l.b16 %v5148
    %v5157 = vunpack.c.l.b16 %v5149
    %v5158 = vunpack.c.l.b16 %v5150
    %v5159 = vpack.c.b16 %v5156, %v5155
    %v5160 = vpack.c.b16 %v5158, %v5157
    %v5164 = vsel %vm2438, %v5145, 0
    %5166 = vmatprep.subr.bf16.mxu0 0
    %5167 = vmatpush1.bf16.msra.mxu0 %v5159
    %5168 = vmatprep.subr.bf16.mxu0 0
    %5169 = vmatpush1.bf16.msra.mxu0 %v5160
    %5170 = vmatprep.subr.bf16.mxu0 0
    %5171 = vmatpush1.bf16.msra.mxu0 0
    %5172 = vmatprep.subr.bf16.mxu0 0
    %5173 = vmatpush1.bf16.msra.mxu0 0
    %5174 = vmatprep.subr.bf16.mxu0 0
    %5175 = vmatpush1.bf16.msra.mxu0 0
    %5176 = vmatprep.subr.bf16.mxu0 0
    %5177 = vmatpush1.bf16.msra.mxu0 0
    %5178 = vmatprep.subr.bf16.mxu0 0
    %5179 = vmatpush1.bf16.msra.mxu0 0
    %5180 = vmatprep.subr.bf16.mxu0 0
    %5181 = vmatpush1.bf16.msra.mxu0 0
    %5182 = vmatprep.subr.bf16.mxu0 0
    %5183 = vmatpush1.bf16.msra.mxu0 0
    %5184 = vmatprep.subr.bf16.mxu0 0
    %5185 = vmatpush1.bf16.msra.mxu0 0
    %5186 = vmatprep.subr.bf16.mxu0 0
    %5187 = vmatpush1.bf16.msra.mxu0 0
    %5188 = vmatprep.subr.bf16.mxu0 0
    %5189 = vmatpush1.bf16.msra.mxu0 0
    %5190 = vmatprep.subr.bf16.mxu0 0
    %5191 = vmatpush1.bf16.msra.mxu0 0
    %5192 = vmatprep.subr.bf16.mxu0 0
    %5193 = vmatpush1.bf16.msra.mxu0 0
    %5194 = vmatprep.subr.bf16.mxu0 0
    %5195 = vmatpush1.bf16.msra.mxu0 0
    %5196 = vmatprep.subr.bf16.mxu0 0
    %5197 = vmatpush1.bf16.msra.mxu0 0
    %5198 = vmatprep.mubr.bf16.mxu0 0
    %5199 = vmatmul.mubr.bf16.gmra.mrb[0].mxu0 %v5164
    %v5200 = vpop.f32.mrb[0].mxu0
    %v5201 = vadd.f32 0.0, %v5200
    %v5202 = vpop.f32.mrb[0].mxu0
    %v5203 = vpop.f32.mrb[0].mxu0
    %v5204 = vpop.f32.mrb[0].mxu0
    %5205 = vdwg.mxu0
    %v5206 = vadd.f32 %v5099, %v5201
    %s5207 = scalar_lea.vmem %s9, 11
    %v5208 = vld [vmem:[%s5207] sm:$0x1]
    %v5210 = vsel %vm446, %v5208, 0
    %5212 = vmatprep.subr.bf16.mxu0 0
    %5213 = vmatpush1.bf16.msra.mxu0 %v4036
    %5214 = vmatprep.subr.bf16.mxu0 0
    %5215 = vmatpush1.bf16.msra.mxu0 0
    %5216 = vmatprep.subr.bf16.mxu0 0
    %5217 = vmatpush1.bf16.msra.mxu0 0
    %5218 = vmatprep.subr.bf16.mxu0 0
    %5219 = vmatpush1.bf16.msra.mxu0 0
    %5220 = vmatprep.subr.bf16.mxu0 0
    %5221 = vmatpush1.bf16.msra.mxu0 0
    %5222 = vmatprep.subr.bf16.mxu0 0
    %5223 = vmatpush1.bf16.msra.mxu0 0
    %5224 = vmatprep.subr.bf16.mxu0 0
    %5225 = vmatpush1.bf16.msra.mxu0 0
    %5226 = vmatprep.subr.bf16.mxu0 0
    %5227 = vmatpush1.bf16.msra.mxu0 0
    %5228 = vmatprep.subr.bf16.mxu0 0
    %5229 = vmatpush1.bf16.msra.mxu0 0
    %5230 = vmatprep.subr.bf16.mxu0 0
    %5231 = vmatpush1.bf16.msra.mxu0 0
    %5232 = vmatprep.subr.bf16.mxu0 0
    %5233 = vmatpush1.bf16.msra.mxu0 0
    %5234 = vmatprep.subr.bf16.mxu0 0
    %5235 = vmatpush1.bf16.msra.mxu0 0
    %5236 = vmatprep.subr.bf16.mxu0 0
    %5237 = vmatpush1.bf16.msra.mxu0 0
    %5238 = vmatprep.subr.bf16.mxu0 0
    %5239 = vmatpush1.bf16.msra.mxu0 0
    %5240 = vmatprep.subr.bf16.mxu0 0
    %5241 = vmatpush1.bf16.msra.mxu0 0
    %5242 = vmatprep.subr.bf16.mxu0 0
    %5243 = vmatpush1.bf16.msra.mxu0 0
    %5244 = vmatprep.mubr.bf16.mxu0 0
    %5245 = vmatmul.mubr.bf16.gmra.mrb[0].mxu0 %v5210
    %v5246 = vpop.f32.mrb[0].mxu0
    %v5247 = vadd.f32 0.0, %v5246
    %v5248 = vpop.f32.mrb[0].mxu0
    %v5249 = vpop.f32.mrb[0].mxu0
    %v5250 = vpop.f32.mrb[0].mxu0
    %5251 = vdwg.mxu0
    %v5252 = vpack.c.bf16 %v5247, %v5247
    %s5253 = scalar_lea.vmem %s10, 176
    %v5254 = vld [vmem:[%s5253] sm:$0xf]
    %v5255 = vld [vmem:[%s5253 + $0x4] sm:$0xf]
    %v5256 = vld [vmem:[%s5253 + $0x8] sm:$0xf]
    %v5257 = vld [vmem:[%s5253 + $0xc] sm:$0xf]
    %v5262 = vunpack.c.l.b16 %v5254
    %v5263 = vunpack.c.l.b16 %v5255
    %v5264 = vunpack.c.l.b16 %v5256
    %v5265 = vunpack.c.l.b16 %v5257
    %v5266 = vpack.c.b16 %v5263, %v5262
    %v5267 = vpack.c.b16 %v5265, %v5264
    %v5271 = vsel %vm2438, %v5252, 0
    %5273 = vmatprep.subr.bf16.mxu0 0
    %5274 = vmatpush1.bf16.msra.mxu0 %v5266
    %5275 = vmatprep.subr.bf16.mxu0 0
    %5276 = vmatpush1.bf16.msra.mxu0 %v5267
    %5277 = vmatprep.subr.bf16.mxu0 0
    %5278 = vmatpush1.bf16.msra.mxu0 0
    %5279 = vmatprep.subr.bf16.mxu0 0
    %5280 = vmatpush1.bf16.msra.mxu0 0
    %5281 = vmatprep.subr.bf16.mxu0 0
    %5282 = vmatpush1.bf16.msra.mxu0 0
    %5283 = vmatprep.subr.bf16.mxu0 0
    %5284 = vmatpush1.bf16.msra.mxu0 0
    %5285 = vmatprep.subr.bf16.mxu0 0
    %5286 = vmatpush1.bf16.msra.mxu0 0
    %5287 = vmatprep.subr.bf16.mxu0 0
    %5288 = vmatpush1.bf16.msra.mxu0 0
    %5289 = vmatprep.subr.bf16.mxu0 0
    %5290 = vmatpush1.bf16.msra.mxu0 0
    %5291 = vmatprep.subr.bf16.mxu0 0
    %5292 = vmatpush1.bf16.msra.mxu0 0
    %5293 = vmatprep.subr.bf16.mxu0 0
    %5294 = vmatpush1.bf16.msra.mxu0 0
    %5295 = vmatprep.subr.bf16.mxu0 0
    %5296 = vmatpush1.bf16.msra.mxu0 0
    %5297 = vmatprep.subr.bf16.mxu0 0
    %5298 = vmatpush1.bf16.msra.mxu0 0
    %5299 = vmatprep.subr.bf16.mxu0 0
    %5300 = vmatpush1.bf16.msra.mxu0 0
    %5301 = vmatprep.subr.bf16.mxu0 0
    %5302 = vmatpush1.bf16.msra.mxu0 0
    %5303 = vmatprep.subr.bf16.mxu0 0
    %5304 = vmatpush1.bf16.msra.mxu0 0
    %5305 = vmatprep.mubr.bf16.mxu0 0
    %5306 = vmatmul.mubr.bf16.gmra.mrb[0].mxu0 %v5271
    %v5307 = vpop.f32.mrb[0].mxu0
    %v5308 = vadd.f32 0.0, %v5307
    %v5309 = vpop.f32.mrb[0].mxu0
    %v5310 = vpop.f32.mrb[0].mxu0
    %v5311 = vpop.f32.mrb[0].mxu0
    %5312 = vdwg.mxu0
    %v5313 = vadd.f32 %v5206, %v5308
    %s5314 = scalar_lea.vmem %s9, 12
    %v5315 = vld [vmem:[%s5314] sm:$0x1]
    %v5317 = vsel %vm446, %v5315, 0
    %5319 = vmatprep.subr.bf16.mxu0 0
    %5320 = vmatpush1.bf16.msra.mxu0 %v4036
    %5321 = vmatprep.subr.bf16.mxu0 0
    %5322 = vmatpush1.bf16.msra.mxu0 0
    %5323 = vmatprep.subr.bf16.mxu0 0
    %5324 = vmatpush1.bf16.msra.mxu0 0
    %5325 = vmatprep.subr.bf16.mxu0 0
    %5326 = vmatpush1.bf16.msra.mxu0 0
    %5327 = vmatprep.subr.bf16.mxu0 0
    %5328 = vmatpush1.bf16.msra.mxu0 0
    %5329 = vmatprep.subr.bf16.mxu0 0
    %5330 = vmatpush1.bf16.msra.mxu0 0
    %5331 = vmatprep.subr.bf16.mxu0 0
    %5332 = vmatpush1.bf16.msra.mxu0 0
    %5333 = vmatprep.subr.bf16.mxu0 0
    %5334 = vmatpush1.bf16.msra.mxu0 0
    %5335 = vmatprep.subr.bf16.mxu0 0
    %5336 = vmatpush1.bf16.msra.mxu0 0
    %5337 = vmatprep.subr.bf16.mxu0 0
    %5338 = vmatpush1.bf16.msra.mxu0 0
    %5339 = vmatprep.subr.bf16.mxu0 0
    %5340 = vmatpush1.bf16.msra.mxu0 0
    %5341 = vmatprep.subr.bf16.mxu0 0
    %5342 = vmatpush1.bf16.msra.mxu0 0
    %5343 = vmatprep.subr.bf16.mxu0 0
    %5344 = vmatpush1.bf16.msra.mxu0 0
    %5345 = vmatprep.subr.bf16.mxu0 0
    %5346 = vmatpush1.bf16.msra.mxu0 0
    %5347 = vmatprep.subr.bf16.mxu0 0
    %5348 = vmatpush1.bf16.msra.mxu0 0
    %5349 = vmatprep.subr.bf16.mxu0 0
    %5350 = vmatpush1.bf16.msra.mxu0 0
    %5351 = vmatprep.mubr.bf16.mxu0 0
    %5352 = vmatmul.mubr.bf16.gmra.mrb[0].mxu0 %v5317
    %v5353 = vpop.f32.mrb[0].mxu0
    %v5354 = vadd.f32 0.0, %v5353
    %v5355 = vpop.f32.mrb[0].mxu0
    %v5356 = vpop.f32.mrb[0].mxu0
    %v5357 = vpop.f32.mrb[0].mxu0
    %5358 = vdwg.mxu0
    %v5359 = vpack.c.bf16 %v5354, %v5354
    %s5360 = scalar_lea.vmem %s10, 192
    %v5361 = vld [vmem:[%s5360] sm:$0xf]
    %v5362 = vld [vmem:[%s5360 + $0x4] sm:$0xf]
    %v5363 = vld [vmem:[%s5360 + $0x8] sm:$0xf]
    %v5364 = vld [vmem:[%s5360 + $0xc] sm:$0xf]
    %v5369 = vunpack.c.l.b16 %v5361
    %v5370 = vunpack.c.l.b16 %v5362
    %v5371 = vunpack.c.l.b16 %v5363
    %v5372 = vunpack.c.l.b16 %v5364
    %v5373 = vpack.c.b16 %v5370, %v5369
    %v5374 = vpack.c.b16 %v5372, %v5371
    %v5378 = vsel %vm2438, %v5359, 0
    %5380 = vmatprep.subr.bf16.mxu0 0
    %5381 = vmatpush1.bf16.msra.mxu0 %v5373
    %5382 = vmatprep.subr.bf16.mxu0 0
    %5383 = vmatpush1.bf16.msra.mxu0 %v5374
    %5384 = vmatprep.subr.bf16.mxu0 0
    %5385 = vmatpush1.bf16.msra.mxu0 0
    %5386 = vmatprep.subr.bf16.mxu0 0
    %5387 = vmatpush1.bf16.msra.mxu0 0
    %5388 = vmatprep.subr.bf16.mxu0 0
    %5389 = vmatpush1.bf16.msra.mxu0 0
    %5390 = vmatprep.subr.bf16.mxu0 0
    %5391 = vmatpush1.bf16.msra.mxu0 0
    %5392 = vmatprep.subr.bf16.mxu0 0
    %5393 = vmatpush1.bf16.msra.mxu0 0
    %5394 = vmatprep.subr.bf16.mxu0 0
    %5395 = vmatpush1.bf16.msra.mxu0 0
    %5396 = vmatprep.subr.bf16.mxu0 0
    %5397 = vmatpush1.bf16.msra.mxu0 0
    %5398 = vmatprep.subr.bf16.mxu0 0
    %5399 = vmatpush1.bf16.msra.mxu0 0
    %5400 = vmatprep.subr.bf16.mxu0 0
    %5401 = vmatpush1.bf16.msra.mxu0 0
    %5402 = vmatprep.subr.bf16.mxu0 0
    %5403 = vmatpush1.bf16.msra.mxu0 0
    %5404 = vmatprep.subr.bf16.mxu0 0
    %5405 = vmatpush1.bf16.msra.mxu0 0
    %5406 = vmatprep.subr.bf16.mxu0 0
    %5407 = vmatpush1.bf16.msra.mxu0 0
    %5408 = vmatprep.subr.bf16.mxu0 0
    %5409 = vmatpush1.bf16.msra.mxu0 0
    %5410 = vmatprep.subr.bf16.mxu0 0
    %5411 = vmatpush1.bf16.msra.mxu0 0
    %5412 = vmatprep.mubr.bf16.mxu0 0
    %5413 = vmatmul.mubr.bf16.gmra.mrb[0].mxu0 %v5378
    %v5414 = vpop.f32.mrb[0].mxu0
    %v5415 = vadd.f32 0.0, %v5414
    %v5416 = vpop.f32.mrb[0].mxu0
    %v5417 = vpop.f32.mrb[0].mxu0
    %v5418 = vpop.f32.mrb[0].mxu0
    %5419 = vdwg.mxu0
    %v5420 = vadd.f32 %v5313, %v5415
    %s5421 = scalar_lea.vmem %s9, 13
    %v5422 = vld [vmem:[%s5421] sm:$0x1]
    %v5424 = vsel %vm446, %v5422, 0
    %5426 = vmatprep.subr.bf16.mxu0 0
    %5427 = vmatpush1.bf16.msra.mxu0 %v4036
    %5428 = vmatprep.subr.bf16.mxu0 0
    %5429 = vmatpush1.bf16.msra.mxu0 0
    %5430 = vmatprep.subr.bf16.mxu0 0
    %5431 = vmatpush1.bf16.msra.mxu0 0
    %5432 = vmatprep.subr.bf16.mxu0 0
    %5433 = vmatpush1.bf16.msra.mxu0 0
    %5434 = vmatprep.subr.bf16.mxu0 0
    %5435 = vmatpush1.bf16.msra.mxu0 0
    %5436 = vmatprep.subr.bf16.mxu0 0
    %5437 = vmatpush1.bf16.msra.mxu0 0
    %5438 = vmatprep.subr.bf16.mxu0 0
    %5439 = vmatpush1.bf16.msra.mxu0 0
    %5440 = vmatprep.subr.bf16.mxu0 0
    %5441 = vmatpush1.bf16.msra.mxu0 0
    %5442 = vmatprep.subr.bf16.mxu0 0
    %5443 = vmatpush1.bf16.msra.mxu0 0
    %5444 = vmatprep.subr.bf16.mxu0 0
    %5445 = vmatpush1.bf16.msra.mxu0 0
    %5446 = vmatprep.subr.bf16.mxu0 0
    %5447 = vmatpush1.bf16.msra.mxu0 0
    %5448 = vmatprep.subr.bf16.mxu0 0
    %5449 = vmatpush1.bf16.msra.mxu0 0
    %5450 = vmatprep.subr.bf16.mxu0 0
    %5451 = vmatpush1.bf16.msra.mxu0 0
    %5452 = vmatprep.subr.bf16.mxu0 0
    %5453 = vmatpush1.bf16.msra.mxu0 0
    %5454 = vmatprep.subr.bf16.mxu0 0
    %5455 = vmatpush1.bf16.msra.mxu0 0
    %5456 = vmatprep.subr.bf16.mxu0 0
    %5457 = vmatpush1.bf16.msra.mxu0 0
    %5458 = vmatprep.mubr.bf16.mxu0 0
    %5459 = vmatmul.mubr.bf16.gmra.mrb[0].mxu0 %v5424
    %v5460 = vpop.f32.mrb[0].mxu0
    %v5461 = vadd.f32 0.0, %v5460
    %v5462 = vpop.f32.mrb[0].mxu0
    %v5463 = vpop.f32.mrb[0].mxu0
    %v5464 = vpop.f32.mrb[0].mxu0
    %5465 = vdwg.mxu0
    %v5466 = vpack.c.bf16 %v5461, %v5461
    %s5467 = scalar_lea.vmem %s10, 208
    %v5468 = vld [vmem:[%s5467] sm:$0xf]
    %v5469 = vld [vmem:[%s5467 + $0x4] sm:$0xf]
    %v5470 = vld [vmem:[%s5467 + $0x8] sm:$0xf]
    %v5471 = vld [vmem:[%s5467 + $0xc] sm:$0xf]
    %v5476 = vunpack.c.l.b16 %v5468
    %v5477 = vunpack.c.l.b16 %v5469
    %v5478 = vunpack.c.l.b16 %v5470
    %v5479 = vunpack.c.l.b16 %v5471
    %v5480 = vpack.c.b16 %v5477, %v5476
    %v5481 = vpack.c.b16 %v5479, %v5478
    %v5485 = vsel %vm2438, %v5466, 0
    %5487 = vmatprep.subr.bf16.mxu0 0
    %5488 = vmatpush1.bf16.msra.mxu0 %v5480
    %5489 = vmatprep.subr.bf16.mxu0 0
    %5490 = vmatpush1.bf16.msra.mxu0 %v5481
    %5491 = vmatprep.subr.bf16.mxu0 0
    %5492 = vmatpush1.bf16.msra.mxu0 0
    %5493 = vmatprep.subr.bf16.mxu0 0
    %5494 = vmatpush1.bf16.msra.mxu0 0
    %5495 = vmatprep.subr.bf16.mxu0 0
    %5496 = vmatpush1.bf16.msra.mxu0 0
    %5497 = vmatprep.subr.bf16.mxu0 0
    %5498 = vmatpush1.bf16.msra.mxu0 0
    %5499 = vmatprep.subr.bf16.mxu0 0
    %5500 = vmatpush1.bf16.msra.mxu0 0
    %5501 = vmatprep.subr.bf16.mxu0 0
    %5502 = vmatpush1.bf16.msra.mxu0 0
    %5503 = vmatprep.subr.bf16.mxu0 0
    %5504 = vmatpush1.bf16.msra.mxu0 0
    %5505 = vmatprep.subr.bf16.mxu0 0
    %5506 = vmatpush1.bf16.msra.mxu0 0
    %5507 = vmatprep.subr.bf16.mxu0 0
    %5508 = vmatpush1.bf16.msra.mxu0 0
    %5509 = vmatprep.subr.bf16.mxu0 0
    %5510 = vmatpush1.bf16.msra.mxu0 0
    %5511 = vmatprep.subr.bf16.mxu0 0
    %5512 = vmatpush1.bf16.msra.mxu0 0
    %5513 = vmatprep.subr.bf16.mxu0 0
    %5514 = vmatpush1.bf16.msra.mxu0 0
    %5515 = vmatprep.subr.bf16.mxu0 0
    %5516 = vmatpush1.bf16.msra.mxu0 0
    %5517 = vmatprep.subr.bf16.mxu0 0
    %5518 = vmatpush1.bf16.msra.mxu0 0
    %5519 = vmatprep.mubr.bf16.mxu0 0
    %5520 = vmatmul.mubr.bf16.gmra.mrb[0].mxu0 %v5485
    %v5521 = vpop.f32.mrb[0].mxu0
    %v5522 = vadd.f32 0.0, %v5521
    %v5523 = vpop.f32.mrb[0].mxu0
    %v5524 = vpop.f32.mrb[0].mxu0
    %v5525 = vpop.f32.mrb[0].mxu0
    %5526 = vdwg.mxu0
    %v5527 = vadd.f32 %v5420, %v5522
    %s5528 = scalar_lea.vmem %s9, 14
    %v5529 = vld [vmem:[%s5528] sm:$0x1]
    %v5531 = vsel %vm446, %v5529, 0
    %5533 = vmatprep.subr.bf16.mxu0 0
    %5534 = vmatpush1.bf16.msra.mxu0 %v4036
    %5535 = vmatprep.subr.bf16.mxu0 0
    %5536 = vmatpush1.bf16.msra.mxu0 0
    %5537 = vmatprep.subr.bf16.mxu0 0
    %5538 = vmatpush1.bf16.msra.mxu0 0
    %5539 = vmatprep.subr.bf16.mxu0 0
    %5540 = vmatpush1.bf16.msra.mxu0 0
    %5541 = vmatprep.subr.bf16.mxu0 0
    %5542 = vmatpush1.bf16.msra.mxu0 0
    %5543 = vmatprep.subr.bf16.mxu0 0
    %5544 = vmatpush1.bf16.msra.mxu0 0
    %5545 = vmatprep.subr.bf16.mxu0 0
    %5546 = vmatpush1.bf16.msra.mxu0 0
    %5547 = vmatprep.subr.bf16.mxu0 0
    %5548 = vmatpush1.bf16.msra.mxu0 0
    %5549 = vmatprep.subr.bf16.mxu0 0
    %5550 = vmatpush1.bf16.msra.mxu0 0
    %5551 = vmatprep.subr.bf16.mxu0 0
    %5552 = vmatpush1.bf16.msra.mxu0 0
    %5553 = vmatprep.subr.bf16.mxu0 0
    %5554 = vmatpush1.bf16.msra.mxu0 0
    %5555 = vmatprep.subr.bf16.mxu0 0
    %5556 = vmatpush1.bf16.msra.mxu0 0
    %5557 = vmatprep.subr.bf16.mxu0 0
    %5558 = vmatpush1.bf16.msra.mxu0 0
    %5559 = vmatprep.subr.bf16.mxu0 0
    %5560 = vmatpush1.bf16.msra.mxu0 0
    %5561 = vmatprep.subr.bf16.mxu0 0
    %5562 = vmatpush1.bf16.msra.mxu0 0
    %5563 = vmatprep.subr.bf16.mxu0 0
    %5564 = vmatpush1.bf16.msra.mxu0 0
    %5565 = vmatprep.mubr.bf16.mxu0 0
    %5566 = vmatmul.mubr.bf16.gmra.mrb[0].mxu0 %v5531
    %v5567 = vpop.f32.mrb[0].mxu0
    %v5568 = vadd.f32 0.0, %v5567
    %v5569 = vpop.f32.mrb[0].mxu0
    %v5570 = vpop.f32.mrb[0].mxu0
    %v5571 = vpop.f32.mrb[0].mxu0
    %5572 = vdwg.mxu0
    %v5573 = vpack.c.bf16 %v5568, %v5568
    %s5574 = scalar_lea.vmem %s10, 224
    %v5575 = vld [vmem:[%s5574] sm:$0xf]
    %v5576 = vld [vmem:[%s5574 + $0x4] sm:$0xf]
    %v5577 = vld [vmem:[%s5574 + $0x8] sm:$0xf]
    %v5578 = vld [vmem:[%s5574 + $0xc] sm:$0xf]
    %v5583 = vunpack.c.l.b16 %v5575
    %v5584 = vunpack.c.l.b16 %v5576
    %v5585 = vunpack.c.l.b16 %v5577
    %v5586 = vunpack.c.l.b16 %v5578
    %v5587 = vpack.c.b16 %v5584, %v5583
    %v5588 = vpack.c.b16 %v5586, %v5585
    %v5592 = vsel %vm2438, %v5573, 0
    %5594 = vmatprep.subr.bf16.mxu0 0
    %5595 = vmatpush1.bf16.msra.mxu0 %v5587
    %5596 = vmatprep.subr.bf16.mxu0 0
    %5597 = vmatpush1.bf16.msra.mxu0 %v5588
    %5598 = vmatprep.subr.bf16.mxu0 0
    %5599 = vmatpush1.bf16.msra.mxu0 0
    %5600 = vmatprep.subr.bf16.mxu0 0
    %5601 = vmatpush1.bf16.msra.mxu0 0
    %5602 = vmatprep.subr.bf16.mxu0 0
    %5603 = vmatpush1.bf16.msra.mxu0 0
    %5604 = vmatprep.subr.bf16.mxu0 0
    %5605 = vmatpush1.bf16.msra.mxu0 0
    %5606 = vmatprep.subr.bf16.mxu0 0
    %5607 = vmatpush1.bf16.msra.mxu0 0
    %5608 = vmatprep.subr.bf16.mxu0 0
    %5609 = vmatpush1.bf16.msra.mxu0 0
    %5610 = vmatprep.subr.bf16.mxu0 0
    %5611 = vmatpush1.bf16.msra.mxu0 0
    %5612 = vmatprep.subr.bf16.mxu0 0
    %5613 = vmatpush1.bf16.msra.mxu0 0
    %5614 = vmatprep.subr.bf16.mxu0 0
    %5615 = vmatpush1.bf16.msra.mxu0 0
    %5616 = vmatprep.subr.bf16.mxu0 0
    %5617 = vmatpush1.bf16.msra.mxu0 0
    %5618 = vmatprep.subr.bf16.mxu0 0
    %5619 = vmatpush1.bf16.msra.mxu0 0
    %5620 = vmatprep.subr.bf16.mxu0 0
    %5621 = vmatpush1.bf16.msra.mxu0 0
    %5622 = vmatprep.subr.bf16.mxu0 0
    %5623 = vmatpush1.bf16.msra.mxu0 0
    %5624 = vmatprep.subr.bf16.mxu0 0
    %5625 = vmatpush1.bf16.msra.mxu0 0
    %5626 = vmatprep.mubr.bf16.mxu0 0
    %5627 = vmatmul.mubr.bf16.gmra.mrb[0].mxu0 %v5592
    %v5628 = vpop.f32.mrb[0].mxu0
    %v5629 = vadd.f32 0.0, %v5628
    %v5630 = vpop.f32.mrb[0].mxu0
    %v5631 = vpop.f32.mrb[0].mxu0
    %v5632 = vpop.f32.mrb[0].mxu0
    %5633 = vdwg.mxu0
    %v5634 = vadd.f32 %v5527, %v5629
    %s5635 = scalar_lea.vmem %s9, 15
    %v5636 = vld [vmem:[%s5635] sm:$0x1]
    %v5638 = vsel %vm446, %v5636, 0
    %5640 = vmatprep.subr.bf16.mxu0 0
    %5641 = vmatpush1.bf16.msra.mxu0 %v4036
    %5642 = vmatprep.subr.bf16.mxu0 0
    %5643 = vmatpush1.bf16.msra.mxu0 0
    %5644 = vmatprep.subr.bf16.mxu0 0
    %5645 = vmatpush1.bf16.msra.mxu0 0
    %5646 = vmatprep.subr.bf16.mxu0 0
    %5647 = vmatpush1.bf16.msra.mxu0 0
    %5648 = vmatprep.subr.bf16.mxu0 0
    %5649 = vmatpush1.bf16.msra.mxu0 0
    %5650 = vmatprep.subr.bf16.mxu0 0
    %5651 = vmatpush1.bf16.msra.mxu0 0
    %5652 = vmatprep.subr.bf16.mxu0 0
    %5653 = vmatpush1.bf16.msra.mxu0 0
    %5654 = vmatprep.subr.bf16.mxu0 0
    %5655 = vmatpush1.bf16.msra.mxu0 0
    %5656 = vmatprep.subr.bf16.mxu0 0
    %5657 = vmatpush1.bf16.msra.mxu0 0
    %5658 = vmatprep.subr.bf16.mxu0 0
    %5659 = vmatpush1.bf16.msra.mxu0 0
    %5660 = vmatprep.subr.bf16.mxu0 0
    %5661 = vmatpush1.bf16.msra.mxu0 0
    %5662 = vmatprep.subr.bf16.mxu0 0
    %5663 = vmatpush1.bf16.msra.mxu0 0
    %5664 = vmatprep.subr.bf16.mxu0 0
    %5665 = vmatpush1.bf16.msra.mxu0 0
    %5666 = vmatprep.subr.bf16.mxu0 0
    %5667 = vmatpush1.bf16.msra.mxu0 0
    %5668 = vmatprep.subr.bf16.mxu0 0
    %5669 = vmatpush1.bf16.msra.mxu0 0
    %5670 = vmatprep.subr.bf16.mxu0 0
    %5671 = vmatpush1.bf16.msra.mxu0 0
    %5672 = vmatprep.mubr.bf16.mxu0 0
    %5673 = vmatmul.mubr.bf16.gmra.mrb[0].mxu0 %v5638
    %v5674 = vpop.f32.mrb[0].mxu0
    %v5675 = vadd.f32 0.0, %v5674
    %v5676 = vpop.f32.mrb[0].mxu0
    %v5677 = vpop.f32.mrb[0].mxu0
    %v5678 = vpop.f32.mrb[0].mxu0
    %5679 = vdwg.mxu0
    %v5680 = vpack.c.bf16 %v5675, %v5675
    %s5681 = scalar_lea.vmem %s10, 240
    %v5682 = vld [vmem:[%s5681] sm:$0xf]
    %v5683 = vld [vmem:[%s5681 + $0x4] sm:$0xf]
    %v5684 = vld [vmem:[%s5681 + $0x8] sm:$0xf]
    %v5685 = vld [vmem:[%s5681 + $0xc] sm:$0xf]
    %v5690 = vunpack.c.l.b16 %v5682
    %v5691 = vunpack.c.l.b16 %v5683
    %v5692 = vunpack.c.l.b16 %v5684
    %v5693 = vunpack.c.l.b16 %v5685
    %v5694 = vpack.c.b16 %v5691, %v5690
    %v5695 = vpack.c.b16 %v5693, %v5692
    %v5699 = vsel %vm2438, %v5680, 0
    %5701 = vmatprep.subr.bf16.mxu0 0
    %5702 = vmatpush1.bf16.msra.mxu0 %v5694
    %5703 = vmatprep.subr.bf16.mxu0 0
    %5704 = vmatpush1.bf16.msra.mxu0 %v5695
    %5705 = vmatprep.subr.bf16.mxu0 0
    %5706 = vmatpush1.bf16.msra.mxu0 0
    %5707 = vmatprep.subr.bf16.mxu0 0
    %5708 = vmatpush1.bf16.msra.mxu0 0
    %5709 = vmatprep.subr.bf16.mxu0 0
    %5710 = vmatpush1.bf16.msra.mxu0 0
    %5711 = vmatprep.subr.bf16.mxu0 0
    %5712 = vmatpush1.bf16.msra.mxu0 0
    %5713 = vmatprep.subr.bf16.mxu0 0
    %5714 = vmatpush1.bf16.msra.mxu0 0
    %5715 = vmatprep.subr.bf16.mxu0 0
    %5716 = vmatpush1.bf16.msra.mxu0 0
    %5717 = vmatprep.subr.bf16.mxu0 0
    %5718 = vmatpush1.bf16.msra.mxu0 0
    %5719 = vmatprep.subr.bf16.mxu0 0
    %5720 = vmatpush1.bf16.msra.mxu0 0
    %5721 = vmatprep.subr.bf16.mxu0 0
    %5722 = vmatpush1.bf16.msra.mxu0 0
    %5723 = vmatprep.subr.bf16.mxu0 0
    %5724 = vmatpush1.bf16.msra.mxu0 0
    %5725 = vmatprep.subr.bf16.mxu0 0
    %5726 = vmatpush1.bf16.msra.mxu0 0
    %5727 = vmatprep.subr.bf16.mxu0 0
    %5728 = vmatpush1.bf16.msra.mxu0 0
    %5729 = vmatprep.subr.bf16.mxu0 0
    %5730 = vmatpush1.bf16.msra.mxu0 0
    %5731 = vmatprep.subr.bf16.mxu0 0
    %5732 = vmatpush1.bf16.msra.mxu0 0
    %5733 = vmatprep.mubr.bf16.mxu0 0
    %5734 = vmatmul.mubr.bf16.gmra.mrb[0].mxu0 %v5699
    %v5735 = vpop.f32.mrb[0].mxu0
    %v5736 = vadd.f32 0.0, %v5735
    %v5737 = vpop.f32.mrb[0].mxu0
    %v5738 = vpop.f32.mrb[0].mxu0
    %v5739 = vpop.f32.mrb[0].mxu0
    %5740 = vdwg.mxu0
    %v5741 = vadd.f32 %v5634, %v5736
    %v5742 = vld [vmem:[%s11] sm:$0x1]
    %v5744 = vlaneseq
    %v5745 = vshrl.u32 %v5744, 7
    %v5746 = vsub.s32 0, %v5745
    %v5747 = vrot.slane %v5742, %v5746
    %v5749 = vadd.f32 %v5741, %v5747
    %vm5750 = vcmask 254976
    %5751 = vst.msk [vmem:[#allocation2] sm:$0x3] %vm5750, %v5749
    // Predicated region
    $region50: #{_forward_impl.1} parent=1 // pred_check
      _
    $region51: #{_forward_impl.1} parent=1 // pred_check_branch
      %5753 = sbr.rel (0) target = $region53
    $region52: #{_forward_impl.1} parent=1 // pred_region
      %s5755 = ssub.s32 32, 32
      %5756 = vsyncadd [#allocation3], %s5755
      %s5758 = sshll.u32 [#allocation2], 4
      %s5759 = int_to_ptr.vmem [resolvable:$true] %s5758
      %5761 = dma.vmem_to_hbm [thread:$0]  %s5759, 32, %s12, [#allocation3]
    $region53: #{_forward_impl.1} parent=1 // pred_fallthru
      _
    // Predicated region
    $region54: #{_forward_impl.1} parent=1 // pred_check
      _
    $region55: #{_forward_impl.1} parent=1 // pred_check_branch
      %5763 = sbr.rel (0) target = $region57
    $region56: #{_forward_impl.1} parent=1 // pred_region
      %5764 = dma.done [#allocation3], 32
    $region57: #{_forward_impl.1} parent=1 // pred_fallthru
      _
    %5765 = vsyncpa [#allocation3], 1

</llo_original>
